<compile_context>
chip_gen: v5e
topology: v5e:2x2
jax: 0.10.0
libtpu: 0.0.40
codegen_flags: <defaults>
</compile_context>

<pallas_src>
import numpy as np
import jax
import jax.numpy as jnp
from jax import lax
from jax.experimental import pallas as pl
from jax.experimental.pallas import tpu as pltpu

PADW = 4        # width halo folded into the flat lane axis (2*PADW >= 5)
DW_HALF = 2     # 5x5 depthwise half-width
SAB_HALF = 5    # merged 3/7/11 SAB conv half-width


def _round_up(x, m):
    return ((x + m - 1) // m) * m


def make_msdafb_kernel(C, H, W):
    Wp = W + 2 * PADW
    N1 = H * Wp
    SO = _round_up(DW_HALF * Wp + DW_HALF + 1, 128)    # dw scratch interior off
    L = SO + N1 + SO
    SOS = _round_up(SAB_HALF * Wp + SAB_HALF + 1, 128)  # SAB scratch interior off
    LS = SOS + N1 + SOS
    inv_hw = 1.0 / float(H * W)

    def kernel(x_ref, maxbias_ref, w1_ref, b1_ref, w2_ref, b2_ref,
               sabw_ref, s1_ref, bb1_ref, dw3_ref, bb3_ref, dw5_ref, bb5_ref,
               wp1_ref, wp3_ref, wp5_ref, pscale_ref, pbias_ref,
               o_ref, x2p_ref, sabp_ref):
        # ---- zero only the halo margins (128-aligned, full-lane stores).
        # Done every step (cheap: ~10 vregs) instead of once under
        # program_id==0, because with a "parallel" batch grid each TensorCore
        # owns a private scratch and may never see step 0.
        x2p_ref[:, pl.ds(0, SO)] = jnp.zeros((C, SO), jnp.float32)
        x2p_ref[:, pl.ds(SO + N1, SO)] = jnp.zeros((C, SO), jnp.float32)
        sabp_ref[:, pl.ds(0, SOS)] = jnp.zeros((2, SOS), jnp.float32)
        sabp_ref[:, pl.ds(SOS + N1, SOS)] = jnp.zeros((2, SOS), jnp.float32)

        x = x_ref[0]                                            # (C, N1)

        # ---------------- Channel Attention Block (CAB) ----------------
        avg_c = jnp.sum(x, axis=1, keepdims=True) * inv_hw      # (C, 1)
        max_c = jnp.max(x + maxbias_ref[...], axis=1, keepdims=True)
        pooled = jnp.concatenate([avg_c, max_c], axis=1)        # (C, 2)
        # shared MLP applied to both pooled vectors in one pass.  These two
        # tiny dots sit on the serial catt path (review note); kept as dots.
        h = jnp.maximum(
            jnp.dot(w1_ref[...], pooled,
                    preferred_element_type=jnp.float32) + b1_ref[...], 0.0)
        o2 = jnp.dot(w2_ref[...], h,
                     preferred_element_type=jnp.float32) + b2_ref[...]
        catt = jax.nn.sigmoid(o2[:, 0:1] + o2[:, 1:2])          # (C, 1)
        x1 = x * catt                                           # (C, N1)

        # ---------------- Spatial Attention Block (SAB) -----------------
        # channel pooling -> (2, N1) maps; merged 3/7/11 convs (+1/3 mean) as
        # an 11x11 shifted-window accumulation over a tiny zero-haloed scratch.
        avg_p = jnp.mean(x1, axis=0, keepdims=True)             # (1, N1)
        max_p = jnp.max(x1, axis=0, keepdims=True)              # (1, N1)
        sabp_ref[:, pl.ds(SOS, N1)] = jnp.concatenate([avg_p, max_p], axis=0)

        sabw = sabw_ref[...]                                    # (2, 121)
        acc_att = jnp.zeros((2, N1), jnp.float32)
        for di in range(2 * SAB_HALF + 1):
            for dj in range(2 * SAB_HALF + 1):
                t = di * (2 * SAB_HALF + 1) + dj
                off = SOS + (di - SAB_HALF) * Wp + (dj - SAB_HALF)
                win = sabp_ref[:, pl.ds(off, N1)]               # (2, N1)
                acc_att = acc_att + sabw[:, t:t + 1] * win
        satt = jax.nn.sigmoid(acc_att[0:1] + acc_att[1:2])      # (1, N1)
        x2 = x1 * satt                                          # (C, N1)

        # ---- MSPDC k=1 branch + its projection dot, issued early so x2 and
        # feat1 die before the 5x5 tap loop; partial y lives in output VMEM.
        x2p_ref[:, pl.ds(SO, N1)] = x2
        feat1 = jnp.maximum(x2 * s1_ref[...] + bb1_ref[...], 0.0)
        o_ref[0] = jnp.dot(wp1_ref[...], feat1.astype(jnp.bfloat16),
                           preferred_element_type=jnp.float32)

        # ---- MSPDC depthwise 3x3 / 5x5 via shifted windows of the padded
        # scratch (BN scales folded into the taps, 3x3 reuses 5x5 windows).
        dw3 = dw3_ref[...]                                      # (C, 9)
        dw5 = dw5_ref[...]                                      # (C, 25)
        acc3 = jnp.zeros((C, N1), jnp.float32)
        acc5 = jnp.zeros((C, N1), jnp.float32)
        for di in range(5):
            oi = di - 2
            for dj in range(5):
                oj = dj - 2
                win = x2p_ref[:, pl.ds(SO + oi * Wp + oj, N1)]  # (C, N1)
                t5 = di * 5 + dj
                acc5 = acc5 + dw5[:, t5:t5 + 1] * win
                if abs(oi) <= 1 and abs(oj) <= 1:               # shared window
                    t3 = (oi + 1) * 3 + (oj + 1)
                    acc3 = acc3 + dw3[:, t3:t3 + 1] * win

        feat3 = jnp.maximum(acc3 + bb3_ref[...], 0.0)
        feat5 = jnp.maximum(acc5 + bb5_ref[...], 0.0)

        # projection = three accumulating (C,C)@(C,N1) dots (channel_shuffle
        # folded host-side), bf16 operands / f32 accumulation on the MXU.
        y = o_ref[0]
        y = y + jnp.dot(wp3_ref[...], feat3.astype(jnp.bfloat16),
                        preferred_element_type=jnp.float32)
        y = y + jnp.dot(wp5_ref[...], feat5.astype(jnp.bfloat16),
                        preferred_element_type=jnp.float32)
        o_ref[0] = y * pscale_ref[...] + pbias_ref[...]          # project BN

    return kernel, N1, L, LS


def msdafb_forward(x_nchw, kp):
    B, C, H, W = x_nchw.shape
    Wp = W + 2 * PADW
    kernel, N1, L, LS = make_msdafb_kernel(C, H, W)

    # fold the width halo into the flat lane axis (contiguous pad + reshape)
    xpad = jnp.pad(x_nchw, ((0, 0), (0, 0), (0, 0), (PADW, PADW)))
    xflat = xpad.reshape(B, C, N1)

    def full_spec(a):
        nd = a.ndim

        def idx(b):
            return (0,) * nd
        return pl.BlockSpec(a.shape, idx)

    weights = [kp["maxbias"], kp["w1"], kp["b1"], kp["w2"], kp["b2"],
               kp["sabw"], kp["s1"], kp["bb1"], kp["dw3"], kp["bb3"],
               kp["dw5"], kp["bb5"], kp["wp1"], kp["wp3"], kp["wp5"],
               kp["pscale"], kp["pbias"]]
    in_specs = [pl.BlockSpec((1, C, N1), lambda b: (b, 0, 0))]
    in_specs += [full_spec(w) for w in weights]

    out = pl.pallas_call(
        kernel,
        out_shape=jax.ShapeDtypeStruct((B, C, N1), jnp.float32),
        grid_spec=pltpu.PrefetchScalarGridSpec(
            num_scalar_prefetch=0,
            grid=(B,),
            in_specs=in_specs,
            out_specs=pl.BlockSpec((1, C, N1), lambda b: (b, 0, 0)),
            scratch_shapes=[pltpu.VMEM((C, L), jnp.float32),
                            pltpu.VMEM((2, LS), jnp.float32)]),
        compiler_params=pltpu.CompilerParams(
            dimension_semantics=("parallel",)),
    )(xflat, *weights)

    # drop the folded-in width halo (cheap XLA slice outside the kernel)
    return out.reshape(B, C, H, Wp)[..., PADW:PADW + W]


# --------------------------------------------------------------------------
# parameter construction (torch-like raw params + folded kernel params)
# --------------------------------------------------------------------------
def build_sab_taps(sab_kernels):
    """Merge the 3 SAB convs (3/7/11) and their 1/3 mean into one centered
    11x11 tap set of shape (2, 121)."""
    K = 2 * SAB_HALF + 1
    taps = np.zeros((2, K, K), np.float32)
    scale = 1.0 / float(len(sab_kernels))
    for k, wk in sab_kernels:
        w = np.asarray(wk)                         # (2, k, k)
        off = (K - k) // 2
        taps[:, off:off + k, off:off + k] += scale * w
    return jnp.asarray(taps.reshape(2, K * K))


def build_params(C, H, W, key):
    Wp = W + 2 * PADW
    N1 = H * Wp
    mid = max(C // 16, 1)
    eps = 1e-5
    keys = jax.random.split(key, 20)

    def nrm(k, shape, sc):
        return sc * jax.random.normal(k, shape, jnp.float32)

    def bn_fold(kk, n):
        k1, k2, k3, k4 = jax.random.split(kk, 4)
        gamma = 1.0 + 0.1 * jax.random.normal(k1, (n,), jnp.float32)
        beta = 0.1 * jax.random.normal(k2, (n,), jnp.float32)
        mean = 0.1 * jax.random.normal(k3, (n,), jnp.float32)
        var = jnp.abs(jax.random.normal(k4, (n,), jnp.float32)) + 0.5
        scale = gamma / jnp.sqrt(var + eps)
        return scale, beta - mean * scale

    # projection weight snapped to bf16-representable values so the kernel's
    # bf16 MXU path only rounds activations (keeps the check tolerance tight)
    wproj = nrm(keys[13], (C, 3 * C), 0.1).astype(jnp.bfloat16
                                                  ).astype(jnp.float32)

    raw = {
        "w1": nrm(keys[0], (mid, C), 0.3), "b1": nrm(keys[1], (mid,), 0.1),
        "w2": nrm(keys[2], (C, mid), 0.3), "b2": nrm(keys[3], (C,), 0.1),
        "sab": [(k, nrm(keys[4 + i], (2, k, k), 0.1))
                for i, k in enumerate((3, 7, 11))],
        "dw": {1: nrm(keys[7], (1, 1, C), 0.3),
               3: nrm(keys[8], (3, 3, C), 0.2),
               5: nrm(keys[9], (5, 5, C), 0.15)},
        "Wproj": wproj,
    }
    bnscale, bnbias = [], []
    for i in range(3):
        s, b = bn_fold(keys[10 + i], C)
        bnscale.append(s)
        bnbias.append(b)
    raw["bnscale"], raw["bnbias"] = bnscale, bnbias
    raw["pscale"], raw["pbias"] = bn_fold(keys[14], C)

    # ---- folded kernel params ----
    kp = {
        "w1": raw["w1"], "b1": raw["b1"].reshape(mid, 1),
        "w2": raw["w2"], "b2": raw["b2"].reshape(C, 1),
        "sabw": build_sab_taps(raw["sab"]),
        # k=1 branch: depthwise weight and BN scale fold into one per-channel
        "s1": (raw["dw"][1][0, 0, :] * bnscale[0]).reshape(C, 1),
        "bb1": bnbias[0].reshape(C, 1),
        # k=3/5 branches: BN scale folded into tap weights, shape (C, k*k)
        "dw3": (raw["dw"][3] * bnscale[1][None, None, :]
                ).transpose(2, 0, 1).reshape(C, 9),
        "bb3": bnbias[1].reshape(C, 1),
        "dw5": (raw["dw"][5] * bnscale[2][None, None, :]
                ).transpose(2, 0, 1).reshape(C, 25),
        "bb5": bnbias[2].reshape(C, 1),
        "pscale": raw["pscale"].reshape(C, 1),
        "pbias": raw["pbias"].reshape(C, 1),
    }
    # channel_shuffle folded into the projection weight (groups=C, cpg=3),
    # then split into the three per-branch (C, C) blocks (bf16 for the MXU)
    perm = np.array([(o % 3) * C + o // 3 for o in range(3 * C)])
    wproj_sh = np.asarray(raw["Wproj"])[:, perm]
    kp["wp1"] = jnp.asarray(wproj_sh[:, 0:C], jnp.bfloat16)
    kp["wp3"] = jnp.asarray(wproj_sh[:, C:2 * C], jnp.bfloat16)
    kp["wp5"] = jnp.asarray(wproj_sh[:, 2 * C:3 * C], jnp.bfloat16)
    # -inf bias on the dead (width-halo) columns for the CAB max pool
    mb = np.zeros((1, N1), np.float32)
    for q in range(N1):
        wcol = q % Wp
        if not (PADW <= wcol < PADW + W):
            mb[0, q] = -1e30
    kp["maxbias"] = jnp.asarray(mb)
    return raw, kp


# --------------------------------------------------------------------------
# pure-JAX (lax.conv) reference of the PyTorch forward, NCHW
# --------------------------------------------------------------------------
def reference_forward(x, raw):
    B, C, H, W = x.shape
    dn = ("NCHW", "OIHW", "NCHW")

    # CAB
    avg = jnp.mean(x, axis=(2, 3), keepdims=True)
    mx = jnp.max(x, axis=(2, 3), keepdims=True)

    def mlp(v):
        h = jax.nn.relu(jnp.einsum("mc,bcij->bmij", raw["w1"], v)
                        + raw["b1"][None, :, None, None])
        return (jnp.einsum("cm,bmij->bcij", raw["w2"], h)
                + raw["b2"][None, :, None, None])

    catt = jax.nn.sigmoid(mlp(avg) + mlp(mx))
    x1 = x * catt

    # SAB
    comb = jnp.concatenate([jnp.mean(x1, axis=1, keepdims=True),
                            jnp.max(x1, axis=1, keepdims=True)], axis=1)
    maps = []
    for k, wk in raw["sab"]:
        maps.append(lax.conv_general_dilated(
            comb, wk[None], (1, 1), "SAME", dimension_numbers=dn))
    satt = jax.nn.sigmoid(sum(maps) / 3.0)
    x2 = x1 * satt

    # MSPDC (parallel mode)
    feats = []
    for i, k in enumerate((1, 3, 5)):
        w_oihw = raw["dw"][k].transpose(2, 0, 1)[:, None]    # (C, 1, k, k)
        f = lax.conv_general_dilated(x2, w_oihw, (1, 1), "SAME",
                                     dimension_numbers=dn,
                                     feature_group_count=C)
        f = jax.nn.relu(f * raw["bnscale"][i][None, :, None, None]
                        + raw["bnbias"][i][None, :, None, None])
        feats.append(f)
    cat = jnp.concatenate(feats, axis=1)                     # (B, 3C, H, W)
    shuf = cat.reshape(B, C, 3, H, W).transpose(0, 2, 1, 3, 4
                                                ).reshape(B, 3 * C, H, W)
    y = jnp.einsum("oc,bchw->bohw", raw["Wproj"], shuf)
    y = (y * raw["pscale"][None, :, None, None]
         + raw["pbias"][None, :, None, None])
    return y


if __name__ == "__main__":
    B, C, H, W = 2, 32, 16, 16      # NCHW; C>=16 so the CAB reduction mid>=1
    key = jax.random.PRNGKey(0)
    kx, kparam = jax.random.split(key)
    x = jax.random.normal(kx, (B, C, H, W), jnp.float32)

    raw, kp = build_params(C, H, W, kparam)

    out = jax.block_until_ready(msdafb_forward(x, kp))
    ref = jax.block_until_ready(reference_forward(x, raw))
    # tolerance accounts for bf16 activation rounding on the projection MXU path
    np.testing.assert_allclose(np.asarray(out), np.asarray(ref),
                               rtol=2e-2, atol=2e-2)
    print("KERNEL_OK")
</pallas_src>

<mosaic_0001>
module attributes {stable_mosaic.version = 11 : i64} {
  func.func @kernel(%arg0: i32, %arg1: memref<1x32x384xf32, #tpu.memory_space<vmem>>, %arg2: memref<1x384xf32, #tpu.memory_space<vmem>>, %arg3: memref<2x32xf32, #tpu.memory_space<vmem>>, %arg4: memref<2x1xf32, #tpu.memory_space<vmem>>, %arg5: memref<32x2xf32, #tpu.memory_space<vmem>>, %arg6: memref<32x1xf32, #tpu.memory_space<vmem>>, %arg7: memref<2x121xf32, #tpu.memory_space<vmem>>, %arg8: memref<32x1xf32, #tpu.memory_space<vmem>>, %arg9: memref<32x1xf32, #tpu.memory_space<vmem>>, %arg10: memref<32x9xf32, #tpu.memory_space<vmem>>, %arg11: memref<32x1xf32, #tpu.memory_space<vmem>>, %arg12: memref<32x25xf32, #tpu.memory_space<vmem>>, %arg13: memref<32x1xf32, #tpu.memory_space<vmem>>, %arg14: memref<32x32xbf16, #tpu.memory_space<vmem>>, %arg15: memref<32x32xbf16, #tpu.memory_space<vmem>>, %arg16: memref<32x32xbf16, #tpu.memory_space<vmem>>, %arg17: memref<32x1xf32, #tpu.memory_space<vmem>>, %arg18: memref<32x1xf32, #tpu.memory_space<vmem>>, %arg19: memref<1x32x384xf32, #tpu.memory_space<vmem>>, %arg20: memref<32x640xf32, #tpu.memory_space<vmem>>, %arg21: memref<2x640xf32, #tpu.memory_space<vmem>>) attributes {dimension_semantics = [#tpu.dimension_semantics<parallel>], iteration_bounds = array<i64: 2>, scalar_prefetch = 0 : i64, scratch_operands = 2 : i64, tpu.core_type = #tpu.core_type<tc>, window_params = [{transform_indices = @transform_0, window_bounds = array<i64: 1, 32, 384>}, {pipeline_mode = #tpu.pipeline_mode<synchronous>, transform_indices = @transform_1, window_bounds = array<i64: 1, 384>}, {pipeline_mode = #tpu.pipeline_mode<synchronous>, transform_indices = @transform_2, window_bounds = array<i64: 2, 32>}, {pipeline_mode = #tpu.pipeline_mode<synchronous>, transform_indices = @transform_3, window_bounds = array<i64: 2, 1>}, {pipeline_mode = #tpu.pipeline_mode<synchronous>, transform_indices = @transform_4, window_bounds = array<i64: 32, 2>}, {pipeline_mode = #tpu.pipeline_mode<synchronous>, transform_indices = @transform_5, window_bounds = array<i64: 32, 1>}, {pipeline_mode = #tpu.pipeline_mode<synchronous>, transform_indices = @transform_6, window_bounds = array<i64: 2, 121>}, {pipeline_mode = #tpu.pipeline_mode<synchronous>, transform_indices = @transform_7, window_bounds = array<i64: 32, 1>}, {pipeline_mode = #tpu.pipeline_mode<synchronous>, transform_indices = @transform_8, window_bounds = array<i64: 32, 1>}, {pipeline_mode = #tpu.pipeline_mode<synchronous>, transform_indices = @transform_9, window_bounds = array<i64: 32, 9>}, {pipeline_mode = #tpu.pipeline_mode<synchronous>, transform_indices = @transform_10, window_bounds = array<i64: 32, 1>}, {pipeline_mode = #tpu.pipeline_mode<synchronous>, transform_indices = @transform_11, window_bounds = array<i64: 32, 25>}, {pipeline_mode = #tpu.pipeline_mode<synchronous>, transform_indices = @transform_12, window_bounds = array<i64: 32, 1>}, {pipeline_mode = #tpu.pipeline_mode<synchronous>, transform_indices = @transform_13, window_bounds = array<i64: 32, 32>}, {pipeline_mode = #tpu.pipeline_mode<synchronous>, transform_indices = @transform_14, window_bounds = array<i64: 32, 32>}, {pipeline_mode = #tpu.pipeline_mode<synchronous>, transform_indices = @transform_15, window_bounds = array<i64: 32, 32>}, {pipeline_mode = #tpu.pipeline_mode<synchronous>, transform_indices = @transform_16, window_bounds = array<i64: 32, 1>}, {pipeline_mode = #tpu.pipeline_mode<synchronous>, transform_indices = @transform_17, window_bounds = array<i64: 32, 1>}, {transform_indices = @transform_18, window_bounds = array<i64: 1, 32, 384>}]} {
    %cst = arith.constant 0.000000e+00 : f32
    %0 = vector.broadcast %cst : f32 to vector<32x128xf32>
    %c0 = arith.constant 0 : index
    %c0_0 = arith.constant 0 : index
    %1 = vector.load %arg20[%c0, %c0_0] : memref<32x640xf32, #tpu.memory_space<vmem>>, vector<32x128xf32>
    tpu.vector_store %arg20[%c0, %c0_0], %0 {strides = array<i32>} : memref<32x640xf32, #tpu.memory_space<vmem>>, vector<32x128xf32>,
    %cst_1 = arith.constant 0.000000e+00 : f32
    %2 = vector.broadcast %cst_1 : f32 to vector<32x128xf32>
    %c0_2 = arith.constant 0 : index
    %c512 = arith.constant 512 : index
    %3 = vector.load %arg20[%c0_2, %c512] : memref<32x640xf32, #tpu.memory_space<vmem>>, vector<32x128xf32>
    tpu.vector_store %arg20[%c0_2, %c512], %2 {strides = array<i32>} : memref<32x640xf32, #tpu.memory_space<vmem>>, vector<32x128xf32>,
    %cst_3 = arith.constant 0.000000e+00 : f32
    %4 = vector.broadcast %cst_3 : f32 to vector<2x128xf32>
    %c0_4 = arith.constant 0 : index
    %c0_5 = arith.constant 0 : index
    %5 = vector.load %arg21[%c0_4, %c0_5] : memref<2x640xf32, #tpu.memory_space<vmem>>, vector<2x128xf32>
    tpu.vector_store %arg21[%c0_4, %c0_5], %4 {strides = array<i32>} : memref<2x640xf32, #tpu.memory_space<vmem>>, vector<2x128xf32>,
    %cst_6 = arith.constant 0.000000e+00 : f32
    %6 = vector.broadcast %cst_6 : f32 to vector<2x128xf32>
    %c0_7 = arith.constant 0 : index
    %c512_8 = arith.constant 512 : index
    %7 = vector.load %arg21[%c0_7, %c512_8] : memref<2x640xf32, #tpu.memory_space<vmem>>, vector<2x128xf32>
    tpu.vector_store %arg21[%c0_7, %c512_8], %6 {strides = array<i32>} : memref<2x640xf32, #tpu.memory_space<vmem>>, vector<2x128xf32>,
    %c0_9 = arith.constant 0 : index
    %c0_10 = arith.constant 0 : index
    %c0_11 = arith.constant 0 : index
    %8 = vector.load %arg1[%c0_9, %c0_10, %c0_11] : memref<1x32x384xf32, #tpu.memory_space<vmem>>, vector<1x32x384xf32>
    %9 = vector.shape_cast %8 : vector<1x32x384xf32> to vector<32x384xf32>
    %cst_12 = arith.constant dense<0.000000e+00> : vector<32xf32>
    %10 = vector.multi_reduction <add>, %9, %cst_12 [1] : vector<32x384xf32> to vector<32xf32>
    %11 = vector.shape_cast %10 : vector<32xf32> to vector<32x1xf32>
    %cst_13 = arith.constant 3.906250e-03 : f32
    %12 = vector.broadcast %cst_13 : f32 to vector<32x1xf32>
    %13 = arith.mulf %11, %12 : vector<32x1xf32>
    %c0_14 = arith.constant 0 : index
    %c0_15 = arith.constant 0 : index
    %14 = vector.load %arg2[%c0_14, %c0_15] : memref<1x384xf32, #tpu.memory_space<vmem>>, vector<1x384xf32>
    %15 = vector.broadcast %14 : vector<1x384xf32> to vector<32x384xf32>
    %16 = arith.addf %9, %15 : vector<32x384xf32>
    %cst_16 = arith.constant dense<0xFF800000> : vector<32xf32>
    %17 = vector.multi_reduction <maximumf>, %16, %cst_16 [1] : vector<32x384xf32> to vector<32xf32>
    %18 = vector.shape_cast %17 : vector<32xf32> to vector<32x1xf32>
    %19 = tpu.concatenate %13, %18 in 1 : vector<32x1xf32>, vector<32x1xf32> -> vector<32x2xf32>
    %c0_17 = arith.constant 0 : index
    %c0_18 = arith.constant 0 : index
    %20 = vector.load %arg3[%c0_17, %c0_18] : memref<2x32xf32, #tpu.memory_space<vmem>>, vector<2x32xf32>
    %cst_19 = arith.constant dense<0.000000e+00> : vector<2x2xf32>
    %21 = tpu.matmul %20, %19, %cst_19 {dimension_numbers = #tpu.dot_dimension_numbers<[1], [0], [0], [1], [0, 0, 1, 1], [], []>} : vector<2x32xf32>, vector<32x2xf32>, vector<2x2xf32> -> vector<2x2xf32>
    %c0_20 = arith.constant 0 : index
    %c0_21 = arith.constant 0 : index
    %22 = vector.load %arg4[%c0_20, %c0_21] : memref<2x1xf32, #tpu.memory_space<vmem>>, vector<2x1xf32>
    %23 = vector.broadcast %22 : vector<2x1xf32> to vector<2x2xf32>
    %24 = arith.addf %21, %23 : vector<2x2xf32>
    %cst_22 = arith.constant 0.000000e+00 : f32
    %25 = vector.broadcast %cst_22 : f32 to vector<2x2xf32>
    %26 = arith.maximumf %24, %25 : vector<2x2xf32>
    %c0_23 = arith.constant 0 : index
    %c0_24 = arith.constant 0 : index
    %27 = vector.load %arg5[%c0_23, %c0_24] : memref<32x2xf32, #tpu.memory_space<vmem>>, vector<32x2xf32>
    %cst_25 = arith.constant dense<0.000000e+00> : vector<32x2xf32>
    %28 = tpu.matmul %27, %26, %cst_25 {dimension_numbers = #tpu.dot_dimension_numbers<[1], [0], [0], [1], [0, 0, 1, 1], [], []>} : vector<32x2xf32>, vector<2x2xf32>, vector<32x2xf32> -> vector<32x2xf32>
    %c0_26 = arith.constant 0 : index
    %c0_27 = arith.constant 0 : index
    %29 = vector.load %arg6[%c0_26, %c0_27] : memref<32x1xf32, #tpu.memory_space<vmem>>, vector<32x1xf32>
    %30 = vector.broadcast %29 : vector<32x1xf32> to vector<32x2xf32>
    %31 = arith.addf %28, %30 : vector<32x2xf32>
    %32 = vector.extract_strided_slice %31 {offsets = [0, 0], sizes = [32, 1], strides = [1, 1]} : vector<32x2xf32> to vector<32x1xf32>
    %33 = vector.extract_strided_slice %31 {offsets = [0, 1], sizes = [32, 1], strides = [1, 1]} : vector<32x2xf32> to vector<32x1xf32>
    %34 = arith.addf %32, %33 : vector<32x1xf32>
    %35 = arith.negf %34 : vector<32x1xf32>
    %36 = math.exp %35 : vector<32x1xf32>
    %cst_28 = arith.constant 1.000000e+00 : f32
    %37 = vector.broadcast %cst_28 : f32 to vector<32x1xf32>
    %38 = arith.addf %37, %36 : vector<32x1xf32>
    %39 = arith.divf %37, %38 : vector<32x1xf32>
    %40 = vector.broadcast %39 : vector<32x1xf32> to vector<32x384xf32>
    %41 = arith.mulf %9, %40 : vector<32x384xf32>
    %cst_29 = arith.constant dense<0.000000e+00> : vector<384xf32>
    %42 = vector.multi_reduction <add>, %41, %cst_29 [0] : vector<32x384xf32> to vector<384xf32>
    %43 = vector.shape_cast %42 : vector<384xf32> to vector<1x384xf32>
    %cst_30 = arith.constant 3.200000e+01 : f32
    %44 = vector.broadcast %cst_30 : f32 to vector<1x384xf32>
    %45 = arith.divf %43, %44 : vector<1x384xf32>
    %cst_31 = arith.constant dense<0xFF800000> : vector<384xf32>
    %46 = vector.multi_reduction <maximumf>, %41, %cst_31 [0] : vector<32x384xf32> to vector<384xf32>
    %47 = vector.shape_cast %46 : vector<384xf32> to vector<1x384xf32>
    %48 = tpu.concatenate %45, %47 in 0 : vector<1x384xf32>, vector<1x384xf32> -> vector<2x384xf32>
    %c0_32 = arith.constant 0 : index
    %c128 = arith.constant 128 : index
    %49 = vector.load %arg21[%c0_32, %c128] : memref<2x640xf32, #tpu.memory_space<vmem>>, vector<2x384xf32>
    tpu.vector_store %arg21[%c0_32, %c128], %48 {strides = array<i32>} : memref<2x640xf32, #tpu.memory_space<vmem>>, vector<2x384xf32>,
    %c0_33 = arith.constant 0 : index
    %c0_34 = arith.constant 0 : index
    %50 = vector.load %arg7[%c0_33, %c0_34] : memref<2x121xf32, #tpu.memory_space<vmem>>, vector<2x121xf32>
    %cst_35 = arith.constant 0.000000e+00 : f32
    %51 = vector.broadcast %cst_35 : f32 to vector<2x384xf32>
    %c0_36 = arith.constant 0 : index
    %c3 = arith.constant 3 : index
    %52 = vector.load %arg21[%c0_36, %c3] : memref<2x640xf32, #tpu.memory_space<vmem>>, vector<2x384xf32>
    %53 = vector.extract_strided_slice %50 {offsets = [0, 0], sizes = [2, 1], strides = [1, 1]} : vector<2x121xf32> to vector<2x1xf32>
    %54 = vector.broadcast %53 : vector<2x1xf32> to vector<2x384xf32>
    %55 = arith.mulf %54, %52 : vector<2x384xf32>
    %56 = arith.addf %51, %55 : vector<2x384xf32>
    %c0_37 = arith.constant 0 : index
    %c4 = arith.constant 4 : index
    %57 = vector.load %arg21[%c0_37, %c4] : memref<2x640xf32, #tpu.memory_space<vmem>>, vector<2x384xf32>
    %58 = vector.extract_strided_slice %50 {offsets = [0, 1], sizes = [2, 1], strides = [1, 1]} : vector<2x121xf32> to vector<2x1xf32>
    %59 = vector.broadcast %58 : vector<2x1xf32> to vector<2x384xf32>
    %60 = arith.mulf %59, %57 : vector<2x384xf32>
    %61 = arith.addf %56, %60 : vector<2x384xf32>
    %c0_38 = arith.constant 0 : index
    %c5 = arith.constant 5 : index
    %62 = vector.load %arg21[%c0_38, %c5] : memref<2x640xf32, #tpu.memory_space<vmem>>, vector<2x384xf32>
    %63 = vector.extract_strided_slice %50 {offsets = [0, 2], sizes = [2, 1], strides = [1, 1]} : vector<2x121xf32> to vector<2x1xf32>
    %64 = vector.broadcast %63 : vector<2x1xf32> to vector<2x384xf32>
    %65 = arith.mulf %64, %62 : vector<2x384xf32>
    %66 = arith.addf %61, %65 : vector<2x384xf32>
    %c0_39 = arith.constant 0 : index
    %c6 = arith.constant 6 : index
    %67 = vector.load %arg21[%c0_39, %c6] : memref<2x640xf32, #tpu.memory_space<vmem>>, vector<2x384xf32>
    %68 = vector.extract_strided_slice %50 {offsets = [0, 3], sizes = [2, 1], strides = [1, 1]} : vector<2x121xf32> to vector<2x1xf32>
    %69 = vector.broadcast %68 : vector<2x1xf32> to vector<2x384xf32>
    %70 = arith.mulf %69, %67 : vector<2x384xf32>
    %71 = arith.addf %66, %70 : vector<2x384xf32>
    %c0_40 = arith.constant 0 : index
    %c7 = arith.constant 7 : index
    %72 = vector.load %arg21[%c0_40, %c7] : memref<2x640xf32, #tpu.memory_space<vmem>>, vector<2x384xf32>
    %73 = vector.extract_strided_slice %50 {offsets = [0, 4], sizes = [2, 1], strides = [1, 1]} : vector<2x121xf32> to vector<2x1xf32>
    %74 = vector.broadcast %73 : vector<2x1xf32> to vector<2x384xf32>
    %75 = arith.mulf %74, %72 : vector<2x384xf32>
    %76 = arith.addf %71, %75 : vector<2x384xf32>
    %c0_41 = arith.constant 0 : index
    %c8 = arith.constant 8 : index
    %77 = vector.load %arg21[%c0_41, %c8] : memref<2x640xf32, #tpu.memory_space<vmem>>, vector<2x384xf32>
    %78 = vector.extract_strided_slice %50 {offsets = [0, 5], sizes = [2, 1], strides = [1, 1]} : vector<2x121xf32> to vector<2x1xf32>
    %79 = vector.broadcast %78 : vector<2x1xf32> to vector<2x384xf32>
    %80 = arith.mulf %79, %77 : vector<2x384xf32>
    %81 = arith.addf %76, %80 : vector<2x384xf32>
    %c0_42 = arith.constant 0 : index
    %c9 = arith.constant 9 : index
    %82 = vector.load %arg21[%c0_42, %c9] : memref<2x640xf32, #tpu.memory_space<vmem>>, vector<2x384xf32>
    %83 = vector.extract_strided_slice %50 {offsets = [0, 6], sizes = [2, 1], strides = [1, 1]} : vector<2x121xf32> to vector<2x1xf32>
    %84 = vector.broadcast %83 : vector<2x1xf32> to vector<2x384xf32>
    %85 = arith.mulf %84, %82 : vector<2x384xf32>
    %86 = arith.addf %81, %85 : vector<2x384xf32>
    %c0_43 = arith.constant 0 : index
    %c10 = arith.constant 10 : index
    %87 = vector.load %arg21[%c0_43, %c10] : memref<2x640xf32, #tpu.memory_space<vmem>>, vector<2x384xf32>
    %88 = vector.extract_strided_slice %50 {offsets = [0, 7], sizes = [2, 1], strides = [1, 1]} : vector<2x121xf32> to vector<2x1xf32>
    %89 = vector.broadcast %88 : vector<2x1xf32> to vector<2x384xf32>
    %90 = arith.mulf %89, %87 : vector<2x384xf32>
    %91 = arith.addf %86, %90 : vector<2x384xf32>
    %c0_44 = arith.constant 0 : index
    %c11 = arith.constant 11 : index
    %92 = vector.load %arg21[%c0_44, %c11] : memref<2x640xf32, #tpu.memory_space<vmem>>, vector<2x384xf32>
    %93 = vector.extract_strided_slice %50 {offsets = [0, 8], sizes = [2, 1], strides = [1, 1]} : vector<2x121xf32> to vector<2x1xf32>
    %94 = vector.broadcast %93 : vector<2x1xf32> to vector<2x384xf32>
    %95 = arith.mulf %94, %92 : vector<2x384xf32>
    %96 = arith.addf %91, %95 : vector<2x384xf32>
    %c0_45 = arith.constant 0 : index
    %c12 = arith.constant 12 : index
    %97 = vector.load %arg21[%c0_45, %c12] : memref<2x640xf32, #tpu.memory_space<vmem>>, vector<2x384xf32>
    %98 = vector.extract_strided_slice %50 {offsets = [0, 9], sizes = [2, 1], strides = [1, 1]} : vector<2x121xf32> to vector<2x1xf32>
    %99 = vector.broadcast %98 : vector<2x1xf32> to vector<2x384xf32>
    %100 = arith.mulf %99, %97 : vector<2x384xf32>
    %101 = arith.addf %96, %100 : vector<2x384xf32>
    %c0_46 = arith.constant 0 : index
    %c13 = arith.constant 13 : index
    %102 = vector.load %arg21[%c0_46, %c13] : memref<2x640xf32, #tpu.memory_space<vmem>>, vector<2x384xf32>
    %103 = vector.extract_strided_slice %50 {offsets = [0, 10], sizes = [2, 1], strides = [1, 1]} : vector<2x121xf32> to vector<2x1xf32>
    %104 = vector.broadcast %103 : vector<2x1xf32> to vector<2x384xf32>
    %105 = arith.mulf %104, %102 : vector<2x384xf32>
    %106 = arith.addf %101, %105 : vector<2x384xf32>
    %c0_47 = arith.constant 0 : index
    %c27 = arith.constant 27 : index
    %107 = vector.load %arg21[%c0_47, %c27] : memref<2x640xf32, #tpu.memory_space<vmem>>, vector<2x384xf32>
    %108 = vector.extract_strided_slice %50 {offsets = [0, 11], sizes = [2, 1], strides = [1, 1]} : vector<2x121xf32> to vector<2x1xf32>
    %109 = vector.broadcast %108 : vector<2x1xf32> to vector<2x384xf32>
    %110 = arith.mulf %109, %107 : vector<2x384xf32>
    %111 = arith.addf %106, %110 : vector<2x384xf32>
    %c0_48 = arith.constant 0 : index
    %c28 = arith.constant 28 : index
    %112 = vector.load %arg21[%c0_48, %c28] : memref<2x640xf32, #tpu.memory_space<vmem>>, vector<2x384xf32>
    %113 = vector.extract_strided_slice %50 {offsets = [0, 12], sizes = [2, 1], strides = [1, 1]} : vector<2x121xf32> to vector<2x1xf32>
    %114 = vector.broadcast %113 : vector<2x1xf32> to vector<2x384xf32>
    %115 = arith.mulf %114, %112 : vector<2x384xf32>
    %116 = arith.addf %111, %115 : vector<2x384xf32>
    %c0_49 = arith.constant 0 : index
    %c29 = arith.constant 29 : index
    %117 = vector.load %arg21[%c0_49, %c29] : memref<2x640xf32, #tpu.memory_space<vmem>>, vector<2x384xf32>
    %118 = vector.extract_strided_slice %50 {offsets = [0, 13], sizes = [2, 1], strides = [1, 1]} : vector<2x121xf32> to vector<2x1xf32>
    %119 = vector.broadcast %118 : vector<2x1xf32> to vector<2x384xf32>
    %120 = arith.mulf %119, %117 : vector<2x384xf32>
    %121 = arith.addf %116, %120 : vector<2x384xf32>
    %c0_50 = arith.constant 0 : index
    %c30 = arith.constant 30 : index
    %122 = vector.load %arg21[%c0_50, %c30] : memref<2x640xf32, #tpu.memory_space<vmem>>, vector<2x384xf32>
    %123 = vector.extract_strided_slice %50 {offsets = [0, 14], sizes = [2, 1], strides = [1, 1]} : vector<2x121xf32> to vector<2x1xf32>
    %124 = vector.broadcast %123 : vector<2x1xf32> to vector<2x384xf32>
    %125 = arith.mulf %124, %122 : vector<2x384xf32>
    %126 = arith.addf %121, %125 : vector<2x384xf32>
    %c0_51 = arith.constant 0 : index
    %c31 = arith.constant 31 : index
    %127 = vector.load %arg21[%c0_51, %c31] : memref<2x640xf32, #tpu.memory_space<vmem>>, vector<2x384xf32>
    %128 = vector.extract_strided_slice %50 {offsets = [0, 15], sizes = [2, 1], strides = [1, 1]} : vector<2x121xf32> to vector<2x1xf32>
    %129 = vector.broadcast %128 : vector<2x1xf32> to vector<2x384xf32>
    %130 = arith.mulf %129, %127 : vector<2x384xf32>
    %131 = arith.addf %126, %130 : vector<2x384xf32>
    %c0_52 = arith.constant 0 : index
    %c32 = arith.constant 32 : index
    %132 = vector.load %arg21[%c0_52, %c32] : memref<2x640xf32, #tpu.memory_space<vmem>>, vector<2x384xf32>
    %133 = vector.extract_strided_slice %50 {offsets = [0, 16], sizes = [2, 1], strides = [1, 1]} : vector<2x121xf32> to vector<2x1xf32>
    %134 = vector.broadcast %133 : vector<2x1xf32> to vector<2x384xf32>
    %135 = arith.mulf %134, %132 : vector<2x384xf32>
    %136 = arith.addf %131, %135 : vector<2x384xf32>
    %c0_53 = arith.constant 0 : index
    %c33 = arith.constant 33 : index
    %137 = vector.load %arg21[%c0_53, %c33] : memref<2x640xf32, #tpu.memory_space<vmem>>, vector<2x384xf32>
    %138 = vector.extract_strided_slice %50 {offsets = [0, 17], sizes = [2, 1], strides = [1, 1]} : vector<2x121xf32> to vector<2x1xf32>
    %139 = vector.broadcast %138 : vector<2x1xf32> to vector<2x384xf32>
    %140 = arith.mulf %139, %137 : vector<2x384xf32>
    %141 = arith.addf %136, %140 : vector<2x384xf32>
    %c0_54 = arith.constant 0 : index
    %c34 = arith.constant 34 : index
    %142 = vector.load %arg21[%c0_54, %c34] : memref<2x640xf32, #tpu.memory_space<vmem>>, vector<2x384xf32>
    %143 = vector.extract_strided_slice %50 {offsets = [0, 18], sizes = [2, 1], strides = [1, 1]} : vector<2x121xf32> to vector<2x1xf32>
    %144 = vector.broadcast %143 : vector<2x1xf32> to vector<2x384xf32>
    %145 = arith.mulf %144, %142 : vector<2x384xf32>
    %146 = arith.addf %141, %145 : vector<2x384xf32>
    %c0_55 = arith.constant 0 : index
    %c35 = arith.constant 35 : index
    %147 = vector.load %arg21[%c0_55, %c35] : memref<2x640xf32, #tpu.memory_space<vmem>>, vector<2x384xf32>
    %148 = vector.extract_strided_slice %50 {offsets = [0, 19], sizes = [2, 1], strides = [1, 1]} : vector<2x121xf32> to vector<2x1xf32>
    %149 = vector.broadcast %148 : vector<2x1xf32> to vector<2x384xf32>
    %150 = arith.mulf %149, %147 : vector<2x384xf32>
    %151 = arith.addf %146, %150 : vector<2x384xf32>
    %c0_56 = arith.constant 0 : index
    %c36 = arith.constant 36 : index
    %152 = vector.load %arg21[%c0_56, %c36] : memref<2x640xf32, #tpu.memory_space<vmem>>, vector<2x384xf32>
    %153 = vector.extract_strided_slice %50 {offsets = [0, 20], sizes = [2, 1], strides = [1, 1]} : vector<2x121xf32> to vector<2x1xf32>
    %154 = vector.broadcast %153 : vector<2x1xf32> to vector<2x384xf32>
    %155 = arith.mulf %154, %152 : vector<2x384xf32>
    %156 = arith.addf %151, %155 : vector<2x384xf32>
    %c0_57 = arith.constant 0 : index
    %c37 = arith.constant 37 : index
    %157 = vector.load %arg21[%c0_57, %c37] : memref<2x640xf32, #tpu.memory_space<vmem>>, vector<2x384xf32>
    %158 = vector.extract_strided_slice %50 {offsets = [0, 21], sizes = [2, 1], strides = [1, 1]} : vector<2x121xf32> to vector<2x1xf32>
    %159 = vector.broadcast %158 : vector<2x1xf32> to vector<2x384xf32>
    %160 = arith.mulf %159, %157 : vector<2x384xf32>
    %161 = arith.addf %156, %160 : vector<2x384xf32>
    %c0_58 = arith.constant 0 : index
    %c51 = arith.constant 51 : index
    %162 = vector.load %arg21[%c0_58, %c51] : memref<2x640xf32, #tpu.memory_space<vmem>>, vector<2x384xf32>
    %163 = vector.extract_strided_slice %50 {offsets = [0, 22], sizes = [2, 1], strides = [1, 1]} : vector<2x121xf32> to vector<2x1xf32>
    %164 = vector.broadcast %163 : vector<2x1xf32> to vector<2x384xf32>
    %165 = arith.mulf %164, %162 : vector<2x384xf32>
    %166 = arith.addf %161, %165 : vector<2x384xf32>
    %c0_59 = arith.constant 0 : index
    %c52 = arith.constant 52 : index
    %167 = vector.load %arg21[%c0_59, %c52] : memref<2x640xf32, #tpu.memory_space<vmem>>, vector<2x384xf32>
    %168 = vector.extract_strided_slice %50 {offsets = [0, 23], sizes = [2, 1], strides = [1, 1]} : vector<2x121xf32> to vector<2x1xf32>
    %169 = vector.broadcast %168 : vector<2x1xf32> to vector<2x384xf32>
    %170 = arith.mulf %169, %167 : vector<2x384xf32>
    %171 = arith.addf %166, %170 : vector<2x384xf32>
    %c0_60 = arith.constant 0 : index
    %c53 = arith.constant 53 : index
    %172 = vector.load %arg21[%c0_60, %c53] : memref<2x640xf32, #tpu.memory_space<vmem>>, vector<2x384xf32>
    %173 = vector.extract_strided_slice %50 {offsets = [0, 24], sizes = [2, 1], strides = [1, 1]} : vector<2x121xf32> to vector<2x1xf32>
    %174 = vector.broadcast %173 : vector<2x1xf32> to vector<2x384xf32>
    %175 = arith.mulf %174, %172 : vector<2x384xf32>
    %176 = arith.addf %171, %175 : vector<2x384xf32>
    %c0_61 = arith.constant 0 : index
    %c54 = arith.constant 54 : index
    %177 = vector.load %arg21[%c0_61, %c54] : memref<2x640xf32, #tpu.memory_space<vmem>>, vector<2x384xf32>
    %178 = vector.extract_strided_slice %50 {offsets = [0, 25], sizes = [2, 1], strides = [1, 1]} : vector<2x121xf32> to vector<2x1xf32>
    %179 = vector.broadcast %178 : vector<2x1xf32> to vector<2x384xf32>
    %180 = arith.mulf %179, %177 : vector<2x384xf32>
    %181 = arith.addf %176, %180 : vector<2x384xf32>
    %c0_62 = arith.constant 0 : index
    %c55 = arith.constant 55 : index
    %182 = vector.load %arg21[%c0_62, %c55] : memref<2x640xf32, #tpu.memory_space<vmem>>, vector<2x384xf32>
    %183 = vector.extract_strided_slice %50 {offsets = [0, 26], sizes = [2, 1], strides = [1, 1]} : vector<2x121xf32> to vector<2x1xf32>
    %184 = vector.broadcast %183 : vector<2x1xf32> to vector<2x384xf32>
    %185 = arith.mulf %184, %182 : vector<2x384xf32>
    %186 = arith.addf %181, %185 : vector<2x384xf32>
    %c0_63 = arith.constant 0 : index
    %c56 = arith.constant 56 : index
    %187 = vector.load %arg21[%c0_63, %c56] : memref<2x640xf32, #tpu.memory_space<vmem>>, vector<2x384xf32>
    %188 = vector.extract_strided_slice %50 {offsets = [0, 27], sizes = [2, 1], strides = [1, 1]} : vector<2x121xf32> to vector<2x1xf32>
    %189 = vector.broadcast %188 : vector<2x1xf32> to vector<2x384xf32>
    %190 = arith.mulf %189, %187 : vector<2x384xf32>
    %191 = arith.addf %186, %190 : vector<2x384xf32>
    %c0_64 = arith.constant 0 : index
    %c57 = arith.constant 57 : index
    %192 = vector.load %arg21[%c0_64, %c57] : memref<2x640xf32, #tpu.memory_space<vmem>>, vector<2x384xf32>
    %193 = vector.extract_strided_slice %50 {offsets = [0, 28], sizes = [2, 1], strides = [1, 1]} : vector<2x121xf32> to vector<2x1xf32>
    %194 = vector.broadcast %193 : vector<2x1xf32> to vector<2x384xf32>
    %195 = arith.mulf %194, %192 : vector<2x384xf32>
    %196 = arith.addf %191, %195 : vector<2x384xf32>
    %c0_65 = arith.constant 0 : index
    %c58 = arith.constant 58 : index
    %197 = vector.load %arg21[%c0_65, %c58] : memref<2x640xf32, #tpu.memory_space<vmem>>, vector<2x384xf32>
    %198 = vector.extract_strided_slice %50 {offsets = [0, 29], sizes = [2, 1], strides = [1, 1]} : vector<2x121xf32> to vector<2x1xf32>
    %199 = vector.broadcast %198 : vector<2x1xf32> to vector<2x384xf32>
    %200 = arith.mulf %199, %197 : vector<2x384xf32>
    %201 = arith.addf %196, %200 : vector<2x384xf32>
    %c0_66 = arith.constant 0 : index
    %c59 = arith.constant 59 : index
    %202 = vector.load %arg21[%c0_66, %c59] : memref<2x640xf32, #tpu.memory_space<vmem>>, vector<2x384xf32>
    %203 = vector.extract_strided_slice %50 {offsets = [0, 30], sizes = [2, 1], strides = [1, 1]} : vector<2x121xf32> to vector<2x1xf32>
    %204 = vector.broadcast %203 : vector<2x1xf32> to vector<2x384xf32>
    %205 = arith.mulf %204, %202 : vector<2x384xf32>
    %206 = arith.addf %201, %205 : vector<2x384xf32>
    %c0_67 = arith.constant 0 : index
    %c60 = arith.constant 60 : index
    %207 = vector.load %arg21[%c0_67, %c60] : memref<2x640xf32, #tpu.memory_space<vmem>>, vector<2x384xf32>
    %208 = vector.extract_strided_slice %50 {offsets = [0, 31], sizes = [2, 1], strides = [1, 1]} : vector<2x121xf32> to vector<2x1xf32>
    %209 = vector.broadcast %208 : vector<2x1xf32> to vector<2x384xf32>
    %210 = arith.mulf %209, %207 : vector<2x384xf32>
    %211 = arith.addf %206, %210 : vector<2x384xf32>
    %c0_68 = arith.constant 0 : index
    %c61 = arith.constant 61 : index
    %212 = vector.load %arg21[%c0_68, %c61] : memref<2x640xf32, #tpu.memory_space<vmem>>, vector<2x384xf32>
    %213 = vector.extract_strided_slice %50 {offsets = [0, 32], sizes = [2, 1], strides = [1, 1]} : vector<2x121xf32> to vector<2x1xf32>
    %214 = vector.broadcast %213 : vector<2x1xf32> to vector<2x384xf32>
    %215 = arith.mulf %214, %212 : vector<2x384xf32>
    %216 = arith.addf %211, %215 : vector<2x384xf32>
    %c0_69 = arith.constant 0 : index
    %c75 = arith.constant 75 : index
    %217 = vector.load %arg21[%c0_69, %c75] : memref<2x640xf32, #tpu.memory_space<vmem>>, vector<2x384xf32>
    %218 = vector.extract_strided_slice %50 {offsets = [0, 33], sizes = [2, 1], strides = [1, 1]} : vector<2x121xf32> to vector<2x1xf32>
    %219 = vector.broadcast %218 : vector<2x1xf32> to vector<2x384xf32>
    %220 = arith.mulf %219, %217 : vector<2x384xf32>
    %221 = arith.addf %216, %220 : vector<2x384xf32>
    %c0_70 = arith.constant 0 : index
    %c76 = arith.constant 76 : index
    %222 = vector.load %arg21[%c0_70, %c76] : memref<2x640xf32, #tpu.memory_space<vmem>>, vector<2x384xf32>
    %223 = vector.extract_strided_slice %50 {offsets = [0, 34], sizes = [2, 1], strides = [1, 1]} : vector<2x121xf32> to vector<2x1xf32>
    %224 = vector.broadcast %223 : vector<2x1xf32> to vector<2x384xf32>
    %225 = arith.mulf %224, %222 : vector<2x384xf32>
    %226 = arith.addf %221, %225 : vector<2x384xf32>
    %c0_71 = arith.constant 0 : index
    %c77 = arith.constant 77 : index
    %227 = vector.load %arg21[%c0_71, %c77] : memref<2x640xf32, #tpu.memory_space<vmem>>, vector<2x384xf32>
    %228 = vector.extract_strided_slice %50 {offsets = [0, 35], sizes = [2, 1], strides = [1, 1]} : vector<2x121xf32> to vector<2x1xf32>
    %229 = vector.broadcast %228 : vector<2x1xf32> to vector<2x384xf32>
    %230 = arith.mulf %229, %227 : vector<2x384xf32>
    %231 = arith.addf %226, %230 : vector<2x384xf32>
    %c0_72 = arith.constant 0 : index
    %c78 = arith.constant 78 : index
    %232 = vector.load %arg21[%c0_72, %c78] : memref<2x640xf32, #tpu.memory_space<vmem>>, vector<2x384xf32>
    %233 = vector.extract_strided_slice %50 {offsets = [0, 36], sizes = [2, 1], strides = [1, 1]} : vector<2x121xf32> to vector<2x1xf32>
    %234 = vector.broadcast %233 : vector<2x1xf32> to vector<2x384xf32>
    %235 = arith.mulf %234, %232 : vector<2x384xf32>
    %236 = arith.addf %231, %235 : vector<2x384xf32>
    %c0_73 = arith.constant 0 : index
    %c79 = arith.constant 79 : index
    %237 = vector.load %arg21[%c0_73, %c79] : memref<2x640xf32, #tpu.memory_space<vmem>>, vector<2x384xf32>
    %238 = vector.extract_strided_slice %50 {offsets = [0, 37], sizes = [2, 1], strides = [1, 1]} : vector<2x121xf32> to vector<2x1xf32>
    %239 = vector.broadcast %238 : vector<2x1xf32> to vector<2x384xf32>
    %240 = arith.mulf %239, %237 : vector<2x384xf32>
    %241 = arith.addf %236, %240 : vector<2x384xf32>
    %c0_74 = arith.constant 0 : index
    %c80 = arith.constant 80 : index
    %242 = vector.load %arg21[%c0_74, %c80] : memref<2x640xf32, #tpu.memory_space<vmem>>, vector<2x384xf32>
    %243 = vector.extract_strided_slice %50 {offsets = [0, 38], sizes = [2, 1], strides = [1, 1]} : vector<2x121xf32> to vector<2x1xf32>
    %244 = vector.broadcast %243 : vector<2x1xf32> to vector<2x384xf32>
    %245 = arith.mulf %244, %242 : vector<2x384xf32>
    %246 = arith.addf %241, %245 : vector<2x384xf32>
    %c0_75 = arith.constant 0 : index
    %c81 = arith.constant 81 : index
    %247 = vector.load %arg21[%c0_75, %c81] : memref<2x640xf32, #tpu.memory_space<vmem>>, vector<2x384xf32>
    %248 = vector.extract_strided_slice %50 {offsets = [0, 39], sizes = [2, 1], strides = [1, 1]} : vector<2x121xf32> to vector<2x1xf32>
    %249 = vector.broadcast %248 : vector<2x1xf32> to vector<2x384xf32>
    %250 = arith.mulf %249, %247 : vector<2x384xf32>
    %251 = arith.addf %246, %250 : vector<2x384xf32>
    %c0_76 = arith.constant 0 : index
    %c82 = arith.constant 82 : index
    %252 = vector.load %arg21[%c0_76, %c82] : memref<2x640xf32, #tpu.memory_space<vmem>>, vector<2x384xf32>
    %253 = vector.extract_strided_slice %50 {offsets = [0, 40], sizes = [2, 1], strides = [1, 1]} : vector<2x121xf32> to vector<2x1xf32>
    %254 = vector.broadcast %253 : vector<2x1xf32> to vector<2x384xf32>
    %255 = arith.mulf %254, %252 : vector<2x384xf32>
    %256 = arith.addf %251, %255 : vector<2x384xf32>
    %c0_77 = arith.constant 0 : index
    %c83 = arith.constant 83 : index
    %257 = vector.load %arg21[%c0_77, %c83] : memref<2x640xf32, #tpu.memory_space<vmem>>, vector<2x384xf32>
    %258 = vector.extract_strided_slice %50 {offsets = [0, 41], sizes = [2, 1], strides = [1, 1]} : vector<2x121xf32> to vector<2x1xf32>
    %259 = vector.broadcast %258 : vector<2x1xf32> to vector<2x384xf32>
    %260 = arith.mulf %259, %257 : vector<2x384xf32>
    %261 = arith.addf %256, %260 : vector<2x384xf32>
    %c0_78 = arith.constant 0 : index
    %c84 = arith.constant 84 : index
    %262 = vector.load %arg21[%c0_78, %c84] : memref<2x640xf32, #tpu.memory_space<vmem>>, vector<2x384xf32>
    %263 = vector.extract_strided_slice %50 {offsets = [0, 42], sizes = [2, 1], strides = [1, 1]} : vector<2x121xf32> to vector<2x1xf32>
    %264 = vector.broadcast %263 : vector<2x1xf32> to vector<2x384xf32>
    %265 = arith.mulf %264, %262 : vector<2x384xf32>
    %266 = arith.addf %261, %265 : vector<2x384xf32>
    %c0_79 = arith.constant 0 : index
    %c85 = arith.constant 85 : index
    %267 = vector.load %arg21[%c0_79, %c85] : memref<2x640xf32, #tpu.memory_space<vmem>>, vector<2x384xf32>
    %268 = vector.extract_strided_slice %50 {offsets = [0, 43], sizes = [2, 1], strides = [1, 1]} : vector<2x121xf32> to vector<2x1xf32>
    %269 = vector.broadcast %268 : vector<2x1xf32> to vector<2x384xf32>
    %270 = arith.mulf %269, %267 : vector<2x384xf32>
    %271 = arith.addf %266, %270 : vector<2x384xf32>
    %c0_80 = arith.constant 0 : index
    %c99 = arith.constant 99 : index
    %272 = vector.load %arg21[%c0_80, %c99] : memref<2x640xf32, #tpu.memory_space<vmem>>, vector<2x384xf32>
    %273 = vector.extract_strided_slice %50 {offsets = [0, 44], sizes = [2, 1], strides = [1, 1]} : vector<2x121xf32> to vector<2x1xf32>
    %274 = vector.broadcast %273 : vector<2x1xf32> to vector<2x384xf32>
    %275 = arith.mulf %274, %272 : vector<2x384xf32>
    %276 = arith.addf %271, %275 : vector<2x384xf32>
    %c0_81 = arith.constant 0 : index
    %c100 = arith.constant 100 : index
    %277 = vector.load %arg21[%c0_81, %c100] : memref<2x640xf32, #tpu.memory_space<vmem>>, vector<2x384xf32>
    %278 = vector.extract_strided_slice %50 {offsets = [0, 45], sizes = [2, 1], strides = [1, 1]} : vector<2x121xf32> to vector<2x1xf32>
    %279 = vector.broadcast %278 : vector<2x1xf32> to vector<2x384xf32>
    %280 = arith.mulf %279, %277 : vector<2x384xf32>
    %281 = arith.addf %276, %280 : vector<2x384xf32>
    %c0_82 = arith.constant 0 : index
    %c101 = arith.constant 101 : index
    %282 = vector.load %arg21[%c0_82, %c101] : memref<2x640xf32, #tpu.memory_space<vmem>>, vector<2x384xf32>
    %283 = vector.extract_strided_slice %50 {offsets = [0, 46], sizes = [2, 1], strides = [1, 1]} : vector<2x121xf32> to vector<2x1xf32>
    %284 = vector.broadcast %283 : vector<2x1xf32> to vector<2x384xf32>
    %285 = arith.mulf %284, %282 : vector<2x384xf32>
    %286 = arith.addf %281, %285 : vector<2x384xf32>
    %c0_83 = arith.constant 0 : index
    %c102 = arith.constant 102 : index
    %287 = vector.load %arg21[%c0_83, %c102] : memref<2x640xf32, #tpu.memory_space<vmem>>, vector<2x384xf32>
    %288 = vector.extract_strided_slice %50 {offsets = [0, 47], sizes = [2, 1], strides = [1, 1]} : vector<2x121xf32> to vector<2x1xf32>
    %289 = vector.broadcast %288 : vector<2x1xf32> to vector<2x384xf32>
    %290 = arith.mulf %289, %287 : vector<2x384xf32>
    %291 = arith.addf %286, %290 : vector<2x384xf32>
    %c0_84 = arith.constant 0 : index
    %c103 = arith.constant 103 : index
    %292 = vector.load %arg21[%c0_84, %c103] : memref<2x640xf32, #tpu.memory_space<vmem>>, vector<2x384xf32>
    %293 = vector.extract_strided_slice %50 {offsets = [0, 48], sizes = [2, 1], strides = [1, 1]} : vector<2x121xf32> to vector<2x1xf32>
    %294 = vector.broadcast %293 : vector<2x1xf32> to vector<2x384xf32>
    %295 = arith.mulf %294, %292 : vector<2x384xf32>
    %296 = arith.addf %291, %295 : vector<2x384xf32>
    %c0_85 = arith.constant 0 : index
    %c104 = arith.constant 104 : index
    %297 = vector.load %arg21[%c0_85, %c104] : memref<2x640xf32, #tpu.memory_space<vmem>>, vector<2x384xf32>
    %298 = vector.extract_strided_slice %50 {offsets = [0, 49], sizes = [2, 1], strides = [1, 1]} : vector<2x121xf32> to vector<2x1xf32>
    %299 = vector.broadcast %298 : vector<2x1xf32> to vector<2x384xf32>
    %300 = arith.mulf %299, %297 : vector<2x384xf32>
    %301 = arith.addf %296, %300 : vector<2x384xf32>
    %c0_86 = arith.constant 0 : index
    %c105 = arith.constant 105 : index
    %302 = vector.load %arg21[%c0_86, %c105] : memref<2x640xf32, #tpu.memory_space<vmem>>, vector<2x384xf32>
    %303 = vector.extract_strided_slice %50 {offsets = [0, 50], sizes = [2, 1], strides = [1, 1]} : vector<2x121xf32> to vector<2x1xf32>
    %304 = vector.broadcast %303 : vector<2x1xf32> to vector<2x384xf32>
    %305 = arith.mulf %304, %302 : vector<2x384xf32>
    %306 = arith.addf %301, %305 : vector<2x384xf32>
    %c0_87 = arith.constant 0 : index
    %c106 = arith.constant 106 : index
    %307 = vector.load %arg21[%c0_87, %c106] : memref<2x640xf32, #tpu.memory_space<vmem>>, vector<2x384xf32>
    %308 = vector.extract_strided_slice %50 {offsets = [0, 51], sizes = [2, 1], strides = [1, 1]} : vector<2x121xf32> to vector<2x1xf32>
    %309 = vector.broadcast %308 : vector<2x1xf32> to vector<2x384xf32>
    %310 = arith.mulf %309, %307 : vector<2x384xf32>
    %311 = arith.addf %306, %310 : vector<2x384xf32>
    %c0_88 = arith.constant 0 : index
    %c107 = arith.constant 107 : index
    %312 = vector.load %arg21[%c0_88, %c107] : memref<2x640xf32, #tpu.memory_space<vmem>>, vector<2x384xf32>
    %313 = vector.extract_strided_slice %50 {offsets = [0, 52], sizes = [2, 1], strides = [1, 1]} : vector<2x121xf32> to vector<2x1xf32>
    %314 = vector.broadcast %313 : vector<2x1xf32> to vector<2x384xf32>
    %315 = arith.mulf %314, %312 : vector<2x384xf32>
    %316 = arith.addf %311, %315 : vector<2x384xf32>
    %c0_89 = arith.constant 0 : index
    %c108 = arith.constant 108 : index
    %317 = vector.load %arg21[%c0_89, %c108] : memref<2x640xf32, #tpu.memory_space<vmem>>, vector<2x384xf32>
    %318 = vector.extract_strided_slice %50 {offsets = [0, 53], sizes = [2, 1], strides = [1, 1]} : vector<2x121xf32> to vector<2x1xf32>
    %319 = vector.broadcast %318 : vector<2x1xf32> to vector<2x384xf32>
    %320 = arith.mulf %319, %317 : vector<2x384xf32>
    %321 = arith.addf %316, %320 : vector<2x384xf32>
    %c0_90 = arith.constant 0 : index
    %c109 = arith.constant 109 : index
    %322 = vector.load %arg21[%c0_90, %c109] : memref<2x640xf32, #tpu.memory_space<vmem>>, vector<2x384xf32>
    %323 = vector.extract_strided_slice %50 {offsets = [0, 54], sizes = [2, 1], strides = [1, 1]} : vector<2x121xf32> to vector<2x1xf32>
    %324 = vector.broadcast %323 : vector<2x1xf32> to vector<2x384xf32>
    %325 = arith.mulf %324, %322 : vector<2x384xf32>
    %326 = arith.addf %321, %325 : vector<2x384xf32>
    %c0_91 = arith.constant 0 : index
    %c123 = arith.constant 123 : index
    %327 = vector.load %arg21[%c0_91, %c123] : memref<2x640xf32, #tpu.memory_space<vmem>>, vector<2x384xf32>
    %328 = vector.extract_strided_slice %50 {offsets = [0, 55], sizes = [2, 1], strides = [1, 1]} : vector<2x121xf32> to vector<2x1xf32>
    %329 = vector.broadcast %328 : vector<2x1xf32> to vector<2x384xf32>
    %330 = arith.mulf %329, %327 : vector<2x384xf32>
    %331 = arith.addf %326, %330 : vector<2x384xf32>
    %c0_92 = arith.constant 0 : index
    %c124 = arith.constant 124 : index
    %332 = vector.load %arg21[%c0_92, %c124] : memref<2x640xf32, #tpu.memory_space<vmem>>, vector<2x384xf32>
    %333 = vector.extract_strided_slice %50 {offsets = [0, 56], sizes = [2, 1], strides = [1, 1]} : vector<2x121xf32> to vector<2x1xf32>
    %334 = vector.broadcast %333 : vector<2x1xf32> to vector<2x384xf32>
    %335 = arith.mulf %334, %332 : vector<2x384xf32>
    %336 = arith.addf %331, %335 : vector<2x384xf32>
    %c0_93 = arith.constant 0 : index
    %c125 = arith.constant 125 : index
    %337 = vector.load %arg21[%c0_93, %c125] : memref<2x640xf32, #tpu.memory_space<vmem>>, vector<2x384xf32>
    %338 = vector.extract_strided_slice %50 {offsets = [0, 57], sizes = [2, 1], strides = [1, 1]} : vector<2x121xf32> to vector<2x1xf32>
    %339 = vector.broadcast %338 : vector<2x1xf32> to vector<2x384xf32>
    %340 = arith.mulf %339, %337 : vector<2x384xf32>
    %341 = arith.addf %336, %340 : vector<2x384xf32>
    %c0_94 = arith.constant 0 : index
    %c126 = arith.constant 126 : index
    %342 = vector.load %arg21[%c0_94, %c126] : memref<2x640xf32, #tpu.memory_space<vmem>>, vector<2x384xf32>
    %343 = vector.extract_strided_slice %50 {offsets = [0, 58], sizes = [2, 1], strides = [1, 1]} : vector<2x121xf32> to vector<2x1xf32>
    %344 = vector.broadcast %343 : vector<2x1xf32> to vector<2x384xf32>
    %345 = arith.mulf %344, %342 : vector<2x384xf32>
    %346 = arith.addf %341, %345 : vector<2x384xf32>
    %c0_95 = arith.constant 0 : index
    %c127 = arith.constant 127 : index
    %347 = vector.load %arg21[%c0_95, %c127] : memref<2x640xf32, #tpu.memory_space<vmem>>, vector<2x384xf32>
    %348 = vector.extract_strided_slice %50 {offsets = [0, 59], sizes = [2, 1], strides = [1, 1]} : vector<2x121xf32> to vector<2x1xf32>
    %349 = vector.broadcast %348 : vector<2x1xf32> to vector<2x384xf32>
    %350 = arith.mulf %349, %347 : vector<2x384xf32>
    %351 = arith.addf %346, %350 : vector<2x384xf32>
    %c0_96 = arith.constant 0 : index
    %c128_97 = arith.constant 128 : index
    %352 = vector.load %arg21[%c0_96, %c128_97] : memref<2x640xf32, #tpu.memory_space<vmem>>, vector<2x384xf32>
    %353 = vector.extract_strided_slice %50 {offsets = [0, 60], sizes = [2, 1], strides = [1, 1]} : vector<2x121xf32> to vector<2x1xf32>
    %354 = vector.broadcast %353 : vector<2x1xf32> to vector<2x384xf32>
    %355 = arith.mulf %354, %352 : vector<2x384xf32>
    %356 = arith.addf %351, %355 : vector<2x384xf32>
    %c0_98 = arith.constant 0 : index
    %c129 = arith.constant 129 : index
    %357 = vector.load %arg21[%c0_98, %c129] : memref<2x640xf32, #tpu.memory_space<vmem>>, vector<2x384xf32>
    %358 = vector.extract_strided_slice %50 {offsets = [0, 61], sizes = [2, 1], strides = [1, 1]} : vector<2x121xf32> to vector<2x1xf32>
    %359 = vector.broadcast %358 : vector<2x1xf32> to vector<2x384xf32>
    %360 = arith.mulf %359, %357 : vector<2x384xf32>
    %361 = arith.addf %356, %360 : vector<2x384xf32>
    %c0_99 = arith.constant 0 : index
    %c130 = arith.constant 130 : index
    %362 = vector.load %arg21[%c0_99, %c130] : memref<2x640xf32, #tpu.memory_space<vmem>>, vector<2x384xf32>
    %363 = vector.extract_strided_slice %50 {offsets = [0, 62], sizes = [2, 1], strides = [1, 1]} : vector<2x121xf32> to vector<2x1xf32>
    %364 = vector.broadcast %363 : vector<2x1xf32> to vector<2x384xf32>
    %365 = arith.mulf %364, %362 : vector<2x384xf32>
    %366 = arith.addf %361, %365 : vector<2x384xf32>
    %c0_100 = arith.constant 0 : index
    %c131 = arith.constant 131 : index
    %367 = vector.load %arg21[%c0_100, %c131] : memref<2x640xf32, #tpu.memory_space<vmem>>, vector<2x384xf32>
    %368 = vector.extract_strided_slice %50 {offsets = [0, 63], sizes = [2, 1], strides = [1, 1]} : vector<2x121xf32> to vector<2x1xf32>
    %369 = vector.broadcast %368 : vector<2x1xf32> to vector<2x384xf32>
    %370 = arith.mulf %369, %367 : vector<2x384xf32>
    %371 = arith.addf %366, %370 : vector<2x384xf32>
    %c0_101 = arith.constant 0 : index
    %c132 = arith.constant 132 : index
    %372 = vector.load %arg21[%c0_101, %c132] : memref<2x640xf32, #tpu.memory_space<vmem>>, vector<2x384xf32>
    %373 = vector.extract_strided_slice %50 {offsets = [0, 64], sizes = [2, 1], strides = [1, 1]} : vector<2x121xf32> to vector<2x1xf32>
    %374 = vector.broadcast %373 : vector<2x1xf32> to vector<2x384xf32>
    %375 = arith.mulf %374, %372 : vector<2x384xf32>
    %376 = arith.addf %371, %375 : vector<2x384xf32>
    %c0_102 = arith.constant 0 : index
    %c133 = arith.constant 133 : index
    %377 = vector.load %arg21[%c0_102, %c133] : memref<2x640xf32, #tpu.memory_space<vmem>>, vector<2x384xf32>
    %378 = vector.extract_strided_slice %50 {offsets = [0, 65], sizes = [2, 1], strides = [1, 1]} : vector<2x121xf32> to vector<2x1xf32>
    %379 = vector.broadcast %378 : vector<2x1xf32> to vector<2x384xf32>
    %380 = arith.mulf %379, %377 : vector<2x384xf32>
    %381 = arith.addf %376, %380 : vector<2x384xf32>
    %c0_103 = arith.constant 0 : index
    %c147 = arith.constant 147 : index
    %382 = vector.load %arg21[%c0_103, %c147] : memref<2x640xf32, #tpu.memory_space<vmem>>, vector<2x384xf32>
    %383 = vector.extract_strided_slice %50 {offsets = [0, 66], sizes = [2, 1], strides = [1, 1]} : vector<2x121xf32> to vector<2x1xf32>
    %384 = vector.broadcast %383 : vector<2x1xf32> to vector<2x384xf32>
    %385 = arith.mulf %384, %382 : vector<2x384xf32>
    %386 = arith.addf %381, %385 : vector<2x384xf32>
    %c0_104 = arith.constant 0 : index
    %c148 = arith.constant 148 : index
    %387 = vector.load %arg21[%c0_104, %c148] : memref<2x640xf32, #tpu.memory_space<vmem>>, vector<2x384xf32>
    %388 = vector.extract_strided_slice %50 {offsets = [0, 67], sizes = [2, 1], strides = [1, 1]} : vector<2x121xf32> to vector<2x1xf32>
    %389 = vector.broadcast %388 : vector<2x1xf32> to vector<2x384xf32>
    %390 = arith.mulf %389, %387 : vector<2x384xf32>
    %391 = arith.addf %386, %390 : vector<2x384xf32>
    %c0_105 = arith.constant 0 : index
    %c149 = arith.constant 149 : index
    %392 = vector.load %arg21[%c0_105, %c149] : memref<2x640xf32, #tpu.memory_space<vmem>>, vector<2x384xf32>
    %393 = vector.extract_strided_slice %50 {offsets = [0, 68], sizes = [2, 1], strides = [1, 1]} : vector<2x121xf32> to vector<2x1xf32>
    %394 = vector.broadcast %393 : vector<2x1xf32> to vector<2x384xf32>
    %395 = arith.mulf %394, %392 : vector<2x384xf32>
    %396 = arith.addf %391, %395 : vector<2x384xf32>
    %c0_106 = arith.constant 0 : index
    %c150 = arith.constant 150 : index
    %397 = vector.load %arg21[%c0_106, %c150] : memref<2x640xf32, #tpu.memory_space<vmem>>, vector<2x384xf32>
    %398 = vector.extract_strided_slice %50 {offsets = [0, 69], sizes = [2, 1], strides = [1, 1]} : vector<2x121xf32> to vector<2x1xf32>
    %399 = vector.broadcast %398 : vector<2x1xf32> to vector<2x384xf32>
    %400 = arith.mulf %399, %397 : vector<2x384xf32>
    %401 = arith.addf %396, %400 : vector<2x384xf32>
    %c0_107 = arith.constant 0 : index
    %c151 = arith.constant 151 : index
    %402 = vector.load %arg21[%c0_107, %c151] : memref<2x640xf32, #tpu.memory_space<vmem>>, vector<2x384xf32>
    %403 = vector.extract_strided_slice %50 {offsets = [0, 70], sizes = [2, 1], strides = [1, 1]} : vector<2x121xf32> to vector<2x1xf32>
    %404 = vector.broadcast %403 : vector<2x1xf32> to vector<2x384xf32>
    %405 = arith.mulf %404, %402 : vector<2x384xf32>
    %406 = arith.addf %401, %405 : vector<2x384xf32>
    %c0_108 = arith.constant 0 : index
    %c152 = arith.constant 152 : index
    %407 = vector.load %arg21[%c0_108, %c152] : memref<2x640xf32, #tpu.memory_space<vmem>>, vector<2x384xf32>
    %408 = vector.extract_strided_slice %50 {offsets = [0, 71], sizes = [2, 1], strides = [1, 1]} : vector<2x121xf32> to vector<2x1xf32>
    %409 = vector.broadcast %408 : vector<2x1xf32> to vector<2x384xf32>
    %410 = arith.mulf %409, %407 : vector<2x384xf32>
    %411 = arith.addf %406, %410 : vector<2x384xf32>
    %c0_109 = arith.constant 0 : index
    %c153 = arith.constant 153 : index
    %412 = vector.load %arg21[%c0_109, %c153] : memref<2x640xf32, #tpu.memory_space<vmem>>, vector<2x384xf32>
    %413 = vector.extract_strided_slice %50 {offsets = [0, 72], sizes = [2, 1], strides = [1, 1]} : vector<2x121xf32> to vector<2x1xf32>
    %414 = vector.broadcast %413 : vector<2x1xf32> to vector<2x384xf32>
    %415 = arith.mulf %414, %412 : vector<2x384xf32>
    %416 = arith.addf %411, %415 : vector<2x384xf32>
    %c0_110 = arith.constant 0 : index
    %c154 = arith.constant 154 : index
    %417 = vector.load %arg21[%c0_110, %c154] : memref<2x640xf32, #tpu.memory_space<vmem>>, vector<2x384xf32>
    %418 = vector.extract_strided_slice %50 {offsets = [0, 73], sizes = [2, 1], strides = [1, 1]} : vector<2x121xf32> to vector<2x1xf32>
    %419 = vector.broadcast %418 : vector<2x1xf32> to vector<2x384xf32>
    %420 = arith.mulf %419, %417 : vector<2x384xf32>
    %421 = arith.addf %416, %420 : vector<2x384xf32>
    %c0_111 = arith.constant 0 : index
    %c155 = arith.constant 155 : index
    %422 = vector.load %arg21[%c0_111, %c155] : memref<2x640xf32, #tpu.memory_space<vmem>>, vector<2x384xf32>
    %423 = vector.extract_strided_slice %50 {offsets = [0, 74], sizes = [2, 1], strides = [1, 1]} : vector<2x121xf32> to vector<2x1xf32>
    %424 = vector.broadcast %423 : vector<2x1xf32> to vector<2x384xf32>
    %425 = arith.mulf %424, %422 : vector<2x384xf32>
    %426 = arith.addf %421, %425 : vector<2x384xf32>
    %c0_112 = arith.constant 0 : index
    %c156 = arith.constant 156 : index
    %427 = vector.load %arg21[%c0_112, %c156] : memref<2x640xf32, #tpu.memory_space<vmem>>, vector<2x384xf32>
    %428 = vector.extract_strided_slice %50 {offsets = [0, 75], sizes = [2, 1], strides = [1, 1]} : vector<2x121xf32> to vector<2x1xf32>
    %429 = vector.broadcast %428 : vector<2x1xf32> to vector<2x384xf32>
    %430 = arith.mulf %429, %427 : vector<2x384xf32>
    %431 = arith.addf %426, %430 : vector<2x384xf32>
    %c0_113 = arith.constant 0 : index
    %c157 = arith.constant 157 : index
    %432 = vector.load %arg21[%c0_113, %c157] : memref<2x640xf32, #tpu.memory_space<vmem>>, vector<2x384xf32>
    %433 = vector.extract_strided_slice %50 {offsets = [0, 76], sizes = [2, 1], strides = [1, 1]} : vector<2x121xf32> to vector<2x1xf32>
    %434 = vector.broadcast %433 : vector<2x1xf32> to vector<2x384xf32>
    %435 = arith.mulf %434, %432 : vector<2x384xf32>
    %436 = arith.addf %431, %435 : vector<2x384xf32>
    %c0_114 = arith.constant 0 : index
    %c171 = arith.constant 171 : index
    %437 = vector.load %arg21[%c0_114, %c171] : memref<2x640xf32, #tpu.memory_space<vmem>>, vector<2x384xf32>
    %438 = vector.extract_strided_slice %50 {offsets = [0, 77], sizes = [2, 1], strides = [1, 1]} : vector<2x121xf32> to vector<2x1xf32>
    %439 = vector.broadcast %438 : vector<2x1xf32> to vector<2x384xf32>
    %440 = arith.mulf %439, %437 : vector<2x384xf32>
    %441 = arith.addf %436, %440 : vector<2x384xf32>
    %c0_115 = arith.constant 0 : index
    %c172 = arith.constant 172 : index
    %442 = vector.load %arg21[%c0_115, %c172] : memref<2x640xf32, #tpu.memory_space<vmem>>, vector<2x384xf32>
    %443 = vector.extract_strided_slice %50 {offsets = [0, 78], sizes = [2, 1], strides = [1, 1]} : vector<2x121xf32> to vector<2x1xf32>
    %444 = vector.broadcast %443 : vector<2x1xf32> to vector<2x384xf32>
    %445 = arith.mulf %444, %442 : vector<2x384xf32>
    %446 = arith.addf %441, %445 : vector<2x384xf32>
    %c0_116 = arith.constant 0 : index
    %c173 = arith.constant 173 : index
    %447 = vector.load %arg21[%c0_116, %c173] : memref<2x640xf32, #tpu.memory_space<vmem>>, vector<2x384xf32>
    %448 = vector.extract_strided_slice %50 {offsets = [0, 79], sizes = [2, 1], strides = [1, 1]} : vector<2x121xf32> to vector<2x1xf32>
    %449 = vector.broadcast %448 : vector<2x1xf32> to vector<2x384xf32>
    %450 = arith.mulf %449, %447 : vector<2x384xf32>
    %451 = arith.addf %446, %450 : vector<2x384xf32>
    %c0_117 = arith.constant 0 : index
    %c174 = arith.constant 174 : index
    %452 = vector.load %arg21[%c0_117, %c174] : memref<2x640xf32, #tpu.memory_space<vmem>>, vector<2x384xf32>
    %453 = vector.extract_strided_slice %50 {offsets = [0, 80], sizes = [2, 1], strides = [1, 1]} : vector<2x121xf32> to vector<2x1xf32>
    %454 = vector.broadcast %453 : vector<2x1xf32> to vector<2x384xf32>
    %455 = arith.mulf %454, %452 : vector<2x384xf32>
    %456 = arith.addf %451, %455 : vector<2x384xf32>
    %c0_118 = arith.constant 0 : index
    %c175 = arith.constant 175 : index
    %457 = vector.load %arg21[%c0_118, %c175] : memref<2x640xf32, #tpu.memory_space<vmem>>, vector<2x384xf32>
    %458 = vector.extract_strided_slice %50 {offsets = [0, 81], sizes = [2, 1], strides = [1, 1]} : vector<2x121xf32> to vector<2x1xf32>
    %459 = vector.broadcast %458 : vector<2x1xf32> to vector<2x384xf32>
    %460 = arith.mulf %459, %457 : vector<2x384xf32>
    %461 = arith.addf %456, %460 : vector<2x384xf32>
    %c0_119 = arith.constant 0 : index
    %c176 = arith.constant 176 : index
    %462 = vector.load %arg21[%c0_119, %c176] : memref<2x640xf32, #tpu.memory_space<vmem>>, vector<2x384xf32>
    %463 = vector.extract_strided_slice %50 {offsets = [0, 82], sizes = [2, 1], strides = [1, 1]} : vector<2x121xf32> to vector<2x1xf32>
    %464 = vector.broadcast %463 : vector<2x1xf32> to vector<2x384xf32>
    %465 = arith.mulf %464, %462 : vector<2x384xf32>
    %466 = arith.addf %461, %465 : vector<2x384xf32>
    %c0_120 = arith.constant 0 : index
    %c177 = arith.constant 177 : index
    %467 = vector.load %arg21[%c0_120, %c177] : memref<2x640xf32, #tpu.memory_space<vmem>>, vector<2x384xf32>
    %468 = vector.extract_strided_slice %50 {offsets = [0, 83], sizes = [2, 1], strides = [1, 1]} : vector<2x121xf32> to vector<2x1xf32>
    %469 = vector.broadcast %468 : vector<2x1xf32> to vector<2x384xf32>
    %470 = arith.mulf %469, %467 : vector<2x384xf32>
    %471 = arith.addf %466, %470 : vector<2x384xf32>
    %c0_121 = arith.constant 0 : index
    %c178 = arith.constant 178 : index
    %472 = vector.load %arg21[%c0_121, %c178] : memref<2x640xf32, #tpu.memory_space<vmem>>, vector<2x384xf32>
    %473 = vector.extract_strided_slice %50 {offsets = [0, 84], sizes = [2, 1], strides = [1, 1]} : vector<2x121xf32> to vector<2x1xf32>
    %474 = vector.broadcast %473 : vector<2x1xf32> to vector<2x384xf32>
    %475 = arith.mulf %474, %472 : vector<2x384xf32>
    %476 = arith.addf %471, %475 : vector<2x384xf32>
    %c0_122 = arith.constant 0 : index
    %c179 = arith.constant 179 : index
    %477 = vector.load %arg21[%c0_122, %c179] : memref<2x640xf32, #tpu.memory_space<vmem>>, vector<2x384xf32>
    %478 = vector.extract_strided_slice %50 {offsets = [0, 85], sizes = [2, 1], strides = [1, 1]} : vector<2x121xf32> to vector<2x1xf32>
    %479 = vector.broadcast %478 : vector<2x1xf32> to vector<2x384xf32>
    %480 = arith.mulf %479, %477 : vector<2x384xf32>
    %481 = arith.addf %476, %480 : vector<2x384xf32>
    %c0_123 = arith.constant 0 : index
    %c180 = arith.constant 180 : index
    %482 = vector.load %arg21[%c0_123, %c180] : memref<2x640xf32, #tpu.memory_space<vmem>>, vector<2x384xf32>
    %483 = vector.extract_strided_slice %50 {offsets = [0, 86], sizes = [2, 1], strides = [1, 1]} : vector<2x121xf32> to vector<2x1xf32>
    %484 = vector.broadcast %483 : vector<2x1xf32> to vector<2x384xf32>
    %485 = arith.mulf %484, %482 : vector<2x384xf32>
    %486 = arith.addf %481, %485 : vector<2x384xf32>
    %c0_124 = arith.constant 0 : index
    %c181 = arith.constant 181 : index
    %487 = vector.load %arg21[%c0_124, %c181] : memref<2x640xf32, #tpu.memory_space<vmem>>, vector<2x384xf32>
    %488 = vector.extract_strided_slice %50 {offsets = [0, 87], sizes = [2, 1], strides = [1, 1]} : vector<2x121xf32> to vector<2x1xf32>
    %489 = vector.broadcast %488 : vector<2x1xf32> to vector<2x384xf32>
    %490 = arith.mulf %489, %487 : vector<2x384xf32>
    %491 = arith.addf %486, %490 : vector<2x384xf32>
    %c0_125 = arith.constant 0 : index
    %c195 = arith.constant 195 : index
    %492 = vector.load %arg21[%c0_125, %c195] : memref<2x640xf32, #tpu.memory_space<vmem>>, vector<2x384xf32>
    %493 = vector.extract_strided_slice %50 {offsets = [0, 88], sizes = [2, 1], strides = [1, 1]} : vector<2x121xf32> to vector<2x1xf32>
    %494 = vector.broadcast %493 : vector<2x1xf32> to vector<2x384xf32>
    %495 = arith.mulf %494, %492 : vector<2x384xf32>
    %496 = arith.addf %491, %495 : vector<2x384xf32>
    %c0_126 = arith.constant 0 : index
    %c196 = arith.constant 196 : index
    %497 = vector.load %arg21[%c0_126, %c196] : memref<2x640xf32, #tpu.memory_space<vmem>>, vector<2x384xf32>
    %498 = vector.extract_strided_slice %50 {offsets = [0, 89], sizes = [2, 1], strides = [1, 1]} : vector<2x121xf32> to vector<2x1xf32>
    %499 = vector.broadcast %498 : vector<2x1xf32> to vector<2x384xf32>
    %500 = arith.mulf %499, %497 : vector<2x384xf32>
    %501 = arith.addf %496, %500 : vector<2x384xf32>
    %c0_127 = arith.constant 0 : index
    %c197 = arith.constant 197 : index
    %502 = vector.load %arg21[%c0_127, %c197] : memref<2x640xf32, #tpu.memory_space<vmem>>, vector<2x384xf32>
    %503 = vector.extract_strided_slice %50 {offsets = [0, 90], sizes = [2, 1], strides = [1, 1]} : vector<2x121xf32> to vector<2x1xf32>
    %504 = vector.broadcast %503 : vector<2x1xf32> to vector<2x384xf32>
    %505 = arith.mulf %504, %502 : vector<2x384xf32>
    %506 = arith.addf %501, %505 : vector<2x384xf32>
    %c0_128 = arith.constant 0 : index
    %c198 = arith.constant 198 : index
    %507 = vector.load %arg21[%c0_128, %c198] : memref<2x640xf32, #tpu.memory_space<vmem>>, vector<2x384xf32>
    %508 = vector.extract_strided_slice %50 {offsets = [0, 91], sizes = [2, 1], strides = [1, 1]} : vector<2x121xf32> to vector<2x1xf32>
    %509 = vector.broadcast %508 : vector<2x1xf32> to vector<2x384xf32>
    %510 = arith.mulf %509, %507 : vector<2x384xf32>
    %511 = arith.addf %506, %510 : vector<2x384xf32>
    %c0_129 = arith.constant 0 : index
    %c199 = arith.constant 199 : index
    %512 = vector.load %arg21[%c0_129, %c199] : memref<2x640xf32, #tpu.memory_space<vmem>>, vector<2x384xf32>
    %513 = vector.extract_strided_slice %50 {offsets = [0, 92], sizes = [2, 1], strides = [1, 1]} : vector<2x121xf32> to vector<2x1xf32>
    %514 = vector.broadcast %513 : vector<2x1xf32> to vector<2x384xf32>
    %515 = arith.mulf %514, %512 : vector<2x384xf32>
    %516 = arith.addf %511, %515 : vector<2x384xf32>
    %c0_130 = arith.constant 0 : index
    %c200 = arith.constant 200 : index
    %517 = vector.load %arg21[%c0_130, %c200] : memref<2x640xf32, #tpu.memory_space<vmem>>, vector<2x384xf32>
    %518 = vector.extract_strided_slice %50 {offsets = [0, 93], sizes = [2, 1], strides = [1, 1]} : vector<2x121xf32> to vector<2x1xf32>
    %519 = vector.broadcast %518 : vector<2x1xf32> to vector<2x384xf32>
    %520 = arith.mulf %519, %517 : vector<2x384xf32>
    %521 = arith.addf %516, %520 : vector<2x384xf32>
    %c0_131 = arith.constant 0 : index
    %c201 = arith.constant 201 : index
    %522 = vector.load %arg21[%c0_131, %c201] : memref<2x640xf32, #tpu.memory_space<vmem>>, vector<2x384xf32>
    %523 = vector.extract_strided_slice %50 {offsets = [0, 94], sizes = [2, 1], strides = [1, 1]} : vector<2x121xf32> to vector<2x1xf32>
    %524 = vector.broadcast %523 : vector<2x1xf32> to vector<2x384xf32>
    %525 = arith.mulf %524, %522 : vector<2x384xf32>
    %526 = arith.addf %521, %525 : vector<2x384xf32>
    %c0_132 = arith.constant 0 : index
    %c202 = arith.constant 202 : index
    %527 = vector.load %arg21[%c0_132, %c202] : memref<2x640xf32, #tpu.memory_space<vmem>>, vector<2x384xf32>
    %528 = vector.extract_strided_slice %50 {offsets = [0, 95], sizes = [2, 1], strides = [1, 1]} : vector<2x121xf32> to vector<2x1xf32>
    %529 = vector.broadcast %528 : vector<2x1xf32> to vector<2x384xf32>
    %530 = arith.mulf %529, %527 : vector<2x384xf32>
    %531 = arith.addf %526, %530 : vector<2x384xf32>
    %c0_133 = arith.constant 0 : index
    %c203 = arith.constant 203 : index
    %532 = vector.load %arg21[%c0_133, %c203] : memref<2x640xf32, #tpu.memory_space<vmem>>, vector<2x384xf32>
    %533 = vector.extract_strided_slice %50 {offsets = [0, 96], sizes = [2, 1], strides = [1, 1]} : vector<2x121xf32> to vector<2x1xf32>
    %534 = vector.broadcast %533 : vector<2x1xf32> to vector<2x384xf32>
    %535 = arith.mulf %534, %532 : vector<2x384xf32>
    %536 = arith.addf %531, %535 : vector<2x384xf32>
    %c0_134 = arith.constant 0 : index
    %c204 = arith.constant 204 : index
    %537 = vector.load %arg21[%c0_134, %c204] : memref<2x640xf32, #tpu.memory_space<vmem>>, vector<2x384xf32>
    %538 = vector.extract_strided_slice %50 {offsets = [0, 97], sizes = [2, 1], strides = [1, 1]} : vector<2x121xf32> to vector<2x1xf32>
    %539 = vector.broadcast %538 : vector<2x1xf32> to vector<2x384xf32>
    %540 = arith.mulf %539, %537 : vector<2x384xf32>
    %541 = arith.addf %536, %540 : vector<2x384xf32>
    %c0_135 = arith.constant 0 : index
    %c205 = arith.constant 205 : index
    %542 = vector.load %arg21[%c0_135, %c205] : memref<2x640xf32, #tpu.memory_space<vmem>>, vector<2x384xf32>
    %543 = vector.extract_strided_slice %50 {offsets = [0, 98], sizes = [2, 1], strides = [1, 1]} : vector<2x121xf32> to vector<2x1xf32>
    %544 = vector.broadcast %543 : vector<2x1xf32> to vector<2x384xf32>
    %545 = arith.mulf %544, %542 : vector<2x384xf32>
    %546 = arith.addf %541, %545 : vector<2x384xf32>
    %c0_136 = arith.constant 0 : index
    %c219 = arith.constant 219 : index
    %547 = vector.load %arg21[%c0_136, %c219] : memref<2x640xf32, #tpu.memory_space<vmem>>, vector<2x384xf32>
    %548 = vector.extract_strided_slice %50 {offsets = [0, 99], sizes = [2, 1], strides = [1, 1]} : vector<2x121xf32> to vector<2x1xf32>
    %549 = vector.broadcast %548 : vector<2x1xf32> to vector<2x384xf32>
    %550 = arith.mulf %549, %547 : vector<2x384xf32>
    %551 = arith.addf %546, %550 : vector<2x384xf32>
    %c0_137 = arith.constant 0 : index
    %c220 = arith.constant 220 : index
    %552 = vector.load %arg21[%c0_137, %c220] : memref<2x640xf32, #tpu.memory_space<vmem>>, vector<2x384xf32>
    %553 = vector.extract_strided_slice %50 {offsets = [0, 100], sizes = [2, 1], strides = [1, 1]} : vector<2x121xf32> to vector<2x1xf32>
    %554 = vector.broadcast %553 : vector<2x1xf32> to vector<2x384xf32>
    %555 = arith.mulf %554, %552 : vector<2x384xf32>
    %556 = arith.addf %551, %555 : vector<2x384xf32>
    %c0_138 = arith.constant 0 : index
    %c221 = arith.constant 221 : index
    %557 = vector.load %arg21[%c0_138, %c221] : memref<2x640xf32, #tpu.memory_space<vmem>>, vector<2x384xf32>
    %558 = vector.extract_strided_slice %50 {offsets = [0, 101], sizes = [2, 1], strides = [1, 1]} : vector<2x121xf32> to vector<2x1xf32>
    %559 = vector.broadcast %558 : vector<2x1xf32> to vector<2x384xf32>
    %560 = arith.mulf %559, %557 : vector<2x384xf32>
    %561 = arith.addf %556, %560 : vector<2x384xf32>
    %c0_139 = arith.constant 0 : index
    %c222 = arith.constant 222 : index
    %562 = vector.load %arg21[%c0_139, %c222] : memref<2x640xf32, #tpu.memory_space<vmem>>, vector<2x384xf32>
    %563 = vector.extract_strided_slice %50 {offsets = [0, 102], sizes = [2, 1], strides = [1, 1]} : vector<2x121xf32> to vector<2x1xf32>
    %564 = vector.broadcast %563 : vector<2x1xf32> to vector<2x384xf32>
    %565 = arith.mulf %564, %562 : vector<2x384xf32>
    %566 = arith.addf %561, %565 : vector<2x384xf32>
    %c0_140 = arith.constant 0 : index
    %c223 = arith.constant 223 : index
    %567 = vector.load %arg21[%c0_140, %c223] : memref<2x640xf32, #tpu.memory_space<vmem>>, vector<2x384xf32>
    %568 = vector.extract_strided_slice %50 {offsets = [0, 103], sizes = [2, 1], strides = [1, 1]} : vector<2x121xf32> to vector<2x1xf32>
    %569 = vector.broadcast %568 : vector<2x1xf32> to vector<2x384xf32>
    %570 = arith.mulf %569, %567 : vector<2x384xf32>
    %571 = arith.addf %566, %570 : vector<2x384xf32>
    %c0_141 = arith.constant 0 : index
    %c224 = arith.constant 224 : index
    %572 = vector.load %arg21[%c0_141, %c224] : memref<2x640xf32, #tpu.memory_space<vmem>>, vector<2x384xf32>
    %573 = vector.extract_strided_slice %50 {offsets = [0, 104], sizes = [2, 1], strides = [1, 1]} : vector<2x121xf32> to vector<2x1xf32>
    %574 = vector.broadcast %573 : vector<2x1xf32> to vector<2x384xf32>
    %575 = arith.mulf %574, %572 : vector<2x384xf32>
    %576 = arith.addf %571, %575 : vector<2x384xf32>
    %c0_142 = arith.constant 0 : index
    %c225 = arith.constant 225 : index
    %577 = vector.load %arg21[%c0_142, %c225] : memref<2x640xf32, #tpu.memory_space<vmem>>, vector<2x384xf32>
    %578 = vector.extract_strided_slice %50 {offsets = [0, 105], sizes = [2, 1], strides = [1, 1]} : vector<2x121xf32> to vector<2x1xf32>
    %579 = vector.broadcast %578 : vector<2x1xf32> to vector<2x384xf32>
    %580 = arith.mulf %579, %577 : vector<2x384xf32>
    %581 = arith.addf %576, %580 : vector<2x384xf32>
    %c0_143 = arith.constant 0 : index
    %c226 = arith.constant 226 : index
    %582 = vector.load %arg21[%c0_143, %c226] : memref<2x640xf32, #tpu.memory_space<vmem>>, vector<2x384xf32>
    %583 = vector.extract_strided_slice %50 {offsets = [0, 106], sizes = [2, 1], strides = [1, 1]} : vector<2x121xf32> to vector<2x1xf32>
    %584 = vector.broadcast %583 : vector<2x1xf32> to vector<2x384xf32>
    %585 = arith.mulf %584, %582 : vector<2x384xf32>
    %586 = arith.addf %581, %585 : vector<2x384xf32>
    %c0_144 = arith.constant 0 : index
    %c227 = arith.constant 227 : index
    %587 = vector.load %arg21[%c0_144, %c227] : memref<2x640xf32, #tpu.memory_space<vmem>>, vector<2x384xf32>
    %588 = vector.extract_strided_slice %50 {offsets = [0, 107], sizes = [2, 1], strides = [1, 1]} : vector<2x121xf32> to vector<2x1xf32>
    %589 = vector.broadcast %588 : vector<2x1xf32> to vector<2x384xf32>
    %590 = arith.mulf %589, %587 : vector<2x384xf32>
    %591 = arith.addf %586, %590 : vector<2x384xf32>
    %c0_145 = arith.constant 0 : index
    %c228 = arith.constant 228 : index
    %592 = vector.load %arg21[%c0_145, %c228] : memref<2x640xf32, #tpu.memory_space<vmem>>, vector<2x384xf32>
    %593 = vector.extract_strided_slice %50 {offsets = [0, 108], sizes = [2, 1], strides = [1, 1]} : vector<2x121xf32> to vector<2x1xf32>
    %594 = vector.broadcast %593 : vector<2x1xf32> to vector<2x384xf32>
    %595 = arith.mulf %594, %592 : vector<2x384xf32>
    %596 = arith.addf %591, %595 : vector<2x384xf32>
    %c0_146 = arith.constant 0 : index
    %c229 = arith.constant 229 : index
    %597 = vector.load %arg21[%c0_146, %c229] : memref<2x640xf32, #tpu.memory_space<vmem>>, vector<2x384xf32>
    %598 = vector.extract_strided_slice %50 {offsets = [0, 109], sizes = [2, 1], strides = [1, 1]} : vector<2x121xf32> to vector<2x1xf32>
    %599 = vector.broadcast %598 : vector<2x1xf32> to vector<2x384xf32>
    %600 = arith.mulf %599, %597 : vector<2x384xf32>
    %601 = arith.addf %596, %600 : vector<2x384xf32>
    %c0_147 = arith.constant 0 : index
    %c243 = arith.constant 243 : index
    %602 = vector.load %arg21[%c0_147, %c243] : memref<2x640xf32, #tpu.memory_space<vmem>>, vector<2x384xf32>
    %603 = vector.extract_strided_slice %50 {offsets = [0, 110], sizes = [2, 1], strides = [1, 1]} : vector<2x121xf32> to vector<2x1xf32>
    %604 = vector.broadcast %603 : vector<2x1xf32> to vector<2x384xf32>
    %605 = arith.mulf %604, %602 : vector<2x384xf32>
    %606 = arith.addf %601, %605 : vector<2x384xf32>
    %c0_148 = arith.constant 0 : index
    %c244 = arith.constant 244 : index
    %607 = vector.load %arg21[%c0_148, %c244] : memref<2x640xf32, #tpu.memory_space<vmem>>, vector<2x384xf32>
    %608 = vector.extract_strided_slice %50 {offsets = [0, 111], sizes = [2, 1], strides = [1, 1]} : vector<2x121xf32> to vector<2x1xf32>
    %609 = vector.broadcast %608 : vector<2x1xf32> to vector<2x384xf32>
    %610 = arith.mulf %609, %607 : vector<2x384xf32>
    %611 = arith.addf %606, %610 : vector<2x384xf32>
    %c0_149 = arith.constant 0 : index
    %c245 = arith.constant 245 : index
    %612 = vector.load %arg21[%c0_149, %c245] : memref<2x640xf32, #tpu.memory_space<vmem>>, vector<2x384xf32>
    %613 = vector.extract_strided_slice %50 {offsets = [0, 112], sizes = [2, 1], strides = [1, 1]} : vector<2x121xf32> to vector<2x1xf32>
    %614 = vector.broadcast %613 : vector<2x1xf32> to vector<2x384xf32>
    %615 = arith.mulf %614, %612 : vector<2x384xf32>
    %616 = arith.addf %611, %615 : vector<2x384xf32>
    %c0_150 = arith.constant 0 : index
    %c246 = arith.constant 246 : index
    %617 = vector.load %arg21[%c0_150, %c246] : memref<2x640xf32, #tpu.memory_space<vmem>>, vector<2x384xf32>
    %618 = vector.extract_strided_slice %50 {offsets = [0, 113], sizes = [2, 1], strides = [1, 1]} : vector<2x121xf32> to vector<2x1xf32>
    %619 = vector.broadcast %618 : vector<2x1xf32> to vector<2x384xf32>
    %620 = arith.mulf %619, %617 : vector<2x384xf32>
    %621 = arith.addf %616, %620 : vector<2x384xf32>
    %c0_151 = arith.constant 0 : index
    %c247 = arith.constant 247 : index
    %622 = vector.load %arg21[%c0_151, %c247] : memref<2x640xf32, #tpu.memory_space<vmem>>, vector<2x384xf32>
    %623 = vector.extract_strided_slice %50 {offsets = [0, 114], sizes = [2, 1], strides = [1, 1]} : vector<2x121xf32> to vector<2x1xf32>
    %624 = vector.broadcast %623 : vector<2x1xf32> to vector<2x384xf32>
    %625 = arith.mulf %624, %622 : vector<2x384xf32>
    %626 = arith.addf %621, %625 : vector<2x384xf32>
    %c0_152 = arith.constant 0 : index
    %c248 = arith.constant 248 : index
    %627 = vector.load %arg21[%c0_152, %c248] : memref<2x640xf32, #tpu.memory_space<vmem>>, vector<2x384xf32>
    %628 = vector.extract_strided_slice %50 {offsets = [0, 115], sizes = [2, 1], strides = [1, 1]} : vector<2x121xf32> to vector<2x1xf32>
    %629 = vector.broadcast %628 : vector<2x1xf32> to vector<2x384xf32>
    %630 = arith.mulf %629, %627 : vector<2x384xf32>
    %631 = arith.addf %626, %630 : vector<2x384xf32>
    %c0_153 = arith.constant 0 : index
    %c249 = arith.constant 249 : index
    %632 = vector.load %arg21[%c0_153, %c249] : memref<2x640xf32, #tpu.memory_space<vmem>>, vector<2x384xf32>
    %633 = vector.extract_strided_slice %50 {offsets = [0, 116], sizes = [2, 1], strides = [1, 1]} : vector<2x121xf32> to vector<2x1xf32>
    %634 = vector.broadcast %633 : vector<2x1xf32> to vector<2x384xf32>
    %635 = arith.mulf %634, %632 : vector<2x384xf32>
    %636 = arith.addf %631, %635 : vector<2x384xf32>
    %c0_154 = arith.constant 0 : index
    %c250 = arith.constant 250 : index
    %637 = vector.load %arg21[%c0_154, %c250] : memref<2x640xf32, #tpu.memory_space<vmem>>, vector<2x384xf32>
    %638 = vector.extract_strided_slice %50 {offsets = [0, 117], sizes = [2, 1], strides = [1, 1]} : vector<2x121xf32> to vector<2x1xf32>
    %639 = vector.broadcast %638 : vector<2x1xf32> to vector<2x384xf32>
    %640 = arith.mulf %639, %637 : vector<2x384xf32>
    %641 = arith.addf %636, %640 : vector<2x384xf32>
    %c0_155 = arith.constant 0 : index
    %c251 = arith.constant 251 : index
    %642 = vector.load %arg21[%c0_155, %c251] : memref<2x640xf32, #tpu.memory_space<vmem>>, vector<2x384xf32>
    %643 = vector.extract_strided_slice %50 {offsets = [0, 118], sizes = [2, 1], strides = [1, 1]} : vector<2x121xf32> to vector<2x1xf32>
    %644 = vector.broadcast %643 : vector<2x1xf32> to vector<2x384xf32>
    %645 = arith.mulf %644, %642 : vector<2x384xf32>
    %646 = arith.addf %641, %645 : vector<2x384xf32>
    %c0_156 = arith.constant 0 : index
    %c252 = arith.constant 252 : index
    %647 = vector.load %arg21[%c0_156, %c252] : memref<2x640xf32, #tpu.memory_space<vmem>>, vector<2x384xf32>
    %648 = vector.extract_strided_slice %50 {offsets = [0, 119], sizes = [2, 1], strides = [1, 1]} : vector<2x121xf32> to vector<2x1xf32>
    %649 = vector.broadcast %648 : vector<2x1xf32> to vector<2x384xf32>
    %650 = arith.mulf %649, %647 : vector<2x384xf32>
    %651 = arith.addf %646, %650 : vector<2x384xf32>
    %c0_157 = arith.constant 0 : index
    %c253 = arith.constant 253 : index
    %652 = vector.load %arg21[%c0_157, %c253] : memref<2x640xf32, #tpu.memory_space<vmem>>, vector<2x384xf32>
    %653 = vector.extract_strided_slice %50 {offsets = [0, 120], sizes = [2, 1], strides = [1, 1]} : vector<2x121xf32> to vector<2x1xf32>
    %654 = vector.broadcast %653 : vector<2x1xf32> to vector<2x384xf32>
    %655 = arith.mulf %654, %652 : vector<2x384xf32>
    %656 = arith.addf %651, %655 : vector<2x384xf32>
    %657 = vector.extract_strided_slice %656 {offsets = [0, 0], sizes = [1, 384], strides = [1, 1]} : vector<2x384xf32> to vector<1x384xf32>
    %658 = vector.extract_strided_slice %656 {offsets = [1, 0], sizes = [1, 384], strides = [1, 1]} : vector<2x384xf32> to vector<1x384xf32>
    %659 = arith.addf %657, %658 : vector<1x384xf32>
    %660 = arith.negf %659 : vector<1x384xf32>
    %661 = math.exp %660 : vector<1x384xf32>
    %cst_158 = arith.constant 1.000000e+00 : f32
    %662 = vector.broadcast %cst_158 : f32 to vector<1x384xf32>
    %663 = arith.addf %662, %661 : vector<1x384xf32>
    %664 = arith.divf %662, %663 : vector<1x384xf32>
    %665 = vector.broadcast %664 : vector<1x384xf32> to vector<32x384xf32>
    %666 = arith.mulf %41, %665 : vector<32x384xf32>
    %c0_159 = arith.constant 0 : index
    %c128_160 = arith.constant 128 : index
    %667 = vector.load %arg20[%c0_159, %c128_160] : memref<32x640xf32, #tpu.memory_space<vmem>>, vector<32x384xf32>
    tpu.vector_store %arg20[%c0_159, %c128_160], %666 {strides = array<i32>} : memref<32x640xf32, #tpu.memory_space<vmem>>, vector<32x384xf32>,
    %c0_161 = arith.constant 0 : index
    %c0_162 = arith.constant 0 : index
    %668 = vector.load %arg8[%c0_161, %c0_162] : memref<32x1xf32, #tpu.memory_space<vmem>>, vector<32x1xf32>
    %669 = vector.broadcast %668 : vector<32x1xf32> to vector<32x384xf32>
    %670 = arith.mulf %666, %669 : vector<32x384xf32>
    %c0_163 = arith.constant 0 : index
    %c0_164 = arith.constant 0 : index
    %671 = vector.load %arg9[%c0_163, %c0_164] : memref<32x1xf32, #tpu.memory_space<vmem>>, vector<32x1xf32>
    %672 = vector.broadcast %671 : vector<32x1xf32> to vector<32x384xf32>
    %673 = arith.addf %670, %672 : vector<32x384xf32>
    %cst_165 = arith.constant 0.000000e+00 : f32
    %674 = vector.broadcast %cst_165 : f32 to vector<32x384xf32>
    %675 = arith.maximumf %673, %674 : vector<32x384xf32>
    %c0_166 = arith.constant 0 : index
    %c0_167 = arith.constant 0 : index
    %676 = vector.load %arg14[%c0_166, %c0_167] : memref<32x32xbf16, #tpu.memory_space<vmem>>, vector<32x32xbf16>
    %677 = arith.truncf %675 : vector<32x384xf32> to vector<32x384xbf16>
    %cst_168 = arith.constant dense<0.000000e+00> : vector<32x384xf32>
    %678 = tpu.matmul %676, %677, %cst_168 {dimension_numbers = #tpu.dot_dimension_numbers<[1], [0], [0], [1], [0, 0, 1, 1], [], []>} : vector<32x32xbf16>, vector<32x384xbf16>, vector<32x384xf32> -> vector<32x384xf32>
    %c0_169 = arith.constant 0 : index
    %c0_170 = arith.constant 0 : index
    %c0_171 = arith.constant 0 : index
    %679 = vector.load %arg19[%c0_169, %c0_170, %c0_171] : memref<1x32x384xf32, #tpu.memory_space<vmem>>, vector<1x32x384xf32>
    %680 = vector.shape_cast %679 : vector<1x32x384xf32> to vector<32x384xf32>
    %681 = vector.shape_cast %678 : vector<32x384xf32> to vector<1x32x384xf32>
    tpu.vector_store %arg19[%c0_169, %c0_170, %c0_171], %681 {strides = array<i32>} : memref<1x32x384xf32, #tpu.memory_space<vmem>>, vector<1x32x384xf32>,
    %c0_172 = arith.constant 0 : index
    %c0_173 = arith.constant 0 : index
    %682 = vector.load %arg10[%c0_172, %c0_173] : memref<32x9xf32, #tpu.memory_space<vmem>>, vector<32x9xf32>
    %c0_174 = arith.constant 0 : index
    %c0_175 = arith.constant 0 : index
    %683 = vector.load %arg12[%c0_174, %c0_175] : memref<32x25xf32, #tpu.memory_space<vmem>>, vector<32x25xf32>
    %cst_176 = arith.constant 0.000000e+00 : f32
    %684 = vector.broadcast %cst_176 : f32 to vector<32x384xf32>
    %cst_177 = arith.constant 0.000000e+00 : f32
    %685 = vector.broadcast %cst_177 : f32 to vector<32x384xf32>
    %c0_178 = arith.constant 0 : index
    %c78_179 = arith.constant 78 : index
    %686 = vector.load %arg20[%c0_178, %c78_179] : memref<32x640xf32, #tpu.memory_space<vmem>>, vector<32x384xf32>
    %687 = vector.extract_strided_slice %683 {offsets = [0, 0], sizes = [32, 1], strides = [1, 1]} : vector<32x25xf32> to vector<32x1xf32>
    %688 = vector.broadcast %687 : vector<32x1xf32> to vector<32x384xf32>
    %689 = arith.mulf %688, %686 : vector<32x384xf32>
    %690 = arith.addf %685, %689 : vector<32x384xf32>
    %c0_180 = arith.constant 0 : index
    %c79_181 = arith.constant 79 : index
    %691 = vector.load %arg20[%c0_180, %c79_181] : memref<32x640xf32, #tpu.memory_space<vmem>>, vector<32x384xf32>
    %692 = vector.extract_strided_slice %683 {offsets = [0, 1], sizes = [32, 1], strides = [1, 1]} : vector<32x25xf32> to vector<32x1xf32>
    %693 = vector.broadcast %692 : vector<32x1xf32> to vector<32x384xf32>
    %694 = arith.mulf %693, %691 : vector<32x384xf32>
    %695 = arith.addf %690, %694 : vector<32x384xf32>
    %c0_182 = arith.constant 0 : index
    %c80_183 = arith.constant 80 : index
    %696 = vector.load %arg20[%c0_182, %c80_183] : memref<32x640xf32, #tpu.memory_space<vmem>>, vector<32x384xf32>
    %697 = vector.extract_strided_slice %683 {offsets = [0, 2], sizes = [32, 1], strides = [1, 1]} : vector<32x25xf32> to vector<32x1xf32>
    %698 = vector.broadcast %697 : vector<32x1xf32> to vector<32x384xf32>
    %699 = arith.mulf %698, %696 : vector<32x384xf32>
    %700 = arith.addf %695, %699 : vector<32x384xf32>
    %c0_184 = arith.constant 0 : index
    %c81_185 = arith.constant 81 : index
    %701 = vector.load %arg20[%c0_184, %c81_185] : memref<32x640xf32, #tpu.memory_space<vmem>>, vector<32x384xf32>
    %702 = vector.extract_strided_slice %683 {offsets = [0, 3], sizes = [32, 1], strides = [1, 1]} : vector<32x25xf32> to vector<32x1xf32>
    %703 = vector.broadcast %702 : vector<32x1xf32> to vector<32x384xf32>
    %704 = arith.mulf %703, %701 : vector<32x384xf32>
    %705 = arith.addf %700, %704 : vector<32x384xf32>
    %c0_186 = arith.constant 0 : index
    %c82_187 = arith.constant 82 : index
    %706 = vector.load %arg20[%c0_186, %c82_187] : memref<32x640xf32, #tpu.memory_space<vmem>>, vector<32x384xf32>
    %707 = vector.extract_strided_slice %683 {offsets = [0, 4], sizes = [32, 1], strides = [1, 1]} : vector<32x25xf32> to vector<32x1xf32>
    %708 = vector.broadcast %707 : vector<32x1xf32> to vector<32x384xf32>
    %709 = arith.mulf %708, %706 : vector<32x384xf32>
    %710 = arith.addf %705, %709 : vector<32x384xf32>
    %c0_188 = arith.constant 0 : index
    %c102_189 = arith.constant 102 : index
    %711 = vector.load %arg20[%c0_188, %c102_189] : memref<32x640xf32, #tpu.memory_space<vmem>>, vector<32x384xf32>
    %712 = vector.extract_strided_slice %683 {offsets = [0, 5], sizes = [32, 1], strides = [1, 1]} : vector<32x25xf32> to vector<32x1xf32>
    %713 = vector.broadcast %712 : vector<32x1xf32> to vector<32x384xf32>
    %714 = arith.mulf %713, %711 : vector<32x384xf32>
    %715 = arith.addf %710, %714 : vector<32x384xf32>
    %c0_190 = arith.constant 0 : index
    %c103_191 = arith.constant 103 : index
    %716 = vector.load %arg20[%c0_190, %c103_191] : memref<32x640xf32, #tpu.memory_space<vmem>>, vector<32x384xf32>
    %717 = vector.extract_strided_slice %683 {offsets = [0, 6], sizes = [32, 1], strides = [1, 1]} : vector<32x25xf32> to vector<32x1xf32>
    %718 = vector.broadcast %717 : vector<32x1xf32> to vector<32x384xf32>
    %719 = arith.mulf %718, %716 : vector<32x384xf32>
    %720 = arith.addf %715, %719 : vector<32x384xf32>
    %721 = vector.extract_strided_slice %682 {offsets = [0, 0], sizes = [32, 1], strides = [1, 1]} : vector<32x9xf32> to vector<32x1xf32>
    %722 = vector.broadcast %721 : vector<32x1xf32> to vector<32x384xf32>
    %723 = arith.mulf %722, %716 : vector<32x384xf32>
    %724 = arith.addf %684, %723 : vector<32x384xf32>
    %c0_192 = arith.constant 0 : index
    %c104_193 = arith.constant 104 : index
    %725 = vector.load %arg20[%c0_192, %c104_193] : memref<32x640xf32, #tpu.memory_space<vmem>>, vector<32x384xf32>
    %726 = vector.extract_strided_slice %683 {offsets = [0, 7], sizes = [32, 1], strides = [1, 1]} : vector<32x25xf32> to vector<32x1xf32>
    %727 = vector.broadcast %726 : vector<32x1xf32> to vector<32x384xf32>
    %728 = arith.mulf %727, %725 : vector<32x384xf32>
    %729 = arith.addf %720, %728 : vector<32x384xf32>
    %730 = vector.extract_strided_slice %682 {offsets = [0, 1], sizes = [32, 1], strides = [1, 1]} : vector<32x9xf32> to vector<32x1xf32>
    %731 = vector.broadcast %730 : vector<32x1xf32> to vector<32x384xf32>
    %732 = arith.mulf %731, %725 : vector<32x384xf32>
    %733 = arith.addf %724, %732 : vector<32x384xf32>
    %c0_194 = arith.constant 0 : index
    %c105_195 = arith.constant 105 : index
    %734 = vector.load %arg20[%c0_194, %c105_195] : memref<32x640xf32, #tpu.memory_space<vmem>>, vector<32x384xf32>
    %735 = vector.extract_strided_slice %683 {offsets = [0, 8], sizes = [32, 1], strides = [1, 1]} : vector<32x25xf32> to vector<32x1xf32>
    %736 = vector.broadcast %735 : vector<32x1xf32> to vector<32x384xf32>
    %737 = arith.mulf %736, %734 : vector<32x384xf32>
    %738 = arith.addf %729, %737 : vector<32x384xf32>
    %739 = vector.extract_strided_slice %682 {offsets = [0, 2], sizes = [32, 1], strides = [1, 1]} : vector<32x9xf32> to vector<32x1xf32>
    %740 = vector.broadcast %739 : vector<32x1xf32> to vector<32x384xf32>
    %741 = arith.mulf %740, %734 : vector<32x384xf32>
    %742 = arith.addf %733, %741 : vector<32x384xf32>
    %c0_196 = arith.constant 0 : index
    %c106_197 = arith.constant 106 : index
    %743 = vector.load %arg20[%c0_196, %c106_197] : memref<32x640xf32, #tpu.memory_space<vmem>>, vector<32x384xf32>
    %744 = vector.extract_strided_slice %683 {offsets = [0, 9], sizes = [32, 1], strides = [1, 1]} : vector<32x25xf32> to vector<32x1xf32>
    %745 = vector.broadcast %744 : vector<32x1xf32> to vector<32x384xf32>
    %746 = arith.mulf %745, %743 : vector<32x384xf32>
    %747 = arith.addf %738, %746 : vector<32x384xf32>
    %c0_198 = arith.constant 0 : index
    %c126_199 = arith.constant 126 : index
    %748 = vector.load %arg20[%c0_198, %c126_199] : memref<32x640xf32, #tpu.memory_space<vmem>>, vector<32x384xf32>
    %749 = vector.extract_strided_slice %683 {offsets = [0, 10], sizes = [32, 1], strides = [1, 1]} : vector<32x25xf32> to vector<32x1xf32>
    %750 = vector.broadcast %749 : vector<32x1xf32> to vector<32x384xf32>
    %751 = arith.mulf %750, %748 : vector<32x384xf32>
    %752 = arith.addf %747, %751 : vector<32x384xf32>
    %c0_200 = arith.constant 0 : index
    %c127_201 = arith.constant 127 : index
    %753 = vector.load %arg20[%c0_200, %c127_201] : memref<32x640xf32, #tpu.memory_space<vmem>>, vector<32x384xf32>
    %754 = vector.extract_strided_slice %683 {offsets = [0, 11], sizes = [32, 1], strides = [1, 1]} : vector<32x25xf32> to vector<32x1xf32>
    %755 = vector.broadcast %754 : vector<32x1xf32> to vector<32x384xf32>
    %756 = arith.mulf %755, %753 : vector<32x384xf32>
    %757 = arith.addf %752, %756 : vector<32x384xf32>
    %758 = vector.extract_strided_slice %682 {offsets = [0, 3], sizes = [32, 1], strides = [1, 1]} : vector<32x9xf32> to vector<32x1xf32>
    %759 = vector.broadcast %758 : vector<32x1xf32> to vector<32x384xf32>
    %760 = arith.mulf %759, %753 : vector<32x384xf32>
    %761 = arith.addf %742, %760 : vector<32x384xf32>
    %c0_202 = arith.constant 0 : index
    %c128_203 = arith.constant 128 : index
    %762 = vector.load %arg20[%c0_202, %c128_203] : memref<32x640xf32, #tpu.memory_space<vmem>>, vector<32x384xf32>
    %763 = vector.extract_strided_slice %683 {offsets = [0, 12], sizes = [32, 1], strides = [1, 1]} : vector<32x25xf32> to vector<32x1xf32>
    %764 = vector.broadcast %763 : vector<32x1xf32> to vector<32x384xf32>
    %765 = arith.mulf %764, %762 : vector<32x384xf32>
    %766 = arith.addf %757, %765 : vector<32x384xf32>
    %767 = vector.extract_strided_slice %682 {offsets = [0, 4], sizes = [32, 1], strides = [1, 1]} : vector<32x9xf32> to vector<32x1xf32>
    %768 = vector.broadcast %767 : vector<32x1xf32> to vector<32x384xf32>
    %769 = arith.mulf %768, %762 : vector<32x384xf32>
    %770 = arith.addf %761, %769 : vector<32x384xf32>
    %c0_204 = arith.constant 0 : index
    %c129_205 = arith.constant 129 : index
    %771 = vector.load %arg20[%c0_204, %c129_205] : memref<32x640xf32, #tpu.memory_space<vmem>>, vector<32x384xf32>
    %772 = vector.extract_strided_slice %683 {offsets = [0, 13], sizes = [32, 1], strides = [1, 1]} : vector<32x25xf32> to vector<32x1xf32>
    %773 = vector.broadcast %772 : vector<32x1xf32> to vector<32x384xf32>
    %774 = arith.mulf %773, %771 : vector<32x384xf32>
    %775 = arith.addf %766, %774 : vector<32x384xf32>
    %776 = vector.extract_strided_slice %682 {offsets = [0, 5], sizes = [32, 1], strides = [1, 1]} : vector<32x9xf32> to vector<32x1xf32>
    %777 = vector.broadcast %776 : vector<32x1xf32> to vector<32x384xf32>
    %778 = arith.mulf %777, %771 : vector<32x384xf32>
    %779 = arith.addf %770, %778 : vector<32x384xf32>
    %c0_206 = arith.constant 0 : index
    %c130_207 = arith.constant 130 : index
    %780 = vector.load %arg20[%c0_206, %c130_207] : memref<32x640xf32, #tpu.memory_space<vmem>>, vector<32x384xf32>
    %781 = vector.extract_strided_slice %683 {offsets = [0, 14], sizes = [32, 1], strides = [1, 1]} : vector<32x25xf32> to vector<32x1xf32>
    %782 = vector.broadcast %781 : vector<32x1xf32> to vector<32x384xf32>
    %783 = arith.mulf %782, %780 : vector<32x384xf32>
    %784 = arith.addf %775, %783 : vector<32x384xf32>
    %c0_208 = arith.constant 0 : index
    %c150_209 = arith.constant 150 : index
    %785 = vector.load %arg20[%c0_208, %c150_209] : memref<32x640xf32, #tpu.memory_space<vmem>>, vector<32x384xf32>
    %786 = vector.extract_strided_slice %683 {offsets = [0, 15], sizes = [32, 1], strides = [1, 1]} : vector<32x25xf32> to vector<32x1xf32>
    %787 = vector.broadcast %786 : vector<32x1xf32> to vector<32x384xf32>
    %788 = arith.mulf %787, %785 : vector<32x384xf32>
    %789 = arith.addf %784, %788 : vector<32x384xf32>
    %c0_210 = arith.constant 0 : index
    %c151_211 = arith.constant 151 : index
    %790 = vector.load %arg20[%c0_210, %c151_211] : memref<32x640xf32, #tpu.memory_space<vmem>>, vector<32x384xf32>
    %791 = vector.extract_strided_slice %683 {offsets = [0, 16], sizes = [32, 1], strides = [1, 1]} : vector<32x25xf32> to vector<32x1xf32>
    %792 = vector.broadcast %791 : vector<32x1xf32> to vector<32x384xf32>
    %793 = arith.mulf %792, %790 : vector<32x384xf32>
    %794 = arith.addf %789, %793 : vector<32x384xf32>
    %795 = vector.extract_strided_slice %682 {offsets = [0, 6], sizes = [32, 1], strides = [1, 1]} : vector<32x9xf32> to vector<32x1xf32>
    %796 = vector.broadcast %795 : vector<32x1xf32> to vector<32x384xf32>
    %797 = arith.mulf %796, %790 : vector<32x384xf32>
    %798 = arith.addf %779, %797 : vector<32x384xf32>
    %c0_212 = arith.constant 0 : index
    %c152_213 = arith.constant 152 : index
    %799 = vector.load %arg20[%c0_212, %c152_213] : memref<32x640xf32, #tpu.memory_space<vmem>>, vector<32x384xf32>
    %800 = vector.extract_strided_slice %683 {offsets = [0, 17], sizes = [32, 1], strides = [1, 1]} : vector<32x25xf32> to vector<32x1xf32>
    %801 = vector.broadcast %800 : vector<32x1xf32> to vector<32x384xf32>
    %802 = arith.mulf %801, %799 : vector<32x384xf32>
    %803 = arith.addf %794, %802 : vector<32x384xf32>
    %804 = vector.extract_strided_slice %682 {offsets = [0, 7], sizes = [32, 1], strides = [1, 1]} : vector<32x9xf32> to vector<32x1xf32>
    %805 = vector.broadcast %804 : vector<32x1xf32> to vector<32x384xf32>
    %806 = arith.mulf %805, %799 : vector<32x384xf32>
    %807 = arith.addf %798, %806 : vector<32x384xf32>
    %c0_214 = arith.constant 0 : index
    %c153_215 = arith.constant 153 : index
    %808 = vector.load %arg20[%c0_214, %c153_215] : memref<32x640xf32, #tpu.memory_space<vmem>>, vector<32x384xf32>
    %809 = vector.extract_strided_slice %683 {offsets = [0, 18], sizes = [32, 1], strides = [1, 1]} : vector<32x25xf32> to vector<32x1xf32>
    %810 = vector.broadcast %809 : vector<32x1xf32> to vector<32x384xf32>
    %811 = arith.mulf %810, %808 : vector<32x384xf32>
    %812 = arith.addf %803, %811 : vector<32x384xf32>
    %813 = vector.extract_strided_slice %682 {offsets = [0, 8], sizes = [32, 1], strides = [1, 1]} : vector<32x9xf32> to vector<32x1xf32>
    %814 = vector.broadcast %813 : vector<32x1xf32> to vector<32x384xf32>
    %815 = arith.mulf %814, %808 : vector<32x384xf32>
    %816 = arith.addf %807, %815 : vector<32x384xf32>
    %c0_216 = arith.constant 0 : index
    %c154_217 = arith.constant 154 : index
    %817 = vector.load %arg20[%c0_216, %c154_217] : memref<32x640xf32, #tpu.memory_space<vmem>>, vector<32x384xf32>
    %818 = vector.extract_strided_slice %683 {offsets = [0, 19], sizes = [32, 1], strides = [1, 1]} : vector<32x25xf32> to vector<32x1xf32>
    %819 = vector.broadcast %818 : vector<32x1xf32> to vector<32x384xf32>
    %820 = arith.mulf %819, %817 : vector<32x384xf32>
    %821 = arith.addf %812, %820 : vector<32x384xf32>
    %c0_218 = arith.constant 0 : index
    %c174_219 = arith.constant 174 : index
    %822 = vector.load %arg20[%c0_218, %c174_219] : memref<32x640xf32, #tpu.memory_space<vmem>>, vector<32x384xf32>
    %823 = vector.extract_strided_slice %683 {offsets = [0, 20], sizes = [32, 1], strides = [1, 1]} : vector<32x25xf32> to vector<32x1xf32>
    %824 = vector.broadcast %823 : vector<32x1xf32> to vector<32x384xf32>
    %825 = arith.mulf %824, %822 : vector<32x384xf32>
    %826 = arith.addf %821, %825 : vector<32x384xf32>
    %c0_220 = arith.constant 0 : index
    %c175_221 = arith.constant 175 : index
    %827 = vector.load %arg20[%c0_220, %c175_221] : memref<32x640xf32, #tpu.memory_space<vmem>>, vector<32x384xf32>
    %828 = vector.extract_strided_slice %683 {offsets = [0, 21], sizes = [32, 1], strides = [1, 1]} : vector<32x25xf32> to vector<32x1xf32>
    %829 = vector.broadcast %828 : vector<32x1xf32> to vector<32x384xf32>
    %830 = arith.mulf %829, %827 : vector<32x384xf32>
    %831 = arith.addf %826, %830 : vector<32x384xf32>
    %c0_222 = arith.constant 0 : index
    %c176_223 = arith.constant 176 : index
    %832 = vector.load %arg20[%c0_222, %c176_223] : memref<32x640xf32, #tpu.memory_space<vmem>>, vector<32x384xf32>
    %833 = vector.extract_strided_slice %683 {offsets = [0, 22], sizes = [32, 1], strides = [1, 1]} : vector<32x25xf32> to vector<32x1xf32>
    %834 = vector.broadcast %833 : vector<32x1xf32> to vector<32x384xf32>
    %835 = arith.mulf %834, %832 : vector<32x384xf32>
    %836 = arith.addf %831, %835 : vector<32x384xf32>
    %c0_224 = arith.constant 0 : index
    %c177_225 = arith.constant 177 : index
    %837 = vector.load %arg20[%c0_224, %c177_225] : memref<32x640xf32, #tpu.memory_space<vmem>>, vector<32x384xf32>
    %838 = vector.extract_strided_slice %683 {offsets = [0, 23], sizes = [32, 1], strides = [1, 1]} : vector<32x25xf32> to vector<32x1xf32>
    %839 = vector.broadcast %838 : vector<32x1xf32> to vector<32x384xf32>
    %840 = arith.mulf %839, %837 : vector<32x384xf32>
    %841 = arith.addf %836, %840 : vector<32x384xf32>
    %c0_226 = arith.constant 0 : index
    %c178_227 = arith.constant 178 : index
    %842 = vector.load %arg20[%c0_226, %c178_227] : memref<32x640xf32, #tpu.memory_space<vmem>>, vector<32x384xf32>
    %843 = vector.extract_strided_slice %683 {offsets = [0, 24], sizes = [32, 1], strides = [1, 1]} : vector<32x25xf32> to vector<32x1xf32>
    %844 = vector.broadcast %843 : vector<32x1xf32> to vector<32x384xf32>
    %845 = arith.mulf %844, %842 : vector<32x384xf32>
    %846 = arith.addf %841, %845 : vector<32x384xf32>
    %c0_228 = arith.constant 0 : index
    %c0_229 = arith.constant 0 : index
    %847 = vector.load %arg11[%c0_228, %c0_229] : memref<32x1xf32, #tpu.memory_space<vmem>>, vector<32x1xf32>
    %848 = vector.broadcast %847 : vector<32x1xf32> to vector<32x384xf32>
    %849 = arith.addf %816, %848 : vector<32x384xf32>
    %cst_230 = arith.constant 0.000000e+00 : f32
    %850 = vector.broadcast %cst_230 : f32 to vector<32x384xf32>
    %851 = arith.maximumf %849, %850 : vector<32x384xf32>
    %c0_231 = arith.constant 0 : index
    %c0_232 = arith.constant 0 : index
    %852 = vector.load %arg13[%c0_231, %c0_232] : memref<32x1xf32, #tpu.memory_space<vmem>>, vector<32x1xf32>
    %853 = vector.broadcast %852 : vector<32x1xf32> to vector<32x384xf32>
    %854 = arith.addf %846, %853 : vector<32x384xf32>
    %cst_233 = arith.constant 0.000000e+00 : f32
    %855 = vector.broadcast %cst_233 : f32 to vector<32x384xf32>
    %856 = arith.maximumf %854, %855 : vector<32x384xf32>
    %c0_234 = arith.constant 0 : index
    %c0_235 = arith.constant 0 : index
    %c0_236 = arith.constant 0 : index
    %857 = vector.load %arg19[%c0_234, %c0_235, %c0_236] : memref<1x32x384xf32, #tpu.memory_space<vmem>>, vector<1x32x384xf32>
    %858 = vector.shape_cast %857 : vector<1x32x384xf32> to vector<32x384xf32>
    %c0_237 = arith.constant 0 : index
    %c0_238 = arith.constant 0 : index
    %859 = vector.load %arg15[%c0_237, %c0_238] : memref<32x32xbf16, #tpu.memory_space<vmem>>, vector<32x32xbf16>
    %860 = arith.truncf %851 : vector<32x384xf32> to vector<32x384xbf16>
    %cst_239 = arith.constant dense<0.000000e+00> : vector<32x384xf32>
    %861 = tpu.matmul %859, %860, %cst_239 {dimension_numbers = #tpu.dot_dimension_numbers<[1], [0], [0], [1], [0, 0, 1, 1], [], []>} : vector<32x32xbf16>, vector<32x384xbf16>, vector<32x384xf32> -> vector<32x384xf32>
    %862 = arith.addf %858, %861 : vector<32x384xf32>
    %c0_240 = arith.constant 0 : index
    %c0_241 = arith.constant 0 : index
    %863 = vector.load %arg16[%c0_240, %c0_241] : memref<32x32xbf16, #tpu.memory_space<vmem>>, vector<32x32xbf16>
    %864 = arith.truncf %856 : vector<32x384xf32> to vector<32x384xbf16>
    %cst_242 = arith.constant dense<0.000000e+00> : vector<32x384xf32>
    %865 = tpu.matmul %863, %864, %cst_242 {dimension_numbers = #tpu.dot_dimension_numbers<[1], [0], [0], [1], [0, 0, 1, 1], [], []>} : vector<32x32xbf16>, vector<32x384xbf16>, vector<32x384xf32> -> vector<32x384xf32>
    %866 = arith.addf %862, %865 : vector<32x384xf32>
    %c0_243 = arith.constant 0 : index
    %c0_244 = arith.constant 0 : index
    %867 = vector.load %arg17[%c0_243, %c0_244] : memref<32x1xf32, #tpu.memory_space<vmem>>, vector<32x1xf32>
    %868 = vector.broadcast %867 : vector<32x1xf32> to vector<32x384xf32>
    %869 = arith.mulf %866, %868 : vector<32x384xf32>
    %c0_245 = arith.constant 0 : index
    %c0_246 = arith.constant 0 : index
    %870 = vector.load %arg18[%c0_245, %c0_246] : memref<32x1xf32, #tpu.memory_space<vmem>>, vector<32x1xf32>
    %871 = vector.broadcast %870 : vector<32x1xf32> to vector<32x384xf32>
    %872 = arith.addf %869, %871 : vector<32x384xf32>
    %c0_247 = arith.constant 0 : index
    %c0_248 = arith.constant 0 : index
    %c0_249 = arith.constant 0 : index
    %873 = vector.load %arg19[%c0_247, %c0_248, %c0_249] : memref<1x32x384xf32, #tpu.memory_space<vmem>>, vector<1x32x384xf32>
    %874 = vector.shape_cast %873 : vector<1x32x384xf32> to vector<32x384xf32>
    %875 = vector.shape_cast %872 : vector<32x384xf32> to vector<1x32x384xf32>
    tpu.vector_store %arg19[%c0_247, %c0_248, %c0_249], %875 {strides = array<i32>} : memref<1x32x384xf32, #tpu.memory_space<vmem>>, vector<1x32x384xf32>,
    return
  }
  func.func @transform_0(%arg0: i32) -> (i32, i32, i32) {
    %c0_i32 = arith.constant 0 : i32
    %c0_i32_0 = arith.constant 0 : i32
    %c0_i32_1 = arith.constant 0 : i32
    return %arg0, %c0_i32, %c0_i32_0 : i32, i32, i32
  }
  func.func @transform_1(%arg0: i32) -> (i32, i32) {
    %c0_i32 = arith.constant 0 : i32
    %c0_i32_0 = arith.constant 0 : i32
    %c0_i32_1 = arith.constant 0 : i32
    return %c0_i32, %c0_i32_0 : i32, i32
  }
  func.func @transform_2(%arg0: i32) -> (i32, i32) {
    %c0_i32 = arith.constant 0 : i32
    %c0_i32_0 = arith.constant 0 : i32
    %c0_i32_1 = arith.constant 0 : i32
    return %c0_i32, %c0_i32_0 : i32, i32
  }
  func.func @transform_3(%arg0: i32) -> (i32, i32) {
    %c0_i32 = arith.constant 0 : i32
    %c0_i32_0 = arith.constant 0 : i32
    %c0_i32_1 = arith.constant 0 : i32
    return %c0_i32, %c0_i32_0 : i32, i32
  }
  func.func @transform_4(%arg0: i32) -> (i32, i32) {
    %c0_i32 = arith.constant 0 : i32
    %c0_i32_0 = arith.constant 0 : i32
    %c0_i32_1 = arith.constant 0 : i32
    return %c0_i32, %c0_i32_0 : i32, i32
  }
  func.func @transform_5(%arg0: i32) -> (i32, i32) {
    %c0_i32 = arith.constant 0 : i32
    %c0_i32_0 = arith.constant 0 : i32
    %c0_i32_1 = arith.constant 0 : i32
    return %c0_i32, %c0_i32_0 : i32, i32
  }
  func.func @transform_6(%arg0: i32) -> (i32, i32) {
    %c0_i32 = arith.constant 0 : i32
    %c0_i32_0 = arith.constant 0 : i32
    %c0_i32_1 = arith.constant 0 : i32
    return %c0_i32, %c0_i32_0 : i32, i32
  }
  func.func @transform_7(%arg0: i32) -> (i32, i32) {
    %c0_i32 = arith.constant 0 : i32
    %c0_i32_0 = arith.constant 0 : i32
    %c0_i32_1 = arith.constant 0 : i32
    return %c0_i32, %c0_i32_0 : i32, i32
  }
  func.func @transform_8(%arg0: i32) -> (i32, i32) {
    %c0_i32 = arith.constant 0 : i32
    %c0_i32_0 = arith.constant 0 : i32
    %c0_i32_1 = arith.constant 0 : i32
    return %c0_i32, %c0_i32_0 : i32, i32
  }
  func.func @transform_9(%arg0: i32) -> (i32, i32) {
    %c0_i32 = arith.constant 0 : i32
    %c0_i32_0 = arith.constant 0 : i32
    %c0_i32_1 = arith.constant 0 : i32
    return %c0_i32, %c0_i32_0 : i32, i32
  }
  func.func @transform_10(%arg0: i32) -> (i32, i32) {
    %c0_i32 = arith.constant 0 : i32
    %c0_i32_0 = arith.constant 0 : i32
    %c0_i32_1 = arith.constant 0 : i32
    return %c0_i32, %c0_i32_0 : i32, i32
  }
  func.func @transform_11(%arg0: i32) -> (i32, i32) {
    %c0_i32 = arith.constant 0 : i32
    %c0_i32_0 = arith.constant 0 : i32
    %c0_i32_1 = arith.constant 0 : i32
    return %c0_i32, %c0_i32_0 : i32, i32
  }
  func.func @transform_12(%arg0: i32) -> (i32, i32) {
    %c0_i32 = arith.constant 0 : i32
    %c0_i32_0 = arith.constant 0 : i32
    %c0_i32_1 = arith.constant 0 : i32
    return %c0_i32, %c0_i32_0 : i32, i32
  }
  func.func @transform_13(%arg0: i32) -> (i32, i32) {
    %c0_i32 = arith.constant 0 : i32
    %c0_i32_0 = arith.constant 0 : i32
    %c0_i32_1 = arith.constant 0 : i32
    return %c0_i32, %c0_i32_0 : i32, i32
  }
  func.func @transform_14(%arg0: i32) -> (i32, i32) {
    %c0_i32 = arith.constant 0 : i32
    %c0_i32_0 = arith.constant 0 : i32
    %c0_i32_1 = arith.constant 0 : i32
    return %c0_i32, %c0_i32_0 : i32, i32
  }
  func.func @transform_15(%arg0: i32) -> (i32, i32) {
    %c0_i32 = arith.constant 0 : i32
    %c0_i32_0 = arith.constant 0 : i32
    %c0_i32_1 = arith.constant 0 : i32
    return %c0_i32, %c0_i32_0 : i32, i32
  }
  func.func @transform_16(%arg0: i32) -> (i32, i32) {
    %c0_i32 = arith.constant 0 : i32
    %c0_i32_0 = arith.constant 0 : i32
    %c0_i32_1 = arith.constant 0 : i32
    return %c0_i32, %c0_i32_0 : i32, i32
  }
  func.func @transform_17(%arg0: i32) -> (i32, i32) {
    %c0_i32 = arith.constant 0 : i32
    %c0_i32_0 = arith.constant 0 : i32
    %c0_i32_1 = arith.constant 0 : i32
    return %c0_i32, %c0_i32_0 : i32, i32
  }
  func.func @transform_18(%arg0: i32) -> (i32, i32, i32) {
    %c0_i32 = arith.constant 0 : i32
    %c0_i32_0 = arith.constant 0 : i32
    %c0_i32_1 = arith.constant 0 : i32
    return %arg0, %c0_i32, %c0_i32_0 : i32, i32, i32
  }
}

</mosaic_0001>

<llo_original>
// kernel: tpu_custom_call.1
$region0: #{tpu_custom_call.1}
  #allocation0 [shape = 'u32[]', space=smem, size = 0x4, offset = 0x4, fixed_abs, tag = 'smem constant byte address 0x4 - core index']
  #allocation1 [shape = 'u32[72,128]{1,0:T(1,128)}', space=vmem, size = 0x9000, scoped, tag = 'internal scratch']
  #allocation2 [shape = 'f32[32,640]{1,0:T(8,128)}', space=vmem, size = 0x14000, scoped, tag = 'scratch operand']
  #allocation3 [shape = 'f32[2,640]{1,0:T(2,128)}', space=vmem, size = 0x1400, scoped, tag = 'scratch operand']
  %s0 = inlined_call_operand.hbm [shape: f32[2,32,384], index: 0, kind: input, shape index: {}]
  %s1 = inlined_call_operand.vmem [shape: f32[1,384], index: 1, kind: input, shape index: {}]
  %s2 = inlined_call_operand.vmem [shape: f32[2,32], index: 2, kind: input, shape index: {}]
  %s3 = inlined_call_operand.vmem [shape: f32[2,1], index: 3, kind: input, shape index: {}]
  %s4 = inlined_call_operand.vmem [shape: f32[32,2], index: 4, kind: input, shape index: {}]
  %s5 = inlined_call_operand.vmem [shape: f32[32,1], index: 5, kind: input, shape index: {}]
  %s6 = inlined_call_operand.vmem [shape: f32[2,121], index: 6, kind: input, shape index: {}]
  %s7 = inlined_call_operand.vmem [shape: f32[32,1], index: 7, kind: input, shape index: {}]
  %s8 = inlined_call_operand.vmem [shape: f32[32,1], index: 8, kind: input, shape index: {}]
  %s9 = inlined_call_operand.vmem [shape: f32[32,9], index: 9, kind: input, shape index: {}]
  %s10 = inlined_call_operand.vmem [shape: f32[32,1], index: 10, kind: input, shape index: {}]
  %s11 = inlined_call_operand.vmem [shape: f32[32,25], index: 11, kind: input, shape index: {}]
  %s12 = inlined_call_operand.vmem [shape: f32[32,1], index: 12, kind: input, shape index: {}]
  %s13 = inlined_call_operand.vmem [shape: bf16[32,32], index: 13, kind: input, shape index: {}]
  %s14 = inlined_call_operand.vmem [shape: bf16[32,32], index: 14, kind: input, shape index: {}]
  %s15 = inlined_call_operand.vmem [shape: bf16[32,32], index: 15, kind: input, shape index: {}]
  %s16 = inlined_call_operand.vmem [shape: f32[32,1], index: 16, kind: input, shape index: {}]
  %s17 = inlined_call_operand.vmem [shape: f32[32,1], index: 17, kind: input, shape index: {}]
  %s18 = inlined_call_operand.hbm [shape: f32[2,32,384], index: 18, kind: output, shape index: {}]
  %s19 = sld [smem:[#allocation0]]
  $region109: #{tpu_custom_call.1} parent=0
    _
  %s21 = ssub.s32 1, %s19
  %s22 = scalar_select 0, %s21, %s19
  $region1: #{tpu_custom_call.1} parent=0
    #allocation4 [shape = 'u8[98304]{0}', space=vmem, size = 0x18000, scoped, tag = 'input window, operand 0']
    #allocation5 [shape = 's32[2]{0}', space=sflag, size = 0x8, scoped, tag = 'scoped memory for tpu_custom_call.1']
    #allocation6 [shape = 's32[2]{0}', space=sflag, size = 0x8, scoped, tag = 'scoped memory for tpu_custom_call.1']
    #allocation7 [shape = 'u8[98304]{0}', space=vmem, size = 0x18000, scoped, tag = 'output window, operand 0']
    %23 = vsyncpa [#allocation5], 0
    %s24 = scalar_lea.sflag [#allocation5], 1
    %25 = vsyncpa %s24, 0
    %26 = vsyncpa [#allocation6], 0
    %s27 = scalar_lea.sflag [#allocation6], 1
    %28 = vsyncpa %s27, 0
    loop: start=0, step=1, limit=4
    $region2: #{tpu_custom_call.1} parent=1 // loop_pre_header
      _
    $region3: #{tpu_custom_call.1} parent=1 // loop_header
      %s30 = sphi 0, %s34
      %p31 = scmp.ge.s32.totalorder %s30, 4
      %s40 = sphi 0, %s42
      %s43 = sphi 0, %s40
      %s44 = sphi 0, %s43
      %s60 = sphi 0, %s44
      %s64 = sphi 0, %s64
      %s66 = sphi 0, %s64
      %s67 = sphi 0, %s66
      %s81 = sphi 0, %s67
      %s85 = sphi 0, %s85
      %s87 = sphi 0, %s85
      %s88 = sphi 0, %s87
      %s102 = sphi 0, %s88
      %s106 = sphi 0, %s106
      %s108 = sphi 0, %s106
      %s109 = sphi 0, %s108
      %s123 = sphi 0, %s109
      %s127 = sphi 0, %s127
      %s129 = sphi 0, %s127
      %s130 = sphi 0, %s129
      %s144 = sphi 0, %s130
      %s148 = sphi 0, %s148
      %s150 = sphi 0, %s148
      %s151 = sphi 0, %s150
      %s165 = sphi 0, %s151
      %s169 = sphi 0, %s169
      %s171 = sphi 0, %s169
      %s172 = sphi 0, %s171
      %s186 = sphi 0, %s172
      %s190 = sphi 0, %s190
      %s192 = sphi 0, %s190
      %s193 = sphi 0, %s192
      %s207 = sphi 0, %s193
      %s211 = sphi 0, %s211
      %s213 = sphi 0, %s211
      %s214 = sphi 0, %s213
      %s228 = sphi 0, %s214
      %s232 = sphi 0, %s232
      %s234 = sphi 0, %s232
      %s235 = sphi 0, %s234
      %s249 = sphi 0, %s235
      %s253 = sphi 0, %s253
      %s255 = sphi 0, %s253
      %s256 = sphi 0, %s255
      %s270 = sphi 0, %s256
      %s274 = sphi 0, %s274
      %s276 = sphi 0, %s274
      %s277 = sphi 0, %s276
      %s291 = sphi 0, %s277
      %s295 = sphi 0, %s295
      %s297 = sphi 0, %s295
      %s298 = sphi 0, %s297
      %s312 = sphi 0, %s298
      %s316 = sphi 0, %s316
      %s318 = sphi 0, %s316
      %s319 = sphi 0, %s318
      %s333 = sphi 0, %s319
      %s337 = sphi 0, %s337
      %s339 = sphi 0, %s337
      %s340 = sphi 0, %s339
      %s354 = sphi 0, %s340
      %s358 = sphi 0, %s358
      %s360 = sphi 0, %s358
      %s361 = sphi 0, %s360
      %s375 = sphi 0, %s361
      %s379 = sphi 0, %s379
      %s381 = sphi 0, %s379
      %s382 = sphi 0, %s381
      %s396 = sphi 0, %s382
      %s400 = sphi 0, %s400
      %s402 = sphi 0, %s400
      %s403 = sphi 0, %s402
      %s417 = sphi 0, %s403
      %s423 = sphi 0, %s425
      %s426 = sphi 0, %s423
      %s427 = sphi 0, %s426
      %s443 = sphi 0, %s427
    $region4: #{tpu_custom_call.1} parent=1 // loop_header_branch
      %33 = sbr.rel (%p31) target = $region8
    $region5: #{tpu_custom_call.1} parent=1 // loop_body
      %s35 = ssub.s32 %s30, 1
      %s36 = ssub.s32 %s30, 2
      %s37 = sadd.s32 %s30, 1
      %s38 = ssub.s32 %s30, %s37
      %p39 = scmp.eq.s32.totalorder %s38, 0
      %s41 = sadd.s32 %s40, 1
      %s42 = scalar_select %p39, %s40, %s41
      %p45 = pneg %p39
      %p46 = scmp.eq.s32.totalorder %s30, 1
      %p47 = por %p45, %p46
      %p48 = scmp.ne.s32.totalorder %s40, %s43
      %p49 = scmp.eq.s32.totalorder %s30, 0
      %p50 = por %p48, %p49
      %p51 = scmp.ne.s32.totalorder %s40, %s43
      %p52 = scmp.eq.s32.totalorder %s35, 1
      %p53 = por %p51, %p52
      %p54 = scmp.ne.s32.totalorder %s43, %s44
      %p55 = scmp.eq.s32.totalorder %s35, 0
      %p56 = por %p54, %p55
      %p57 = scmp.ne.s32.totalorder %s43, %s44
      %p58 = scmp.eq.s32.totalorder %s36, 1
      %p59 = por %p57, %p58
      %p61 = scmp.ne.s32.totalorder %s44, %s60
      %p62 = scmp.eq.s32.totalorder %s36, 0
      %p63 = por %p61, %p62
      %s65 = sadd.s32 %s64, 1
      %p68 = scmp.eq.s32.totalorder %s30, 1
      %p69 = scmp.ne.s32.totalorder %s64, %s66
      %p70 = scmp.eq.s32.totalorder %s30, 0
      %p71 = por %p69, %p70
      %p72 = scmp.ne.s32.totalorder %s64, %s66
      %p73 = scmp.eq.s32.totalorder %s35, 1
      %p74 = por %p72, %p73
      %p75 = scmp.ne.s32.totalorder %s66, %s67
      %p76 = scmp.eq.s32.totalorder %s35, 0
      %p77 = por %p75, %p76
      %p78 = scmp.ne.s32.totalorder %s66, %s67
      %p79 = scmp.eq.s32.totalorder %s36, 1
      %p80 = por %p78, %p79
      %p82 = scmp.ne.s32.totalorder %s67, %s81
      %p83 = scmp.eq.s32.totalorder %s36, 0
      %p84 = por %p82, %p83
      %s86 = sadd.s32 %s85, 1
      %p89 = scmp.eq.s32.totalorder %s30, 1
      %p90 = scmp.ne.s32.totalorder %s85, %s87
      %p91 = scmp.eq.s32.totalorder %s30, 0
      %p92 = por %p90, %p91
      %p93 = scmp.ne.s32.totalorder %s85, %s87
      %p94 = scmp.eq.s32.totalorder %s35, 1
      %p95 = por %p93, %p94
      %p96 = scmp.ne.s32.totalorder %s87, %s88
      %p97 = scmp.eq.s32.totalorder %s35, 0
      %p98 = por %p96, %p97
      %p99 = scmp.ne.s32.totalorder %s87, %s88
      %p100 = scmp.eq.s32.totalorder %s36, 1
      %p101 = por %p99, %p100
      %p103 = scmp.ne.s32.totalorder %s88, %s102
      %p104 = scmp.eq.s32.totalorder %s36, 0
      %p105 = por %p103, %p104
      %s107 = sadd.s32 %s106, 1
      %p110 = scmp.eq.s32.totalorder %s30, 1
      %p111 = scmp.ne.s32.totalorder %s106, %s108
      %p112 = scmp.eq.s32.totalorder %s30, 0
      %p113 = por %p111, %p112
      %p114 = scmp.ne.s32.totalorder %s106, %s108
      %p115 = scmp.eq.s32.totalorder %s35, 1
      %p116 = por %p114, %p115
      %p117 = scmp.ne.s32.totalorder %s108, %s109
      %p118 = scmp.eq.s32.totalorder %s35, 0
      %p119 = por %p117, %p118
      %p120 = scmp.ne.s32.totalorder %s108, %s109
      %p121 = scmp.eq.s32.totalorder %s36, 1
      %p122 = por %p120, %p121
      %p124 = scmp.ne.s32.totalorder %s109, %s123
      %p125 = scmp.eq.s32.totalorder %s36, 0
      %p126 = por %p124, %p125
      %s128 = sadd.s32 %s127, 1
      %p131 = scmp.eq.s32.totalorder %s30, 1
      %p132 = scmp.ne.s32.totalorder %s127, %s129
      %p133 = scmp.eq.s32.totalorder %s30, 0
      %p134 = por %p132, %p133
      %p135 = scmp.ne.s32.totalorder %s127, %s129
      %p136 = scmp.eq.s32.totalorder %s35, 1
      %p137 = por %p135, %p136
      %p138 = scmp.ne.s32.totalorder %s129, %s130
      %p139 = scmp.eq.s32.totalorder %s35, 0
      %p140 = por %p138, %p139
      %p141 = scmp.ne.s32.totalorder %s129, %s130
      %p142 = scmp.eq.s32.totalorder %s36, 1
      %p143 = por %p141, %p142
      %p145 = scmp.ne.s32.totalorder %s130, %s144
      %p146 = scmp.eq.s32.totalorder %s36, 0
      %p147 = por %p145, %p146
      %s149 = sadd.s32 %s148, 1
      %p152 = scmp.eq.s32.totalorder %s30, 1
      %p153 = scmp.ne.s32.totalorder %s148, %s150
      %p154 = scmp.eq.s32.totalorder %s30, 0
      %p155 = por %p153, %p154
      %p156 = scmp.ne.s32.totalorder %s148, %s150
      %p157 = scmp.eq.s32.totalorder %s35, 1
      %p158 = por %p156, %p157
      %p159 = scmp.ne.s32.totalorder %s150, %s151
      %p160 = scmp.eq.s32.totalorder %s35, 0
      %p161 = por %p159, %p160
      %p162 = scmp.ne.s32.totalorder %s150, %s151
      %p163 = scmp.eq.s32.totalorder %s36, 1
      %p164 = por %p162, %p163
      %p166 = scmp.ne.s32.totalorder %s151, %s165
      %p167 = scmp.eq.s32.totalorder %s36, 0
      %p168 = por %p166, %p167
      %s170 = sadd.s32 %s169, 1
      %p173 = scmp.eq.s32.totalorder %s30, 1
      %p174 = scmp.ne.s32.totalorder %s169, %s171
      %p175 = scmp.eq.s32.totalorder %s30, 0
      %p176 = por %p174, %p175
      %p177 = scmp.ne.s32.totalorder %s169, %s171
      %p178 = scmp.eq.s32.totalorder %s35, 1
      %p179 = por %p177, %p178
      %p180 = scmp.ne.s32.totalorder %s171, %s172
      %p181 = scmp.eq.s32.totalorder %s35, 0
      %p182 = por %p180, %p181
      %p183 = scmp.ne.s32.totalorder %s171, %s172
      %p184 = scmp.eq.s32.totalorder %s36, 1
      %p185 = por %p183, %p184
      %p187 = scmp.ne.s32.totalorder %s172, %s186
      %p188 = scmp.eq.s32.totalorder %s36, 0
      %p189 = por %p187, %p188
      %s191 = sadd.s32 %s190, 1
      %p194 = scmp.eq.s32.totalorder %s30, 1
      %p195 = scmp.ne.s32.totalorder %s190, %s192
      %p196 = scmp.eq.s32.totalorder %s30, 0
      %p197 = por %p195, %p196
      %p198 = scmp.ne.s32.totalorder %s190, %s192
      %p199 = scmp.eq.s32.totalorder %s35, 1
      %p200 = por %p198, %p199
      %p201 = scmp.ne.s32.totalorder %s192, %s193
      %p202 = scmp.eq.s32.totalorder %s35, 0
      %p203 = por %p201, %p202
      %p204 = scmp.ne.s32.totalorder %s192, %s193
      %p205 = scmp.eq.s32.totalorder %s36, 1
      %p206 = por %p204, %p205
      %p208 = scmp.ne.s32.totalorder %s193, %s207
      %p209 = scmp.eq.s32.totalorder %s36, 0
      %p210 = por %p208, %p209
      %s212 = sadd.s32 %s211, 1
      %p215 = scmp.eq.s32.totalorder %s30, 1
      %p216 = scmp.ne.s32.totalorder %s211, %s213
      %p217 = scmp.eq.s32.totalorder %s30, 0
      %p218 = por %p216, %p217
      %p219 = scmp.ne.s32.totalorder %s211, %s213
      %p220 = scmp.eq.s32.totalorder %s35, 1
      %p221 = por %p219, %p220
      %p222 = scmp.ne.s32.totalorder %s213, %s214
      %p223 = scmp.eq.s32.totalorder %s35, 0
      %p224 = por %p222, %p223
      %p225 = scmp.ne.s32.totalorder %s213, %s214
      %p226 = scmp.eq.s32.totalorder %s36, 1
      %p227 = por %p225, %p226
      %p229 = scmp.ne.s32.totalorder %s214, %s228
      %p230 = scmp.eq.s32.totalorder %s36, 0
      %p231 = por %p229, %p230
      %s233 = sadd.s32 %s232, 1
      %p236 = scmp.eq.s32.totalorder %s30, 1
      %p237 = scmp.ne.s32.totalorder %s232, %s234
      %p238 = scmp.eq.s32.totalorder %s30, 0
      %p239 = por %p237, %p238
      %p240 = scmp.ne.s32.totalorder %s232, %s234
      %p241 = scmp.eq.s32.totalorder %s35, 1
      %p242 = por %p240, %p241
      %p243 = scmp.ne.s32.totalorder %s234, %s235
      %p244 = scmp.eq.s32.totalorder %s35, 0
      %p245 = por %p243, %p244
      %p246 = scmp.ne.s32.totalorder %s234, %s235
      %p247 = scmp.eq.s32.totalorder %s36, 1
      %p248 = por %p246, %p247
      %p250 = scmp.ne.s32.totalorder %s235, %s249
      %p251 = scmp.eq.s32.totalorder %s36, 0
      %p252 = por %p250, %p251
      %s254 = sadd.s32 %s253, 1
      %p257 = scmp.eq.s32.totalorder %s30, 1
      %p258 = scmp.ne.s32.totalorder %s253, %s255
      %p259 = scmp.eq.s32.totalorder %s30, 0
      %p260 = por %p258, %p259
      %p261 = scmp.ne.s32.totalorder %s253, %s255
      %p262 = scmp.eq.s32.totalorder %s35, 1
      %p263 = por %p261, %p262
      %p264 = scmp.ne.s32.totalorder %s255, %s256
      %p265 = scmp.eq.s32.totalorder %s35, 0
      %p266 = por %p264, %p265
      %p267 = scmp.ne.s32.totalorder %s255, %s256
      %p268 = scmp.eq.s32.totalorder %s36, 1
      %p269 = por %p267, %p268
      %p271 = scmp.ne.s32.totalorder %s256, %s270
      %p272 = scmp.eq.s32.totalorder %s36, 0
      %p273 = por %p271, %p272
      %s275 = sadd.s32 %s274, 1
      %p278 = scmp.eq.s32.totalorder %s30, 1
      %p279 = scmp.ne.s32.totalorder %s274, %s276
      %p280 = scmp.eq.s32.totalorder %s30, 0
      %p281 = por %p279, %p280
      %p282 = scmp.ne.s32.totalorder %s274, %s276
      %p283 = scmp.eq.s32.totalorder %s35, 1
      %p284 = por %p282, %p283
      %p285 = scmp.ne.s32.totalorder %s276, %s277
      %p286 = scmp.eq.s32.totalorder %s35, 0
      %p287 = por %p285, %p286
      %p288 = scmp.ne.s32.totalorder %s276, %s277
      %p289 = scmp.eq.s32.totalorder %s36, 1
      %p290 = por %p288, %p289
      %p292 = scmp.ne.s32.totalorder %s277, %s291
      %p293 = scmp.eq.s32.totalorder %s36, 0
      %p294 = por %p292, %p293
      %s296 = sadd.s32 %s295, 1
      %p299 = scmp.eq.s32.totalorder %s30, 1
      %p300 = scmp.ne.s32.totalorder %s295, %s297
      %p301 = scmp.eq.s32.totalorder %s30, 0
      %p302 = por %p300, %p301
      %p303 = scmp.ne.s32.totalorder %s295, %s297
      %p304 = scmp.eq.s32.totalorder %s35, 1
      %p305 = por %p303, %p304
      %p306 = scmp.ne.s32.totalorder %s297, %s298
      %p307 = scmp.eq.s32.totalorder %s35, 0
      %p308 = por %p306, %p307
      %p309 = scmp.ne.s32.totalorder %s297, %s298
      %p310 = scmp.eq.s32.totalorder %s36, 1
      %p311 = por %p309, %p310
      %p313 = scmp.ne.s32.totalorder %s298, %s312
      %p314 = scmp.eq.s32.totalorder %s36, 0
      %p315 = por %p313, %p314
      %s317 = sadd.s32 %s316, 1
      %p320 = scmp.eq.s32.totalorder %s30, 1
      %p321 = scmp.ne.s32.totalorder %s316, %s318
      %p322 = scmp.eq.s32.totalorder %s30, 0
      %p323 = por %p321, %p322
      %p324 = scmp.ne.s32.totalorder %s316, %s318
      %p325 = scmp.eq.s32.totalorder %s35, 1
      %p326 = por %p324, %p325
      %p327 = scmp.ne.s32.totalorder %s318, %s319
      %p328 = scmp.eq.s32.totalorder %s35, 0
      %p329 = por %p327, %p328
      %p330 = scmp.ne.s32.totalorder %s318, %s319
      %p331 = scmp.eq.s32.totalorder %s36, 1
      %p332 = por %p330, %p331
      %p334 = scmp.ne.s32.totalorder %s319, %s333
      %p335 = scmp.eq.s32.totalorder %s36, 0
      %p336 = por %p334, %p335
      %s338 = sadd.s32 %s337, 1
      %p341 = scmp.eq.s32.totalorder %s30, 1
      %p342 = scmp.ne.s32.totalorder %s337, %s339
      %p343 = scmp.eq.s32.totalorder %s30, 0
      %p344 = por %p342, %p343
      %p345 = scmp.ne.s32.totalorder %s337, %s339
      %p346 = scmp.eq.s32.totalorder %s35, 1
      %p347 = por %p345, %p346
      %p348 = scmp.ne.s32.totalorder %s339, %s340
      %p349 = scmp.eq.s32.totalorder %s35, 0
      %p350 = por %p348, %p349
      %p351 = scmp.ne.s32.totalorder %s339, %s340
      %p352 = scmp.eq.s32.totalorder %s36, 1
      %p353 = por %p351, %p352
      %p355 = scmp.ne.s32.totalorder %s340, %s354
      %p356 = scmp.eq.s32.totalorder %s36, 0
      %p357 = por %p355, %p356
      %s359 = sadd.s32 %s358, 1
      %p362 = scmp.eq.s32.totalorder %s30, 1
      %p363 = scmp.ne.s32.totalorder %s358, %s360
      %p364 = scmp.eq.s32.totalorder %s30, 0
      %p365 = por %p363, %p364
      %p366 = scmp.ne.s32.totalorder %s358, %s360
      %p367 = scmp.eq.s32.totalorder %s35, 1
      %p368 = por %p366, %p367
      %p369 = scmp.ne.s32.totalorder %s360, %s361
      %p370 = scmp.eq.s32.totalorder %s35, 0
      %p371 = por %p369, %p370
      %p372 = scmp.ne.s32.totalorder %s360, %s361
      %p373 = scmp.eq.s32.totalorder %s36, 1
      %p374 = por %p372, %p373
      %p376 = scmp.ne.s32.totalorder %s361, %s375
      %p377 = scmp.eq.s32.totalorder %s36, 0
      %p378 = por %p376, %p377
      %s380 = sadd.s32 %s379, 1
      %p383 = scmp.eq.s32.totalorder %s30, 1
      %p384 = scmp.ne.s32.totalorder %s379, %s381
      %p385 = scmp.eq.s32.totalorder %s30, 0
      %p386 = por %p384, %p385
      %p387 = scmp.ne.s32.totalorder %s379, %s381
      %p388 = scmp.eq.s32.totalorder %s35, 1
      %p389 = por %p387, %p388
      %p390 = scmp.ne.s32.totalorder %s381, %s382
      %p391 = scmp.eq.s32.totalorder %s35, 0
      %p392 = por %p390, %p391
      %p393 = scmp.ne.s32.totalorder %s381, %s382
      %p394 = scmp.eq.s32.totalorder %s36, 1
      %p395 = por %p393, %p394
      %p397 = scmp.ne.s32.totalorder %s382, %s396
      %p398 = scmp.eq.s32.totalorder %s36, 0
      %p399 = por %p397, %p398
      %s401 = sadd.s32 %s400, 1
      %p404 = scmp.eq.s32.totalorder %s30, 1
      %p405 = scmp.ne.s32.totalorder %s400, %s402
      %p406 = scmp.eq.s32.totalorder %s30, 0
      %p407 = por %p405, %p406
      %p408 = scmp.ne.s32.totalorder %s400, %s402
      %p409 = scmp.eq.s32.totalorder %s35, 1
      %p410 = por %p408, %p409
      %p411 = scmp.ne.s32.totalorder %s402, %s403
      %p412 = scmp.eq.s32.totalorder %s35, 0
      %p413 = por %p411, %p412
      %p414 = scmp.ne.s32.totalorder %s402, %s403
      %p415 = scmp.eq.s32.totalorder %s36, 1
      %p416 = por %p414, %p415
      %p418 = scmp.ne.s32.totalorder %s403, %s417
      %p419 = scmp.eq.s32.totalorder %s36, 0
      %p420 = por %p418, %p419
      %s421 = ssub.s32 %s30, %s37
      %p422 = scmp.eq.s32.totalorder %s421, 0
      %s424 = sadd.s32 %s423, 1
      %s425 = scalar_select %p422, %s423, %s424
      %p428 = pneg %p422
      %p429 = scmp.eq.s32.totalorder %s30, 1
      %p430 = por %p428, %p429
      %p431 = scmp.ne.s32.totalorder %s423, %s426
      %p432 = scmp.eq.s32.totalorder %s30, 0
      %p433 = por %p431, %p432
      %p434 = scmp.ne.s32.totalorder %s423, %s426
      %p435 = scmp.eq.s32.totalorder %s35, 1
      %p436 = por %p434, %p435
      %p437 = scmp.ne.s32.totalorder %s426, %s427
      %p438 = scmp.eq.s32.totalorder %s35, 0
      %p439 = por %p437, %p438
      %p440 = scmp.ne.s32.totalorder %s426, %s427
      %p441 = scmp.eq.s32.totalorder %s36, 1
      %p442 = por %p440, %p441
      %p444 = scmp.ne.s32.totalorder %s427, %s443
      %p445 = scmp.eq.s32.totalorder %s36, 0
      %p446 = por %p444, %p445
      %p447 = scmp.le.s32.totalorder 1, %s30
      %p448 = scmp.lt.s32.totalorder %s30, 3
      %p449 = pnand %p447, %p448
      %p450 = pneg %p449
      // Predicated region
      $region9: #{tpu_custom_call.1} parent=5 // pred_check
        _
      $region10: #{tpu_custom_call.1} parent=5 // pred_check_branch
        %452 = sbr.rel (%p449) target = $region12
      $region11: #{tpu_custom_call.1} parent=5 // pred_region
        %s453 = ssub.s32 %s30, 1
        // Predicated region
        $region13: #{tpu_custom_call.1} parent=11 // pred_check
          %p454 = pneg %p77
        $region14: #{tpu_custom_call.1} parent=11 // pred_check_branch
          %456 = sbr.rel (%p454) target = $region16
        $region15: #{tpu_custom_call.1} parent=11 // pred_region
          _
        $region16: #{tpu_custom_call.1} parent=11 // pred_fallthru
          _
        // Predicated region
        $region17: #{tpu_custom_call.1} parent=11 // pred_check
          %p457 = pneg %p98
        $region18: #{tpu_custom_call.1} parent=11 // pred_check_branch
          %459 = sbr.rel (%p457) target = $region20
        $region19: #{tpu_custom_call.1} parent=11 // pred_region
          _
        $region20: #{tpu_custom_call.1} parent=11 // pred_fallthru
          _
        // Predicated region
        $region21: #{tpu_custom_call.1} parent=11 // pred_check
          %p460 = pneg %p119
        $region22: #{tpu_custom_call.1} parent=11 // pred_check_branch
          %462 = sbr.rel (%p460) target = $region24
        $region23: #{tpu_custom_call.1} parent=11 // pred_region
          _
        $region24: #{tpu_custom_call.1} parent=11 // pred_fallthru
          _
        // Predicated region
        $region25: #{tpu_custom_call.1} parent=11 // pred_check
          %p463 = pneg %p140
        $region26: #{tpu_custom_call.1} parent=11 // pred_check_branch
          %465 = sbr.rel (%p463) target = $region28
        $region27: #{tpu_custom_call.1} parent=11 // pred_region
          _
        $region28: #{tpu_custom_call.1} parent=11 // pred_fallthru
          _
        // Predicated region
        $region29: #{tpu_custom_call.1} parent=11 // pred_check
          %p466 = pneg %p161
        $region30: #{tpu_custom_call.1} parent=11 // pred_check_branch
          %468 = sbr.rel (%p466) target = $region32
        $region31: #{tpu_custom_call.1} parent=11 // pred_region
          _
        $region32: #{tpu_custom_call.1} parent=11 // pred_fallthru
          _
        // Predicated region
        $region33: #{tpu_custom_call.1} parent=11 // pred_check
          %p469 = pneg %p182
        $region34: #{tpu_custom_call.1} parent=11 // pred_check_branch
          %471 = sbr.rel (%p469) target = $region36
        $region35: #{tpu_custom_call.1} parent=11 // pred_region
          _
        $region36: #{tpu_custom_call.1} parent=11 // pred_fallthru
          _
        // Predicated region
        $region37: #{tpu_custom_call.1} parent=11 // pred_check
          %p472 = pneg %p203
        $region38: #{tpu_custom_call.1} parent=11 // pred_check_branch
          %474 = sbr.rel (%p472) target = $region40
        $region39: #{tpu_custom_call.1} parent=11 // pred_region
          _
        $region40: #{tpu_custom_call.1} parent=11 // pred_fallthru
          _
        // Predicated region
        $region41: #{tpu_custom_call.1} parent=11 // pred_check
          %p475 = pneg %p224
        $region42: #{tpu_custom_call.1} parent=11 // pred_check_branch
          %477 = sbr.rel (%p475) target = $region44
        $region43: #{tpu_custom_call.1} parent=11 // pred_region
          _
        $region44: #{tpu_custom_call.1} parent=11 // pred_fallthru
          _
        // Predicated region
        $region45: #{tpu_custom_call.1} parent=11 // pred_check
          %p478 = pneg %p245
        $region46: #{tpu_custom_call.1} parent=11 // pred_check_branch
          %480 = sbr.rel (%p478) target = $region48
        $region47: #{tpu_custom_call.1} parent=11 // pred_region
          _
        $region48: #{tpu_custom_call.1} parent=11 // pred_fallthru
          _
        // Predicated region
        $region49: #{tpu_custom_call.1} parent=11 // pred_check
          %p481 = pneg %p266
        $region50: #{tpu_custom_call.1} parent=11 // pred_check_branch
          %483 = sbr.rel (%p481) target = $region52
        $region51: #{tpu_custom_call.1} parent=11 // pred_region
          _
        $region52: #{tpu_custom_call.1} parent=11 // pred_fallthru
          _
        // Predicated region
        $region53: #{tpu_custom_call.1} parent=11 // pred_check
          %p484 = pneg %p287
        $region54: #{tpu_custom_call.1} parent=11 // pred_check_branch
          %486 = sbr.rel (%p484) target = $region56
        $region55: #{tpu_custom_call.1} parent=11 // pred_region
          _
        $region56: #{tpu_custom_call.1} parent=11 // pred_fallthru
          _
        // Predicated region
        $region57: #{tpu_custom_call.1} parent=11 // pred_check
          %p487 = pneg %p308
        $region58: #{tpu_custom_call.1} parent=11 // pred_check_branch
          %489 = sbr.rel (%p487) target = $region60
        $region59: #{tpu_custom_call.1} parent=11 // pred_region
          _
        $region60: #{tpu_custom_call.1} parent=11 // pred_fallthru
          _
        // Predicated region
        $region61: #{tpu_custom_call.1} parent=11 // pred_check
          %p490 = pneg %p329
        $region62: #{tpu_custom_call.1} parent=11 // pred_check_branch
          %492 = sbr.rel (%p490) target = $region64
        $region63: #{tpu_custom_call.1} parent=11 // pred_region
          _
        $region64: #{tpu_custom_call.1} parent=11 // pred_fallthru
          _
        // Predicated region
        $region65: #{tpu_custom_call.1} parent=11 // pred_check
          %p493 = pneg %p350
        $region66: #{tpu_custom_call.1} parent=11 // pred_check_branch
          %495 = sbr.rel (%p493) target = $region68
        $region67: #{tpu_custom_call.1} parent=11 // pred_region
          _
        $region68: #{tpu_custom_call.1} parent=11 // pred_fallthru
          _
        // Predicated region
        $region69: #{tpu_custom_call.1} parent=11 // pred_check
          %p496 = pneg %p371
        $region70: #{tpu_custom_call.1} parent=11 // pred_check_branch
          %498 = sbr.rel (%p496) target = $region72
        $region71: #{tpu_custom_call.1} parent=11 // pred_region
          _
        $region72: #{tpu_custom_call.1} parent=11 // pred_fallthru
          _
        // Predicated region
        $region73: #{tpu_custom_call.1} parent=11 // pred_check
          %p499 = pneg %p392
        $region74: #{tpu_custom_call.1} parent=11 // pred_check_branch
          %501 = sbr.rel (%p499) target = $region76
        $region75: #{tpu_custom_call.1} parent=11 // pred_region
          _
        $region76: #{tpu_custom_call.1} parent=11 // pred_fallthru
          _
        // Predicated region
        $region77: #{tpu_custom_call.1} parent=11 // pred_check
          %p502 = pneg %p413
        $region78: #{tpu_custom_call.1} parent=11 // pred_check_branch
          %504 = sbr.rel (%p502) target = $region80
        $region79: #{tpu_custom_call.1} parent=11 // pred_region
          _
        $region80: #{tpu_custom_call.1} parent=11 // pred_fallthru
          _
      $region12: #{tpu_custom_call.1} parent=5 // pred_fallthru
        _
      %p505 = scmp.lt.s32.totalorder %s30, 2
      // Predicated region
      $region81: #{tpu_custom_call.1} parent=5 // pred_check
        %p506 = pneg %p505
      $region82: #{tpu_custom_call.1} parent=5 // pred_check_branch
        %508 = sbr.rel (%p506) target = $region84
      $region83: #{tpu_custom_call.1} parent=5 // pred_region
        // Predicated region
        $region85: #{tpu_custom_call.1} parent=83 // pred_check
          %p509 = pneg %p50
        $region86: #{tpu_custom_call.1} parent=83 // pred_check_branch
          %511 = sbr.rel (%p509) target = $region88
        $region87: #{tpu_custom_call.1} parent=83 // pred_region
          %s512 = sand.u32 %s40, 1
          %s513 = scalar_lea.sflag [#allocation5], %s512
          %s514 = sand.u32 %s40, 1
          %s515 = smul.addr %s514, 96
          %s516 = scalar_lea.vmem [#allocation4], %s515
          %518 = vsyncadd %s513, 0
          %s519 = smul.addr %s30, 12
          %s520 = smul.addr %s519, 8
          %s521 = scalar_lea.hbm %s0, %s520
          %s522 = sshll.u32 %s521, 4
          %s523 = int_to_ptr.hbm [resolvable:$true] %s522
          %s524 = sshll.u32 %s516, 4
          %s525 = int_to_ptr.vmem [resolvable:$true] %s524
          %530 = dma.hbm_to_vmem [thread:$0]  %s523, 1536, %s525, %s513, 384, 384, 24
        $region88: #{tpu_custom_call.1} parent=83 // pred_fallthru
          _
      $region84: #{tpu_custom_call.1} parent=5 // pred_fallthru
        _
      %p531 = scmp.le.s32.totalorder 1, %s30
      %p532 = scmp.lt.s32.totalorder %s30, 3
      %p533 = pnand %p531, %p532
      %p534 = pneg %p533
      // Predicated region
      $region89: #{tpu_custom_call.1} parent=5 // pred_check
        _
      $region90: #{tpu_custom_call.1} parent=5 // pred_check_branch
        %536 = sbr.rel (%p533) target = $region92
      $region91: #{tpu_custom_call.1} parent=5 // pred_region
        %s537 = ssub.s32 %s30, 1
        %s538 = sand.u32 %s43, 1
        %s539 = scalar_lea.sflag [#allocation5], %s538
        %s540 = sand.u32 %s43, 1
        %s541 = smul.addr %s540, 96
        %s542 = scalar_lea.vmem [#allocation4], %s541
        // Predicated region
        $region93: #{tpu_custom_call.1} parent=91 // pred_check
          %p543 = pneg %p56
        $region94: #{tpu_custom_call.1} parent=91 // pred_check_branch
          %545 = sbr.rel (%p543) target = $region96
        $region95: #{tpu_custom_call.1} parent=91 // pred_region
          %547 = dma.done %s539, 1536
        $region96: #{tpu_custom_call.1} parent=91 // pred_fallthru
          _
        %s548 = sand.u32 %s43, 1
        %s549 = scalar_lea.sflag [#allocation5], %s548
        %s550 = sand.u32 %s43, 1
        %s551 = smul.addr %s550, 96
        %s552 = scalar_lea.vmem [#allocation4], %s551
        %p553 = pneg %p56
        %p554 = pneg %p53
        %p555 = pneg %p77
        %p556 = pneg %p74
        %p557 = pneg %p98
        %p558 = pneg %p95
        %p559 = pneg %p119
        %p560 = pneg %p116
        %p561 = pneg %p140
        %p562 = pneg %p137
        %p563 = pneg %p161
        %p564 = pneg %p158
        %p565 = pneg %p182
        %p566 = pneg %p179
        %p567 = pneg %p203
        %p568 = pneg %p200
        %p569 = pneg %p224
        %p570 = pneg %p221
        %p571 = pneg %p245
        %p572 = pneg %p242
        %p573 = pneg %p266
        %p574 = pneg %p263
        %p575 = pneg %p287
        %p576 = pneg %p284
        %p577 = pneg %p308
        %p578 = pneg %p305
        %p579 = pneg %p329
        %p580 = pneg %p326
        %p581 = pneg %p350
        %p582 = pneg %p347
        %p583 = pneg %p371
        %p584 = pneg %p368
        %p585 = pneg %p392
        %p586 = pneg %p389
        %p587 = pneg %p413
        %p588 = pneg %p410
        %p589 = pneg %p439
        %p590 = pneg %p436
        %s591 = sand.u32 %s426, 1
        %s592 = scalar_lea.sflag [#allocation6], %s591
        %s593 = sand.u32 %s426, 1
        %s594 = smul.addr %s593, 96
        %s595 = scalar_lea.vmem [#allocation7], %s594
        %597 = vst [vmem:[#allocation2] sm:$0xff] 0.0
        %598 = vst [vmem:[#allocation2 + $0x28] sm:$0xff] 0.0
        %599 = vst [vmem:[#allocation2 + $0x50] sm:$0xff] 0.0
        %600 = vst [vmem:[#allocation2 + $0x78] sm:$0xff] 0.0
        %601 = vst [vmem:[#allocation2 + $0x20] sm:$0xff] 0.0
        %602 = vst [vmem:[#allocation2 + $0x48] sm:$0xff] 0.0
        %603 = vst [vmem:[#allocation2 + $0x70] sm:$0xff] 0.0
        %604 = vst [vmem:[#allocation2 + $0x98] sm:$0xff] 0.0
        %605 = vst [vmem:[#allocation3] sm:$0x3] 0.0
        %606 = vst [vmem:[#allocation3 + $0x8] sm:$0x3] 0.0
        %v607 = vld [vmem:[%s542] sm:$0xff]
        %v608 = vld [vmem:[%s542 + $0x8] sm:$0xff]
        %v609 = vld [vmem:[%s542 + $0x10] sm:$0xff]
        %v610 = vld [vmem:[%s542 + $0x18] sm:$0xff]
        %v611 = vld [vmem:[%s542 + $0x20] sm:$0xff]
        %v612 = vld [vmem:[%s542 + $0x28] sm:$0xff]
        %v613 = vld [vmem:[%s542 + $0x30] sm:$0xff]
        %v614 = vld [vmem:[%s542 + $0x38] sm:$0xff]
        %v615 = vld [vmem:[%s542 + $0x40] sm:$0xff]
        %v616 = vld [vmem:[%s542 + $0x48] sm:$0xff]
        %v617 = vld [vmem:[%s542 + $0x50] sm:$0xff]
        %v618 = vld [vmem:[%s542 + $0x58] sm:$0xff]
        %v619 = vadd.f32 %v607, %v608
        %v620 = vadd.f32 %v619, %v609
        %621 = vadd.xlane.f32.xlu0 %v620
        %v622 = vpop.xlane.xlu0 %621
        %v623 = vadd.f32 %v610, %v611
        %v624 = vadd.f32 %v623, %v612
        %625 = vadd.xlane.f32.xlu0 %v624
        %v626 = vpop.xlane.xlu0 %625
        %v627 = vadd.f32 %v613, %v614
        %v628 = vadd.f32 %v627, %v615
        %629 = vadd.xlane.f32.xlu0 %v628
        %v630 = vpop.xlane.xlu0 %629
        %v631 = vadd.f32 %v616, %v617
        %v632 = vadd.f32 %v631, %v618
        %633 = vadd.xlane.f32.xlu0 %v632
        %v634 = vpop.xlane.xlu0 %633
        %v635 = vmul.f32 %v622, 0.00390625
        %v636 = vmul.f32 %v626, 0.00390625
        %v637 = vmul.f32 %v630, 0.00390625
        %v638 = vmul.f32 %v634, 0.00390625
        %v639 = vld [vmem:[%s1] sm:$0x7]
        %v641 = vperm.slane %v639, 0
        %v642 = vperm.slane %v639, 1
        %v643 = vperm.slane %v639, 2
        %v647 = vadd.f32 %v607, %v641
        %v648 = vadd.f32 %v608, %v642
        %v649 = vadd.f32 %v609, %v643
        %v650 = vadd.f32 %v610, %v641
        %v651 = vadd.f32 %v611, %v642
        %v652 = vadd.f32 %v612, %v643
        %v653 = vadd.f32 %v613, %v641
        %v654 = vadd.f32 %v614, %v642
        %v655 = vadd.f32 %v615, %v643
        %v656 = vadd.f32 %v616, %v641
        %v657 = vadd.f32 %v617, %v642
        %v658 = vadd.f32 %v618, %v643
        %v659 = vmax.f32 %v647, %v648
        %v660 = vmax.f32 %v659, %v649
        %661 = vmax.xlane.f32.xlu0 %v660
        %v662 = vpop.xlane.xlu0 %661
        %v663 = vmax.f32 %v650, %v651
        %v664 = vmax.f32 %v663, %v652
        %665 = vmax.xlane.f32.xlu0 %v664
        %v666 = vpop.xlane.xlu0 %665
        %v667 = vmax.f32 %v653, %v654
        %v668 = vmax.f32 %v667, %v655
        %669 = vmax.xlane.f32.xlu0 %v668
        %v670 = vpop.xlane.xlu0 %669
        %v671 = vmax.f32 %v656, %v657
        %v672 = vmax.f32 %v671, %v658
        %673 = vmax.xlane.f32.xlu0 %v672
        %v674 = vpop.xlane.xlu0 %673
        %vm675 = vcmask 7168
        %v676 = vsel %vm675, %v635, %v662
        %v677 = vsel %vm675, %v636, %v666
        %v678 = vsel %vm675, %v637, %v670
        %v679 = vsel %vm675, %v638, %v674
        %v680 = vld [vmem:[%s2] sm:$0x3]
        %v681 = vld [vmem:[%s3] sm:$0x3]
        %683 = vset.pattern.permute.xlu0 0
        %684 = vperm.xlu0 %683, %v681
        %v685 = vpop.permute.xlu0 %684
        %vm687 = vcmask 261120
        %v689 = vsel %vm687, %v680, 0
        %691 = vmatpush.msra.mxu0 0.0
        %692 = vmatpush.msra.mxu0 0.0
        %693 = vmatpush.msra.mxu0 0.0
        %694 = vmatpush.msra.mxu0 0.0
        %695 = vmatpush.msra.mxu0 0.0
        %696 = vmatpush.msra.mxu0 0.0
        %697 = vmatpush.msra.mxu0 0.0
        %698 = vmatpush.msra.mxu0 0.0
        %699 = vmatpush.msra.mxu0 0.0
        %700 = vmatpush.msra.mxu0 0.0
        %701 = vmatpush.msra.mxu0 0.0
        %702 = vmatpush.msra.mxu0 0.0
        %703 = vmatpush.msra.mxu0 %v679
        %704 = vmatpush.msra.mxu0 %v678
        %705 = vmatpush.msra.mxu0 %v677
        %706 = vmatpush.msra.mxu0 %v676
        %707 = vmatmul.f32.gmra.mxu0 %v689
        %v708 = vpop.f32.mrf.mxu0
        %v709 = vadd.f32 %v685, %v708
        %710 = vdwg.mxu0
        %v711 = vmax.f32 %v709, 0.0
        %v712 = vld [vmem:[%s4] sm:$0xff]
        %v713 = vld [vmem:[%s4 + $0x8] sm:$0xff]
        %v714 = vld [vmem:[%s4 + $0x10] sm:$0xff]
        %v715 = vld [vmem:[%s4 + $0x18] sm:$0xff]
        %v716 = vld [vmem:[%s5] sm:$0xff]
        %v717 = vld [vmem:[%s5 + $0x8] sm:$0xff]
        %v718 = vld [vmem:[%s5 + $0x10] sm:$0xff]
        %v719 = vld [vmem:[%s5 + $0x18] sm:$0xff]
        %721 = vset.pattern.permute.xlu0 0
        %722 = vperm.xlu0 %721, %v716
        %v723 = vpop.permute.xlu0 %722
        %726 = vset.pattern.permute.xlu0 0
        %727 = vperm.xlu0 %726, %v717
        %v728 = vpop.permute.xlu0 %727
        %731 = vset.pattern.permute.xlu0 0
        %732 = vperm.xlu0 %731, %v718
        %v733 = vpop.permute.xlu0 %732
        %736 = vset.pattern.permute.xlu0 0
        %737 = vperm.xlu0 %736, %v719
        %v738 = vpop.permute.xlu0 %737
        %vm740 = vcmask 15360
        %v742 = vsel %vm740, %v712, 0
        %v745 = vsel %vm740, %v713, 0
        %v748 = vsel %vm740, %v714, 0
        %v751 = vsel %vm740, %v715, 0
        %vm753 = vcmask 1041408
        %v755 = vsel %vm753, %v711, 0
        %757 = vmatpush.msra.mxu0 0.0
        %758 = vmatpush.msra.mxu0 0.0
        %759 = vmatpush.msra.mxu0 0.0
        %760 = vmatpush.msra.mxu0 0.0
        %761 = vmatpush.msra.mxu0 0.0
        %762 = vmatpush.msra.mxu0 0.0
        %763 = vmatpush.msra.mxu0 0.0
        %764 = vmatpush.msra.mxu0 0.0
        %765 = vmatpush.msra.mxu0 0.0
        %766 = vmatpush.msra.mxu0 0.0
        %767 = vmatpush.msra.mxu0 0.0
        %768 = vmatpush.msra.mxu0 0.0
        %769 = vmatpush.msra.mxu0 0.0
        %770 = vmatpush.msra.mxu0 0.0
        %771 = vmatpush.msra.mxu0 0.0
        %772 = vmatpush.msra.mxu0 %v755
        %773 = vmatmul.f32.gmra.mxu0 %v742
        %v774 = vpop.f32.mrf.mxu0
        %v775 = vadd.f32 %v723, %v774
        %776 = vmatmul.f32.gmra.mxu0 %v745
        %v777 = vpop.f32.mrf.mxu0
        %v778 = vadd.f32 %v728, %v777
        %779 = vmatmul.f32.gmra.mxu0 %v748
        %v780 = vpop.f32.mrf.mxu0
        %v781 = vadd.f32 %v733, %v780
        %782 = vmatmul.f32.gmra.mxu0 %v751
        %v783 = vpop.f32.mrf.mxu0
        %v784 = vadd.f32 %v738, %v783
        %785 = vdwg.mxu0
        %790 = vrot.lane.b32.xlu0 %v775, 127
        %v791 = vpop.permute.xlu0 %790
        %792 = vrot.lane.b32.xlu0 %v778, 127
        %v793 = vpop.permute.xlu0 %792
        %794 = vrot.lane.b32.xlu0 %v781, 127
        %v795 = vpop.permute.xlu0 %794
        %796 = vrot.lane.b32.xlu0 %v784, 127
        %v797 = vpop.permute.xlu0 %796
        %v802 = vadd.f32 %v775, %v791
        %v803 = vadd.f32 %v778, %v793
        %v804 = vadd.f32 %v781, %v795
        %v805 = vadd.f32 %v784, %v797
        %v806 = vxor.u32 %v802, 2147483648
        %v807 = vxor.u32 %v803, 2147483648
        %v808 = vxor.u32 %v804, 2147483648
        %v809 = vxor.u32 %v805, 2147483648
        %v810 = vmul.f32 %v806, 1.442695
        %v811 = vpow.pop %v810
        %v812 = vmul.f32 %v807, 1.442695
        %v813 = vpow.pop %v812
        %v814 = vmul.f32 %v808, 1.442695
        %v815 = vpow.pop %v814
        %v816 = vmul.f32 %v809, 1.442695
        %v817 = vpow.pop %v816
        %v818 = vadd.f32 %v811, 1.0
        %v819 = vadd.f32 %v813, 1.0
        %v820 = vadd.f32 %v815, 1.0
        %v821 = vadd.f32 %v817, 1.0
        %v822 = vrcp.pop %v818
        %v823 = vmul.f32 %v818, %v822
        %v824 = vsub.f32 1.0, %v823
        %v825 = vmul.f32 %v822, %v824
        %v826 = vadd.f32 %v822, %v825
        %vm827 = vweird.f32 %v818
        %vm828 = vweird.f32 %v822
        %vm829 = vmor %vm827, %vm828
        %v830 = vsel %vm829, %v822, %v826
        %v831 = vand.u32 2147483647, %v818
        %vm832 = vcmp.eq.f32.partialorder %v831, 8.507059e+37
        %v833 = vand.u32 %v818, 2147483648
        %v834 = vor.u32 1.1754944e-38, %v833
        %v835 = vsel %vm832, %v834, %v830
        %v836 = vmul.f32 1.0, %v835
        %v837 = vrcp.pop %v819
        %v838 = vmul.f32 %v819, %v837
        %v839 = vsub.f32 1.0, %v838
        %v840 = vmul.f32 %v837, %v839
        %v841 = vadd.f32 %v837, %v840
        %vm842 = vweird.f32 %v819
        %vm843 = vweird.f32 %v837
        %vm844 = vmor %vm842, %vm843
        %v845 = vsel %vm844, %v837, %v841
        %v846 = vand.u32 2147483647, %v819
        %vm847 = vcmp.eq.f32.partialorder %v846, 8.507059e+37
        %v848 = vand.u32 %v819, 2147483648
        %v849 = vor.u32 1.1754944e-38, %v848
        %v850 = vsel %vm847, %v849, %v845
        %v851 = vmul.f32 1.0, %v850
        %v852 = vrcp.pop %v820
        %v853 = vmul.f32 %v820, %v852
        %v854 = vsub.f32 1.0, %v853
        %v855 = vmul.f32 %v852, %v854
        %v856 = vadd.f32 %v852, %v855
        %vm857 = vweird.f32 %v820
        %vm858 = vweird.f32 %v852
        %vm859 = vmor %vm857, %vm858
        %v860 = vsel %vm859, %v852, %v856
        %v861 = vand.u32 2147483647, %v820
        %vm862 = vcmp.eq.f32.partialorder %v861, 8.507059e+37
        %v863 = vand.u32 %v820, 2147483648
        %v864 = vor.u32 1.1754944e-38, %v863
        %v865 = vsel %vm862, %v864, %v860
        %v866 = vmul.f32 1.0, %v865
        %v867 = vrcp.pop %v821
        %v868 = vmul.f32 %v821, %v867
        %v869 = vsub.f32 1.0, %v868
        %v870 = vmul.f32 %v867, %v869
        %v871 = vadd.f32 %v867, %v870
        %vm872 = vweird.f32 %v821
        %vm873 = vweird.f32 %v867
        %vm874 = vmor %vm872, %vm873
        %v875 = vsel %vm874, %v867, %v871
        %v876 = vand.u32 2147483647, %v821
        %vm877 = vcmp.eq.f32.partialorder %v876, 8.507059e+37
        %v878 = vand.u32 %v821, 2147483648
        %v879 = vor.u32 1.1754944e-38, %v878
        %v880 = vsel %vm877, %v879, %v875
        %v881 = vmul.f32 1.0, %v880
        %883 = vset.pattern.permute.xlu0 0
        %884 = vperm.xlu0 %883, %v836
        %v885 = vpop.permute.xlu0 %884
        %888 = vset.pattern.permute.xlu0 0
        %889 = vperm.xlu0 %888, %v851
        %v890 = vpop.permute.xlu0 %889
        %893 = vset.pattern.permute.xlu0 0
        %894 = vperm.xlu0 %893, %v866
        %v895 = vpop.permute.xlu0 %894
        %898 = vset.pattern.permute.xlu0 0
        %899 = vperm.xlu0 %898, %v881
        %v900 = vpop.permute.xlu0 %899
        %v902 = vmul.f32 %v607, %v885
        %v903 = vmul.f32 %v608, %v885
        %v904 = vmul.f32 %v609, %v885
        %v905 = vmul.f32 %v610, %v890
        %v906 = vmul.f32 %v611, %v890
        %v907 = vmul.f32 %v612, %v890
        %v908 = vmul.f32 %v613, %v895
        %v909 = vmul.f32 %v614, %v895
        %v910 = vmul.f32 %v615, %v895
        %v911 = vmul.f32 %v616, %v900
        %v912 = vmul.f32 %v617, %v900
        %v913 = vmul.f32 %v618, %v900
        %v914 = vadd.f32 %v902, %v905
        %v915 = vadd.f32 %v914, %v908
        %v916 = vadd.f32 %v915, %v911
        %v917 = vrot.slane %v916, 4
        %v918 = vadd.f32 %v916, %v917
        %v919 = vrot.slane %v918, 2
        %v920 = vadd.f32 %v918, %v919
        %v921 = vrot.slane %v920, 1
        %v922 = vadd.f32 %v920, %v921
        %v923 = vadd.f32 %v903, %v906
        %v924 = vadd.f32 %v923, %v909
        %v925 = vadd.f32 %v924, %v912
        %v926 = vrot.slane %v925, 4
        %v927 = vadd.f32 %v925, %v926
        %v928 = vrot.slane %v927, 2
        %v929 = vadd.f32 %v927, %v928
        %v930 = vrot.slane %v929, 1
        %v931 = vadd.f32 %v929, %v930
        %v932 = vadd.f32 %v904, %v907
        %v933 = vadd.f32 %v932, %v910
        %v934 = vadd.f32 %v933, %v913
        %v935 = vrot.slane %v934, 4
        %v936 = vadd.f32 %v934, %v935
        %v937 = vrot.slane %v936, 2
        %v938 = vadd.f32 %v936, %v937
        %v939 = vrot.slane %v938, 1
        %v940 = vadd.f32 %v938, %v939
        %v941 = vrcp.pop 32.0
        %v942 = vmul.f32 32.0, %v941
        %v943 = vsub.f32 1.0, %v942
        %v944 = vmul.f32 %v941, %v943
        %v945 = vadd.f32 %v941, %v944
        %vm946 = vweird.f32 %v941
        %v947 = vsel %vm946, %v941, %v945
        %v948 = vmul.f32 %v922, %v947
        %v949 = vmul.f32 %v931, %v947
        %v950 = vmul.f32 %v940, %v947
        %v951 = vmax.f32 %v902, %v908
        %v952 = vmax.f32 %v905, %v911
        %v953 = vmax.f32 %v951, %v952
        %v954 = vrot.slane %v953, 4
        %v955 = vmax.f32 %v953, %v954
        %v956 = vrot.slane %v955, 2
        %v957 = vmax.f32 %v955, %v956
        %v958 = vrot.slane %v957, 1
        %v959 = vmax.f32 %v957, %v958
        %v960 = vmax.f32 %v903, %v909
        %v961 = vmax.f32 %v906, %v912
        %v962 = vmax.f32 %v960, %v961
        %v963 = vrot.slane %v962, 4
        %v964 = vmax.f32 %v962, %v963
        %v965 = vrot.slane %v964, 2
        %v966 = vmax.f32 %v964, %v965
        %v967 = vrot.slane %v966, 1
        %v968 = vmax.f32 %v966, %v967
        %v969 = vmax.f32 %v904, %v910
        %v970 = vmax.f32 %v907, %v913
        %v971 = vmax.f32 %v969, %v970
        %v972 = vrot.slane %v971, 4
        %v973 = vmax.f32 %v971, %v972
        %v974 = vrot.slane %v973, 2
        %v975 = vmax.f32 %v973, %v974
        %v976 = vrot.slane %v975, 1
        %v977 = vmax.f32 %v975, %v976
        %vm978 = vcmask 1040384
        %v979 = vsel %vm978, %v948, %v959
        %v980 = vsel %vm978, %v949, %v968
        %v981 = vsel %vm978, %v950, %v977
        %v985 = vrot.slane %v980, 6
        %v986 = vrot.slane %v981, 4
        %v987 = vsel %vm753, %v979, %v985
        %vm988 = vcmask 1043456
        %v989 = vsel %vm988, %v987, %v986
        %991 = vst [vmem:[#allocation3 + $0x2] sm:$0x3f] %v989
        %v992 = vld [vmem:[%s6] sm:$0x3]
        %v993 = vld [vmem:[#allocation3] sm:$0xff]
        %995 = vset.pattern.permute.xlu0 0
        %996 = vperm.xlu0 %995, %v992
        %v997 = vpop.permute.xlu0 %996
        %1000 = vst [vmem:[#allocation1] ss:$4 sm:$0xff] %v993
        %v1001 = vld.sshfl [vmem:[#allocation1] sm:$0xff pattern:$0x73625140]
        %v1002 = vld.sshfl [vmem:[#allocation1 + $0x8] sm:$0xff pattern:$0x73625140]
        %v1003 = vld.sshfl [vmem:[#allocation1 + $0x10] sm:$0xff pattern:$0x73625140]
        %v1004 = vld.sshfl [vmem:[#allocation1 + $0x18] sm:$0xff pattern:$0x73625140]
        %1005 = vrot.lane.b32.xlu0 %v1001, 125
        %v1006 = vpop.permute.xlu0 %1005
        %1007 = vrot.lane.b32.xlu0 %v1002, 125
        %v1008 = vpop.permute.xlu0 %1007
        %1009 = vrot.lane.b32.xlu0 %v1003, 125
        %v1010 = vpop.permute.xlu0 %1009
        %1011 = vrot.lane.b32.xlu0 %v1004, 125
        %v1012 = vpop.permute.xlu0 %1011
        %vm1013 = vcmask 1022976
        %v1014 = vsel %vm1013, %v1006, %v1008
        %v1015 = vsel %vm1013, %v1008, %v1010
        %v1016 = vsel %vm1013, %v1010, %v1012
        %v1020 = vmul.f32 %v997, %v1014
        %v1021 = vmul.f32 %v997, %v1015
        %v1022 = vmul.f32 %v997, %v1016
        %v1023 = vadd.f32 %v1020, 0.0
        %v1024 = vadd.f32 %v1021, 0.0
        %v1025 = vadd.f32 %v1022, 0.0
        %v1026 = vld [vmem:[#allocation3] sm:$0xff]
        %1027 = vset.pattern.permute.xlu0 1
        %1028 = vperm.xlu0 %1027, %v992
        %v1029 = vpop.permute.xlu0 %1028
        %1032 = vst [vmem:[#allocation1] ss:$4 sm:$0xff] %v1026
        %v1033 = vld.sshfl [vmem:[#allocation1] sm:$0xff pattern:$0x73625140]
        %v1034 = vld.sshfl [vmem:[#allocation1 + $0x8] sm:$0xff pattern:$0x73625140]
        %v1035 = vld.sshfl [vmem:[#allocation1 + $0x10] sm:$0xff pattern:$0x73625140]
        %v1036 = vld.sshfl [vmem:[#allocation1 + $0x18] sm:$0xff pattern:$0x73625140]
        %1037 = vrot.lane.b32.xlu0 %v1033, 124
        %v1038 = vpop.permute.xlu0 %1037
        %1039 = vrot.lane.b32.xlu0 %v1034, 124
        %v1040 = vpop.permute.xlu0 %1039
        %1041 = vrot.lane.b32.xlu0 %v1035, 124
        %v1042 = vpop.permute.xlu0 %1041
        %1043 = vrot.lane.b32.xlu0 %v1036, 124
        %v1044 = vpop.permute.xlu0 %1043
        %vm1045 = vcmask 1014784
        %v1046 = vsel %vm1045, %v1038, %v1040
        %v1047 = vsel %vm1045, %v1040, %v1042
        %v1048 = vsel %vm1045, %v1042, %v1044
        %v1052 = vmul.f32 %v1029, %v1046
        %v1053 = vmul.f32 %v1029, %v1047
        %v1054 = vmul.f32 %v1029, %v1048
        %v1055 = vadd.f32 %v1023, %v1052
        %v1056 = vadd.f32 %v1024, %v1053
        %v1057 = vadd.f32 %v1025, %v1054
        %v1058 = vld [vmem:[#allocation3] sm:$0xff]
        %1059 = vset.pattern.permute.xlu0 2
        %1060 = vperm.xlu0 %1059, %v992
        %v1061 = vpop.permute.xlu0 %1060
        %1064 = vst [vmem:[#allocation1] ss:$4 sm:$0xff] %v1058
        %v1065 = vld.sshfl [vmem:[#allocation1] sm:$0xff pattern:$0x73625140]
        %v1066 = vld.sshfl [vmem:[#allocation1 + $0x8] sm:$0xff pattern:$0x73625140]
        %v1067 = vld.sshfl [vmem:[#allocation1 + $0x10] sm:$0xff pattern:$0x73625140]
        %v1068 = vld.sshfl [vmem:[#allocation1 + $0x18] sm:$0xff pattern:$0x73625140]
        %1069 = vrot.lane.b32.xlu0 %v1065, 123
        %v1070 = vpop.permute.xlu0 %1069
        %1071 = vrot.lane.b32.xlu0 %v1066, 123
        %v1072 = vpop.permute.xlu0 %1071
        %1073 = vrot.lane.b32.xlu0 %v1067, 123
        %v1074 = vpop.permute.xlu0 %1073
        %1075 = vrot.lane.b32.xlu0 %v1068, 123
        %v1076 = vpop.permute.xlu0 %1075
        %vm1077 = vcmask 1006592
        %v1078 = vsel %vm1077, %v1070, %v1072
        %v1079 = vsel %vm1077, %v1072, %v1074
        %v1080 = vsel %vm1077, %v1074, %v1076
        %v1084 = vmul.f32 %v1061, %v1078
        %v1085 = vmul.f32 %v1061, %v1079
        %v1086 = vmul.f32 %v1061, %v1080
        %v1087 = vadd.f32 %v1055, %v1084
        %v1088 = vadd.f32 %v1056, %v1085
        %v1089 = vadd.f32 %v1057, %v1086
        %v1090 = vld [vmem:[#allocation3] sm:$0xff]
        %1091 = vset.pattern.permute.xlu0 3
        %1092 = vperm.xlu0 %1091, %v992
        %v1093 = vpop.permute.xlu0 %1092
        %1096 = vst [vmem:[#allocation1] ss:$4 sm:$0xff] %v1090
        %v1097 = vld.sshfl [vmem:[#allocation1] sm:$0xff pattern:$0x73625140]
        %v1098 = vld.sshfl [vmem:[#allocation1 + $0x8] sm:$0xff pattern:$0x73625140]
        %v1099 = vld.sshfl [vmem:[#allocation1 + $0x10] sm:$0xff pattern:$0x73625140]
        %v1100 = vld.sshfl [vmem:[#allocation1 + $0x18] sm:$0xff pattern:$0x73625140]
        %1101 = vrot.lane.b32.xlu0 %v1097, 122
        %v1102 = vpop.permute.xlu0 %1101
        %1103 = vrot.lane.b32.xlu0 %v1098, 122
        %v1104 = vpop.permute.xlu0 %1103
        %1105 = vrot.lane.b32.xlu0 %v1099, 122
        %v1106 = vpop.permute.xlu0 %1105
        %1107 = vrot.lane.b32.xlu0 %v1100, 122
        %v1108 = vpop.permute.xlu0 %1107
        %vm1109 = vcmask 998400
        %v1110 = vsel %vm1109, %v1102, %v1104
        %v1111 = vsel %vm1109, %v1104, %v1106
        %v1112 = vsel %vm1109, %v1106, %v1108
        %v1116 = vmul.f32 %v1093, %v1110
        %v1117 = vmul.f32 %v1093, %v1111
        %v1118 = vmul.f32 %v1093, %v1112
        %v1119 = vadd.f32 %v1087, %v1116
        %v1120 = vadd.f32 %v1088, %v1117
        %v1121 = vadd.f32 %v1089, %v1118
        %v1122 = vld [vmem:[#allocation3] sm:$0xff]
        %1123 = vset.pattern.permute.xlu0 4
        %1124 = vperm.xlu0 %1123, %v992
        %v1125 = vpop.permute.xlu0 %1124
        %1128 = vst [vmem:[#allocation1] ss:$4 sm:$0xff] %v1122
        %v1129 = vld.sshfl [vmem:[#allocation1] sm:$0xff pattern:$0x73625140]
        %v1130 = vld.sshfl [vmem:[#allocation1 + $0x8] sm:$0xff pattern:$0x73625140]
        %v1131 = vld.sshfl [vmem:[#allocation1 + $0x10] sm:$0xff pattern:$0x73625140]
        %v1132 = vld.sshfl [vmem:[#allocation1 + $0x18] sm:$0xff pattern:$0x73625140]
        %1133 = vrot.lane.b32.xlu0 %v1129, 121
        %v1134 = vpop.permute.xlu0 %1133
        %1135 = vrot.lane.b32.xlu0 %v1130, 121
        %v1136 = vpop.permute.xlu0 %1135
        %1137 = vrot.lane.b32.xlu0 %v1131, 121
        %v1138 = vpop.permute.xlu0 %1137
        %1139 = vrot.lane.b32.xlu0 %v1132, 121
        %v1140 = vpop.permute.xlu0 %1139
        %vm1141 = vcmask 990208
        %v1142 = vsel %vm1141, %v1134, %v1136
        %v1143 = vsel %vm1141, %v1136, %v1138
        %v1144 = vsel %vm1141, %v1138, %v1140
        %v1148 = vmul.f32 %v1125, %v1142
        %v1149 = vmul.f32 %v1125, %v1143
        %v1150 = vmul.f32 %v1125, %v1144
        %v1151 = vadd.f32 %v1119, %v1148
        %v1152 = vadd.f32 %v1120, %v1149
        %v1153 = vadd.f32 %v1121, %v1150
        %v1154 = vld [vmem:[#allocation3] sm:$0xff]
        %1155 = vset.pattern.permute.xlu0 5
        %1156 = vperm.xlu0 %1155, %v992
        %v1157 = vpop.permute.xlu0 %1156
        %1160 = vst [vmem:[#allocation1] ss:$4 sm:$0xff] %v1154
        %v1161 = vld.sshfl [vmem:[#allocation1] sm:$0xff pattern:$0x73625140]
        %v1162 = vld.sshfl [vmem:[#allocation1 + $0x8] sm:$0xff pattern:$0x73625140]
        %v1163 = vld.sshfl [vmem:[#allocation1 + $0x10] sm:$0xff pattern:$0x73625140]
        %v1164 = vld.sshfl [vmem:[#allocation1 + $0x18] sm:$0xff pattern:$0x73625140]
        %1165 = vrot.lane.b32.xlu0 %v1161, 120
        %v1166 = vpop.permute.xlu0 %1165
        %1167 = vrot.lane.b32.xlu0 %v1162, 120
        %v1168 = vpop.permute.xlu0 %1167
        %1169 = vrot.lane.b32.xlu0 %v1163, 120
        %v1170 = vpop.permute.xlu0 %1169
        %1171 = vrot.lane.b32.xlu0 %v1164, 120
        %v1172 = vpop.permute.xlu0 %1171
        %vm1173 = vcmask 982016
        %v1174 = vsel %vm1173, %v1166, %v1168
        %v1175 = vsel %vm1173, %v1168, %v1170
        %v1176 = vsel %vm1173, %v1170, %v1172
        %v1180 = vmul.f32 %v1157, %v1174
        %v1181 = vmul.f32 %v1157, %v1175
        %v1182 = vmul.f32 %v1157, %v1176
        %v1183 = vadd.f32 %v1151, %v1180
        %v1184 = vadd.f32 %v1152, %v1181
        %v1185 = vadd.f32 %v1153, %v1182
        %v1186 = vld [vmem:[#allocation3] sm:$0xff]
        %1187 = vset.pattern.permute.xlu0 6
        %1188 = vperm.xlu0 %1187, %v992
        %v1189 = vpop.permute.xlu0 %1188
        %1192 = vst [vmem:[#allocation1] ss:$4 sm:$0xff] %v1186
        %v1193 = vld.sshfl [vmem:[#allocation1] sm:$0xff pattern:$0x73625140]
        %v1194 = vld.sshfl [vmem:[#allocation1 + $0x8] sm:$0xff pattern:$0x73625140]
        %v1195 = vld.sshfl [vmem:[#allocation1 + $0x10] sm:$0xff pattern:$0x73625140]
        %v1196 = vld.sshfl [vmem:[#allocation1 + $0x18] sm:$0xff pattern:$0x73625140]
        %1197 = vrot.lane.b32.xlu0 %v1193, 119
        %v1198 = vpop.permute.xlu0 %1197
        %1199 = vrot.lane.b32.xlu0 %v1194, 119
        %v1200 = vpop.permute.xlu0 %1199
        %1201 = vrot.lane.b32.xlu0 %v1195, 119
        %v1202 = vpop.permute.xlu0 %1201
        %1203 = vrot.lane.b32.xlu0 %v1196, 119
        %v1204 = vpop.permute.xlu0 %1203
        %vm1205 = vcmask 973824
        %v1206 = vsel %vm1205, %v1198, %v1200
        %v1207 = vsel %vm1205, %v1200, %v1202
        %v1208 = vsel %vm1205, %v1202, %v1204
        %v1212 = vmul.f32 %v1189, %v1206
        %v1213 = vmul.f32 %v1189, %v1207
        %v1214 = vmul.f32 %v1189, %v1208
        %v1215 = vadd.f32 %v1183, %v1212
        %v1216 = vadd.f32 %v1184, %v1213
        %v1217 = vadd.f32 %v1185, %v1214
        %v1218 = vld [vmem:[#allocation3] sm:$0xff]
        %1219 = vset.pattern.permute.xlu0 7
        %1220 = vperm.xlu0 %1219, %v992
        %v1221 = vpop.permute.xlu0 %1220
        %1224 = vst [vmem:[#allocation1] ss:$4 sm:$0xff] %v1218
        %v1225 = vld.sshfl [vmem:[#allocation1] sm:$0xff pattern:$0x73625140]
        %v1226 = vld.sshfl [vmem:[#allocation1 + $0x8] sm:$0xff pattern:$0x73625140]
        %v1227 = vld.sshfl [vmem:[#allocation1 + $0x10] sm:$0xff pattern:$0x73625140]
        %v1228 = vld.sshfl [vmem:[#allocation1 + $0x18] sm:$0xff pattern:$0x73625140]
        %1229 = vrot.lane.b32.xlu0 %v1225, 118
        %v1230 = vpop.permute.xlu0 %1229
        %1231 = vrot.lane.b32.xlu0 %v1226, 118
        %v1232 = vpop.permute.xlu0 %1231
        %1233 = vrot.lane.b32.xlu0 %v1227, 118
        %v1234 = vpop.permute.xlu0 %1233
        %1235 = vrot.lane.b32.xlu0 %v1228, 118
        %v1236 = vpop.permute.xlu0 %1235
        %vm1237 = vcmask 965632
        %v1238 = vsel %vm1237, %v1230, %v1232
        %v1239 = vsel %vm1237, %v1232, %v1234
        %v1240 = vsel %vm1237, %v1234, %v1236
        %v1244 = vmul.f32 %v1221, %v1238
        %v1245 = vmul.f32 %v1221, %v1239
        %v1246 = vmul.f32 %v1221, %v1240
        %v1247 = vadd.f32 %v1215, %v1244
        %v1248 = vadd.f32 %v1216, %v1245
        %v1249 = vadd.f32 %v1217, %v1246
        %v1250 = vld [vmem:[#allocation3] sm:$0xff]
        %1251 = vset.pattern.permute.xlu0 8
        %1252 = vperm.xlu0 %1251, %v992
        %v1253 = vpop.permute.xlu0 %1252
        %1256 = vst [vmem:[#allocation1] ss:$4 sm:$0xff] %v1250
        %v1257 = vld.sshfl [vmem:[#allocation1] sm:$0xff pattern:$0x73625140]
        %v1258 = vld.sshfl [vmem:[#allocation1 + $0x8] sm:$0xff pattern:$0x73625140]
        %v1259 = vld.sshfl [vmem:[#allocation1 + $0x10] sm:$0xff pattern:$0x73625140]
        %v1260 = vld.sshfl [vmem:[#allocation1 + $0x18] sm:$0xff pattern:$0x73625140]
        %1261 = vrot.lane.b32.xlu0 %v1257, 117
        %v1262 = vpop.permute.xlu0 %1261
        %1263 = vrot.lane.b32.xlu0 %v1258, 117
        %v1264 = vpop.permute.xlu0 %1263
        %1265 = vrot.lane.b32.xlu0 %v1259, 117
        %v1266 = vpop.permute.xlu0 %1265
        %1267 = vrot.lane.b32.xlu0 %v1260, 117
        %v1268 = vpop.permute.xlu0 %1267
        %vm1269 = vcmask 957440
        %v1270 = vsel %vm1269, %v1262, %v1264
        %v1271 = vsel %vm1269, %v1264, %v1266
        %v1272 = vsel %vm1269, %v1266, %v1268
        %v1276 = vmul.f32 %v1253, %v1270
        %v1277 = vmul.f32 %v1253, %v1271
        %v1278 = vmul.f32 %v1253, %v1272
        %v1279 = vadd.f32 %v1247, %v1276
        %v1280 = vadd.f32 %v1248, %v1277
        %v1281 = vadd.f32 %v1249, %v1278
        %v1282 = vld [vmem:[#allocation3] sm:$0xff]
        %1283 = vset.pattern.permute.xlu0 9
        %1284 = vperm.xlu0 %1283, %v992
        %v1285 = vpop.permute.xlu0 %1284
        %1288 = vst [vmem:[#allocation1] ss:$4 sm:$0xff] %v1282
        %v1289 = vld.sshfl [vmem:[#allocation1] sm:$0xff pattern:$0x73625140]
        %v1290 = vld.sshfl [vmem:[#allocation1 + $0x8] sm:$0xff pattern:$0x73625140]
        %v1291 = vld.sshfl [vmem:[#allocation1 + $0x10] sm:$0xff pattern:$0x73625140]
        %v1292 = vld.sshfl [vmem:[#allocation1 + $0x18] sm:$0xff pattern:$0x73625140]
        %1293 = vrot.lane.b32.xlu0 %v1289, 116
        %v1294 = vpop.permute.xlu0 %1293
        %1295 = vrot.lane.b32.xlu0 %v1290, 116
        %v1296 = vpop.permute.xlu0 %1295
        %1297 = vrot.lane.b32.xlu0 %v1291, 116
        %v1298 = vpop.permute.xlu0 %1297
        %1299 = vrot.lane.b32.xlu0 %v1292, 116
        %v1300 = vpop.permute.xlu0 %1299
        %vm1301 = vcmask 949248
        %v1302 = vsel %vm1301, %v1294, %v1296
        %v1303 = vsel %vm1301, %v1296, %v1298
        %v1304 = vsel %vm1301, %v1298, %v1300
        %v1308 = vmul.f32 %v1285, %v1302
        %v1309 = vmul.f32 %v1285, %v1303
        %v1310 = vmul.f32 %v1285, %v1304
        %v1311 = vadd.f32 %v1279, %v1308
        %v1312 = vadd.f32 %v1280, %v1309
        %v1313 = vadd.f32 %v1281, %v1310
        %v1314 = vld [vmem:[#allocation3] sm:$0xff]
        %1315 = vset.pattern.permute.xlu0 10
        %1316 = vperm.xlu0 %1315, %v992
        %v1317 = vpop.permute.xlu0 %1316
        %1320 = vst [vmem:[#allocation1] ss:$4 sm:$0xff] %v1314
        %v1321 = vld.sshfl [vmem:[#allocation1] sm:$0xff pattern:$0x73625140]
        %v1322 = vld.sshfl [vmem:[#allocation1 + $0x8] sm:$0xff pattern:$0x73625140]
        %v1323 = vld.sshfl [vmem:[#allocation1 + $0x10] sm:$0xff pattern:$0x73625140]
        %v1324 = vld.sshfl [vmem:[#allocation1 + $0x18] sm:$0xff pattern:$0x73625140]
        %1325 = vrot.lane.b32.xlu0 %v1321, 115
        %v1326 = vpop.permute.xlu0 %1325
        %1327 = vrot.lane.b32.xlu0 %v1322, 115
        %v1328 = vpop.permute.xlu0 %1327
        %1329 = vrot.lane.b32.xlu0 %v1323, 115
        %v1330 = vpop.permute.xlu0 %1329
        %1331 = vrot.lane.b32.xlu0 %v1324, 115
        %v1332 = vpop.permute.xlu0 %1331
        %vm1333 = vcmask 941056
        %v1334 = vsel %vm1333, %v1326, %v1328
        %v1335 = vsel %vm1333, %v1328, %v1330
        %v1336 = vsel %vm1333, %v1330, %v1332
        %v1340 = vmul.f32 %v1317, %v1334
        %v1341 = vmul.f32 %v1317, %v1335
        %v1342 = vmul.f32 %v1317, %v1336
        %v1343 = vadd.f32 %v1311, %v1340
        %v1344 = vadd.f32 %v1312, %v1341
        %v1345 = vadd.f32 %v1313, %v1342
        %v1346 = vld [vmem:[#allocation3] sm:$0xff]
        %1347 = vset.pattern.permute.xlu0 11
        %1348 = vperm.xlu0 %1347, %v992
        %v1349 = vpop.permute.xlu0 %1348
        %1352 = vst [vmem:[#allocation1] ss:$4 sm:$0xff] %v1346
        %v1353 = vld.sshfl [vmem:[#allocation1] sm:$0xff pattern:$0x73625140]
        %v1354 = vld.sshfl [vmem:[#allocation1 + $0x8] sm:$0xff pattern:$0x73625140]
        %v1355 = vld.sshfl [vmem:[#allocation1 + $0x10] sm:$0xff pattern:$0x73625140]
        %v1356 = vld.sshfl [vmem:[#allocation1 + $0x18] sm:$0xff pattern:$0x73625140]
        %1357 = vrot.lane.b32.xlu0 %v1353, 101
        %v1358 = vpop.permute.xlu0 %1357
        %1359 = vrot.lane.b32.xlu0 %v1354, 101
        %v1360 = vpop.permute.xlu0 %1359
        %1361 = vrot.lane.b32.xlu0 %v1355, 101
        %v1362 = vpop.permute.xlu0 %1361
        %1363 = vrot.lane.b32.xlu0 %v1356, 101
        %v1364 = vpop.permute.xlu0 %1363
        %vm1365 = vcmask 826368
        %v1366 = vsel %vm1365, %v1358, %v1360
        %v1367 = vsel %vm1365, %v1360, %v1362
        %v1368 = vsel %vm1365, %v1362, %v1364
        %v1372 = vmul.f32 %v1349, %v1366
        %v1373 = vmul.f32 %v1349, %v1367
        %v1374 = vmul.f32 %v1349, %v1368
        %v1375 = vadd.f32 %v1343, %v1372
        %v1376 = vadd.f32 %v1344, %v1373
        %v1377 = vadd.f32 %v1345, %v1374
        %v1378 = vld [vmem:[#allocation3] sm:$0xff]
        %1379 = vset.pattern.permute.xlu0 12
        %1380 = vperm.xlu0 %1379, %v992
        %v1381 = vpop.permute.xlu0 %1380
        %1384 = vst [vmem:[#allocation1] ss:$4 sm:$0xff] %v1378
        %v1385 = vld.sshfl [vmem:[#allocation1] sm:$0xff pattern:$0x73625140]
        %v1386 = vld.sshfl [vmem:[#allocation1 + $0x8] sm:$0xff pattern:$0x73625140]
        %v1387 = vld.sshfl [vmem:[#allocation1 + $0x10] sm:$0xff pattern:$0x73625140]
        %v1388 = vld.sshfl [vmem:[#allocation1 + $0x18] sm:$0xff pattern:$0x73625140]
        %1389 = vrot.lane.b32.xlu0 %v1385, 100
        %v1390 = vpop.permute.xlu0 %1389
        %1391 = vrot.lane.b32.xlu0 %v1386, 100
        %v1392 = vpop.permute.xlu0 %1391
        %1393 = vrot.lane.b32.xlu0 %v1387, 100
        %v1394 = vpop.permute.xlu0 %1393
        %1395 = vrot.lane.b32.xlu0 %v1388, 100
        %v1396 = vpop.permute.xlu0 %1395
        %vm1397 = vcmask 818176
        %v1398 = vsel %vm1397, %v1390, %v1392
        %v1399 = vsel %vm1397, %v1392, %v1394
        %v1400 = vsel %vm1397, %v1394, %v1396
        %v1404 = vmul.f32 %v1381, %v1398
        %v1405 = vmul.f32 %v1381, %v1399
        %v1406 = vmul.f32 %v1381, %v1400
        %v1407 = vadd.f32 %v1375, %v1404
        %v1408 = vadd.f32 %v1376, %v1405
        %v1409 = vadd.f32 %v1377, %v1406
        %v1410 = vld [vmem:[#allocation3] sm:$0xff]
        %1411 = vset.pattern.permute.xlu0 13
        %1412 = vperm.xlu0 %1411, %v992
        %v1413 = vpop.permute.xlu0 %1412
        %1416 = vst [vmem:[#allocation1] ss:$4 sm:$0xff] %v1410
        %v1417 = vld.sshfl [vmem:[#allocation1] sm:$0xff pattern:$0x73625140]
        %v1418 = vld.sshfl [vmem:[#allocation1 + $0x8] sm:$0xff pattern:$0x73625140]
        %v1419 = vld.sshfl [vmem:[#allocation1 + $0x10] sm:$0xff pattern:$0x73625140]
        %v1420 = vld.sshfl [vmem:[#allocation1 + $0x18] sm:$0xff pattern:$0x73625140]
        %1421 = vrot.lane.b32.xlu0 %v1417, 99
        %v1422 = vpop.permute.xlu0 %1421
        %1423 = vrot.lane.b32.xlu0 %v1418, 99
        %v1424 = vpop.permute.xlu0 %1423
        %1425 = vrot.lane.b32.xlu0 %v1419, 99
        %v1426 = vpop.permute.xlu0 %1425
        %1427 = vrot.lane.b32.xlu0 %v1420, 99
        %v1428 = vpop.permute.xlu0 %1427
        %vm1429 = vcmask 809984
        %v1430 = vsel %vm1429, %v1422, %v1424
        %v1431 = vsel %vm1429, %v1424, %v1426
        %v1432 = vsel %vm1429, %v1426, %v1428
        %v1436 = vmul.f32 %v1413, %v1430
        %v1437 = vmul.f32 %v1413, %v1431
        %v1438 = vmul.f32 %v1413, %v1432
        %v1439 = vadd.f32 %v1407, %v1436
        %v1440 = vadd.f32 %v1408, %v1437
        %v1441 = vadd.f32 %v1409, %v1438
        %v1442 = vld [vmem:[#allocation3] sm:$0xff]
        %1443 = vset.pattern.permute.xlu0 14
        %1444 = vperm.xlu0 %1443, %v992
        %v1445 = vpop.permute.xlu0 %1444
        %1448 = vst [vmem:[#allocation1] ss:$4 sm:$0xff] %v1442
        %v1449 = vld.sshfl [vmem:[#allocation1] sm:$0xff pattern:$0x73625140]
        %v1450 = vld.sshfl [vmem:[#allocation1 + $0x8] sm:$0xff pattern:$0x73625140]
        %v1451 = vld.sshfl [vmem:[#allocation1 + $0x10] sm:$0xff pattern:$0x73625140]
        %v1452 = vld.sshfl [vmem:[#allocation1 + $0x18] sm:$0xff pattern:$0x73625140]
        %1453 = vrot.lane.b32.xlu0 %v1449, 98
        %v1454 = vpop.permute.xlu0 %1453
        %1455 = vrot.lane.b32.xlu0 %v1450, 98
        %v1456 = vpop.permute.xlu0 %1455
        %1457 = vrot.lane.b32.xlu0 %v1451, 98
        %v1458 = vpop.permute.xlu0 %1457
        %1459 = vrot.lane.b32.xlu0 %v1452, 98
        %v1460 = vpop.permute.xlu0 %1459
        %vm1461 = vcmask 801792
        %v1462 = vsel %vm1461, %v1454, %v1456
        %v1463 = vsel %vm1461, %v1456, %v1458
        %v1464 = vsel %vm1461, %v1458, %v1460
        %v1468 = vmul.f32 %v1445, %v1462
        %v1469 = vmul.f32 %v1445, %v1463
        %v1470 = vmul.f32 %v1445, %v1464
        %v1471 = vadd.f32 %v1439, %v1468
        %v1472 = vadd.f32 %v1440, %v1469
        %v1473 = vadd.f32 %v1441, %v1470
        %v1474 = vld [vmem:[#allocation3] sm:$0xff]
        %1475 = vset.pattern.permute.xlu0 15
        %1476 = vperm.xlu0 %1475, %v992
        %v1477 = vpop.permute.xlu0 %1476
        %1480 = vst [vmem:[#allocation1] ss:$4 sm:$0xff] %v1474
        %v1481 = vld.sshfl [vmem:[#allocation1] sm:$0xff pattern:$0x73625140]
        %v1482 = vld.sshfl [vmem:[#allocation1 + $0x8] sm:$0xff pattern:$0x73625140]
        %v1483 = vld.sshfl [vmem:[#allocation1 + $0x10] sm:$0xff pattern:$0x73625140]
        %v1484 = vld.sshfl [vmem:[#allocation1 + $0x18] sm:$0xff pattern:$0x73625140]
        %1485 = vrot.lane.b32.xlu0 %v1481, 97
        %v1486 = vpop.permute.xlu0 %1485
        %1487 = vrot.lane.b32.xlu0 %v1482, 97
        %v1488 = vpop.permute.xlu0 %1487
        %1489 = vrot.lane.b32.xlu0 %v1483, 97
        %v1490 = vpop.permute.xlu0 %1489
        %1491 = vrot.lane.b32.xlu0 %v1484, 97
        %v1492 = vpop.permute.xlu0 %1491
        %vm1493 = vcmask 793600
        %v1494 = vsel %vm1493, %v1486, %v1488
        %v1495 = vsel %vm1493, %v1488, %v1490
        %v1496 = vsel %vm1493, %v1490, %v1492
        %v1500 = vmul.f32 %v1477, %v1494
        %v1501 = vmul.f32 %v1477, %v1495
        %v1502 = vmul.f32 %v1477, %v1496
        %v1503 = vadd.f32 %v1471, %v1500
        %v1504 = vadd.f32 %v1472, %v1501
        %v1505 = vadd.f32 %v1473, %v1502
        %v1506 = vld [vmem:[#allocation3] sm:$0xff]
        %1507 = vset.pattern.permute.xlu0 16
        %1508 = vperm.xlu0 %1507, %v992
        %v1509 = vpop.permute.xlu0 %1508
        %1512 = vst [vmem:[#allocation1] ss:$4 sm:$0xff] %v1506
        %v1513 = vld.sshfl [vmem:[#allocation1] sm:$0xff pattern:$0x73625140]
        %v1514 = vld.sshfl [vmem:[#allocation1 + $0x8] sm:$0xff pattern:$0x73625140]
        %v1515 = vld.sshfl [vmem:[#allocation1 + $0x10] sm:$0xff pattern:$0x73625140]
        %v1516 = vld.sshfl [vmem:[#allocation1 + $0x18] sm:$0xff pattern:$0x73625140]
        %1517 = vrot.lane.b32.xlu0 %v1513, 96
        %v1518 = vpop.permute.xlu0 %1517
        %1519 = vrot.lane.b32.xlu0 %v1514, 96
        %v1520 = vpop.permute.xlu0 %1519
        %1521 = vrot.lane.b32.xlu0 %v1515, 96
        %v1522 = vpop.permute.xlu0 %1521
        %1523 = vrot.lane.b32.xlu0 %v1516, 96
        %v1524 = vpop.permute.xlu0 %1523
        %vm1525 = vcmask 785408
        %v1526 = vsel %vm1525, %v1518, %v1520
        %v1527 = vsel %vm1525, %v1520, %v1522
        %v1528 = vsel %vm1525, %v1522, %v1524
        %v1532 = vmul.f32 %v1509, %v1526
        %v1533 = vmul.f32 %v1509, %v1527
        %v1534 = vmul.f32 %v1509, %v1528
        %v1535 = vadd.f32 %v1503, %v1532
        %v1536 = vadd.f32 %v1504, %v1533
        %v1537 = vadd.f32 %v1505, %v1534
        %v1538 = vld [vmem:[#allocation3] sm:$0xff]
        %1539 = vset.pattern.permute.xlu0 17
        %1540 = vperm.xlu0 %1539, %v992
        %v1541 = vpop.permute.xlu0 %1540
        %1544 = vst [vmem:[#allocation1] ss:$4 sm:$0xff] %v1538
        %v1545 = vld.sshfl [vmem:[#allocation1] sm:$0xff pattern:$0x73625140]
        %v1546 = vld.sshfl [vmem:[#allocation1 + $0x8] sm:$0xff pattern:$0x73625140]
        %v1547 = vld.sshfl [vmem:[#allocation1 + $0x10] sm:$0xff pattern:$0x73625140]
        %v1548 = vld.sshfl [vmem:[#allocation1 + $0x18] sm:$0xff pattern:$0x73625140]
        %1549 = vrot.lane.b32.xlu0 %v1545, 95
        %v1550 = vpop.permute.xlu0 %1549
        %1551 = vrot.lane.b32.xlu0 %v1546, 95
        %v1552 = vpop.permute.xlu0 %1551
        %1553 = vrot.lane.b32.xlu0 %v1547, 95
        %v1554 = vpop.permute.xlu0 %1553
        %1555 = vrot.lane.b32.xlu0 %v1548, 95
        %v1556 = vpop.permute.xlu0 %1555
        %vm1557 = vcmask 777216
        %v1558 = vsel %vm1557, %v1550, %v1552
        %v1559 = vsel %vm1557, %v1552, %v1554
        %v1560 = vsel %vm1557, %v1554, %v1556
        %v1564 = vmul.f32 %v1541, %v1558
        %v1565 = vmul.f32 %v1541, %v1559
        %v1566 = vmul.f32 %v1541, %v1560
        %v1567 = vadd.f32 %v1535, %v1564
        %v1568 = vadd.f32 %v1536, %v1565
        %v1569 = vadd.f32 %v1537, %v1566
        %v1570 = vld [vmem:[#allocation3] sm:$0xff]
        %1571 = vset.pattern.permute.xlu0 18
        %1572 = vperm.xlu0 %1571, %v992
        %v1573 = vpop.permute.xlu0 %1572
        %1576 = vst [vmem:[#allocation1] ss:$4 sm:$0xff] %v1570
        %v1577 = vld.sshfl [vmem:[#allocation1] sm:$0xff pattern:$0x73625140]
        %v1578 = vld.sshfl [vmem:[#allocation1 + $0x8] sm:$0xff pattern:$0x73625140]
        %v1579 = vld.sshfl [vmem:[#allocation1 + $0x10] sm:$0xff pattern:$0x73625140]
        %v1580 = vld.sshfl [vmem:[#allocation1 + $0x18] sm:$0xff pattern:$0x73625140]
        %1581 = vrot.lane.b32.xlu0 %v1577, 94
        %v1582 = vpop.permute.xlu0 %1581
        %1583 = vrot.lane.b32.xlu0 %v1578, 94
        %v1584 = vpop.permute.xlu0 %1583
        %1585 = vrot.lane.b32.xlu0 %v1579, 94
        %v1586 = vpop.permute.xlu0 %1585
        %1587 = vrot.lane.b32.xlu0 %v1580, 94
        %v1588 = vpop.permute.xlu0 %1587
        %vm1589 = vcmask 769024
        %v1590 = vsel %vm1589, %v1582, %v1584
        %v1591 = vsel %vm1589, %v1584, %v1586
        %v1592 = vsel %vm1589, %v1586, %v1588
        %v1596 = vmul.f32 %v1573, %v1590
        %v1597 = vmul.f32 %v1573, %v1591
        %v1598 = vmul.f32 %v1573, %v1592
        %v1599 = vadd.f32 %v1567, %v1596
        %v1600 = vadd.f32 %v1568, %v1597
        %v1601 = vadd.f32 %v1569, %v1598
        %v1602 = vld [vmem:[#allocation3] sm:$0xff]
        %1603 = vset.pattern.permute.xlu0 19
        %1604 = vperm.xlu0 %1603, %v992
        %v1605 = vpop.permute.xlu0 %1604
        %1608 = vst [vmem:[#allocation1] ss:$4 sm:$0xff] %v1602
        %v1609 = vld.sshfl [vmem:[#allocation1] sm:$0xff pattern:$0x73625140]
        %v1610 = vld.sshfl [vmem:[#allocation1 + $0x8] sm:$0xff pattern:$0x73625140]
        %v1611 = vld.sshfl [vmem:[#allocation1 + $0x10] sm:$0xff pattern:$0x73625140]
        %v1612 = vld.sshfl [vmem:[#allocation1 + $0x18] sm:$0xff pattern:$0x73625140]
        %1613 = vrot.lane.b32.xlu0 %v1609, 93
        %v1614 = vpop.permute.xlu0 %1613
        %1615 = vrot.lane.b32.xlu0 %v1610, 93
        %v1616 = vpop.permute.xlu0 %1615
        %1617 = vrot.lane.b32.xlu0 %v1611, 93
        %v1618 = vpop.permute.xlu0 %1617
        %1619 = vrot.lane.b32.xlu0 %v1612, 93
        %v1620 = vpop.permute.xlu0 %1619
        %vm1621 = vcmask 760832
        %v1622 = vsel %vm1621, %v1614, %v1616
        %v1623 = vsel %vm1621, %v1616, %v1618
        %v1624 = vsel %vm1621, %v1618, %v1620
        %v1628 = vmul.f32 %v1605, %v1622
        %v1629 = vmul.f32 %v1605, %v1623
        %v1630 = vmul.f32 %v1605, %v1624
        %v1631 = vadd.f32 %v1599, %v1628
        %v1632 = vadd.f32 %v1600, %v1629
        %v1633 = vadd.f32 %v1601, %v1630
        %v1634 = vld [vmem:[#allocation3] sm:$0xff]
        %1635 = vset.pattern.permute.xlu0 20
        %1636 = vperm.xlu0 %1635, %v992
        %v1637 = vpop.permute.xlu0 %1636
        %1640 = vst [vmem:[#allocation1] ss:$4 sm:$0xff] %v1634
        %v1641 = vld.sshfl [vmem:[#allocation1] sm:$0xff pattern:$0x73625140]
        %v1642 = vld.sshfl [vmem:[#allocation1 + $0x8] sm:$0xff pattern:$0x73625140]
        %v1643 = vld.sshfl [vmem:[#allocation1 + $0x10] sm:$0xff pattern:$0x73625140]
        %v1644 = vld.sshfl [vmem:[#allocation1 + $0x18] sm:$0xff pattern:$0x73625140]
        %1645 = vrot.lane.b32.xlu0 %v1641, 92
        %v1646 = vpop.permute.xlu0 %1645
        %1647 = vrot.lane.b32.xlu0 %v1642, 92
        %v1648 = vpop.permute.xlu0 %1647
        %1649 = vrot.lane.b32.xlu0 %v1643, 92
        %v1650 = vpop.permute.xlu0 %1649
        %1651 = vrot.lane.b32.xlu0 %v1644, 92
        %v1652 = vpop.permute.xlu0 %1651
        %vm1653 = vcmask 752640
        %v1654 = vsel %vm1653, %v1646, %v1648
        %v1655 = vsel %vm1653, %v1648, %v1650
        %v1656 = vsel %vm1653, %v1650, %v1652
        %v1660 = vmul.f32 %v1637, %v1654
        %v1661 = vmul.f32 %v1637, %v1655
        %v1662 = vmul.f32 %v1637, %v1656
        %v1663 = vadd.f32 %v1631, %v1660
        %v1664 = vadd.f32 %v1632, %v1661
        %v1665 = vadd.f32 %v1633, %v1662
        %v1666 = vld [vmem:[#allocation3] sm:$0xff]
        %1667 = vset.pattern.permute.xlu0 21
        %1668 = vperm.xlu0 %1667, %v992
        %v1669 = vpop.permute.xlu0 %1668
        %1672 = vst [vmem:[#allocation1] ss:$4 sm:$0xff] %v1666
        %v1673 = vld.sshfl [vmem:[#allocation1] sm:$0xff pattern:$0x73625140]
        %v1674 = vld.sshfl [vmem:[#allocation1 + $0x8] sm:$0xff pattern:$0x73625140]
        %v1675 = vld.sshfl [vmem:[#allocation1 + $0x10] sm:$0xff pattern:$0x73625140]
        %v1676 = vld.sshfl [vmem:[#allocation1 + $0x18] sm:$0xff pattern:$0x73625140]
        %1677 = vrot.lane.b32.xlu0 %v1673, 91
        %v1678 = vpop.permute.xlu0 %1677
        %1679 = vrot.lane.b32.xlu0 %v1674, 91
        %v1680 = vpop.permute.xlu0 %1679
        %1681 = vrot.lane.b32.xlu0 %v1675, 91
        %v1682 = vpop.permute.xlu0 %1681
        %1683 = vrot.lane.b32.xlu0 %v1676, 91
        %v1684 = vpop.permute.xlu0 %1683
        %vm1685 = vcmask 744448
        %v1686 = vsel %vm1685, %v1678, %v1680
        %v1687 = vsel %vm1685, %v1680, %v1682
        %v1688 = vsel %vm1685, %v1682, %v1684
        %v1692 = vmul.f32 %v1669, %v1686
        %v1693 = vmul.f32 %v1669, %v1687
        %v1694 = vmul.f32 %v1669, %v1688
        %v1695 = vadd.f32 %v1663, %v1692
        %v1696 = vadd.f32 %v1664, %v1693
        %v1697 = vadd.f32 %v1665, %v1694
        %v1698 = vld [vmem:[#allocation3] sm:$0xff]
        %1699 = vset.pattern.permute.xlu0 22
        %1700 = vperm.xlu0 %1699, %v992
        %v1701 = vpop.permute.xlu0 %1700
        %1704 = vst [vmem:[#allocation1] ss:$4 sm:$0xff] %v1698
        %v1705 = vld.sshfl [vmem:[#allocation1] sm:$0xff pattern:$0x73625140]
        %v1706 = vld.sshfl [vmem:[#allocation1 + $0x8] sm:$0xff pattern:$0x73625140]
        %v1707 = vld.sshfl [vmem:[#allocation1 + $0x10] sm:$0xff pattern:$0x73625140]
        %v1708 = vld.sshfl [vmem:[#allocation1 + $0x18] sm:$0xff pattern:$0x73625140]
        %1709 = vrot.lane.b32.xlu0 %v1705, 77
        %v1710 = vpop.permute.xlu0 %1709
        %1711 = vrot.lane.b32.xlu0 %v1706, 77
        %v1712 = vpop.permute.xlu0 %1711
        %1713 = vrot.lane.b32.xlu0 %v1707, 77
        %v1714 = vpop.permute.xlu0 %1713
        %1715 = vrot.lane.b32.xlu0 %v1708, 77
        %v1716 = vpop.permute.xlu0 %1715
        %vm1717 = vcmask 629760
        %v1718 = vsel %vm1717, %v1710, %v1712
        %v1719 = vsel %vm1717, %v1712, %v1714
        %v1720 = vsel %vm1717, %v1714, %v1716
        %v1724 = vmul.f32 %v1701, %v1718
        %v1725 = vmul.f32 %v1701, %v1719
        %v1726 = vmul.f32 %v1701, %v1720
        %v1727 = vadd.f32 %v1695, %v1724
        %v1728 = vadd.f32 %v1696, %v1725
        %v1729 = vadd.f32 %v1697, %v1726
        %v1730 = vld [vmem:[#allocation3] sm:$0xff]
        %1731 = vset.pattern.permute.xlu0 23
        %1732 = vperm.xlu0 %1731, %v992
        %v1733 = vpop.permute.xlu0 %1732
        %1736 = vst [vmem:[#allocation1] ss:$4 sm:$0xff] %v1730
        %v1737 = vld.sshfl [vmem:[#allocation1] sm:$0xff pattern:$0x73625140]
        %v1738 = vld.sshfl [vmem:[#allocation1 + $0x8] sm:$0xff pattern:$0x73625140]
        %v1739 = vld.sshfl [vmem:[#allocation1 + $0x10] sm:$0xff pattern:$0x73625140]
        %v1740 = vld.sshfl [vmem:[#allocation1 + $0x18] sm:$0xff pattern:$0x73625140]
        %1741 = vrot.lane.b32.xlu0 %v1737, 76
        %v1742 = vpop.permute.xlu0 %1741
        %1743 = vrot.lane.b32.xlu0 %v1738, 76
        %v1744 = vpop.permute.xlu0 %1743
        %1745 = vrot.lane.b32.xlu0 %v1739, 76
        %v1746 = vpop.permute.xlu0 %1745
        %1747 = vrot.lane.b32.xlu0 %v1740, 76
        %v1748 = vpop.permute.xlu0 %1747
        %vm1749 = vcmask 621568
        %v1750 = vsel %vm1749, %v1742, %v1744
        %v1751 = vsel %vm1749, %v1744, %v1746
        %v1752 = vsel %vm1749, %v1746, %v1748
        %v1756 = vmul.f32 %v1733, %v1750
        %v1757 = vmul.f32 %v1733, %v1751
        %v1758 = vmul.f32 %v1733, %v1752
        %v1759 = vadd.f32 %v1727, %v1756
        %v1760 = vadd.f32 %v1728, %v1757
        %v1761 = vadd.f32 %v1729, %v1758
        %v1762 = vld [vmem:[#allocation3] sm:$0xff]
        %1763 = vset.pattern.permute.xlu0 24
        %1764 = vperm.xlu0 %1763, %v992
        %v1765 = vpop.permute.xlu0 %1764
        %1768 = vst [vmem:[#allocation1] ss:$4 sm:$0xff] %v1762
        %v1769 = vld.sshfl [vmem:[#allocation1] sm:$0xff pattern:$0x73625140]
        %v1770 = vld.sshfl [vmem:[#allocation1 + $0x8] sm:$0xff pattern:$0x73625140]
        %v1771 = vld.sshfl [vmem:[#allocation1 + $0x10] sm:$0xff pattern:$0x73625140]
        %v1772 = vld.sshfl [vmem:[#allocation1 + $0x18] sm:$0xff pattern:$0x73625140]
        %1773 = vrot.lane.b32.xlu0 %v1769, 75
        %v1774 = vpop.permute.xlu0 %1773
        %1775 = vrot.lane.b32.xlu0 %v1770, 75
        %v1776 = vpop.permute.xlu0 %1775
        %1777 = vrot.lane.b32.xlu0 %v1771, 75
        %v1778 = vpop.permute.xlu0 %1777
        %1779 = vrot.lane.b32.xlu0 %v1772, 75
        %v1780 = vpop.permute.xlu0 %1779
        %vm1781 = vcmask 613376
        %v1782 = vsel %vm1781, %v1774, %v1776
        %v1783 = vsel %vm1781, %v1776, %v1778
        %v1784 = vsel %vm1781, %v1778, %v1780
        %v1788 = vmul.f32 %v1765, %v1782
        %v1789 = vmul.f32 %v1765, %v1783
        %v1790 = vmul.f32 %v1765, %v1784
        %v1791 = vadd.f32 %v1759, %v1788
        %v1792 = vadd.f32 %v1760, %v1789
        %v1793 = vadd.f32 %v1761, %v1790
        %v1794 = vld [vmem:[#allocation3] sm:$0xff]
        %1795 = vset.pattern.permute.xlu0 25
        %1796 = vperm.xlu0 %1795, %v992
        %v1797 = vpop.permute.xlu0 %1796
        %1800 = vst [vmem:[#allocation1] ss:$4 sm:$0xff] %v1794
        %v1801 = vld.sshfl [vmem:[#allocation1] sm:$0xff pattern:$0x73625140]
        %v1802 = vld.sshfl [vmem:[#allocation1 + $0x8] sm:$0xff pattern:$0x73625140]
        %v1803 = vld.sshfl [vmem:[#allocation1 + $0x10] sm:$0xff pattern:$0x73625140]
        %v1804 = vld.sshfl [vmem:[#allocation1 + $0x18] sm:$0xff pattern:$0x73625140]
        %1805 = vrot.lane.b32.xlu0 %v1801, 74
        %v1806 = vpop.permute.xlu0 %1805
        %1807 = vrot.lane.b32.xlu0 %v1802, 74
        %v1808 = vpop.permute.xlu0 %1807
        %1809 = vrot.lane.b32.xlu0 %v1803, 74
        %v1810 = vpop.permute.xlu0 %1809
        %1811 = vrot.lane.b32.xlu0 %v1804, 74
        %v1812 = vpop.permute.xlu0 %1811
        %vm1813 = vcmask 605184
        %v1814 = vsel %vm1813, %v1806, %v1808
        %v1815 = vsel %vm1813, %v1808, %v1810
        %v1816 = vsel %vm1813, %v1810, %v1812
        %v1820 = vmul.f32 %v1797, %v1814
        %v1821 = vmul.f32 %v1797, %v1815
        %v1822 = vmul.f32 %v1797, %v1816
        %v1823 = vadd.f32 %v1791, %v1820
        %v1824 = vadd.f32 %v1792, %v1821
        %v1825 = vadd.f32 %v1793, %v1822
        %v1826 = vld [vmem:[#allocation3] sm:$0xff]
        %1827 = vset.pattern.permute.xlu0 26
        %1828 = vperm.xlu0 %1827, %v992
        %v1829 = vpop.permute.xlu0 %1828
        %1832 = vst [vmem:[#allocation1] ss:$4 sm:$0xff] %v1826
        %v1833 = vld.sshfl [vmem:[#allocation1] sm:$0xff pattern:$0x73625140]
        %v1834 = vld.sshfl [vmem:[#allocation1 + $0x8] sm:$0xff pattern:$0x73625140]
        %v1835 = vld.sshfl [vmem:[#allocation1 + $0x10] sm:$0xff pattern:$0x73625140]
        %v1836 = vld.sshfl [vmem:[#allocation1 + $0x18] sm:$0xff pattern:$0x73625140]
        %1837 = vrot.lane.b32.xlu0 %v1833, 73
        %v1838 = vpop.permute.xlu0 %1837
        %1839 = vrot.lane.b32.xlu0 %v1834, 73
        %v1840 = vpop.permute.xlu0 %1839
        %1841 = vrot.lane.b32.xlu0 %v1835, 73
        %v1842 = vpop.permute.xlu0 %1841
        %1843 = vrot.lane.b32.xlu0 %v1836, 73
        %v1844 = vpop.permute.xlu0 %1843
        %vm1845 = vcmask 596992
        %v1846 = vsel %vm1845, %v1838, %v1840
        %v1847 = vsel %vm1845, %v1840, %v1842
        %v1848 = vsel %vm1845, %v1842, %v1844
        %v1852 = vmul.f32 %v1829, %v1846
        %v1853 = vmul.f32 %v1829, %v1847
        %v1854 = vmul.f32 %v1829, %v1848
        %v1855 = vadd.f32 %v1823, %v1852
        %v1856 = vadd.f32 %v1824, %v1853
        %v1857 = vadd.f32 %v1825, %v1854
        %v1858 = vld [vmem:[#allocation3] sm:$0xff]
        %1859 = vset.pattern.permute.xlu0 27
        %1860 = vperm.xlu0 %1859, %v992
        %v1861 = vpop.permute.xlu0 %1860
        %1864 = vst [vmem:[#allocation1] ss:$4 sm:$0xff] %v1858
        %v1865 = vld.sshfl [vmem:[#allocation1] sm:$0xff pattern:$0x73625140]
        %v1866 = vld.sshfl [vmem:[#allocation1 + $0x8] sm:$0xff pattern:$0x73625140]
        %v1867 = vld.sshfl [vmem:[#allocation1 + $0x10] sm:$0xff pattern:$0x73625140]
        %v1868 = vld.sshfl [vmem:[#allocation1 + $0x18] sm:$0xff pattern:$0x73625140]
        %1869 = vrot.lane.b32.xlu0 %v1865, 72
        %v1870 = vpop.permute.xlu0 %1869
        %1871 = vrot.lane.b32.xlu0 %v1866, 72
        %v1872 = vpop.permute.xlu0 %1871
        %1873 = vrot.lane.b32.xlu0 %v1867, 72
        %v1874 = vpop.permute.xlu0 %1873
        %1875 = vrot.lane.b32.xlu0 %v1868, 72
        %v1876 = vpop.permute.xlu0 %1875
        %vm1877 = vcmask 588800
        %v1878 = vsel %vm1877, %v1870, %v1872
        %v1879 = vsel %vm1877, %v1872, %v1874
        %v1880 = vsel %vm1877, %v1874, %v1876
        %v1884 = vmul.f32 %v1861, %v1878
        %v1885 = vmul.f32 %v1861, %v1879
        %v1886 = vmul.f32 %v1861, %v1880
        %v1887 = vadd.f32 %v1855, %v1884
        %v1888 = vadd.f32 %v1856, %v1885
        %v1889 = vadd.f32 %v1857, %v1886
        %v1890 = vld [vmem:[#allocation3] sm:$0xff]
        %1891 = vset.pattern.permute.xlu0 28
        %1892 = vperm.xlu0 %1891, %v992
        %v1893 = vpop.permute.xlu0 %1892
        %1896 = vst [vmem:[#allocation1] ss:$4 sm:$0xff] %v1890
        %v1897 = vld.sshfl [vmem:[#allocation1] sm:$0xff pattern:$0x73625140]
        %v1898 = vld.sshfl [vmem:[#allocation1 + $0x8] sm:$0xff pattern:$0x73625140]
        %v1899 = vld.sshfl [vmem:[#allocation1 + $0x10] sm:$0xff pattern:$0x73625140]
        %v1900 = vld.sshfl [vmem:[#allocation1 + $0x18] sm:$0xff pattern:$0x73625140]
        %1901 = vrot.lane.b32.xlu0 %v1897, 71
        %v1902 = vpop.permute.xlu0 %1901
        %1903 = vrot.lane.b32.xlu0 %v1898, 71
        %v1904 = vpop.permute.xlu0 %1903
        %1905 = vrot.lane.b32.xlu0 %v1899, 71
        %v1906 = vpop.permute.xlu0 %1905
        %1907 = vrot.lane.b32.xlu0 %v1900, 71
        %v1908 = vpop.permute.xlu0 %1907
        %vm1909 = vcmask 580608
        %v1910 = vsel %vm1909, %v1902, %v1904
        %v1911 = vsel %vm1909, %v1904, %v1906
        %v1912 = vsel %vm1909, %v1906, %v1908
        %v1916 = vmul.f32 %v1893, %v1910
        %v1917 = vmul.f32 %v1893, %v1911
        %v1918 = vmul.f32 %v1893, %v1912
        %v1919 = vadd.f32 %v1887, %v1916
        %v1920 = vadd.f32 %v1888, %v1917
        %v1921 = vadd.f32 %v1889, %v1918
        %v1922 = vld [vmem:[#allocation3] sm:$0xff]
        %1923 = vset.pattern.permute.xlu0 29
        %1924 = vperm.xlu0 %1923, %v992
        %v1925 = vpop.permute.xlu0 %1924
        %1928 = vst [vmem:[#allocation1] ss:$4 sm:$0xff] %v1922
        %v1929 = vld.sshfl [vmem:[#allocation1] sm:$0xff pattern:$0x73625140]
        %v1930 = vld.sshfl [vmem:[#allocation1 + $0x8] sm:$0xff pattern:$0x73625140]
        %v1931 = vld.sshfl [vmem:[#allocation1 + $0x10] sm:$0xff pattern:$0x73625140]
        %v1932 = vld.sshfl [vmem:[#allocation1 + $0x18] sm:$0xff pattern:$0x73625140]
        %1933 = vrot.lane.b32.xlu0 %v1929, 70
        %v1934 = vpop.permute.xlu0 %1933
        %1935 = vrot.lane.b32.xlu0 %v1930, 70
        %v1936 = vpop.permute.xlu0 %1935
        %1937 = vrot.lane.b32.xlu0 %v1931, 70
        %v1938 = vpop.permute.xlu0 %1937
        %1939 = vrot.lane.b32.xlu0 %v1932, 70
        %v1940 = vpop.permute.xlu0 %1939
        %vm1941 = vcmask 572416
        %v1942 = vsel %vm1941, %v1934, %v1936
        %v1943 = vsel %vm1941, %v1936, %v1938
        %v1944 = vsel %vm1941, %v1938, %v1940
        %v1948 = vmul.f32 %v1925, %v1942
        %v1949 = vmul.f32 %v1925, %v1943
        %v1950 = vmul.f32 %v1925, %v1944
        %v1951 = vadd.f32 %v1919, %v1948
        %v1952 = vadd.f32 %v1920, %v1949
        %v1953 = vadd.f32 %v1921, %v1950
        %v1954 = vld [vmem:[#allocation3] sm:$0xff]
        %1955 = vset.pattern.permute.xlu0 30
        %1956 = vperm.xlu0 %1955, %v992
        %v1957 = vpop.permute.xlu0 %1956
        %1960 = vst [vmem:[#allocation1] ss:$4 sm:$0xff] %v1954
        %v1961 = vld.sshfl [vmem:[#allocation1] sm:$0xff pattern:$0x73625140]
        %v1962 = vld.sshfl [vmem:[#allocation1 + $0x8] sm:$0xff pattern:$0x73625140]
        %v1963 = vld.sshfl [vmem:[#allocation1 + $0x10] sm:$0xff pattern:$0x73625140]
        %v1964 = vld.sshfl [vmem:[#allocation1 + $0x18] sm:$0xff pattern:$0x73625140]
        %1965 = vrot.lane.b32.xlu0 %v1961, 69
        %v1966 = vpop.permute.xlu0 %1965
        %1967 = vrot.lane.b32.xlu0 %v1962, 69
        %v1968 = vpop.permute.xlu0 %1967
        %1969 = vrot.lane.b32.xlu0 %v1963, 69
        %v1970 = vpop.permute.xlu0 %1969
        %1971 = vrot.lane.b32.xlu0 %v1964, 69
        %v1972 = vpop.permute.xlu0 %1971
        %vm1973 = vcmask 564224
        %v1974 = vsel %vm1973, %v1966, %v1968
        %v1975 = vsel %vm1973, %v1968, %v1970
        %v1976 = vsel %vm1973, %v1970, %v1972
        %v1980 = vmul.f32 %v1957, %v1974
        %v1981 = vmul.f32 %v1957, %v1975
        %v1982 = vmul.f32 %v1957, %v1976
        %v1983 = vadd.f32 %v1951, %v1980
        %v1984 = vadd.f32 %v1952, %v1981
        %v1985 = vadd.f32 %v1953, %v1982
        %v1986 = vld [vmem:[#allocation3] sm:$0xff]
        %1987 = vset.pattern.permute.xlu0 31
        %1988 = vperm.xlu0 %1987, %v992
        %v1989 = vpop.permute.xlu0 %1988
        %1992 = vst [vmem:[#allocation1] ss:$4 sm:$0xff] %v1986
        %v1993 = vld.sshfl [vmem:[#allocation1] sm:$0xff pattern:$0x73625140]
        %v1994 = vld.sshfl [vmem:[#allocation1 + $0x8] sm:$0xff pattern:$0x73625140]
        %v1995 = vld.sshfl [vmem:[#allocation1 + $0x10] sm:$0xff pattern:$0x73625140]
        %v1996 = vld.sshfl [vmem:[#allocation1 + $0x18] sm:$0xff pattern:$0x73625140]
        %1997 = vrot.lane.b32.xlu0 %v1993, 68
        %v1998 = vpop.permute.xlu0 %1997
        %1999 = vrot.lane.b32.xlu0 %v1994, 68
        %v2000 = vpop.permute.xlu0 %1999
        %2001 = vrot.lane.b32.xlu0 %v1995, 68
        %v2002 = vpop.permute.xlu0 %2001
        %2003 = vrot.lane.b32.xlu0 %v1996, 68
        %v2004 = vpop.permute.xlu0 %2003
        %vm2005 = vcmask 556032
        %v2006 = vsel %vm2005, %v1998, %v2000
        %v2007 = vsel %vm2005, %v2000, %v2002
        %v2008 = vsel %vm2005, %v2002, %v2004
        %v2012 = vmul.f32 %v1989, %v2006
        %v2013 = vmul.f32 %v1989, %v2007
        %v2014 = vmul.f32 %v1989, %v2008
        %v2015 = vadd.f32 %v1983, %v2012
        %v2016 = vadd.f32 %v1984, %v2013
        %v2017 = vadd.f32 %v1985, %v2014
        %v2018 = vld [vmem:[#allocation3] sm:$0xff]
        %2019 = vset.pattern.permute.xlu0 32
        %2020 = vperm.xlu0 %2019, %v992
        %v2021 = vpop.permute.xlu0 %2020
        %2024 = vst [vmem:[#allocation1] ss:$4 sm:$0xff] %v2018
        %v2025 = vld.sshfl [vmem:[#allocation1] sm:$0xff pattern:$0x73625140]
        %v2026 = vld.sshfl [vmem:[#allocation1 + $0x8] sm:$0xff pattern:$0x73625140]
        %v2027 = vld.sshfl [vmem:[#allocation1 + $0x10] sm:$0xff pattern:$0x73625140]
        %v2028 = vld.sshfl [vmem:[#allocation1 + $0x18] sm:$0xff pattern:$0x73625140]
        %2029 = vrot.lane.b32.xlu0 %v2025, 67
        %v2030 = vpop.permute.xlu0 %2029
        %2031 = vrot.lane.b32.xlu0 %v2026, 67
        %v2032 = vpop.permute.xlu0 %2031
        %2033 = vrot.lane.b32.xlu0 %v2027, 67
        %v2034 = vpop.permute.xlu0 %2033
        %2035 = vrot.lane.b32.xlu0 %v2028, 67
        %v2036 = vpop.permute.xlu0 %2035
        %vm2037 = vcmask 547840
        %v2038 = vsel %vm2037, %v2030, %v2032
        %v2039 = vsel %vm2037, %v2032, %v2034
        %v2040 = vsel %vm2037, %v2034, %v2036
        %v2044 = vmul.f32 %v2021, %v2038
        %v2045 = vmul.f32 %v2021, %v2039
        %v2046 = vmul.f32 %v2021, %v2040
        %v2047 = vadd.f32 %v2015, %v2044
        %v2048 = vadd.f32 %v2016, %v2045
        %v2049 = vadd.f32 %v2017, %v2046
        %v2050 = vld [vmem:[#allocation3] sm:$0xff]
        %2051 = vset.pattern.permute.xlu0 33
        %2052 = vperm.xlu0 %2051, %v992
        %v2053 = vpop.permute.xlu0 %2052
        %2056 = vst [vmem:[#allocation1] ss:$4 sm:$0xff] %v2050
        %v2057 = vld.sshfl [vmem:[#allocation1] sm:$0xff pattern:$0x73625140]
        %v2058 = vld.sshfl [vmem:[#allocation1 + $0x8] sm:$0xff pattern:$0x73625140]
        %v2059 = vld.sshfl [vmem:[#allocation1 + $0x10] sm:$0xff pattern:$0x73625140]
        %v2060 = vld.sshfl [vmem:[#allocation1 + $0x18] sm:$0xff pattern:$0x73625140]
        %2061 = vrot.lane.b32.xlu0 %v2057, 53
        %v2062 = vpop.permute.xlu0 %2061
        %2063 = vrot.lane.b32.xlu0 %v2058, 53
        %v2064 = vpop.permute.xlu0 %2063
        %2065 = vrot.lane.b32.xlu0 %v2059, 53
        %v2066 = vpop.permute.xlu0 %2065
        %2067 = vrot.lane.b32.xlu0 %v2060, 53
        %v2068 = vpop.permute.xlu0 %2067
        %vm2069 = vcmask 433152
        %v2070 = vsel %vm2069, %v2062, %v2064
        %v2071 = vsel %vm2069, %v2064, %v2066
        %v2072 = vsel %vm2069, %v2066, %v2068
        %v2076 = vmul.f32 %v2053, %v2070
        %v2077 = vmul.f32 %v2053, %v2071
        %v2078 = vmul.f32 %v2053, %v2072
        %v2079 = vadd.f32 %v2047, %v2076
        %v2080 = vadd.f32 %v2048, %v2077
        %v2081 = vadd.f32 %v2049, %v2078
        %v2082 = vld [vmem:[#allocation3] sm:$0xff]
        %2083 = vset.pattern.permute.xlu0 34
        %2084 = vperm.xlu0 %2083, %v992
        %v2085 = vpop.permute.xlu0 %2084
        %2088 = vst [vmem:[#allocation1] ss:$4 sm:$0xff] %v2082
        %v2089 = vld.sshfl [vmem:[#allocation1] sm:$0xff pattern:$0x73625140]
        %v2090 = vld.sshfl [vmem:[#allocation1 + $0x8] sm:$0xff pattern:$0x73625140]
        %v2091 = vld.sshfl [vmem:[#allocation1 + $0x10] sm:$0xff pattern:$0x73625140]
        %v2092 = vld.sshfl [vmem:[#allocation1 + $0x18] sm:$0xff pattern:$0x73625140]
        %2093 = vrot.lane.b32.xlu0 %v2089, 52
        %v2094 = vpop.permute.xlu0 %2093
        %2095 = vrot.lane.b32.xlu0 %v2090, 52
        %v2096 = vpop.permute.xlu0 %2095
        %2097 = vrot.lane.b32.xlu0 %v2091, 52
        %v2098 = vpop.permute.xlu0 %2097
        %2099 = vrot.lane.b32.xlu0 %v2092, 52
        %v2100 = vpop.permute.xlu0 %2099
        %vm2101 = vcmask 424960
        %v2102 = vsel %vm2101, %v2094, %v2096
        %v2103 = vsel %vm2101, %v2096, %v2098
        %v2104 = vsel %vm2101, %v2098, %v2100
        %v2108 = vmul.f32 %v2085, %v2102
        %v2109 = vmul.f32 %v2085, %v2103
        %v2110 = vmul.f32 %v2085, %v2104
        %v2111 = vadd.f32 %v2079, %v2108
        %v2112 = vadd.f32 %v2080, %v2109
        %v2113 = vadd.f32 %v2081, %v2110
        %v2114 = vld [vmem:[#allocation3] sm:$0xff]
        %2115 = vset.pattern.permute.xlu0 35
        %2116 = vperm.xlu0 %2115, %v992
        %v2117 = vpop.permute.xlu0 %2116
        %2120 = vst [vmem:[#allocation1] ss:$4 sm:$0xff] %v2114
        %v2121 = vld.sshfl [vmem:[#allocation1] sm:$0xff pattern:$0x73625140]
        %v2122 = vld.sshfl [vmem:[#allocation1 + $0x8] sm:$0xff pattern:$0x73625140]
        %v2123 = vld.sshfl [vmem:[#allocation1 + $0x10] sm:$0xff pattern:$0x73625140]
        %v2124 = vld.sshfl [vmem:[#allocation1 + $0x18] sm:$0xff pattern:$0x73625140]
        %2125 = vrot.lane.b32.xlu0 %v2121, 51
        %v2126 = vpop.permute.xlu0 %2125
        %2127 = vrot.lane.b32.xlu0 %v2122, 51
        %v2128 = vpop.permute.xlu0 %2127
        %2129 = vrot.lane.b32.xlu0 %v2123, 51
        %v2130 = vpop.permute.xlu0 %2129
        %2131 = vrot.lane.b32.xlu0 %v2124, 51
        %v2132 = vpop.permute.xlu0 %2131
        %vm2133 = vcmask 416768
        %v2134 = vsel %vm2133, %v2126, %v2128
        %v2135 = vsel %vm2133, %v2128, %v2130
        %v2136 = vsel %vm2133, %v2130, %v2132
        %v2140 = vmul.f32 %v2117, %v2134
        %v2141 = vmul.f32 %v2117, %v2135
        %v2142 = vmul.f32 %v2117, %v2136
        %v2143 = vadd.f32 %v2111, %v2140
        %v2144 = vadd.f32 %v2112, %v2141
        %v2145 = vadd.f32 %v2113, %v2142
        %v2146 = vld [vmem:[#allocation3] sm:$0xff]
        %2147 = vset.pattern.permute.xlu0 36
        %2148 = vperm.xlu0 %2147, %v992
        %v2149 = vpop.permute.xlu0 %2148
        %2152 = vst [vmem:[#allocation1] ss:$4 sm:$0xff] %v2146
        %v2153 = vld.sshfl [vmem:[#allocation1] sm:$0xff pattern:$0x73625140]
        %v2154 = vld.sshfl [vmem:[#allocation1 + $0x8] sm:$0xff pattern:$0x73625140]
        %v2155 = vld.sshfl [vmem:[#allocation1 + $0x10] sm:$0xff pattern:$0x73625140]
        %v2156 = vld.sshfl [vmem:[#allocation1 + $0x18] sm:$0xff pattern:$0x73625140]
        %2157 = vrot.lane.b32.xlu0 %v2153, 50
        %v2158 = vpop.permute.xlu0 %2157
        %2159 = vrot.lane.b32.xlu0 %v2154, 50
        %v2160 = vpop.permute.xlu0 %2159
        %2161 = vrot.lane.b32.xlu0 %v2155, 50
        %v2162 = vpop.permute.xlu0 %2161
        %2163 = vrot.lane.b32.xlu0 %v2156, 50
        %v2164 = vpop.permute.xlu0 %2163
        %vm2165 = vcmask 408576
        %v2166 = vsel %vm2165, %v2158, %v2160
        %v2167 = vsel %vm2165, %v2160, %v2162
        %v2168 = vsel %vm2165, %v2162, %v2164
        %v2172 = vmul.f32 %v2149, %v2166
        %v2173 = vmul.f32 %v2149, %v2167
        %v2174 = vmul.f32 %v2149, %v2168
        %v2175 = vadd.f32 %v2143, %v2172
        %v2176 = vadd.f32 %v2144, %v2173
        %v2177 = vadd.f32 %v2145, %v2174
        %v2178 = vld [vmem:[#allocation3] sm:$0xff]
        %2179 = vset.pattern.permute.xlu0 37
        %2180 = vperm.xlu0 %2179, %v992
        %v2181 = vpop.permute.xlu0 %2180
        %2184 = vst [vmem:[#allocation1] ss:$4 sm:$0xff] %v2178
        %v2185 = vld.sshfl [vmem:[#allocation1] sm:$0xff pattern:$0x73625140]
        %v2186 = vld.sshfl [vmem:[#allocation1 + $0x8] sm:$0xff pattern:$0x73625140]
        %v2187 = vld.sshfl [vmem:[#allocation1 + $0x10] sm:$0xff pattern:$0x73625140]
        %v2188 = vld.sshfl [vmem:[#allocation1 + $0x18] sm:$0xff pattern:$0x73625140]
        %2189 = vrot.lane.b32.xlu0 %v2185, 49
        %v2190 = vpop.permute.xlu0 %2189
        %2191 = vrot.lane.b32.xlu0 %v2186, 49
        %v2192 = vpop.permute.xlu0 %2191
        %2193 = vrot.lane.b32.xlu0 %v2187, 49
        %v2194 = vpop.permute.xlu0 %2193
        %2195 = vrot.lane.b32.xlu0 %v2188, 49
        %v2196 = vpop.permute.xlu0 %2195
        %vm2197 = vcmask 400384
        %v2198 = vsel %vm2197, %v2190, %v2192
        %v2199 = vsel %vm2197, %v2192, %v2194
        %v2200 = vsel %vm2197, %v2194, %v2196
        %v2204 = vmul.f32 %v2181, %v2198
        %v2205 = vmul.f32 %v2181, %v2199
        %v2206 = vmul.f32 %v2181, %v2200
        %v2207 = vadd.f32 %v2175, %v2204
        %v2208 = vadd.f32 %v2176, %v2205
        %v2209 = vadd.f32 %v2177, %v2206
        %v2210 = vld [vmem:[#allocation3] sm:$0xff]
        %2211 = vset.pattern.permute.xlu0 38
        %2212 = vperm.xlu0 %2211, %v992
        %v2213 = vpop.permute.xlu0 %2212
        %2216 = vst [vmem:[#allocation1] ss:$4 sm:$0xff] %v2210
        %v2217 = vld.sshfl [vmem:[#allocation1] sm:$0xff pattern:$0x73625140]
        %v2218 = vld.sshfl [vmem:[#allocation1 + $0x8] sm:$0xff pattern:$0x73625140]
        %v2219 = vld.sshfl [vmem:[#allocation1 + $0x10] sm:$0xff pattern:$0x73625140]
        %v2220 = vld.sshfl [vmem:[#allocation1 + $0x18] sm:$0xff pattern:$0x73625140]
        %2221 = vrot.lane.b32.xlu0 %v2217, 48
        %v2222 = vpop.permute.xlu0 %2221
        %2223 = vrot.lane.b32.xlu0 %v2218, 48
        %v2224 = vpop.permute.xlu0 %2223
        %2225 = vrot.lane.b32.xlu0 %v2219, 48
        %v2226 = vpop.permute.xlu0 %2225
        %2227 = vrot.lane.b32.xlu0 %v2220, 48
        %v2228 = vpop.permute.xlu0 %2227
        %vm2229 = vcmask 392192
        %v2230 = vsel %vm2229, %v2222, %v2224
        %v2231 = vsel %vm2229, %v2224, %v2226
        %v2232 = vsel %vm2229, %v2226, %v2228
        %v2236 = vmul.f32 %v2213, %v2230
        %v2237 = vmul.f32 %v2213, %v2231
        %v2238 = vmul.f32 %v2213, %v2232
        %v2239 = vadd.f32 %v2207, %v2236
        %v2240 = vadd.f32 %v2208, %v2237
        %v2241 = vadd.f32 %v2209, %v2238
        %v2242 = vld [vmem:[#allocation3] sm:$0xff]
        %2243 = vset.pattern.permute.xlu0 39
        %2244 = vperm.xlu0 %2243, %v992
        %v2245 = vpop.permute.xlu0 %2244
        %2248 = vst [vmem:[#allocation1] ss:$4 sm:$0xff] %v2242
        %v2249 = vld.sshfl [vmem:[#allocation1] sm:$0xff pattern:$0x73625140]
        %v2250 = vld.sshfl [vmem:[#allocation1 + $0x8] sm:$0xff pattern:$0x73625140]
        %v2251 = vld.sshfl [vmem:[#allocation1 + $0x10] sm:$0xff pattern:$0x73625140]
        %v2252 = vld.sshfl [vmem:[#allocation1 + $0x18] sm:$0xff pattern:$0x73625140]
        %2253 = vrot.lane.b32.xlu0 %v2249, 47
        %v2254 = vpop.permute.xlu0 %2253
        %2255 = vrot.lane.b32.xlu0 %v2250, 47
        %v2256 = vpop.permute.xlu0 %2255
        %2257 = vrot.lane.b32.xlu0 %v2251, 47
        %v2258 = vpop.permute.xlu0 %2257
        %2259 = vrot.lane.b32.xlu0 %v2252, 47
        %v2260 = vpop.permute.xlu0 %2259
        %vm2261 = vcmask 384000
        %v2262 = vsel %vm2261, %v2254, %v2256
        %v2263 = vsel %vm2261, %v2256, %v2258
        %v2264 = vsel %vm2261, %v2258, %v2260
        %v2268 = vmul.f32 %v2245, %v2262
        %v2269 = vmul.f32 %v2245, %v2263
        %v2270 = vmul.f32 %v2245, %v2264
        %v2271 = vadd.f32 %v2239, %v2268
        %v2272 = vadd.f32 %v2240, %v2269
        %v2273 = vadd.f32 %v2241, %v2270
        %v2274 = vld [vmem:[#allocation3] sm:$0xff]
        %2275 = vset.pattern.permute.xlu0 40
        %2276 = vperm.xlu0 %2275, %v992
        %v2277 = vpop.permute.xlu0 %2276
        %2280 = vst [vmem:[#allocation1] ss:$4 sm:$0xff] %v2274
        %v2281 = vld.sshfl [vmem:[#allocation1] sm:$0xff pattern:$0x73625140]
        %v2282 = vld.sshfl [vmem:[#allocation1 + $0x8] sm:$0xff pattern:$0x73625140]
        %v2283 = vld.sshfl [vmem:[#allocation1 + $0x10] sm:$0xff pattern:$0x73625140]
        %v2284 = vld.sshfl [vmem:[#allocation1 + $0x18] sm:$0xff pattern:$0x73625140]
        %2285 = vrot.lane.b32.xlu0 %v2281, 46
        %v2286 = vpop.permute.xlu0 %2285
        %2287 = vrot.lane.b32.xlu0 %v2282, 46
        %v2288 = vpop.permute.xlu0 %2287
        %2289 = vrot.lane.b32.xlu0 %v2283, 46
        %v2290 = vpop.permute.xlu0 %2289
        %2291 = vrot.lane.b32.xlu0 %v2284, 46
        %v2292 = vpop.permute.xlu0 %2291
        %vm2293 = vcmask 375808
        %v2294 = vsel %vm2293, %v2286, %v2288
        %v2295 = vsel %vm2293, %v2288, %v2290
        %v2296 = vsel %vm2293, %v2290, %v2292
        %v2300 = vmul.f32 %v2277, %v2294
        %v2301 = vmul.f32 %v2277, %v2295
        %v2302 = vmul.f32 %v2277, %v2296
        %v2303 = vadd.f32 %v2271, %v2300
        %v2304 = vadd.f32 %v2272, %v2301
        %v2305 = vadd.f32 %v2273, %v2302
        %v2306 = vld [vmem:[#allocation3] sm:$0xff]
        %2307 = vset.pattern.permute.xlu0 41
        %2308 = vperm.xlu0 %2307, %v992
        %v2309 = vpop.permute.xlu0 %2308
        %2312 = vst [vmem:[#allocation1] ss:$4 sm:$0xff] %v2306
        %v2313 = vld.sshfl [vmem:[#allocation1] sm:$0xff pattern:$0x73625140]
        %v2314 = vld.sshfl [vmem:[#allocation1 + $0x8] sm:$0xff pattern:$0x73625140]
        %v2315 = vld.sshfl [vmem:[#allocation1 + $0x10] sm:$0xff pattern:$0x73625140]
        %v2316 = vld.sshfl [vmem:[#allocation1 + $0x18] sm:$0xff pattern:$0x73625140]
        %2317 = vrot.lane.b32.xlu0 %v2313, 45
        %v2318 = vpop.permute.xlu0 %2317
        %2319 = vrot.lane.b32.xlu0 %v2314, 45
        %v2320 = vpop.permute.xlu0 %2319
        %2321 = vrot.lane.b32.xlu0 %v2315, 45
        %v2322 = vpop.permute.xlu0 %2321
        %2323 = vrot.lane.b32.xlu0 %v2316, 45
        %v2324 = vpop.permute.xlu0 %2323
        %vm2325 = vcmask 367616
        %v2326 = vsel %vm2325, %v2318, %v2320
        %v2327 = vsel %vm2325, %v2320, %v2322
        %v2328 = vsel %vm2325, %v2322, %v2324
        %v2332 = vmul.f32 %v2309, %v2326
        %v2333 = vmul.f32 %v2309, %v2327
        %v2334 = vmul.f32 %v2309, %v2328
        %v2335 = vadd.f32 %v2303, %v2332
        %v2336 = vadd.f32 %v2304, %v2333
        %v2337 = vadd.f32 %v2305, %v2334
        %v2338 = vld [vmem:[#allocation3] sm:$0xff]
        %2339 = vset.pattern.permute.xlu0 42
        %2340 = vperm.xlu0 %2339, %v992
        %v2341 = vpop.permute.xlu0 %2340
        %2344 = vst [vmem:[#allocation1] ss:$4 sm:$0xff] %v2338
        %v2345 = vld.sshfl [vmem:[#allocation1] sm:$0xff pattern:$0x73625140]
        %v2346 = vld.sshfl [vmem:[#allocation1 + $0x8] sm:$0xff pattern:$0x73625140]
        %v2347 = vld.sshfl [vmem:[#allocation1 + $0x10] sm:$0xff pattern:$0x73625140]
        %v2348 = vld.sshfl [vmem:[#allocation1 + $0x18] sm:$0xff pattern:$0x73625140]
        %2349 = vrot.lane.b32.xlu0 %v2345, 44
        %v2350 = vpop.permute.xlu0 %2349
        %2351 = vrot.lane.b32.xlu0 %v2346, 44
        %v2352 = vpop.permute.xlu0 %2351
        %2353 = vrot.lane.b32.xlu0 %v2347, 44
        %v2354 = vpop.permute.xlu0 %2353
        %2355 = vrot.lane.b32.xlu0 %v2348, 44
        %v2356 = vpop.permute.xlu0 %2355
        %vm2357 = vcmask 359424
        %v2358 = vsel %vm2357, %v2350, %v2352
        %v2359 = vsel %vm2357, %v2352, %v2354
        %v2360 = vsel %vm2357, %v2354, %v2356
        %v2364 = vmul.f32 %v2341, %v2358
        %v2365 = vmul.f32 %v2341, %v2359
        %v2366 = vmul.f32 %v2341, %v2360
        %v2367 = vadd.f32 %v2335, %v2364
        %v2368 = vadd.f32 %v2336, %v2365
        %v2369 = vadd.f32 %v2337, %v2366
        %v2370 = vld [vmem:[#allocation3] sm:$0xff]
        %2371 = vset.pattern.permute.xlu0 43
        %2372 = vperm.xlu0 %2371, %v992
        %v2373 = vpop.permute.xlu0 %2372
        %2376 = vst [vmem:[#allocation1] ss:$4 sm:$0xff] %v2370
        %v2377 = vld.sshfl [vmem:[#allocation1] sm:$0xff pattern:$0x73625140]
        %v2378 = vld.sshfl [vmem:[#allocation1 + $0x8] sm:$0xff pattern:$0x73625140]
        %v2379 = vld.sshfl [vmem:[#allocation1 + $0x10] sm:$0xff pattern:$0x73625140]
        %v2380 = vld.sshfl [vmem:[#allocation1 + $0x18] sm:$0xff pattern:$0x73625140]
        %2381 = vrot.lane.b32.xlu0 %v2377, 43
        %v2382 = vpop.permute.xlu0 %2381
        %2383 = vrot.lane.b32.xlu0 %v2378, 43
        %v2384 = vpop.permute.xlu0 %2383
        %2385 = vrot.lane.b32.xlu0 %v2379, 43
        %v2386 = vpop.permute.xlu0 %2385
        %2387 = vrot.lane.b32.xlu0 %v2380, 43
        %v2388 = vpop.permute.xlu0 %2387
        %vm2389 = vcmask 351232
        %v2390 = vsel %vm2389, %v2382, %v2384
        %v2391 = vsel %vm2389, %v2384, %v2386
        %v2392 = vsel %vm2389, %v2386, %v2388
        %v2396 = vmul.f32 %v2373, %v2390
        %v2397 = vmul.f32 %v2373, %v2391
        %v2398 = vmul.f32 %v2373, %v2392
        %v2399 = vadd.f32 %v2367, %v2396
        %v2400 = vadd.f32 %v2368, %v2397
        %v2401 = vadd.f32 %v2369, %v2398
        %v2402 = vld [vmem:[#allocation3] sm:$0xff]
        %2403 = vset.pattern.permute.xlu0 44
        %2404 = vperm.xlu0 %2403, %v992
        %v2405 = vpop.permute.xlu0 %2404
        %2408 = vst [vmem:[#allocation1] ss:$4 sm:$0xff] %v2402
        %v2409 = vld.sshfl [vmem:[#allocation1] sm:$0xff pattern:$0x73625140]
        %v2410 = vld.sshfl [vmem:[#allocation1 + $0x8] sm:$0xff pattern:$0x73625140]
        %v2411 = vld.sshfl [vmem:[#allocation1 + $0x10] sm:$0xff pattern:$0x73625140]
        %v2412 = vld.sshfl [vmem:[#allocation1 + $0x18] sm:$0xff pattern:$0x73625140]
        %2413 = vrot.lane.b32.xlu0 %v2409, 29
        %v2414 = vpop.permute.xlu0 %2413
        %2415 = vrot.lane.b32.xlu0 %v2410, 29
        %v2416 = vpop.permute.xlu0 %2415
        %2417 = vrot.lane.b32.xlu0 %v2411, 29
        %v2418 = vpop.permute.xlu0 %2417
        %2419 = vrot.lane.b32.xlu0 %v2412, 29
        %v2420 = vpop.permute.xlu0 %2419
        %vm2421 = vcmask 236544
        %v2422 = vsel %vm2421, %v2414, %v2416
        %v2423 = vsel %vm2421, %v2416, %v2418
        %v2424 = vsel %vm2421, %v2418, %v2420
        %v2428 = vmul.f32 %v2405, %v2422
        %v2429 = vmul.f32 %v2405, %v2423
        %v2430 = vmul.f32 %v2405, %v2424
        %v2431 = vadd.f32 %v2399, %v2428
        %v2432 = vadd.f32 %v2400, %v2429
        %v2433 = vadd.f32 %v2401, %v2430
        %v2434 = vld [vmem:[#allocation3] sm:$0xff]
        %2435 = vset.pattern.permute.xlu0 45
        %2436 = vperm.xlu0 %2435, %v992
        %v2437 = vpop.permute.xlu0 %2436
        %2440 = vst [vmem:[#allocation1] ss:$4 sm:$0xff] %v2434
        %v2441 = vld.sshfl [vmem:[#allocation1] sm:$0xff pattern:$0x73625140]
        %v2442 = vld.sshfl [vmem:[#allocation1 + $0x8] sm:$0xff pattern:$0x73625140]
        %v2443 = vld.sshfl [vmem:[#allocation1 + $0x10] sm:$0xff pattern:$0x73625140]
        %v2444 = vld.sshfl [vmem:[#allocation1 + $0x18] sm:$0xff pattern:$0x73625140]
        %2445 = vrot.lane.b32.xlu0 %v2441, 28
        %v2446 = vpop.permute.xlu0 %2445
        %2447 = vrot.lane.b32.xlu0 %v2442, 28
        %v2448 = vpop.permute.xlu0 %2447
        %2449 = vrot.lane.b32.xlu0 %v2443, 28
        %v2450 = vpop.permute.xlu0 %2449
        %2451 = vrot.lane.b32.xlu0 %v2444, 28
        %v2452 = vpop.permute.xlu0 %2451
        %vm2453 = vcmask 228352
        %v2454 = vsel %vm2453, %v2446, %v2448
        %v2455 = vsel %vm2453, %v2448, %v2450
        %v2456 = vsel %vm2453, %v2450, %v2452
        %v2460 = vmul.f32 %v2437, %v2454
        %v2461 = vmul.f32 %v2437, %v2455
        %v2462 = vmul.f32 %v2437, %v2456
        %v2463 = vadd.f32 %v2431, %v2460
        %v2464 = vadd.f32 %v2432, %v2461
        %v2465 = vadd.f32 %v2433, %v2462
        %v2466 = vld [vmem:[#allocation3] sm:$0xff]
        %2467 = vset.pattern.permute.xlu0 46
        %2468 = vperm.xlu0 %2467, %v992
        %v2469 = vpop.permute.xlu0 %2468
        %2472 = vst [vmem:[#allocation1] ss:$4 sm:$0xff] %v2466
        %v2473 = vld.sshfl [vmem:[#allocation1] sm:$0xff pattern:$0x73625140]
        %v2474 = vld.sshfl [vmem:[#allocation1 + $0x8] sm:$0xff pattern:$0x73625140]
        %v2475 = vld.sshfl [vmem:[#allocation1 + $0x10] sm:$0xff pattern:$0x73625140]
        %v2476 = vld.sshfl [vmem:[#allocation1 + $0x18] sm:$0xff pattern:$0x73625140]
        %2477 = vrot.lane.b32.xlu0 %v2473, 27
        %v2478 = vpop.permute.xlu0 %2477
        %2479 = vrot.lane.b32.xlu0 %v2474, 27
        %v2480 = vpop.permute.xlu0 %2479
        %2481 = vrot.lane.b32.xlu0 %v2475, 27
        %v2482 = vpop.permute.xlu0 %2481
        %2483 = vrot.lane.b32.xlu0 %v2476, 27
        %v2484 = vpop.permute.xlu0 %2483
        %vm2485 = vcmask 220160
        %v2486 = vsel %vm2485, %v2478, %v2480
        %v2487 = vsel %vm2485, %v2480, %v2482
        %v2488 = vsel %vm2485, %v2482, %v2484
        %v2492 = vmul.f32 %v2469, %v2486
        %v2493 = vmul.f32 %v2469, %v2487
        %v2494 = vmul.f32 %v2469, %v2488
        %v2495 = vadd.f32 %v2463, %v2492
        %v2496 = vadd.f32 %v2464, %v2493
        %v2497 = vadd.f32 %v2465, %v2494
        %v2498 = vld [vmem:[#allocation3] sm:$0xff]
        %2499 = vset.pattern.permute.xlu0 47
        %2500 = vperm.xlu0 %2499, %v992
        %v2501 = vpop.permute.xlu0 %2500
        %2504 = vst [vmem:[#allocation1] ss:$4 sm:$0xff] %v2498
        %v2505 = vld.sshfl [vmem:[#allocation1] sm:$0xff pattern:$0x73625140]
        %v2506 = vld.sshfl [vmem:[#allocation1 + $0x8] sm:$0xff pattern:$0x73625140]
        %v2507 = vld.sshfl [vmem:[#allocation1 + $0x10] sm:$0xff pattern:$0x73625140]
        %v2508 = vld.sshfl [vmem:[#allocation1 + $0x18] sm:$0xff pattern:$0x73625140]
        %2509 = vrot.lane.b32.xlu0 %v2505, 26
        %v2510 = vpop.permute.xlu0 %2509
        %2511 = vrot.lane.b32.xlu0 %v2506, 26
        %v2512 = vpop.permute.xlu0 %2511
        %2513 = vrot.lane.b32.xlu0 %v2507, 26
        %v2514 = vpop.permute.xlu0 %2513
        %2515 = vrot.lane.b32.xlu0 %v2508, 26
        %v2516 = vpop.permute.xlu0 %2515
        %vm2517 = vcmask 211968
        %v2518 = vsel %vm2517, %v2510, %v2512
        %v2519 = vsel %vm2517, %v2512, %v2514
        %v2520 = vsel %vm2517, %v2514, %v2516
        %v2524 = vmul.f32 %v2501, %v2518
        %v2525 = vmul.f32 %v2501, %v2519
        %v2526 = vmul.f32 %v2501, %v2520
        %v2527 = vadd.f32 %v2495, %v2524
        %v2528 = vadd.f32 %v2496, %v2525
        %v2529 = vadd.f32 %v2497, %v2526
        %v2530 = vld [vmem:[#allocation3] sm:$0xff]
        %2531 = vset.pattern.permute.xlu0 48
        %2532 = vperm.xlu0 %2531, %v992
        %v2533 = vpop.permute.xlu0 %2532
        %2536 = vst [vmem:[#allocation1] ss:$4 sm:$0xff] %v2530
        %v2537 = vld.sshfl [vmem:[#allocation1] sm:$0xff pattern:$0x73625140]
        %v2538 = vld.sshfl [vmem:[#allocation1 + $0x8] sm:$0xff pattern:$0x73625140]
        %v2539 = vld.sshfl [vmem:[#allocation1 + $0x10] sm:$0xff pattern:$0x73625140]
        %v2540 = vld.sshfl [vmem:[#allocation1 + $0x18] sm:$0xff pattern:$0x73625140]
        %2541 = vrot.lane.b32.xlu0 %v2537, 25
        %v2542 = vpop.permute.xlu0 %2541
        %2543 = vrot.lane.b32.xlu0 %v2538, 25
        %v2544 = vpop.permute.xlu0 %2543
        %2545 = vrot.lane.b32.xlu0 %v2539, 25
        %v2546 = vpop.permute.xlu0 %2545
        %2547 = vrot.lane.b32.xlu0 %v2540, 25
        %v2548 = vpop.permute.xlu0 %2547
        %vm2549 = vcmask 203776
        %v2550 = vsel %vm2549, %v2542, %v2544
        %v2551 = vsel %vm2549, %v2544, %v2546
        %v2552 = vsel %vm2549, %v2546, %v2548
        %v2556 = vmul.f32 %v2533, %v2550
        %v2557 = vmul.f32 %v2533, %v2551
        %v2558 = vmul.f32 %v2533, %v2552
        %v2559 = vadd.f32 %v2527, %v2556
        %v2560 = vadd.f32 %v2528, %v2557
        %v2561 = vadd.f32 %v2529, %v2558
        %v2562 = vld [vmem:[#allocation3] sm:$0xff]
        %2563 = vset.pattern.permute.xlu0 49
        %2564 = vperm.xlu0 %2563, %v992
        %v2565 = vpop.permute.xlu0 %2564
        %2568 = vst [vmem:[#allocation1] ss:$4 sm:$0xff] %v2562
        %v2569 = vld.sshfl [vmem:[#allocation1] sm:$0xff pattern:$0x73625140]
        %v2570 = vld.sshfl [vmem:[#allocation1 + $0x8] sm:$0xff pattern:$0x73625140]
        %v2571 = vld.sshfl [vmem:[#allocation1 + $0x10] sm:$0xff pattern:$0x73625140]
        %v2572 = vld.sshfl [vmem:[#allocation1 + $0x18] sm:$0xff pattern:$0x73625140]
        %2573 = vrot.lane.b32.xlu0 %v2569, 24
        %v2574 = vpop.permute.xlu0 %2573
        %2575 = vrot.lane.b32.xlu0 %v2570, 24
        %v2576 = vpop.permute.xlu0 %2575
        %2577 = vrot.lane.b32.xlu0 %v2571, 24
        %v2578 = vpop.permute.xlu0 %2577
        %2579 = vrot.lane.b32.xlu0 %v2572, 24
        %v2580 = vpop.permute.xlu0 %2579
        %vm2581 = vcmask 195584
        %v2582 = vsel %vm2581, %v2574, %v2576
        %v2583 = vsel %vm2581, %v2576, %v2578
        %v2584 = vsel %vm2581, %v2578, %v2580
        %v2588 = vmul.f32 %v2565, %v2582
        %v2589 = vmul.f32 %v2565, %v2583
        %v2590 = vmul.f32 %v2565, %v2584
        %v2591 = vadd.f32 %v2559, %v2588
        %v2592 = vadd.f32 %v2560, %v2589
        %v2593 = vadd.f32 %v2561, %v2590
        %v2594 = vld [vmem:[#allocation3] sm:$0xff]
        %2595 = vset.pattern.permute.xlu0 50
        %2596 = vperm.xlu0 %2595, %v992
        %v2597 = vpop.permute.xlu0 %2596
        %2600 = vst [vmem:[#allocation1] ss:$4 sm:$0xff] %v2594
        %v2601 = vld.sshfl [vmem:[#allocation1] sm:$0xff pattern:$0x73625140]
        %v2602 = vld.sshfl [vmem:[#allocation1 + $0x8] sm:$0xff pattern:$0x73625140]
        %v2603 = vld.sshfl [vmem:[#allocation1 + $0x10] sm:$0xff pattern:$0x73625140]
        %v2604 = vld.sshfl [vmem:[#allocation1 + $0x18] sm:$0xff pattern:$0x73625140]
        %2605 = vrot.lane.b32.xlu0 %v2601, 23
        %v2606 = vpop.permute.xlu0 %2605
        %2607 = vrot.lane.b32.xlu0 %v2602, 23
        %v2608 = vpop.permute.xlu0 %2607
        %2609 = vrot.lane.b32.xlu0 %v2603, 23
        %v2610 = vpop.permute.xlu0 %2609
        %2611 = vrot.lane.b32.xlu0 %v2604, 23
        %v2612 = vpop.permute.xlu0 %2611
        %vm2613 = vcmask 187392
        %v2614 = vsel %vm2613, %v2606, %v2608
        %v2615 = vsel %vm2613, %v2608, %v2610
        %v2616 = vsel %vm2613, %v2610, %v2612
        %v2620 = vmul.f32 %v2597, %v2614
        %v2621 = vmul.f32 %v2597, %v2615
        %v2622 = vmul.f32 %v2597, %v2616
        %v2623 = vadd.f32 %v2591, %v2620
        %v2624 = vadd.f32 %v2592, %v2621
        %v2625 = vadd.f32 %v2593, %v2622
        %v2626 = vld [vmem:[#allocation3] sm:$0xff]
        %2627 = vset.pattern.permute.xlu0 51
        %2628 = vperm.xlu0 %2627, %v992
        %v2629 = vpop.permute.xlu0 %2628
        %2632 = vst [vmem:[#allocation1] ss:$4 sm:$0xff] %v2626
        %v2633 = vld.sshfl [vmem:[#allocation1] sm:$0xff pattern:$0x73625140]
        %v2634 = vld.sshfl [vmem:[#allocation1 + $0x8] sm:$0xff pattern:$0x73625140]
        %v2635 = vld.sshfl [vmem:[#allocation1 + $0x10] sm:$0xff pattern:$0x73625140]
        %v2636 = vld.sshfl [vmem:[#allocation1 + $0x18] sm:$0xff pattern:$0x73625140]
        %2637 = vrot.lane.b32.xlu0 %v2633, 22
        %v2638 = vpop.permute.xlu0 %2637
        %2639 = vrot.lane.b32.xlu0 %v2634, 22
        %v2640 = vpop.permute.xlu0 %2639
        %2641 = vrot.lane.b32.xlu0 %v2635, 22
        %v2642 = vpop.permute.xlu0 %2641
        %2643 = vrot.lane.b32.xlu0 %v2636, 22
        %v2644 = vpop.permute.xlu0 %2643
        %vm2645 = vcmask 179200
        %v2646 = vsel %vm2645, %v2638, %v2640
        %v2647 = vsel %vm2645, %v2640, %v2642
        %v2648 = vsel %vm2645, %v2642, %v2644
        %v2652 = vmul.f32 %v2629, %v2646
        %v2653 = vmul.f32 %v2629, %v2647
        %v2654 = vmul.f32 %v2629, %v2648
        %v2655 = vadd.f32 %v2623, %v2652
        %v2656 = vadd.f32 %v2624, %v2653
        %v2657 = vadd.f32 %v2625, %v2654
        %v2658 = vld [vmem:[#allocation3] sm:$0xff]
        %2659 = vset.pattern.permute.xlu0 52
        %2660 = vperm.xlu0 %2659, %v992
        %v2661 = vpop.permute.xlu0 %2660
        %2664 = vst [vmem:[#allocation1] ss:$4 sm:$0xff] %v2658
        %v2665 = vld.sshfl [vmem:[#allocation1] sm:$0xff pattern:$0x73625140]
        %v2666 = vld.sshfl [vmem:[#allocation1 + $0x8] sm:$0xff pattern:$0x73625140]
        %v2667 = vld.sshfl [vmem:[#allocation1 + $0x10] sm:$0xff pattern:$0x73625140]
        %v2668 = vld.sshfl [vmem:[#allocation1 + $0x18] sm:$0xff pattern:$0x73625140]
        %2669 = vrot.lane.b32.xlu0 %v2665, 21
        %v2670 = vpop.permute.xlu0 %2669
        %2671 = vrot.lane.b32.xlu0 %v2666, 21
        %v2672 = vpop.permute.xlu0 %2671
        %2673 = vrot.lane.b32.xlu0 %v2667, 21
        %v2674 = vpop.permute.xlu0 %2673
        %2675 = vrot.lane.b32.xlu0 %v2668, 21
        %v2676 = vpop.permute.xlu0 %2675
        %vm2677 = vcmask 171008
        %v2678 = vsel %vm2677, %v2670, %v2672
        %v2679 = vsel %vm2677, %v2672, %v2674
        %v2680 = vsel %vm2677, %v2674, %v2676
        %v2684 = vmul.f32 %v2661, %v2678
        %v2685 = vmul.f32 %v2661, %v2679
        %v2686 = vmul.f32 %v2661, %v2680
        %v2687 = vadd.f32 %v2655, %v2684
        %v2688 = vadd.f32 %v2656, %v2685
        %v2689 = vadd.f32 %v2657, %v2686
        %v2690 = vld [vmem:[#allocation3] sm:$0xff]
        %2691 = vset.pattern.permute.xlu0 53
        %2692 = vperm.xlu0 %2691, %v992
        %v2693 = vpop.permute.xlu0 %2692
        %2696 = vst [vmem:[#allocation1] ss:$4 sm:$0xff] %v2690
        %v2697 = vld.sshfl [vmem:[#allocation1] sm:$0xff pattern:$0x73625140]
        %v2698 = vld.sshfl [vmem:[#allocation1 + $0x8] sm:$0xff pattern:$0x73625140]
        %v2699 = vld.sshfl [vmem:[#allocation1 + $0x10] sm:$0xff pattern:$0x73625140]
        %v2700 = vld.sshfl [vmem:[#allocation1 + $0x18] sm:$0xff pattern:$0x73625140]
        %2701 = vrot.lane.b32.xlu0 %v2697, 20
        %v2702 = vpop.permute.xlu0 %2701
        %2703 = vrot.lane.b32.xlu0 %v2698, 20
        %v2704 = vpop.permute.xlu0 %2703
        %2705 = vrot.lane.b32.xlu0 %v2699, 20
        %v2706 = vpop.permute.xlu0 %2705
        %2707 = vrot.lane.b32.xlu0 %v2700, 20
        %v2708 = vpop.permute.xlu0 %2707
        %vm2709 = vcmask 162816
        %v2710 = vsel %vm2709, %v2702, %v2704
        %v2711 = vsel %vm2709, %v2704, %v2706
        %v2712 = vsel %vm2709, %v2706, %v2708
        %v2716 = vmul.f32 %v2693, %v2710
        %v2717 = vmul.f32 %v2693, %v2711
        %v2718 = vmul.f32 %v2693, %v2712
        %v2719 = vadd.f32 %v2687, %v2716
        %v2720 = vadd.f32 %v2688, %v2717
        %v2721 = vadd.f32 %v2689, %v2718
        %v2722 = vld [vmem:[#allocation3] sm:$0xff]
        %2723 = vset.pattern.permute.xlu0 54
        %2724 = vperm.xlu0 %2723, %v992
        %v2725 = vpop.permute.xlu0 %2724
        %2728 = vst [vmem:[#allocation1] ss:$4 sm:$0xff] %v2722
        %v2729 = vld.sshfl [vmem:[#allocation1] sm:$0xff pattern:$0x73625140]
        %v2730 = vld.sshfl [vmem:[#allocation1 + $0x8] sm:$0xff pattern:$0x73625140]
        %v2731 = vld.sshfl [vmem:[#allocation1 + $0x10] sm:$0xff pattern:$0x73625140]
        %v2732 = vld.sshfl [vmem:[#allocation1 + $0x18] sm:$0xff pattern:$0x73625140]
        %2733 = vrot.lane.b32.xlu0 %v2729, 19
        %v2734 = vpop.permute.xlu0 %2733
        %2735 = vrot.lane.b32.xlu0 %v2730, 19
        %v2736 = vpop.permute.xlu0 %2735
        %2737 = vrot.lane.b32.xlu0 %v2731, 19
        %v2738 = vpop.permute.xlu0 %2737
        %2739 = vrot.lane.b32.xlu0 %v2732, 19
        %v2740 = vpop.permute.xlu0 %2739
        %vm2741 = vcmask 154624
        %v2742 = vsel %vm2741, %v2734, %v2736
        %v2743 = vsel %vm2741, %v2736, %v2738
        %v2744 = vsel %vm2741, %v2738, %v2740
        %v2748 = vmul.f32 %v2725, %v2742
        %v2749 = vmul.f32 %v2725, %v2743
        %v2750 = vmul.f32 %v2725, %v2744
        %v2751 = vadd.f32 %v2719, %v2748
        %v2752 = vadd.f32 %v2720, %v2749
        %v2753 = vadd.f32 %v2721, %v2750
        %v2754 = vld [vmem:[#allocation3] sm:$0xff]
        %2755 = vset.pattern.permute.xlu0 55
        %2756 = vperm.xlu0 %2755, %v992
        %v2757 = vpop.permute.xlu0 %2756
        %2760 = vst [vmem:[#allocation1] ss:$4 sm:$0xff] %v2754
        %v2761 = vld.sshfl [vmem:[#allocation1] sm:$0xff pattern:$0x73625140]
        %v2762 = vld.sshfl [vmem:[#allocation1 + $0x8] sm:$0xff pattern:$0x73625140]
        %v2763 = vld.sshfl [vmem:[#allocation1 + $0x10] sm:$0xff pattern:$0x73625140]
        %v2764 = vld.sshfl [vmem:[#allocation1 + $0x18] sm:$0xff pattern:$0x73625140]
        %2765 = vrot.lane.b32.xlu0 %v2761, 5
        %v2766 = vpop.permute.xlu0 %2765
        %2767 = vrot.lane.b32.xlu0 %v2762, 5
        %v2768 = vpop.permute.xlu0 %2767
        %2769 = vrot.lane.b32.xlu0 %v2763, 5
        %v2770 = vpop.permute.xlu0 %2769
        %2771 = vrot.lane.b32.xlu0 %v2764, 5
        %v2772 = vpop.permute.xlu0 %2771
        %vm2773 = vcmask 39936
        %v2774 = vsel %vm2773, %v2766, %v2768
        %v2775 = vsel %vm2773, %v2768, %v2770
        %v2776 = vsel %vm2773, %v2770, %v2772
        %v2780 = vmul.f32 %v2757, %v2774
        %v2781 = vmul.f32 %v2757, %v2775
        %v2782 = vmul.f32 %v2757, %v2776
        %v2783 = vadd.f32 %v2751, %v2780
        %v2784 = vadd.f32 %v2752, %v2781
        %v2785 = vadd.f32 %v2753, %v2782
        %v2786 = vld [vmem:[#allocation3] sm:$0xff]
        %2787 = vset.pattern.permute.xlu0 56
        %2788 = vperm.xlu0 %2787, %v992
        %v2789 = vpop.permute.xlu0 %2788
        %2792 = vst [vmem:[#allocation1] ss:$4 sm:$0xff] %v2786
        %v2793 = vld.sshfl [vmem:[#allocation1] sm:$0xff pattern:$0x73625140]
        %v2794 = vld.sshfl [vmem:[#allocation1 + $0x8] sm:$0xff pattern:$0x73625140]
        %v2795 = vld.sshfl [vmem:[#allocation1 + $0x10] sm:$0xff pattern:$0x73625140]
        %v2796 = vld.sshfl [vmem:[#allocation1 + $0x18] sm:$0xff pattern:$0x73625140]
        %2797 = vrot.lane.b32.xlu0 %v2793, 4
        %v2798 = vpop.permute.xlu0 %2797
        %2799 = vrot.lane.b32.xlu0 %v2794, 4
        %v2800 = vpop.permute.xlu0 %2799
        %2801 = vrot.lane.b32.xlu0 %v2795, 4
        %v2802 = vpop.permute.xlu0 %2801
        %2803 = vrot.lane.b32.xlu0 %v2796, 4
        %v2804 = vpop.permute.xlu0 %2803
        %vm2805 = vcmask 31744
        %v2806 = vsel %vm2805, %v2798, %v2800
        %v2807 = vsel %vm2805, %v2800, %v2802
        %v2808 = vsel %vm2805, %v2802, %v2804
        %v2812 = vmul.f32 %v2789, %v2806
        %v2813 = vmul.f32 %v2789, %v2807
        %v2814 = vmul.f32 %v2789, %v2808
        %v2815 = vadd.f32 %v2783, %v2812
        %v2816 = vadd.f32 %v2784, %v2813
        %v2817 = vadd.f32 %v2785, %v2814
        %v2818 = vld [vmem:[#allocation3] sm:$0xff]
        %2819 = vset.pattern.permute.xlu0 57
        %2820 = vperm.xlu0 %2819, %v992
        %v2821 = vpop.permute.xlu0 %2820
        %2824 = vst [vmem:[#allocation1] ss:$4 sm:$0xff] %v2818
        %v2825 = vld.sshfl [vmem:[#allocation1] sm:$0xff pattern:$0x73625140]
        %v2826 = vld.sshfl [vmem:[#allocation1 + $0x8] sm:$0xff pattern:$0x73625140]
        %v2827 = vld.sshfl [vmem:[#allocation1 + $0x10] sm:$0xff pattern:$0x73625140]
        %v2828 = vld.sshfl [vmem:[#allocation1 + $0x18] sm:$0xff pattern:$0x73625140]
        %2829 = vrot.lane.b32.xlu0 %v2825, 3
        %v2830 = vpop.permute.xlu0 %2829
        %2831 = vrot.lane.b32.xlu0 %v2826, 3
        %v2832 = vpop.permute.xlu0 %2831
        %2833 = vrot.lane.b32.xlu0 %v2827, 3
        %v2834 = vpop.permute.xlu0 %2833
        %2835 = vrot.lane.b32.xlu0 %v2828, 3
        %v2836 = vpop.permute.xlu0 %2835
        %vm2837 = vcmask 23552
        %v2838 = vsel %vm2837, %v2830, %v2832
        %v2839 = vsel %vm2837, %v2832, %v2834
        %v2840 = vsel %vm2837, %v2834, %v2836
        %v2844 = vmul.f32 %v2821, %v2838
        %v2845 = vmul.f32 %v2821, %v2839
        %v2846 = vmul.f32 %v2821, %v2840
        %v2847 = vadd.f32 %v2815, %v2844
        %v2848 = vadd.f32 %v2816, %v2845
        %v2849 = vadd.f32 %v2817, %v2846
        %v2850 = vld [vmem:[#allocation3] sm:$0xff]
        %2851 = vset.pattern.permute.xlu0 58
        %2852 = vperm.xlu0 %2851, %v992
        %v2853 = vpop.permute.xlu0 %2852
        %2856 = vst [vmem:[#allocation1] ss:$4 sm:$0xff] %v2850
        %v2857 = vld.sshfl [vmem:[#allocation1] sm:$0xff pattern:$0x73625140]
        %v2858 = vld.sshfl [vmem:[#allocation1 + $0x8] sm:$0xff pattern:$0x73625140]
        %v2859 = vld.sshfl [vmem:[#allocation1 + $0x10] sm:$0xff pattern:$0x73625140]
        %v2860 = vld.sshfl [vmem:[#allocation1 + $0x18] sm:$0xff pattern:$0x73625140]
        %2861 = vrot.lane.b32.xlu0 %v2857, 2
        %v2862 = vpop.permute.xlu0 %2861
        %2863 = vrot.lane.b32.xlu0 %v2858, 2
        %v2864 = vpop.permute.xlu0 %2863
        %2865 = vrot.lane.b32.xlu0 %v2859, 2
        %v2866 = vpop.permute.xlu0 %2865
        %2867 = vrot.lane.b32.xlu0 %v2860, 2
        %v2868 = vpop.permute.xlu0 %2867
        %v2869 = vsel %vm740, %v2862, %v2864
        %v2870 = vsel %vm740, %v2864, %v2866
        %v2871 = vsel %vm740, %v2866, %v2868
        %v2875 = vmul.f32 %v2853, %v2869
        %v2876 = vmul.f32 %v2853, %v2870
        %v2877 = vmul.f32 %v2853, %v2871
        %v2878 = vadd.f32 %v2847, %v2875
        %v2879 = vadd.f32 %v2848, %v2876
        %v2880 = vadd.f32 %v2849, %v2877
        %v2881 = vld [vmem:[#allocation3] sm:$0xff]
        %2882 = vset.pattern.permute.xlu0 59
        %2883 = vperm.xlu0 %2882, %v992
        %v2884 = vpop.permute.xlu0 %2883
        %2887 = vst [vmem:[#allocation1] ss:$4 sm:$0xff] %v2881
        %v2888 = vld.sshfl [vmem:[#allocation1] sm:$0xff pattern:$0x73625140]
        %v2889 = vld.sshfl [vmem:[#allocation1 + $0x8] sm:$0xff pattern:$0x73625140]
        %v2890 = vld.sshfl [vmem:[#allocation1 + $0x10] sm:$0xff pattern:$0x73625140]
        %v2891 = vld.sshfl [vmem:[#allocation1 + $0x18] sm:$0xff pattern:$0x73625140]
        %2892 = vrot.lane.b32.xlu0 %v2888, 1
        %v2893 = vpop.permute.xlu0 %2892
        %2894 = vrot.lane.b32.xlu0 %v2889, 1
        %v2895 = vpop.permute.xlu0 %2894
        %2896 = vrot.lane.b32.xlu0 %v2890, 1
        %v2897 = vpop.permute.xlu0 %2896
        %2898 = vrot.lane.b32.xlu0 %v2891, 1
        %v2899 = vpop.permute.xlu0 %2898
        %v2900 = vsel %vm675, %v2893, %v2895
        %v2901 = vsel %vm675, %v2895, %v2897
        %v2902 = vsel %vm675, %v2897, %v2899
        %v2906 = vmul.f32 %v2884, %v2900
        %v2907 = vmul.f32 %v2884, %v2901
        %v2908 = vmul.f32 %v2884, %v2902
        %v2909 = vadd.f32 %v2878, %v2906
        %v2910 = vadd.f32 %v2879, %v2907
        %v2911 = vadd.f32 %v2880, %v2908
        %v2912 = vld [vmem:[#allocation3 + $0x2] sm:$0x3f]
        %2913 = vset.pattern.permute.xlu0 60
        %2914 = vperm.xlu0 %2913, %v992
        %v2915 = vpop.permute.xlu0 %2914
        %2918 = vst [vmem:[#allocation1] ss:$4 sm:$0xff] %v2912
        %v2919 = vld.sshfl [vmem:[#allocation1] sm:$0xff pattern:$0x73625140]
        %v2920 = vld.sshfl [vmem:[#allocation1 + $0x8] sm:$0xff pattern:$0x73625140]
        %v2921 = vld.sshfl [vmem:[#allocation1 + $0x10] sm:$0xff pattern:$0x73625140]
        %v2925 = vmul.f32 %v2915, %v2919
        %v2926 = vmul.f32 %v2915, %v2920
        %v2927 = vmul.f32 %v2915, %v2921
        %v2928 = vadd.f32 %v2909, %v2925
        %v2929 = vadd.f32 %v2910, %v2926
        %v2930 = vadd.f32 %v2911, %v2927
        %v2931 = vld [vmem:[#allocation3 + $0x2] sm:$0xff]
        %2932 = vset.pattern.permute.xlu0 61
        %2933 = vperm.xlu0 %2932, %v992
        %v2934 = vpop.permute.xlu0 %2933
        %2937 = vst [vmem:[#allocation1] ss:$4 sm:$0xff] %v2931
        %v2938 = vld.sshfl [vmem:[#allocation1] sm:$0xff pattern:$0x73625140]
        %v2939 = vld.sshfl [vmem:[#allocation1 + $0x8] sm:$0xff pattern:$0x73625140]
        %v2940 = vld.sshfl [vmem:[#allocation1 + $0x10] sm:$0xff pattern:$0x73625140]
        %v2941 = vld.sshfl [vmem:[#allocation1 + $0x18] sm:$0xff pattern:$0x73625140]
        %2942 = vrot.lane.b32.xlu0 %v2938, 127
        %v2943 = vpop.permute.xlu0 %2942
        %2944 = vrot.lane.b32.xlu0 %v2939, 127
        %v2945 = vpop.permute.xlu0 %2944
        %2946 = vrot.lane.b32.xlu0 %v2940, 127
        %v2947 = vpop.permute.xlu0 %2946
        %2948 = vrot.lane.b32.xlu0 %v2941, 127
        %v2949 = vpop.permute.xlu0 %2948
        %vm2950 = vcmask 1039360
        %v2951 = vsel %vm2950, %v2943, %v2945
        %v2952 = vsel %vm2950, %v2945, %v2947
        %v2953 = vsel %vm2950, %v2947, %v2949
        %v2957 = vmul.f32 %v2934, %v2951
        %v2958 = vmul.f32 %v2934, %v2952
        %v2959 = vmul.f32 %v2934, %v2953
        %v2960 = vadd.f32 %v2928, %v2957
        %v2961 = vadd.f32 %v2929, %v2958
        %v2962 = vadd.f32 %v2930, %v2959
        %v2963 = vld [vmem:[#allocation3 + $0x2] sm:$0xff]
        %2964 = vset.pattern.permute.xlu0 62
        %2965 = vperm.xlu0 %2964, %v992
        %v2966 = vpop.permute.xlu0 %2965
        %2969 = vst [vmem:[#allocation1] ss:$4 sm:$0xff] %v2963
        %v2970 = vld.sshfl [vmem:[#allocation1] sm:$0xff pattern:$0x73625140]
        %v2971 = vld.sshfl [vmem:[#allocation1 + $0x8] sm:$0xff pattern:$0x73625140]
        %v2972 = vld.sshfl [vmem:[#allocation1 + $0x10] sm:$0xff pattern:$0x73625140]
        %v2973 = vld.sshfl [vmem:[#allocation1 + $0x18] sm:$0xff pattern:$0x73625140]
        %2974 = vrot.lane.b32.xlu0 %v2970, 126
        %v2975 = vpop.permute.xlu0 %2974
        %2976 = vrot.lane.b32.xlu0 %v2971, 126
        %v2977 = vpop.permute.xlu0 %2976
        %2978 = vrot.lane.b32.xlu0 %v2972, 126
        %v2979 = vpop.permute.xlu0 %2978
        %2980 = vrot.lane.b32.xlu0 %v2973, 126
        %v2981 = vpop.permute.xlu0 %2980
        %vm2982 = vcmask 1031168
        %v2983 = vsel %vm2982, %v2975, %v2977
        %v2984 = vsel %vm2982, %v2977, %v2979
        %v2985 = vsel %vm2982, %v2979, %v2981
        %v2989 = vmul.f32 %v2966, %v2983
        %v2990 = vmul.f32 %v2966, %v2984
        %v2991 = vmul.f32 %v2966, %v2985
        %v2992 = vadd.f32 %v2960, %v2989
        %v2993 = vadd.f32 %v2961, %v2990
        %v2994 = vadd.f32 %v2962, %v2991
        %v2995 = vld [vmem:[#allocation3 + $0x2] sm:$0xff]
        %2996 = vset.pattern.permute.xlu0 63
        %2997 = vperm.xlu0 %2996, %v992
        %v2998 = vpop.permute.xlu0 %2997
        %3001 = vst [vmem:[#allocation1] ss:$4 sm:$0xff] %v2995
        %v3002 = vld.sshfl [vmem:[#allocation1] sm:$0xff pattern:$0x73625140]
        %v3003 = vld.sshfl [vmem:[#allocation1 + $0x8] sm:$0xff pattern:$0x73625140]
        %v3004 = vld.sshfl [vmem:[#allocation1 + $0x10] sm:$0xff pattern:$0x73625140]
        %v3005 = vld.sshfl [vmem:[#allocation1 + $0x18] sm:$0xff pattern:$0x73625140]
        %3006 = vrot.lane.b32.xlu0 %v3002, 125
        %v3007 = vpop.permute.xlu0 %3006
        %3008 = vrot.lane.b32.xlu0 %v3003, 125
        %v3009 = vpop.permute.xlu0 %3008
        %3010 = vrot.lane.b32.xlu0 %v3004, 125
        %v3011 = vpop.permute.xlu0 %3010
        %3012 = vrot.lane.b32.xlu0 %v3005, 125
        %v3013 = vpop.permute.xlu0 %3012
        %v3014 = vsel %vm1013, %v3007, %v3009
        %v3015 = vsel %vm1013, %v3009, %v3011
        %v3016 = vsel %vm1013, %v3011, %v3013
        %v3020 = vmul.f32 %v2998, %v3014
        %v3021 = vmul.f32 %v2998, %v3015
        %v3022 = vmul.f32 %v2998, %v3016
        %v3023 = vadd.f32 %v2992, %v3020
        %v3024 = vadd.f32 %v2993, %v3021
        %v3025 = vadd.f32 %v2994, %v3022
        %v3026 = vld [vmem:[#allocation3 + $0x2] sm:$0xff]
        %3027 = vset.pattern.permute.xlu0 64
        %3028 = vperm.xlu0 %3027, %v992
        %v3029 = vpop.permute.xlu0 %3028
        %3032 = vst [vmem:[#allocation1] ss:$4 sm:$0xff] %v3026
        %v3033 = vld.sshfl [vmem:[#allocation1] sm:$0xff pattern:$0x73625140]
        %v3034 = vld.sshfl [vmem:[#allocation1 + $0x8] sm:$0xff pattern:$0x73625140]
        %v3035 = vld.sshfl [vmem:[#allocation1 + $0x10] sm:$0xff pattern:$0x73625140]
        %v3036 = vld.sshfl [vmem:[#allocation1 + $0x18] sm:$0xff pattern:$0x73625140]
        %3037 = vrot.lane.b32.xlu0 %v3033, 124
        %v3038 = vpop.permute.xlu0 %3037
        %3039 = vrot.lane.b32.xlu0 %v3034, 124
        %v3040 = vpop.permute.xlu0 %3039
        %3041 = vrot.lane.b32.xlu0 %v3035, 124
        %v3042 = vpop.permute.xlu0 %3041
        %3043 = vrot.lane.b32.xlu0 %v3036, 124
        %v3044 = vpop.permute.xlu0 %3043
        %v3045 = vsel %vm1045, %v3038, %v3040
        %v3046 = vsel %vm1045, %v3040, %v3042
        %v3047 = vsel %vm1045, %v3042, %v3044
        %v3051 = vmul.f32 %v3029, %v3045
        %v3052 = vmul.f32 %v3029, %v3046
        %v3053 = vmul.f32 %v3029, %v3047
        %v3054 = vadd.f32 %v3023, %v3051
        %v3055 = vadd.f32 %v3024, %v3052
        %v3056 = vadd.f32 %v3025, %v3053
        %v3057 = vld [vmem:[#allocation3 + $0x2] sm:$0xff]
        %3058 = vset.pattern.permute.xlu0 65
        %3059 = vperm.xlu0 %3058, %v992
        %v3060 = vpop.permute.xlu0 %3059
        %3063 = vst [vmem:[#allocation1] ss:$4 sm:$0xff] %v3057
        %v3064 = vld.sshfl [vmem:[#allocation1] sm:$0xff pattern:$0x73625140]
        %v3065 = vld.sshfl [vmem:[#allocation1 + $0x8] sm:$0xff pattern:$0x73625140]
        %v3066 = vld.sshfl [vmem:[#allocation1 + $0x10] sm:$0xff pattern:$0x73625140]
        %v3067 = vld.sshfl [vmem:[#allocation1 + $0x18] sm:$0xff pattern:$0x73625140]
        %3068 = vrot.lane.b32.xlu0 %v3064, 123
        %v3069 = vpop.permute.xlu0 %3068
        %3070 = vrot.lane.b32.xlu0 %v3065, 123
        %v3071 = vpop.permute.xlu0 %3070
        %3072 = vrot.lane.b32.xlu0 %v3066, 123
        %v3073 = vpop.permute.xlu0 %3072
        %3074 = vrot.lane.b32.xlu0 %v3067, 123
        %v3075 = vpop.permute.xlu0 %3074
        %v3076 = vsel %vm1077, %v3069, %v3071
        %v3077 = vsel %vm1077, %v3071, %v3073
        %v3078 = vsel %vm1077, %v3073, %v3075
        %v3082 = vmul.f32 %v3060, %v3076
        %v3083 = vmul.f32 %v3060, %v3077
        %v3084 = vmul.f32 %v3060, %v3078
        %v3085 = vadd.f32 %v3054, %v3082
        %v3086 = vadd.f32 %v3055, %v3083
        %v3087 = vadd.f32 %v3056, %v3084
        %v3088 = vld [vmem:[#allocation3 + $0x2] sm:$0xff]
        %3089 = vset.pattern.permute.xlu0 66
        %3090 = vperm.xlu0 %3089, %v992
        %v3091 = vpop.permute.xlu0 %3090
        %3094 = vst [vmem:[#allocation1] ss:$4 sm:$0xff] %v3088
        %v3095 = vld.sshfl [vmem:[#allocation1] sm:$0xff pattern:$0x73625140]
        %v3096 = vld.sshfl [vmem:[#allocation1 + $0x8] sm:$0xff pattern:$0x73625140]
        %v3097 = vld.sshfl [vmem:[#allocation1 + $0x10] sm:$0xff pattern:$0x73625140]
        %v3098 = vld.sshfl [vmem:[#allocation1 + $0x18] sm:$0xff pattern:$0x73625140]
        %3099 = vrot.lane.b32.xlu0 %v3095, 109
        %v3100 = vpop.permute.xlu0 %3099
        %3101 = vrot.lane.b32.xlu0 %v3096, 109
        %v3102 = vpop.permute.xlu0 %3101
        %3103 = vrot.lane.b32.xlu0 %v3097, 109
        %v3104 = vpop.permute.xlu0 %3103
        %3105 = vrot.lane.b32.xlu0 %v3098, 109
        %v3106 = vpop.permute.xlu0 %3105
        %vm3107 = vcmask 891904
        %v3108 = vsel %vm3107, %v3100, %v3102
        %v3109 = vsel %vm3107, %v3102, %v3104
        %v3110 = vsel %vm3107, %v3104, %v3106
        %v3114 = vmul.f32 %v3091, %v3108
        %v3115 = vmul.f32 %v3091, %v3109
        %v3116 = vmul.f32 %v3091, %v3110
        %v3117 = vadd.f32 %v3085, %v3114
        %v3118 = vadd.f32 %v3086, %v3115
        %v3119 = vadd.f32 %v3087, %v3116
        %v3120 = vld [vmem:[#allocation3 + $0x2] sm:$0xff]
        %3121 = vset.pattern.permute.xlu0 67
        %3122 = vperm.xlu0 %3121, %v992
        %v3123 = vpop.permute.xlu0 %3122
        %3126 = vst [vmem:[#allocation1] ss:$4 sm:$0xff] %v3120
        %v3127 = vld.sshfl [vmem:[#allocation1] sm:$0xff pattern:$0x73625140]
        %v3128 = vld.sshfl [vmem:[#allocation1 + $0x8] sm:$0xff pattern:$0x73625140]
        %v3129 = vld.sshfl [vmem:[#allocation1 + $0x10] sm:$0xff pattern:$0x73625140]
        %v3130 = vld.sshfl [vmem:[#allocation1 + $0x18] sm:$0xff pattern:$0x73625140]
        %3131 = vrot.lane.b32.xlu0 %v3127, 108
        %v3132 = vpop.permute.xlu0 %3131
        %3133 = vrot.lane.b32.xlu0 %v3128, 108
        %v3134 = vpop.permute.xlu0 %3133
        %3135 = vrot.lane.b32.xlu0 %v3129, 108
        %v3136 = vpop.permute.xlu0 %3135
        %3137 = vrot.lane.b32.xlu0 %v3130, 108
        %v3138 = vpop.permute.xlu0 %3137
        %vm3139 = vcmask 883712
        %v3140 = vsel %vm3139, %v3132, %v3134
        %v3141 = vsel %vm3139, %v3134, %v3136
        %v3142 = vsel %vm3139, %v3136, %v3138
        %v3146 = vmul.f32 %v3123, %v3140
        %v3147 = vmul.f32 %v3123, %v3141
        %v3148 = vmul.f32 %v3123, %v3142
        %v3149 = vadd.f32 %v3117, %v3146
        %v3150 = vadd.f32 %v3118, %v3147
        %v3151 = vadd.f32 %v3119, %v3148
        %v3152 = vld [vmem:[#allocation3 + $0x2] sm:$0xff]
        %3153 = vset.pattern.permute.xlu0 68
        %3154 = vperm.xlu0 %3153, %v992
        %v3155 = vpop.permute.xlu0 %3154
        %3158 = vst [vmem:[#allocation1] ss:$4 sm:$0xff] %v3152
        %v3159 = vld.sshfl [vmem:[#allocation1] sm:$0xff pattern:$0x73625140]
        %v3160 = vld.sshfl [vmem:[#allocation1 + $0x8] sm:$0xff pattern:$0x73625140]
        %v3161 = vld.sshfl [vmem:[#allocation1 + $0x10] sm:$0xff pattern:$0x73625140]
        %v3162 = vld.sshfl [vmem:[#allocation1 + $0x18] sm:$0xff pattern:$0x73625140]
        %3163 = vrot.lane.b32.xlu0 %v3159, 107
        %v3164 = vpop.permute.xlu0 %3163
        %3165 = vrot.lane.b32.xlu0 %v3160, 107
        %v3166 = vpop.permute.xlu0 %3165
        %3167 = vrot.lane.b32.xlu0 %v3161, 107
        %v3168 = vpop.permute.xlu0 %3167
        %3169 = vrot.lane.b32.xlu0 %v3162, 107
        %v3170 = vpop.permute.xlu0 %3169
        %vm3171 = vcmask 875520
        %v3172 = vsel %vm3171, %v3164, %v3166
        %v3173 = vsel %vm3171, %v3166, %v3168
        %v3174 = vsel %vm3171, %v3168, %v3170
        %v3178 = vmul.f32 %v3155, %v3172
        %v3179 = vmul.f32 %v3155, %v3173
        %v3180 = vmul.f32 %v3155, %v3174
        %v3181 = vadd.f32 %v3149, %v3178
        %v3182 = vadd.f32 %v3150, %v3179
        %v3183 = vadd.f32 %v3151, %v3180
        %v3184 = vld [vmem:[#allocation3 + $0x2] sm:$0xff]
        %3185 = vset.pattern.permute.xlu0 69
        %3186 = vperm.xlu0 %3185, %v992
        %v3187 = vpop.permute.xlu0 %3186
        %3190 = vst [vmem:[#allocation1] ss:$4 sm:$0xff] %v3184
        %v3191 = vld.sshfl [vmem:[#allocation1] sm:$0xff pattern:$0x73625140]
        %v3192 = vld.sshfl [vmem:[#allocation1 + $0x8] sm:$0xff pattern:$0x73625140]
        %v3193 = vld.sshfl [vmem:[#allocation1 + $0x10] sm:$0xff pattern:$0x73625140]
        %v3194 = vld.sshfl [vmem:[#allocation1 + $0x18] sm:$0xff pattern:$0x73625140]
        %3195 = vrot.lane.b32.xlu0 %v3191, 106
        %v3196 = vpop.permute.xlu0 %3195
        %3197 = vrot.lane.b32.xlu0 %v3192, 106
        %v3198 = vpop.permute.xlu0 %3197
        %3199 = vrot.lane.b32.xlu0 %v3193, 106
        %v3200 = vpop.permute.xlu0 %3199
        %3201 = vrot.lane.b32.xlu0 %v3194, 106
        %v3202 = vpop.permute.xlu0 %3201
        %vm3203 = vcmask 867328
        %v3204 = vsel %vm3203, %v3196, %v3198
        %v3205 = vsel %vm3203, %v3198, %v3200
        %v3206 = vsel %vm3203, %v3200, %v3202
        %v3210 = vmul.f32 %v3187, %v3204
        %v3211 = vmul.f32 %v3187, %v3205
        %v3212 = vmul.f32 %v3187, %v3206
        %v3213 = vadd.f32 %v3181, %v3210
        %v3214 = vadd.f32 %v3182, %v3211
        %v3215 = vadd.f32 %v3183, %v3212
        %v3216 = vld [vmem:[#allocation3 + $0x2] sm:$0xff]
        %3217 = vset.pattern.permute.xlu0 70
        %3218 = vperm.xlu0 %3217, %v992
        %v3219 = vpop.permute.xlu0 %3218
        %3222 = vst [vmem:[#allocation1] ss:$4 sm:$0xff] %v3216
        %v3223 = vld.sshfl [vmem:[#allocation1] sm:$0xff pattern:$0x73625140]
        %v3224 = vld.sshfl [vmem:[#allocation1 + $0x8] sm:$0xff pattern:$0x73625140]
        %v3225 = vld.sshfl [vmem:[#allocation1 + $0x10] sm:$0xff pattern:$0x73625140]
        %v3226 = vld.sshfl [vmem:[#allocation1 + $0x18] sm:$0xff pattern:$0x73625140]
        %3227 = vrot.lane.b32.xlu0 %v3223, 105
        %v3228 = vpop.permute.xlu0 %3227
        %3229 = vrot.lane.b32.xlu0 %v3224, 105
        %v3230 = vpop.permute.xlu0 %3229
        %3231 = vrot.lane.b32.xlu0 %v3225, 105
        %v3232 = vpop.permute.xlu0 %3231
        %3233 = vrot.lane.b32.xlu0 %v3226, 105
        %v3234 = vpop.permute.xlu0 %3233
        %vm3235 = vcmask 859136
        %v3236 = vsel %vm3235, %v3228, %v3230
        %v3237 = vsel %vm3235, %v3230, %v3232
        %v3238 = vsel %vm3235, %v3232, %v3234
        %v3242 = vmul.f32 %v3219, %v3236
        %v3243 = vmul.f32 %v3219, %v3237
        %v3244 = vmul.f32 %v3219, %v3238
        %v3245 = vadd.f32 %v3213, %v3242
        %v3246 = vadd.f32 %v3214, %v3243
        %v3247 = vadd.f32 %v3215, %v3244
        %v3248 = vld [vmem:[#allocation3 + $0x2] sm:$0xff]
        %3249 = vset.pattern.permute.xlu0 71
        %3250 = vperm.xlu0 %3249, %v992
        %v3251 = vpop.permute.xlu0 %3250
        %3254 = vst [vmem:[#allocation1] ss:$4 sm:$0xff] %v3248
        %v3255 = vld.sshfl [vmem:[#allocation1] sm:$0xff pattern:$0x73625140]
        %v3256 = vld.sshfl [vmem:[#allocation1 + $0x8] sm:$0xff pattern:$0x73625140]
        %v3257 = vld.sshfl [vmem:[#allocation1 + $0x10] sm:$0xff pattern:$0x73625140]
        %v3258 = vld.sshfl [vmem:[#allocation1 + $0x18] sm:$0xff pattern:$0x73625140]
        %3259 = vrot.lane.b32.xlu0 %v3255, 104
        %v3260 = vpop.permute.xlu0 %3259
        %3261 = vrot.lane.b32.xlu0 %v3256, 104
        %v3262 = vpop.permute.xlu0 %3261
        %3263 = vrot.lane.b32.xlu0 %v3257, 104
        %v3264 = vpop.permute.xlu0 %3263
        %3265 = vrot.lane.b32.xlu0 %v3258, 104
        %v3266 = vpop.permute.xlu0 %3265
        %vm3267 = vcmask 850944
        %v3268 = vsel %vm3267, %v3260, %v3262
        %v3269 = vsel %vm3267, %v3262, %v3264
        %v3270 = vsel %vm3267, %v3264, %v3266
        %v3274 = vmul.f32 %v3251, %v3268
        %v3275 = vmul.f32 %v3251, %v3269
        %v3276 = vmul.f32 %v3251, %v3270
        %v3277 = vadd.f32 %v3245, %v3274
        %v3278 = vadd.f32 %v3246, %v3275
        %v3279 = vadd.f32 %v3247, %v3276
        %v3280 = vld [vmem:[#allocation3 + $0x2] sm:$0xff]
        %3281 = vset.pattern.permute.xlu0 72
        %3282 = vperm.xlu0 %3281, %v992
        %v3283 = vpop.permute.xlu0 %3282
        %3286 = vst [vmem:[#allocation1] ss:$4 sm:$0xff] %v3280
        %v3287 = vld.sshfl [vmem:[#allocation1] sm:$0xff pattern:$0x73625140]
        %v3288 = vld.sshfl [vmem:[#allocation1 + $0x8] sm:$0xff pattern:$0x73625140]
        %v3289 = vld.sshfl [vmem:[#allocation1 + $0x10] sm:$0xff pattern:$0x73625140]
        %v3290 = vld.sshfl [vmem:[#allocation1 + $0x18] sm:$0xff pattern:$0x73625140]
        %3291 = vrot.lane.b32.xlu0 %v3287, 103
        %v3292 = vpop.permute.xlu0 %3291
        %3293 = vrot.lane.b32.xlu0 %v3288, 103
        %v3294 = vpop.permute.xlu0 %3293
        %3295 = vrot.lane.b32.xlu0 %v3289, 103
        %v3296 = vpop.permute.xlu0 %3295
        %3297 = vrot.lane.b32.xlu0 %v3290, 103
        %v3298 = vpop.permute.xlu0 %3297
        %vm3299 = vcmask 842752
        %v3300 = vsel %vm3299, %v3292, %v3294
        %v3301 = vsel %vm3299, %v3294, %v3296
        %v3302 = vsel %vm3299, %v3296, %v3298
        %v3306 = vmul.f32 %v3283, %v3300
        %v3307 = vmul.f32 %v3283, %v3301
        %v3308 = vmul.f32 %v3283, %v3302
        %v3309 = vadd.f32 %v3277, %v3306
        %v3310 = vadd.f32 %v3278, %v3307
        %v3311 = vadd.f32 %v3279, %v3308
        %v3312 = vld [vmem:[#allocation3 + $0x2] sm:$0xff]
        %3313 = vset.pattern.permute.xlu0 73
        %3314 = vperm.xlu0 %3313, %v992
        %v3315 = vpop.permute.xlu0 %3314
        %3318 = vst [vmem:[#allocation1] ss:$4 sm:$0xff] %v3312
        %v3319 = vld.sshfl [vmem:[#allocation1] sm:$0xff pattern:$0x73625140]
        %v3320 = vld.sshfl [vmem:[#allocation1 + $0x8] sm:$0xff pattern:$0x73625140]
        %v3321 = vld.sshfl [vmem:[#allocation1 + $0x10] sm:$0xff pattern:$0x73625140]
        %v3322 = vld.sshfl [vmem:[#allocation1 + $0x18] sm:$0xff pattern:$0x73625140]
        %3323 = vrot.lane.b32.xlu0 %v3319, 102
        %v3324 = vpop.permute.xlu0 %3323
        %3325 = vrot.lane.b32.xlu0 %v3320, 102
        %v3326 = vpop.permute.xlu0 %3325
        %3327 = vrot.lane.b32.xlu0 %v3321, 102
        %v3328 = vpop.permute.xlu0 %3327
        %3329 = vrot.lane.b32.xlu0 %v3322, 102
        %v3330 = vpop.permute.xlu0 %3329
        %vm3331 = vcmask 834560
        %v3332 = vsel %vm3331, %v3324, %v3326
        %v3333 = vsel %vm3331, %v3326, %v3328
        %v3334 = vsel %vm3331, %v3328, %v3330
        %v3338 = vmul.f32 %v3315, %v3332
        %v3339 = vmul.f32 %v3315, %v3333
        %v3340 = vmul.f32 %v3315, %v3334
        %v3341 = vadd.f32 %v3309, %v3338
        %v3342 = vadd.f32 %v3310, %v3339
        %v3343 = vadd.f32 %v3311, %v3340
        %v3344 = vld [vmem:[#allocation3 + $0x2] sm:$0xff]
        %3345 = vset.pattern.permute.xlu0 74
        %3346 = vperm.xlu0 %3345, %v992
        %v3347 = vpop.permute.xlu0 %3346
        %3350 = vst [vmem:[#allocation1] ss:$4 sm:$0xff] %v3344
        %v3351 = vld.sshfl [vmem:[#allocation1] sm:$0xff pattern:$0x73625140]
        %v3352 = vld.sshfl [vmem:[#allocation1 + $0x8] sm:$0xff pattern:$0x73625140]
        %v3353 = vld.sshfl [vmem:[#allocation1 + $0x10] sm:$0xff pattern:$0x73625140]
        %v3354 = vld.sshfl [vmem:[#allocation1 + $0x18] sm:$0xff pattern:$0x73625140]
        %3355 = vrot.lane.b32.xlu0 %v3351, 101
        %v3356 = vpop.permute.xlu0 %3355
        %3357 = vrot.lane.b32.xlu0 %v3352, 101
        %v3358 = vpop.permute.xlu0 %3357
        %3359 = vrot.lane.b32.xlu0 %v3353, 101
        %v3360 = vpop.permute.xlu0 %3359
        %3361 = vrot.lane.b32.xlu0 %v3354, 101
        %v3362 = vpop.permute.xlu0 %3361
        %v3363 = vsel %vm1365, %v3356, %v3358
        %v3364 = vsel %vm1365, %v3358, %v3360
        %v3365 = vsel %vm1365, %v3360, %v3362
        %v3369 = vmul.f32 %v3347, %v3363
        %v3370 = vmul.f32 %v3347, %v3364
        %v3371 = vmul.f32 %v3347, %v3365
        %v3372 = vadd.f32 %v3341, %v3369
        %v3373 = vadd.f32 %v3342, %v3370
        %v3374 = vadd.f32 %v3343, %v3371
        %v3375 = vld [vmem:[#allocation3 + $0x2] sm:$0xff]
        %3376 = vset.pattern.permute.xlu0 75
        %3377 = vperm.xlu0 %3376, %v992
        %v3378 = vpop.permute.xlu0 %3377
        %3381 = vst [vmem:[#allocation1] ss:$4 sm:$0xff] %v3375
        %v3382 = vld.sshfl [vmem:[#allocation1] sm:$0xff pattern:$0x73625140]
        %v3383 = vld.sshfl [vmem:[#allocation1 + $0x8] sm:$0xff pattern:$0x73625140]
        %v3384 = vld.sshfl [vmem:[#allocation1 + $0x10] sm:$0xff pattern:$0x73625140]
        %v3385 = vld.sshfl [vmem:[#allocation1 + $0x18] sm:$0xff pattern:$0x73625140]
        %3386 = vrot.lane.b32.xlu0 %v3382, 100
        %v3387 = vpop.permute.xlu0 %3386
        %3388 = vrot.lane.b32.xlu0 %v3383, 100
        %v3389 = vpop.permute.xlu0 %3388
        %3390 = vrot.lane.b32.xlu0 %v3384, 100
        %v3391 = vpop.permute.xlu0 %3390
        %3392 = vrot.lane.b32.xlu0 %v3385, 100
        %v3393 = vpop.permute.xlu0 %3392
        %v3394 = vsel %vm1397, %v3387, %v3389
        %v3395 = vsel %vm1397, %v3389, %v3391
        %v3396 = vsel %vm1397, %v3391, %v3393
        %v3400 = vmul.f32 %v3378, %v3394
        %v3401 = vmul.f32 %v3378, %v3395
        %v3402 = vmul.f32 %v3378, %v3396
        %v3403 = vadd.f32 %v3372, %v3400
        %v3404 = vadd.f32 %v3373, %v3401
        %v3405 = vadd.f32 %v3374, %v3402
        %v3406 = vld [vmem:[#allocation3 + $0x2] sm:$0xff]
        %3407 = vset.pattern.permute.xlu0 76
        %3408 = vperm.xlu0 %3407, %v992
        %v3409 = vpop.permute.xlu0 %3408
        %3412 = vst [vmem:[#allocation1] ss:$4 sm:$0xff] %v3406
        %v3413 = vld.sshfl [vmem:[#allocation1] sm:$0xff pattern:$0x73625140]
        %v3414 = vld.sshfl [vmem:[#allocation1 + $0x8] sm:$0xff pattern:$0x73625140]
        %v3415 = vld.sshfl [vmem:[#allocation1 + $0x10] sm:$0xff pattern:$0x73625140]
        %v3416 = vld.sshfl [vmem:[#allocation1 + $0x18] sm:$0xff pattern:$0x73625140]
        %3417 = vrot.lane.b32.xlu0 %v3413, 99
        %v3418 = vpop.permute.xlu0 %3417
        %3419 = vrot.lane.b32.xlu0 %v3414, 99
        %v3420 = vpop.permute.xlu0 %3419
        %3421 = vrot.lane.b32.xlu0 %v3415, 99
        %v3422 = vpop.permute.xlu0 %3421
        %3423 = vrot.lane.b32.xlu0 %v3416, 99
        %v3424 = vpop.permute.xlu0 %3423
        %v3425 = vsel %vm1429, %v3418, %v3420
        %v3426 = vsel %vm1429, %v3420, %v3422
        %v3427 = vsel %vm1429, %v3422, %v3424
        %v3431 = vmul.f32 %v3409, %v3425
        %v3432 = vmul.f32 %v3409, %v3426
        %v3433 = vmul.f32 %v3409, %v3427
        %v3434 = vadd.f32 %v3403, %v3431
        %v3435 = vadd.f32 %v3404, %v3432
        %v3436 = vadd.f32 %v3405, %v3433
        %v3437 = vld [vmem:[#allocation3 + $0x2] sm:$0xff]
        %3438 = vset.pattern.permute.xlu0 77
        %3439 = vperm.xlu0 %3438, %v992
        %v3440 = vpop.permute.xlu0 %3439
        %3443 = vst [vmem:[#allocation1] ss:$4 sm:$0xff] %v3437
        %v3444 = vld.sshfl [vmem:[#allocation1] sm:$0xff pattern:$0x73625140]
        %v3445 = vld.sshfl [vmem:[#allocation1 + $0x8] sm:$0xff pattern:$0x73625140]
        %v3446 = vld.sshfl [vmem:[#allocation1 + $0x10] sm:$0xff pattern:$0x73625140]
        %v3447 = vld.sshfl [vmem:[#allocation1 + $0x18] sm:$0xff pattern:$0x73625140]
        %3448 = vrot.lane.b32.xlu0 %v3444, 85
        %v3449 = vpop.permute.xlu0 %3448
        %3450 = vrot.lane.b32.xlu0 %v3445, 85
        %v3451 = vpop.permute.xlu0 %3450
        %3452 = vrot.lane.b32.xlu0 %v3446, 85
        %v3453 = vpop.permute.xlu0 %3452
        %3454 = vrot.lane.b32.xlu0 %v3447, 85
        %v3455 = vpop.permute.xlu0 %3454
        %vm3456 = vcmask 695296
        %v3457 = vsel %vm3456, %v3449, %v3451
        %v3458 = vsel %vm3456, %v3451, %v3453
        %v3459 = vsel %vm3456, %v3453, %v3455
        %v3463 = vmul.f32 %v3440, %v3457
        %v3464 = vmul.f32 %v3440, %v3458
        %v3465 = vmul.f32 %v3440, %v3459
        %v3466 = vadd.f32 %v3434, %v3463
        %v3467 = vadd.f32 %v3435, %v3464
        %v3468 = vadd.f32 %v3436, %v3465
        %v3469 = vld [vmem:[#allocation3 + $0x2] sm:$0xff]
        %3470 = vset.pattern.permute.xlu0 78
        %3471 = vperm.xlu0 %3470, %v992
        %v3472 = vpop.permute.xlu0 %3471
        %3475 = vst [vmem:[#allocation1] ss:$4 sm:$0xff] %v3469
        %v3476 = vld.sshfl [vmem:[#allocation1] sm:$0xff pattern:$0x73625140]
        %v3477 = vld.sshfl [vmem:[#allocation1 + $0x8] sm:$0xff pattern:$0x73625140]
        %v3478 = vld.sshfl [vmem:[#allocation1 + $0x10] sm:$0xff pattern:$0x73625140]
        %v3479 = vld.sshfl [vmem:[#allocation1 + $0x18] sm:$0xff pattern:$0x73625140]
        %3480 = vrot.lane.b32.xlu0 %v3476, 84
        %v3481 = vpop.permute.xlu0 %3480
        %3482 = vrot.lane.b32.xlu0 %v3477, 84
        %v3483 = vpop.permute.xlu0 %3482
        %3484 = vrot.lane.b32.xlu0 %v3478, 84
        %v3485 = vpop.permute.xlu0 %3484
        %3486 = vrot.lane.b32.xlu0 %v3479, 84
        %v3487 = vpop.permute.xlu0 %3486
        %vm3488 = vcmask 687104
        %v3489 = vsel %vm3488, %v3481, %v3483
        %v3490 = vsel %vm3488, %v3483, %v3485
        %v3491 = vsel %vm3488, %v3485, %v3487
        %v3495 = vmul.f32 %v3472, %v3489
        %v3496 = vmul.f32 %v3472, %v3490
        %v3497 = vmul.f32 %v3472, %v3491
        %v3498 = vadd.f32 %v3466, %v3495
        %v3499 = vadd.f32 %v3467, %v3496
        %v3500 = vadd.f32 %v3468, %v3497
        %v3501 = vld [vmem:[#allocation3 + $0x2] sm:$0xff]
        %3502 = vset.pattern.permute.xlu0 79
        %3503 = vperm.xlu0 %3502, %v992
        %v3504 = vpop.permute.xlu0 %3503
        %3507 = vst [vmem:[#allocation1] ss:$4 sm:$0xff] %v3501
        %v3508 = vld.sshfl [vmem:[#allocation1] sm:$0xff pattern:$0x73625140]
        %v3509 = vld.sshfl [vmem:[#allocation1 + $0x8] sm:$0xff pattern:$0x73625140]
        %v3510 = vld.sshfl [vmem:[#allocation1 + $0x10] sm:$0xff pattern:$0x73625140]
        %v3511 = vld.sshfl [vmem:[#allocation1 + $0x18] sm:$0xff pattern:$0x73625140]
        %3512 = vrot.lane.b32.xlu0 %v3508, 83
        %v3513 = vpop.permute.xlu0 %3512
        %3514 = vrot.lane.b32.xlu0 %v3509, 83
        %v3515 = vpop.permute.xlu0 %3514
        %3516 = vrot.lane.b32.xlu0 %v3510, 83
        %v3517 = vpop.permute.xlu0 %3516
        %3518 = vrot.lane.b32.xlu0 %v3511, 83
        %v3519 = vpop.permute.xlu0 %3518
        %vm3520 = vcmask 678912
        %v3521 = vsel %vm3520, %v3513, %v3515
        %v3522 = vsel %vm3520, %v3515, %v3517
        %v3523 = vsel %vm3520, %v3517, %v3519
        %v3527 = vmul.f32 %v3504, %v3521
        %v3528 = vmul.f32 %v3504, %v3522
        %v3529 = vmul.f32 %v3504, %v3523
        %v3530 = vadd.f32 %v3498, %v3527
        %v3531 = vadd.f32 %v3499, %v3528
        %v3532 = vadd.f32 %v3500, %v3529
        %v3533 = vld [vmem:[#allocation3 + $0x2] sm:$0xff]
        %3534 = vset.pattern.permute.xlu0 80
        %3535 = vperm.xlu0 %3534, %v992
        %v3536 = vpop.permute.xlu0 %3535
        %3539 = vst [vmem:[#allocation1] ss:$4 sm:$0xff] %v3533
        %v3540 = vld.sshfl [vmem:[#allocation1] sm:$0xff pattern:$0x73625140]
        %v3541 = vld.sshfl [vmem:[#allocation1 + $0x8] sm:$0xff pattern:$0x73625140]
        %v3542 = vld.sshfl [vmem:[#allocation1 + $0x10] sm:$0xff pattern:$0x73625140]
        %v3543 = vld.sshfl [vmem:[#allocation1 + $0x18] sm:$0xff pattern:$0x73625140]
        %3544 = vrot.lane.b32.xlu0 %v3540, 82
        %v3545 = vpop.permute.xlu0 %3544
        %3546 = vrot.lane.b32.xlu0 %v3541, 82
        %v3547 = vpop.permute.xlu0 %3546
        %3548 = vrot.lane.b32.xlu0 %v3542, 82
        %v3549 = vpop.permute.xlu0 %3548
        %3550 = vrot.lane.b32.xlu0 %v3543, 82
        %v3551 = vpop.permute.xlu0 %3550
        %vm3552 = vcmask 670720
        %v3553 = vsel %vm3552, %v3545, %v3547
        %v3554 = vsel %vm3552, %v3547, %v3549
        %v3555 = vsel %vm3552, %v3549, %v3551
        %v3559 = vmul.f32 %v3536, %v3553
        %v3560 = vmul.f32 %v3536, %v3554
        %v3561 = vmul.f32 %v3536, %v3555
        %v3562 = vadd.f32 %v3530, %v3559
        %v3563 = vadd.f32 %v3531, %v3560
        %v3564 = vadd.f32 %v3532, %v3561
        %v3565 = vld [vmem:[#allocation3 + $0x2] sm:$0xff]
        %3566 = vset.pattern.permute.xlu0 81
        %3567 = vperm.xlu0 %3566, %v992
        %v3568 = vpop.permute.xlu0 %3567
        %3571 = vst [vmem:[#allocation1] ss:$4 sm:$0xff] %v3565
        %v3572 = vld.sshfl [vmem:[#allocation1] sm:$0xff pattern:$0x73625140]
        %v3573 = vld.sshfl [vmem:[#allocation1 + $0x8] sm:$0xff pattern:$0x73625140]
        %v3574 = vld.sshfl [vmem:[#allocation1 + $0x10] sm:$0xff pattern:$0x73625140]
        %v3575 = vld.sshfl [vmem:[#allocation1 + $0x18] sm:$0xff pattern:$0x73625140]
        %3576 = vrot.lane.b32.xlu0 %v3572, 81
        %v3577 = vpop.permute.xlu0 %3576
        %3578 = vrot.lane.b32.xlu0 %v3573, 81
        %v3579 = vpop.permute.xlu0 %3578
        %3580 = vrot.lane.b32.xlu0 %v3574, 81
        %v3581 = vpop.permute.xlu0 %3580
        %3582 = vrot.lane.b32.xlu0 %v3575, 81
        %v3583 = vpop.permute.xlu0 %3582
        %vm3584 = vcmask 662528
        %v3585 = vsel %vm3584, %v3577, %v3579
        %v3586 = vsel %vm3584, %v3579, %v3581
        %v3587 = vsel %vm3584, %v3581, %v3583
        %v3591 = vmul.f32 %v3568, %v3585
        %v3592 = vmul.f32 %v3568, %v3586
        %v3593 = vmul.f32 %v3568, %v3587
        %v3594 = vadd.f32 %v3562, %v3591
        %v3595 = vadd.f32 %v3563, %v3592
        %v3596 = vadd.f32 %v3564, %v3593
        %v3597 = vld [vmem:[#allocation3 + $0x2] sm:$0xff]
        %3598 = vset.pattern.permute.xlu0 82
        %3599 = vperm.xlu0 %3598, %v992
        %v3600 = vpop.permute.xlu0 %3599
        %3603 = vst [vmem:[#allocation1] ss:$4 sm:$0xff] %v3597
        %v3604 = vld.sshfl [vmem:[#allocation1] sm:$0xff pattern:$0x73625140]
        %v3605 = vld.sshfl [vmem:[#allocation1 + $0x8] sm:$0xff pattern:$0x73625140]
        %v3606 = vld.sshfl [vmem:[#allocation1 + $0x10] sm:$0xff pattern:$0x73625140]
        %v3607 = vld.sshfl [vmem:[#allocation1 + $0x18] sm:$0xff pattern:$0x73625140]
        %3608 = vrot.lane.b32.xlu0 %v3604, 80
        %v3609 = vpop.permute.xlu0 %3608
        %3610 = vrot.lane.b32.xlu0 %v3605, 80
        %v3611 = vpop.permute.xlu0 %3610
        %3612 = vrot.lane.b32.xlu0 %v3606, 80
        %v3613 = vpop.permute.xlu0 %3612
        %3614 = vrot.lane.b32.xlu0 %v3607, 80
        %v3615 = vpop.permute.xlu0 %3614
        %vm3616 = vcmask 654336
        %v3617 = vsel %vm3616, %v3609, %v3611
        %v3618 = vsel %vm3616, %v3611, %v3613
        %v3619 = vsel %vm3616, %v3613, %v3615
        %v3623 = vmul.f32 %v3600, %v3617
        %v3624 = vmul.f32 %v3600, %v3618
        %v3625 = vmul.f32 %v3600, %v3619
        %v3626 = vadd.f32 %v3594, %v3623
        %v3627 = vadd.f32 %v3595, %v3624
        %v3628 = vadd.f32 %v3596, %v3625
        %v3629 = vld [vmem:[#allocation3 + $0x2] sm:$0xff]
        %3630 = vset.pattern.permute.xlu0 83
        %3631 = vperm.xlu0 %3630, %v992
        %v3632 = vpop.permute.xlu0 %3631
        %3635 = vst [vmem:[#allocation1] ss:$4 sm:$0xff] %v3629
        %v3636 = vld.sshfl [vmem:[#allocation1] sm:$0xff pattern:$0x73625140]
        %v3637 = vld.sshfl [vmem:[#allocation1 + $0x8] sm:$0xff pattern:$0x73625140]
        %v3638 = vld.sshfl [vmem:[#allocation1 + $0x10] sm:$0xff pattern:$0x73625140]
        %v3639 = vld.sshfl [vmem:[#allocation1 + $0x18] sm:$0xff pattern:$0x73625140]
        %3640 = vrot.lane.b32.xlu0 %v3636, 79
        %v3641 = vpop.permute.xlu0 %3640
        %3642 = vrot.lane.b32.xlu0 %v3637, 79
        %v3643 = vpop.permute.xlu0 %3642
        %3644 = vrot.lane.b32.xlu0 %v3638, 79
        %v3645 = vpop.permute.xlu0 %3644
        %3646 = vrot.lane.b32.xlu0 %v3639, 79
        %v3647 = vpop.permute.xlu0 %3646
        %vm3648 = vcmask 646144
        %v3649 = vsel %vm3648, %v3641, %v3643
        %v3650 = vsel %vm3648, %v3643, %v3645
        %v3651 = vsel %vm3648, %v3645, %v3647
        %v3655 = vmul.f32 %v3632, %v3649
        %v3656 = vmul.f32 %v3632, %v3650
        %v3657 = vmul.f32 %v3632, %v3651
        %v3658 = vadd.f32 %v3626, %v3655
        %v3659 = vadd.f32 %v3627, %v3656
        %v3660 = vadd.f32 %v3628, %v3657
        %v3661 = vld [vmem:[#allocation3 + $0x2] sm:$0xff]
        %3662 = vset.pattern.permute.xlu0 84
        %3663 = vperm.xlu0 %3662, %v992
        %v3664 = vpop.permute.xlu0 %3663
        %3667 = vst [vmem:[#allocation1] ss:$4 sm:$0xff] %v3661
        %v3668 = vld.sshfl [vmem:[#allocation1] sm:$0xff pattern:$0x73625140]
        %v3669 = vld.sshfl [vmem:[#allocation1 + $0x8] sm:$0xff pattern:$0x73625140]
        %v3670 = vld.sshfl [vmem:[#allocation1 + $0x10] sm:$0xff pattern:$0x73625140]
        %v3671 = vld.sshfl [vmem:[#allocation1 + $0x18] sm:$0xff pattern:$0x73625140]
        %3672 = vrot.lane.b32.xlu0 %v3668, 78
        %v3673 = vpop.permute.xlu0 %3672
        %3674 = vrot.lane.b32.xlu0 %v3669, 78
        %v3675 = vpop.permute.xlu0 %3674
        %3676 = vrot.lane.b32.xlu0 %v3670, 78
        %v3677 = vpop.permute.xlu0 %3676
        %3678 = vrot.lane.b32.xlu0 %v3671, 78
        %v3679 = vpop.permute.xlu0 %3678
        %vm3680 = vcmask 637952
        %v3681 = vsel %vm3680, %v3673, %v3675
        %v3682 = vsel %vm3680, %v3675, %v3677
        %v3683 = vsel %vm3680, %v3677, %v3679
        %v3687 = vmul.f32 %v3664, %v3681
        %v3688 = vmul.f32 %v3664, %v3682
        %v3689 = vmul.f32 %v3664, %v3683
        %v3690 = vadd.f32 %v3658, %v3687
        %v3691 = vadd.f32 %v3659, %v3688
        %v3692 = vadd.f32 %v3660, %v3689
        %v3693 = vld [vmem:[#allocation3 + $0x2] sm:$0xff]
        %3694 = vset.pattern.permute.xlu0 85
        %3695 = vperm.xlu0 %3694, %v992
        %v3696 = vpop.permute.xlu0 %3695
        %3699 = vst [vmem:[#allocation1] ss:$4 sm:$0xff] %v3693
        %v3700 = vld.sshfl [vmem:[#allocation1] sm:$0xff pattern:$0x73625140]
        %v3701 = vld.sshfl [vmem:[#allocation1 + $0x8] sm:$0xff pattern:$0x73625140]
        %v3702 = vld.sshfl [vmem:[#allocation1 + $0x10] sm:$0xff pattern:$0x73625140]
        %v3703 = vld.sshfl [vmem:[#allocation1 + $0x18] sm:$0xff pattern:$0x73625140]
        %3704 = vrot.lane.b32.xlu0 %v3700, 77
        %v3705 = vpop.permute.xlu0 %3704
        %3706 = vrot.lane.b32.xlu0 %v3701, 77
        %v3707 = vpop.permute.xlu0 %3706
        %3708 = vrot.lane.b32.xlu0 %v3702, 77
        %v3709 = vpop.permute.xlu0 %3708
        %3710 = vrot.lane.b32.xlu0 %v3703, 77
        %v3711 = vpop.permute.xlu0 %3710
        %v3712 = vsel %vm1717, %v3705, %v3707
        %v3713 = vsel %vm1717, %v3707, %v3709
        %v3714 = vsel %vm1717, %v3709, %v3711
        %v3718 = vmul.f32 %v3696, %v3712
        %v3719 = vmul.f32 %v3696, %v3713
        %v3720 = vmul.f32 %v3696, %v3714
        %v3721 = vadd.f32 %v3690, %v3718
        %v3722 = vadd.f32 %v3691, %v3719
        %v3723 = vadd.f32 %v3692, %v3720
        %v3724 = vld [vmem:[#allocation3 + $0x2] sm:$0xff]
        %3725 = vset.pattern.permute.xlu0 86
        %3726 = vperm.xlu0 %3725, %v992
        %v3727 = vpop.permute.xlu0 %3726
        %3730 = vst [vmem:[#allocation1] ss:$4 sm:$0xff] %v3724
        %v3731 = vld.sshfl [vmem:[#allocation1] sm:$0xff pattern:$0x73625140]
        %v3732 = vld.sshfl [vmem:[#allocation1 + $0x8] sm:$0xff pattern:$0x73625140]
        %v3733 = vld.sshfl [vmem:[#allocation1 + $0x10] sm:$0xff pattern:$0x73625140]
        %v3734 = vld.sshfl [vmem:[#allocation1 + $0x18] sm:$0xff pattern:$0x73625140]
        %3735 = vrot.lane.b32.xlu0 %v3731, 76
        %v3736 = vpop.permute.xlu0 %3735
        %3737 = vrot.lane.b32.xlu0 %v3732, 76
        %v3738 = vpop.permute.xlu0 %3737
        %3739 = vrot.lane.b32.xlu0 %v3733, 76
        %v3740 = vpop.permute.xlu0 %3739
        %3741 = vrot.lane.b32.xlu0 %v3734, 76
        %v3742 = vpop.permute.xlu0 %3741
        %v3743 = vsel %vm1749, %v3736, %v3738
        %v3744 = vsel %vm1749, %v3738, %v3740
        %v3745 = vsel %vm1749, %v3740, %v3742
        %v3749 = vmul.f32 %v3727, %v3743
        %v3750 = vmul.f32 %v3727, %v3744
        %v3751 = vmul.f32 %v3727, %v3745
        %v3752 = vadd.f32 %v3721, %v3749
        %v3753 = vadd.f32 %v3722, %v3750
        %v3754 = vadd.f32 %v3723, %v3751
        %v3755 = vld [vmem:[#allocation3 + $0x2] sm:$0xff]
        %3756 = vset.pattern.permute.xlu0 87
        %3757 = vperm.xlu0 %3756, %v992
        %v3758 = vpop.permute.xlu0 %3757
        %3761 = vst [vmem:[#allocation1] ss:$4 sm:$0xff] %v3755
        %v3762 = vld.sshfl [vmem:[#allocation1] sm:$0xff pattern:$0x73625140]
        %v3763 = vld.sshfl [vmem:[#allocation1 + $0x8] sm:$0xff pattern:$0x73625140]
        %v3764 = vld.sshfl [vmem:[#allocation1 + $0x10] sm:$0xff pattern:$0x73625140]
        %v3765 = vld.sshfl [vmem:[#allocation1 + $0x18] sm:$0xff pattern:$0x73625140]
        %3766 = vrot.lane.b32.xlu0 %v3762, 75
        %v3767 = vpop.permute.xlu0 %3766
        %3768 = vrot.lane.b32.xlu0 %v3763, 75
        %v3769 = vpop.permute.xlu0 %3768
        %3770 = vrot.lane.b32.xlu0 %v3764, 75
        %v3771 = vpop.permute.xlu0 %3770
        %3772 = vrot.lane.b32.xlu0 %v3765, 75
        %v3773 = vpop.permute.xlu0 %3772
        %v3774 = vsel %vm1781, %v3767, %v3769
        %v3775 = vsel %vm1781, %v3769, %v3771
        %v3776 = vsel %vm1781, %v3771, %v3773
        %v3780 = vmul.f32 %v3758, %v3774
        %v3781 = vmul.f32 %v3758, %v3775
        %v3782 = vmul.f32 %v3758, %v3776
        %v3783 = vadd.f32 %v3752, %v3780
        %v3784 = vadd.f32 %v3753, %v3781
        %v3785 = vadd.f32 %v3754, %v3782
        %v3786 = vld [vmem:[#allocation3 + $0x2] sm:$0xff]
        %3787 = vset.pattern.permute.xlu0 88
        %3788 = vperm.xlu0 %3787, %v992
        %v3789 = vpop.permute.xlu0 %3788
        %3792 = vst [vmem:[#allocation1] ss:$4 sm:$0xff] %v3786
        %v3793 = vld.sshfl [vmem:[#allocation1] sm:$0xff pattern:$0x73625140]
        %v3794 = vld.sshfl [vmem:[#allocation1 + $0x8] sm:$0xff pattern:$0x73625140]
        %v3795 = vld.sshfl [vmem:[#allocation1 + $0x10] sm:$0xff pattern:$0x73625140]
        %v3796 = vld.sshfl [vmem:[#allocation1 + $0x18] sm:$0xff pattern:$0x73625140]
        %3797 = vrot.lane.b32.xlu0 %v3793, 61
        %v3798 = vpop.permute.xlu0 %3797
        %3799 = vrot.lane.b32.xlu0 %v3794, 61
        %v3800 = vpop.permute.xlu0 %3799
        %3801 = vrot.lane.b32.xlu0 %v3795, 61
        %v3802 = vpop.permute.xlu0 %3801
        %3803 = vrot.lane.b32.xlu0 %v3796, 61
        %v3804 = vpop.permute.xlu0 %3803
        %vm3805 = vcmask 498688
        %v3806 = vsel %vm3805, %v3798, %v3800
        %v3807 = vsel %vm3805, %v3800, %v3802
        %v3808 = vsel %vm3805, %v3802, %v3804
        %v3812 = vmul.f32 %v3789, %v3806
        %v3813 = vmul.f32 %v3789, %v3807
        %v3814 = vmul.f32 %v3789, %v3808
        %v3815 = vadd.f32 %v3783, %v3812
        %v3816 = vadd.f32 %v3784, %v3813
        %v3817 = vadd.f32 %v3785, %v3814
        %v3818 = vld [vmem:[#allocation3 + $0x2] sm:$0xff]
        %3819 = vset.pattern.permute.xlu0 89
        %3820 = vperm.xlu0 %3819, %v992
        %v3821 = vpop.permute.xlu0 %3820
        %3824 = vst [vmem:[#allocation1] ss:$4 sm:$0xff] %v3818
        %v3825 = vld.sshfl [vmem:[#allocation1] sm:$0xff pattern:$0x73625140]
        %v3826 = vld.sshfl [vmem:[#allocation1 + $0x8] sm:$0xff pattern:$0x73625140]
        %v3827 = vld.sshfl [vmem:[#allocation1 + $0x10] sm:$0xff pattern:$0x73625140]
        %v3828 = vld.sshfl [vmem:[#allocation1 + $0x18] sm:$0xff pattern:$0x73625140]
        %3829 = vrot.lane.b32.xlu0 %v3825, 60
        %v3830 = vpop.permute.xlu0 %3829
        %3831 = vrot.lane.b32.xlu0 %v3826, 60
        %v3832 = vpop.permute.xlu0 %3831
        %3833 = vrot.lane.b32.xlu0 %v3827, 60
        %v3834 = vpop.permute.xlu0 %3833
        %3835 = vrot.lane.b32.xlu0 %v3828, 60
        %v3836 = vpop.permute.xlu0 %3835
        %vm3837 = vcmask 490496
        %v3838 = vsel %vm3837, %v3830, %v3832
        %v3839 = vsel %vm3837, %v3832, %v3834
        %v3840 = vsel %vm3837, %v3834, %v3836
        %v3844 = vmul.f32 %v3821, %v3838
        %v3845 = vmul.f32 %v3821, %v3839
        %v3846 = vmul.f32 %v3821, %v3840
        %v3847 = vadd.f32 %v3815, %v3844
        %v3848 = vadd.f32 %v3816, %v3845
        %v3849 = vadd.f32 %v3817, %v3846
        %v3850 = vld [vmem:[#allocation3 + $0x2] sm:$0xff]
        %3851 = vset.pattern.permute.xlu0 90
        %3852 = vperm.xlu0 %3851, %v992
        %v3853 = vpop.permute.xlu0 %3852
        %3856 = vst [vmem:[#allocation1] ss:$4 sm:$0xff] %v3850
        %v3857 = vld.sshfl [vmem:[#allocation1] sm:$0xff pattern:$0x73625140]
        %v3858 = vld.sshfl [vmem:[#allocation1 + $0x8] sm:$0xff pattern:$0x73625140]
        %v3859 = vld.sshfl [vmem:[#allocation1 + $0x10] sm:$0xff pattern:$0x73625140]
        %v3860 = vld.sshfl [vmem:[#allocation1 + $0x18] sm:$0xff pattern:$0x73625140]
        %3861 = vrot.lane.b32.xlu0 %v3857, 59
        %v3862 = vpop.permute.xlu0 %3861
        %3863 = vrot.lane.b32.xlu0 %v3858, 59
        %v3864 = vpop.permute.xlu0 %3863
        %3865 = vrot.lane.b32.xlu0 %v3859, 59
        %v3866 = vpop.permute.xlu0 %3865
        %3867 = vrot.lane.b32.xlu0 %v3860, 59
        %v3868 = vpop.permute.xlu0 %3867
        %vm3869 = vcmask 482304
        %v3870 = vsel %vm3869, %v3862, %v3864
        %v3871 = vsel %vm3869, %v3864, %v3866
        %v3872 = vsel %vm3869, %v3866, %v3868
        %v3876 = vmul.f32 %v3853, %v3870
        %v3877 = vmul.f32 %v3853, %v3871
        %v3878 = vmul.f32 %v3853, %v3872
        %v3879 = vadd.f32 %v3847, %v3876
        %v3880 = vadd.f32 %v3848, %v3877
        %v3881 = vadd.f32 %v3849, %v3878
        %v3882 = vld [vmem:[#allocation3 + $0x2] sm:$0xff]
        %3883 = vset.pattern.permute.xlu0 91
        %3884 = vperm.xlu0 %3883, %v992
        %v3885 = vpop.permute.xlu0 %3884
        %3888 = vst [vmem:[#allocation1] ss:$4 sm:$0xff] %v3882
        %v3889 = vld.sshfl [vmem:[#allocation1] sm:$0xff pattern:$0x73625140]
        %v3890 = vld.sshfl [vmem:[#allocation1 + $0x8] sm:$0xff pattern:$0x73625140]
        %v3891 = vld.sshfl [vmem:[#allocation1 + $0x10] sm:$0xff pattern:$0x73625140]
        %v3892 = vld.sshfl [vmem:[#allocation1 + $0x18] sm:$0xff pattern:$0x73625140]
        %3893 = vrot.lane.b32.xlu0 %v3889, 58
        %v3894 = vpop.permute.xlu0 %3893
        %3895 = vrot.lane.b32.xlu0 %v3890, 58
        %v3896 = vpop.permute.xlu0 %3895
        %3897 = vrot.lane.b32.xlu0 %v3891, 58
        %v3898 = vpop.permute.xlu0 %3897
        %3899 = vrot.lane.b32.xlu0 %v3892, 58
        %v3900 = vpop.permute.xlu0 %3899
        %vm3901 = vcmask 474112
        %v3902 = vsel %vm3901, %v3894, %v3896
        %v3903 = vsel %vm3901, %v3896, %v3898
        %v3904 = vsel %vm3901, %v3898, %v3900
        %v3908 = vmul.f32 %v3885, %v3902
        %v3909 = vmul.f32 %v3885, %v3903
        %v3910 = vmul.f32 %v3885, %v3904
        %v3911 = vadd.f32 %v3879, %v3908
        %v3912 = vadd.f32 %v3880, %v3909
        %v3913 = vadd.f32 %v3881, %v3910
        %v3914 = vld [vmem:[#allocation3 + $0x2] sm:$0xff]
        %3915 = vset.pattern.permute.xlu0 92
        %3916 = vperm.xlu0 %3915, %v992
        %v3917 = vpop.permute.xlu0 %3916
        %3920 = vst [vmem:[#allocation1] ss:$4 sm:$0xff] %v3914
        %v3921 = vld.sshfl [vmem:[#allocation1] sm:$0xff pattern:$0x73625140]
        %v3922 = vld.sshfl [vmem:[#allocation1 + $0x8] sm:$0xff pattern:$0x73625140]
        %v3923 = vld.sshfl [vmem:[#allocation1 + $0x10] sm:$0xff pattern:$0x73625140]
        %v3924 = vld.sshfl [vmem:[#allocation1 + $0x18] sm:$0xff pattern:$0x73625140]
        %3925 = vrot.lane.b32.xlu0 %v3921, 57
        %v3926 = vpop.permute.xlu0 %3925
        %3927 = vrot.lane.b32.xlu0 %v3922, 57
        %v3928 = vpop.permute.xlu0 %3927
        %3929 = vrot.lane.b32.xlu0 %v3923, 57
        %v3930 = vpop.permute.xlu0 %3929
        %3931 = vrot.lane.b32.xlu0 %v3924, 57
        %v3932 = vpop.permute.xlu0 %3931
        %vm3933 = vcmask 465920
        %v3934 = vsel %vm3933, %v3926, %v3928
        %v3935 = vsel %vm3933, %v3928, %v3930
        %v3936 = vsel %vm3933, %v3930, %v3932
        %v3940 = vmul.f32 %v3917, %v3934
        %v3941 = vmul.f32 %v3917, %v3935
        %v3942 = vmul.f32 %v3917, %v3936
        %v3943 = vadd.f32 %v3911, %v3940
        %v3944 = vadd.f32 %v3912, %v3941
        %v3945 = vadd.f32 %v3913, %v3942
        %v3946 = vld [vmem:[#allocation3 + $0x2] sm:$0xff]
        %3947 = vset.pattern.permute.xlu0 93
        %3948 = vperm.xlu0 %3947, %v992
        %v3949 = vpop.permute.xlu0 %3948
        %3952 = vst [vmem:[#allocation1] ss:$4 sm:$0xff] %v3946
        %v3953 = vld.sshfl [vmem:[#allocation1] sm:$0xff pattern:$0x73625140]
        %v3954 = vld.sshfl [vmem:[#allocation1 + $0x8] sm:$0xff pattern:$0x73625140]
        %v3955 = vld.sshfl [vmem:[#allocation1 + $0x10] sm:$0xff pattern:$0x73625140]
        %v3956 = vld.sshfl [vmem:[#allocation1 + $0x18] sm:$0xff pattern:$0x73625140]
        %3957 = vrot.lane.b32.xlu0 %v3953, 56
        %v3958 = vpop.permute.xlu0 %3957
        %3959 = vrot.lane.b32.xlu0 %v3954, 56
        %v3960 = vpop.permute.xlu0 %3959
        %3961 = vrot.lane.b32.xlu0 %v3955, 56
        %v3962 = vpop.permute.xlu0 %3961
        %3963 = vrot.lane.b32.xlu0 %v3956, 56
        %v3964 = vpop.permute.xlu0 %3963
        %vm3965 = vcmask 457728
        %v3966 = vsel %vm3965, %v3958, %v3960
        %v3967 = vsel %vm3965, %v3960, %v3962
        %v3968 = vsel %vm3965, %v3962, %v3964
        %v3972 = vmul.f32 %v3949, %v3966
        %v3973 = vmul.f32 %v3949, %v3967
        %v3974 = vmul.f32 %v3949, %v3968
        %v3975 = vadd.f32 %v3943, %v3972
        %v3976 = vadd.f32 %v3944, %v3973
        %v3977 = vadd.f32 %v3945, %v3974
        %v3978 = vld [vmem:[#allocation3 + $0x2] sm:$0xff]
        %3979 = vset.pattern.permute.xlu0 94
        %3980 = vperm.xlu0 %3979, %v992
        %v3981 = vpop.permute.xlu0 %3980
        %3984 = vst [vmem:[#allocation1] ss:$4 sm:$0xff] %v3978
        %v3985 = vld.sshfl [vmem:[#allocation1] sm:$0xff pattern:$0x73625140]
        %v3986 = vld.sshfl [vmem:[#allocation1 + $0x8] sm:$0xff pattern:$0x73625140]
        %v3987 = vld.sshfl [vmem:[#allocation1 + $0x10] sm:$0xff pattern:$0x73625140]
        %v3988 = vld.sshfl [vmem:[#allocation1 + $0x18] sm:$0xff pattern:$0x73625140]
        %3989 = vrot.lane.b32.xlu0 %v3985, 55
        %v3990 = vpop.permute.xlu0 %3989
        %3991 = vrot.lane.b32.xlu0 %v3986, 55
        %v3992 = vpop.permute.xlu0 %3991
        %3993 = vrot.lane.b32.xlu0 %v3987, 55
        %v3994 = vpop.permute.xlu0 %3993
        %3995 = vrot.lane.b32.xlu0 %v3988, 55
        %v3996 = vpop.permute.xlu0 %3995
        %vm3997 = vcmask 449536
        %v3998 = vsel %vm3997, %v3990, %v3992
        %v3999 = vsel %vm3997, %v3992, %v3994
        %v4000 = vsel %vm3997, %v3994, %v3996
        %v4004 = vmul.f32 %v3981, %v3998
        %v4005 = vmul.f32 %v3981, %v3999
        %v4006 = vmul.f32 %v3981, %v4000
        %v4007 = vadd.f32 %v3975, %v4004
        %v4008 = vadd.f32 %v3976, %v4005
        %v4009 = vadd.f32 %v3977, %v4006
        %v4010 = vld [vmem:[#allocation3 + $0x2] sm:$0xff]
        %4011 = vset.pattern.permute.xlu0 95
        %4012 = vperm.xlu0 %4011, %v992
        %v4013 = vpop.permute.xlu0 %4012
        %4016 = vst [vmem:[#allocation1] ss:$4 sm:$0xff] %v4010
        %v4017 = vld.sshfl [vmem:[#allocation1] sm:$0xff pattern:$0x73625140]
        %v4018 = vld.sshfl [vmem:[#allocation1 + $0x8] sm:$0xff pattern:$0x73625140]
        %v4019 = vld.sshfl [vmem:[#allocation1 + $0x10] sm:$0xff pattern:$0x73625140]
        %v4020 = vld.sshfl [vmem:[#allocation1 + $0x18] sm:$0xff pattern:$0x73625140]
        %4021 = vrot.lane.b32.xlu0 %v4017, 54
        %v4022 = vpop.permute.xlu0 %4021
        %4023 = vrot.lane.b32.xlu0 %v4018, 54
        %v4024 = vpop.permute.xlu0 %4023
        %4025 = vrot.lane.b32.xlu0 %v4019, 54
        %v4026 = vpop.permute.xlu0 %4025
        %4027 = vrot.lane.b32.xlu0 %v4020, 54
        %v4028 = vpop.permute.xlu0 %4027
        %vm4029 = vcmask 441344
        %v4030 = vsel %vm4029, %v4022, %v4024
        %v4031 = vsel %vm4029, %v4024, %v4026
        %v4032 = vsel %vm4029, %v4026, %v4028
        %v4036 = vmul.f32 %v4013, %v4030
        %v4037 = vmul.f32 %v4013, %v4031
        %v4038 = vmul.f32 %v4013, %v4032
        %v4039 = vadd.f32 %v4007, %v4036
        %v4040 = vadd.f32 %v4008, %v4037
        %v4041 = vadd.f32 %v4009, %v4038
        %v4042 = vld [vmem:[#allocation3 + $0x2] sm:$0xff]
        %4043 = vset.pattern.permute.xlu0 96
        %4044 = vperm.xlu0 %4043, %v992
        %v4045 = vpop.permute.xlu0 %4044
        %4048 = vst [vmem:[#allocation1] ss:$4 sm:$0xff] %v4042
        %v4049 = vld.sshfl [vmem:[#allocation1] sm:$0xff pattern:$0x73625140]
        %v4050 = vld.sshfl [vmem:[#allocation1 + $0x8] sm:$0xff pattern:$0x73625140]
        %v4051 = vld.sshfl [vmem:[#allocation1 + $0x10] sm:$0xff pattern:$0x73625140]
        %v4052 = vld.sshfl [vmem:[#allocation1 + $0x18] sm:$0xff pattern:$0x73625140]
        %4053 = vrot.lane.b32.xlu0 %v4049, 53
        %v4054 = vpop.permute.xlu0 %4053
        %4055 = vrot.lane.b32.xlu0 %v4050, 53
        %v4056 = vpop.permute.xlu0 %4055
        %4057 = vrot.lane.b32.xlu0 %v4051, 53
        %v4058 = vpop.permute.xlu0 %4057
        %4059 = vrot.lane.b32.xlu0 %v4052, 53
        %v4060 = vpop.permute.xlu0 %4059
        %v4061 = vsel %vm2069, %v4054, %v4056
        %v4062 = vsel %vm2069, %v4056, %v4058
        %v4063 = vsel %vm2069, %v4058, %v4060
        %v4067 = vmul.f32 %v4045, %v4061
        %v4068 = vmul.f32 %v4045, %v4062
        %v4069 = vmul.f32 %v4045, %v4063
        %v4070 = vadd.f32 %v4039, %v4067
        %v4071 = vadd.f32 %v4040, %v4068
        %v4072 = vadd.f32 %v4041, %v4069
        %v4073 = vld [vmem:[#allocation3 + $0x2] sm:$0xff]
        %4074 = vset.pattern.permute.xlu0 97
        %4075 = vperm.xlu0 %4074, %v992
        %v4076 = vpop.permute.xlu0 %4075
        %4079 = vst [vmem:[#allocation1] ss:$4 sm:$0xff] %v4073
        %v4080 = vld.sshfl [vmem:[#allocation1] sm:$0xff pattern:$0x73625140]
        %v4081 = vld.sshfl [vmem:[#allocation1 + $0x8] sm:$0xff pattern:$0x73625140]
        %v4082 = vld.sshfl [vmem:[#allocation1 + $0x10] sm:$0xff pattern:$0x73625140]
        %v4083 = vld.sshfl [vmem:[#allocation1 + $0x18] sm:$0xff pattern:$0x73625140]
        %4084 = vrot.lane.b32.xlu0 %v4080, 52
        %v4085 = vpop.permute.xlu0 %4084
        %4086 = vrot.lane.b32.xlu0 %v4081, 52
        %v4087 = vpop.permute.xlu0 %4086
        %4088 = vrot.lane.b32.xlu0 %v4082, 52
        %v4089 = vpop.permute.xlu0 %4088
        %4090 = vrot.lane.b32.xlu0 %v4083, 52
        %v4091 = vpop.permute.xlu0 %4090
        %v4092 = vsel %vm2101, %v4085, %v4087
        %v4093 = vsel %vm2101, %v4087, %v4089
        %v4094 = vsel %vm2101, %v4089, %v4091
        %v4098 = vmul.f32 %v4076, %v4092
        %v4099 = vmul.f32 %v4076, %v4093
        %v4100 = vmul.f32 %v4076, %v4094
        %v4101 = vadd.f32 %v4070, %v4098
        %v4102 = vadd.f32 %v4071, %v4099
        %v4103 = vadd.f32 %v4072, %v4100
        %v4104 = vld [vmem:[#allocation3 + $0x2] sm:$0xff]
        %4105 = vset.pattern.permute.xlu0 98
        %4106 = vperm.xlu0 %4105, %v992
        %v4107 = vpop.permute.xlu0 %4106
        %4110 = vst [vmem:[#allocation1] ss:$4 sm:$0xff] %v4104
        %v4111 = vld.sshfl [vmem:[#allocation1] sm:$0xff pattern:$0x73625140]
        %v4112 = vld.sshfl [vmem:[#allocation1 + $0x8] sm:$0xff pattern:$0x73625140]
        %v4113 = vld.sshfl [vmem:[#allocation1 + $0x10] sm:$0xff pattern:$0x73625140]
        %v4114 = vld.sshfl [vmem:[#allocation1 + $0x18] sm:$0xff pattern:$0x73625140]
        %4115 = vrot.lane.b32.xlu0 %v4111, 51
        %v4116 = vpop.permute.xlu0 %4115
        %4117 = vrot.lane.b32.xlu0 %v4112, 51
        %v4118 = vpop.permute.xlu0 %4117
        %4119 = vrot.lane.b32.xlu0 %v4113, 51
        %v4120 = vpop.permute.xlu0 %4119
        %4121 = vrot.lane.b32.xlu0 %v4114, 51
        %v4122 = vpop.permute.xlu0 %4121
        %v4123 = vsel %vm2133, %v4116, %v4118
        %v4124 = vsel %vm2133, %v4118, %v4120
        %v4125 = vsel %vm2133, %v4120, %v4122
        %v4129 = vmul.f32 %v4107, %v4123
        %v4130 = vmul.f32 %v4107, %v4124
        %v4131 = vmul.f32 %v4107, %v4125
        %v4132 = vadd.f32 %v4101, %v4129
        %v4133 = vadd.f32 %v4102, %v4130
        %v4134 = vadd.f32 %v4103, %v4131
        %v4135 = vld [vmem:[#allocation3 + $0x2] sm:$0xff]
        %4136 = vset.pattern.permute.xlu0 99
        %4137 = vperm.xlu0 %4136, %v992
        %v4138 = vpop.permute.xlu0 %4137
        %4141 = vst [vmem:[#allocation1] ss:$4 sm:$0xff] %v4135
        %v4142 = vld.sshfl [vmem:[#allocation1] sm:$0xff pattern:$0x73625140]
        %v4143 = vld.sshfl [vmem:[#allocation1 + $0x8] sm:$0xff pattern:$0x73625140]
        %v4144 = vld.sshfl [vmem:[#allocation1 + $0x10] sm:$0xff pattern:$0x73625140]
        %v4145 = vld.sshfl [vmem:[#allocation1 + $0x18] sm:$0xff pattern:$0x73625140]
        %4146 = vrot.lane.b32.xlu0 %v4142, 37
        %v4147 = vpop.permute.xlu0 %4146
        %4148 = vrot.lane.b32.xlu0 %v4143, 37
        %v4149 = vpop.permute.xlu0 %4148
        %4150 = vrot.lane.b32.xlu0 %v4144, 37
        %v4151 = vpop.permute.xlu0 %4150
        %4152 = vrot.lane.b32.xlu0 %v4145, 37
        %v4153 = vpop.permute.xlu0 %4152
        %vm4154 = vcmask 302080
        %v4155 = vsel %vm4154, %v4147, %v4149
        %v4156 = vsel %vm4154, %v4149, %v4151
        %v4157 = vsel %vm4154, %v4151, %v4153
        %v4161 = vmul.f32 %v4138, %v4155
        %v4162 = vmul.f32 %v4138, %v4156
        %v4163 = vmul.f32 %v4138, %v4157
        %v4164 = vadd.f32 %v4132, %v4161
        %v4165 = vadd.f32 %v4133, %v4162
        %v4166 = vadd.f32 %v4134, %v4163
        %v4167 = vld [vmem:[#allocation3 + $0x2] sm:$0xff]
        %4168 = vset.pattern.permute.xlu0 100
        %4169 = vperm.xlu0 %4168, %v992
        %v4170 = vpop.permute.xlu0 %4169
        %4173 = vst [vmem:[#allocation1] ss:$4 sm:$0xff] %v4167
        %v4174 = vld.sshfl [vmem:[#allocation1] sm:$0xff pattern:$0x73625140]
        %v4175 = vld.sshfl [vmem:[#allocation1 + $0x8] sm:$0xff pattern:$0x73625140]
        %v4176 = vld.sshfl [vmem:[#allocation1 + $0x10] sm:$0xff pattern:$0x73625140]
        %v4177 = vld.sshfl [vmem:[#allocation1 + $0x18] sm:$0xff pattern:$0x73625140]
        %4178 = vrot.lane.b32.xlu0 %v4174, 36
        %v4179 = vpop.permute.xlu0 %4178
        %4180 = vrot.lane.b32.xlu0 %v4175, 36
        %v4181 = vpop.permute.xlu0 %4180
        %4182 = vrot.lane.b32.xlu0 %v4176, 36
        %v4183 = vpop.permute.xlu0 %4182
        %4184 = vrot.lane.b32.xlu0 %v4177, 36
        %v4185 = vpop.permute.xlu0 %4184
        %vm4186 = vcmask 293888
        %v4187 = vsel %vm4186, %v4179, %v4181
        %v4188 = vsel %vm4186, %v4181, %v4183
        %v4189 = vsel %vm4186, %v4183, %v4185
        %v4193 = vmul.f32 %v4170, %v4187
        %v4194 = vmul.f32 %v4170, %v4188
        %v4195 = vmul.f32 %v4170, %v4189
        %v4196 = vadd.f32 %v4164, %v4193
        %v4197 = vadd.f32 %v4165, %v4194
        %v4198 = vadd.f32 %v4166, %v4195
        %v4199 = vld [vmem:[#allocation3 + $0x2] sm:$0xff]
        %4200 = vset.pattern.permute.xlu0 101
        %4201 = vperm.xlu0 %4200, %v992
        %v4202 = vpop.permute.xlu0 %4201
        %4205 = vst [vmem:[#allocation1] ss:$4 sm:$0xff] %v4199
        %v4206 = vld.sshfl [vmem:[#allocation1] sm:$0xff pattern:$0x73625140]
        %v4207 = vld.sshfl [vmem:[#allocation1 + $0x8] sm:$0xff pattern:$0x73625140]
        %v4208 = vld.sshfl [vmem:[#allocation1 + $0x10] sm:$0xff pattern:$0x73625140]
        %v4209 = vld.sshfl [vmem:[#allocation1 + $0x18] sm:$0xff pattern:$0x73625140]
        %4210 = vrot.lane.b32.xlu0 %v4206, 35
        %v4211 = vpop.permute.xlu0 %4210
        %4212 = vrot.lane.b32.xlu0 %v4207, 35
        %v4213 = vpop.permute.xlu0 %4212
        %4214 = vrot.lane.b32.xlu0 %v4208, 35
        %v4215 = vpop.permute.xlu0 %4214
        %4216 = vrot.lane.b32.xlu0 %v4209, 35
        %v4217 = vpop.permute.xlu0 %4216
        %vm4218 = vcmask 285696
        %v4219 = vsel %vm4218, %v4211, %v4213
        %v4220 = vsel %vm4218, %v4213, %v4215
        %v4221 = vsel %vm4218, %v4215, %v4217
        %v4225 = vmul.f32 %v4202, %v4219
        %v4226 = vmul.f32 %v4202, %v4220
        %v4227 = vmul.f32 %v4202, %v4221
        %v4228 = vadd.f32 %v4196, %v4225
        %v4229 = vadd.f32 %v4197, %v4226
        %v4230 = vadd.f32 %v4198, %v4227
        %v4231 = vld [vmem:[#allocation3 + $0x2] sm:$0xff]
        %4232 = vset.pattern.permute.xlu0 102
        %4233 = vperm.xlu0 %4232, %v992
        %v4234 = vpop.permute.xlu0 %4233
        %4237 = vst [vmem:[#allocation1] ss:$4 sm:$0xff] %v4231
        %v4238 = vld.sshfl [vmem:[#allocation1] sm:$0xff pattern:$0x73625140]
        %v4239 = vld.sshfl [vmem:[#allocation1 + $0x8] sm:$0xff pattern:$0x73625140]
        %v4240 = vld.sshfl [vmem:[#allocation1 + $0x10] sm:$0xff pattern:$0x73625140]
        %v4241 = vld.sshfl [vmem:[#allocation1 + $0x18] sm:$0xff pattern:$0x73625140]
        %4242 = vrot.lane.b32.xlu0 %v4238, 34
        %v4243 = vpop.permute.xlu0 %4242
        %4244 = vrot.lane.b32.xlu0 %v4239, 34
        %v4245 = vpop.permute.xlu0 %4244
        %4246 = vrot.lane.b32.xlu0 %v4240, 34
        %v4247 = vpop.permute.xlu0 %4246
        %4248 = vrot.lane.b32.xlu0 %v4241, 34
        %v4249 = vpop.permute.xlu0 %4248
        %vm4250 = vcmask 277504
        %v4251 = vsel %vm4250, %v4243, %v4245
        %v4252 = vsel %vm4250, %v4245, %v4247
        %v4253 = vsel %vm4250, %v4247, %v4249
        %v4257 = vmul.f32 %v4234, %v4251
        %v4258 = vmul.f32 %v4234, %v4252
        %v4259 = vmul.f32 %v4234, %v4253
        %v4260 = vadd.f32 %v4228, %v4257
        %v4261 = vadd.f32 %v4229, %v4258
        %v4262 = vadd.f32 %v4230, %v4259
        %v4263 = vld [vmem:[#allocation3 + $0x2] sm:$0xff]
        %4264 = vset.pattern.permute.xlu0 103
        %4265 = vperm.xlu0 %4264, %v992
        %v4266 = vpop.permute.xlu0 %4265
        %4269 = vst [vmem:[#allocation1] ss:$4 sm:$0xff] %v4263
        %v4270 = vld.sshfl [vmem:[#allocation1] sm:$0xff pattern:$0x73625140]
        %v4271 = vld.sshfl [vmem:[#allocation1 + $0x8] sm:$0xff pattern:$0x73625140]
        %v4272 = vld.sshfl [vmem:[#allocation1 + $0x10] sm:$0xff pattern:$0x73625140]
        %v4273 = vld.sshfl [vmem:[#allocation1 + $0x18] sm:$0xff pattern:$0x73625140]
        %4274 = vrot.lane.b32.xlu0 %v4270, 33
        %v4275 = vpop.permute.xlu0 %4274
        %4276 = vrot.lane.b32.xlu0 %v4271, 33
        %v4277 = vpop.permute.xlu0 %4276
        %4278 = vrot.lane.b32.xlu0 %v4272, 33
        %v4279 = vpop.permute.xlu0 %4278
        %4280 = vrot.lane.b32.xlu0 %v4273, 33
        %v4281 = vpop.permute.xlu0 %4280
        %vm4282 = vcmask 269312
        %v4283 = vsel %vm4282, %v4275, %v4277
        %v4284 = vsel %vm4282, %v4277, %v4279
        %v4285 = vsel %vm4282, %v4279, %v4281
        %v4289 = vmul.f32 %v4266, %v4283
        %v4290 = vmul.f32 %v4266, %v4284
        %v4291 = vmul.f32 %v4266, %v4285
        %v4292 = vadd.f32 %v4260, %v4289
        %v4293 = vadd.f32 %v4261, %v4290
        %v4294 = vadd.f32 %v4262, %v4291
        %v4295 = vld [vmem:[#allocation3 + $0x2] sm:$0xff]
        %4296 = vset.pattern.permute.xlu0 104
        %4297 = vperm.xlu0 %4296, %v992
        %v4298 = vpop.permute.xlu0 %4297
        %4301 = vst [vmem:[#allocation1] ss:$4 sm:$0xff] %v4295
        %v4302 = vld.sshfl [vmem:[#allocation1] sm:$0xff pattern:$0x73625140]
        %v4303 = vld.sshfl [vmem:[#allocation1 + $0x8] sm:$0xff pattern:$0x73625140]
        %v4304 = vld.sshfl [vmem:[#allocation1 + $0x10] sm:$0xff pattern:$0x73625140]
        %v4305 = vld.sshfl [vmem:[#allocation1 + $0x18] sm:$0xff pattern:$0x73625140]
        %4306 = vrot.lane.b32.xlu0 %v4302, 32
        %v4307 = vpop.permute.xlu0 %4306
        %4308 = vrot.lane.b32.xlu0 %v4303, 32
        %v4309 = vpop.permute.xlu0 %4308
        %4310 = vrot.lane.b32.xlu0 %v4304, 32
        %v4311 = vpop.permute.xlu0 %4310
        %4312 = vrot.lane.b32.xlu0 %v4305, 32
        %v4313 = vpop.permute.xlu0 %4312
        %v4314 = vsel %vm687, %v4307, %v4309
        %v4315 = vsel %vm687, %v4309, %v4311
        %v4316 = vsel %vm687, %v4311, %v4313
        %v4320 = vmul.f32 %v4298, %v4314
        %v4321 = vmul.f32 %v4298, %v4315
        %v4322 = vmul.f32 %v4298, %v4316
        %v4323 = vadd.f32 %v4292, %v4320
        %v4324 = vadd.f32 %v4293, %v4321
        %v4325 = vadd.f32 %v4294, %v4322
        %v4326 = vld [vmem:[#allocation3 + $0x2] sm:$0xff]
        %4327 = vset.pattern.permute.xlu0 105
        %4328 = vperm.xlu0 %4327, %v992
        %v4329 = vpop.permute.xlu0 %4328
        %4332 = vst [vmem:[#allocation1] ss:$4 sm:$0xff] %v4326
        %v4333 = vld.sshfl [vmem:[#allocation1] sm:$0xff pattern:$0x73625140]
        %v4334 = vld.sshfl [vmem:[#allocation1 + $0x8] sm:$0xff pattern:$0x73625140]
        %v4335 = vld.sshfl [vmem:[#allocation1 + $0x10] sm:$0xff pattern:$0x73625140]
        %v4336 = vld.sshfl [vmem:[#allocation1 + $0x18] sm:$0xff pattern:$0x73625140]
        %4337 = vrot.lane.b32.xlu0 %v4333, 31
        %v4338 = vpop.permute.xlu0 %4337
        %4339 = vrot.lane.b32.xlu0 %v4334, 31
        %v4340 = vpop.permute.xlu0 %4339
        %4341 = vrot.lane.b32.xlu0 %v4335, 31
        %v4342 = vpop.permute.xlu0 %4341
        %4343 = vrot.lane.b32.xlu0 %v4336, 31
        %v4344 = vpop.permute.xlu0 %4343
        %vm4345 = vcmask 252928
        %v4346 = vsel %vm4345, %v4338, %v4340
        %v4347 = vsel %vm4345, %v4340, %v4342
        %v4348 = vsel %vm4345, %v4342, %v4344
        %v4352 = vmul.f32 %v4329, %v4346
        %v4353 = vmul.f32 %v4329, %v4347
        %v4354 = vmul.f32 %v4329, %v4348
        %v4355 = vadd.f32 %v4323, %v4352
        %v4356 = vadd.f32 %v4324, %v4353
        %v4357 = vadd.f32 %v4325, %v4354
        %v4358 = vld [vmem:[#allocation3 + $0x2] sm:$0xff]
        %4359 = vset.pattern.permute.xlu0 106
        %4360 = vperm.xlu0 %4359, %v992
        %v4361 = vpop.permute.xlu0 %4360
        %4364 = vst [vmem:[#allocation1] ss:$4 sm:$0xff] %v4358
        %v4365 = vld.sshfl [vmem:[#allocation1] sm:$0xff pattern:$0x73625140]
        %v4366 = vld.sshfl [vmem:[#allocation1 + $0x8] sm:$0xff pattern:$0x73625140]
        %v4367 = vld.sshfl [vmem:[#allocation1 + $0x10] sm:$0xff pattern:$0x73625140]
        %v4368 = vld.sshfl [vmem:[#allocation1 + $0x18] sm:$0xff pattern:$0x73625140]
        %4369 = vrot.lane.b32.xlu0 %v4365, 30
        %v4370 = vpop.permute.xlu0 %4369
        %4371 = vrot.lane.b32.xlu0 %v4366, 30
        %v4372 = vpop.permute.xlu0 %4371
        %4373 = vrot.lane.b32.xlu0 %v4367, 30
        %v4374 = vpop.permute.xlu0 %4373
        %4375 = vrot.lane.b32.xlu0 %v4368, 30
        %v4376 = vpop.permute.xlu0 %4375
        %vm4377 = vcmask 244736
        %v4378 = vsel %vm4377, %v4370, %v4372
        %v4379 = vsel %vm4377, %v4372, %v4374
        %v4380 = vsel %vm4377, %v4374, %v4376
        %v4384 = vmul.f32 %v4361, %v4378
        %v4385 = vmul.f32 %v4361, %v4379
        %v4386 = vmul.f32 %v4361, %v4380
        %v4387 = vadd.f32 %v4355, %v4384
        %v4388 = vadd.f32 %v4356, %v4385
        %v4389 = vadd.f32 %v4357, %v4386
        %v4390 = vld [vmem:[#allocation3 + $0x2] sm:$0xff]
        %4391 = vset.pattern.permute.xlu0 107
        %4392 = vperm.xlu0 %4391, %v992
        %v4393 = vpop.permute.xlu0 %4392
        %4396 = vst [vmem:[#allocation1] ss:$4 sm:$0xff] %v4390
        %v4397 = vld.sshfl [vmem:[#allocation1] sm:$0xff pattern:$0x73625140]
        %v4398 = vld.sshfl [vmem:[#allocation1 + $0x8] sm:$0xff pattern:$0x73625140]
        %v4399 = vld.sshfl [vmem:[#allocation1 + $0x10] sm:$0xff pattern:$0x73625140]
        %v4400 = vld.sshfl [vmem:[#allocation1 + $0x18] sm:$0xff pattern:$0x73625140]
        %4401 = vrot.lane.b32.xlu0 %v4397, 29
        %v4402 = vpop.permute.xlu0 %4401
        %4403 = vrot.lane.b32.xlu0 %v4398, 29
        %v4404 = vpop.permute.xlu0 %4403
        %4405 = vrot.lane.b32.xlu0 %v4399, 29
        %v4406 = vpop.permute.xlu0 %4405
        %4407 = vrot.lane.b32.xlu0 %v4400, 29
        %v4408 = vpop.permute.xlu0 %4407
        %v4409 = vsel %vm2421, %v4402, %v4404
        %v4410 = vsel %vm2421, %v4404, %v4406
        %v4411 = vsel %vm2421, %v4406, %v4408
        %v4415 = vmul.f32 %v4393, %v4409
        %v4416 = vmul.f32 %v4393, %v4410
        %v4417 = vmul.f32 %v4393, %v4411
        %v4418 = vadd.f32 %v4387, %v4415
        %v4419 = vadd.f32 %v4388, %v4416
        %v4420 = vadd.f32 %v4389, %v4417
        %v4421 = vld [vmem:[#allocation3 + $0x2] sm:$0xff]
        %4422 = vset.pattern.permute.xlu0 108
        %4423 = vperm.xlu0 %4422, %v992
        %v4424 = vpop.permute.xlu0 %4423
        %4427 = vst [vmem:[#allocation1] ss:$4 sm:$0xff] %v4421
        %v4428 = vld.sshfl [vmem:[#allocation1] sm:$0xff pattern:$0x73625140]
        %v4429 = vld.sshfl [vmem:[#allocation1 + $0x8] sm:$0xff pattern:$0x73625140]
        %v4430 = vld.sshfl [vmem:[#allocation1 + $0x10] sm:$0xff pattern:$0x73625140]
        %v4431 = vld.sshfl [vmem:[#allocation1 + $0x18] sm:$0xff pattern:$0x73625140]
        %4432 = vrot.lane.b32.xlu0 %v4428, 28
        %v4433 = vpop.permute.xlu0 %4432
        %4434 = vrot.lane.b32.xlu0 %v4429, 28
        %v4435 = vpop.permute.xlu0 %4434
        %4436 = vrot.lane.b32.xlu0 %v4430, 28
        %v4437 = vpop.permute.xlu0 %4436
        %4438 = vrot.lane.b32.xlu0 %v4431, 28
        %v4439 = vpop.permute.xlu0 %4438
        %v4440 = vsel %vm2453, %v4433, %v4435
        %v4441 = vsel %vm2453, %v4435, %v4437
        %v4442 = vsel %vm2453, %v4437, %v4439
        %v4446 = vmul.f32 %v4424, %v4440
        %v4447 = vmul.f32 %v4424, %v4441
        %v4448 = vmul.f32 %v4424, %v4442
        %v4449 = vadd.f32 %v4418, %v4446
        %v4450 = vadd.f32 %v4419, %v4447
        %v4451 = vadd.f32 %v4420, %v4448
        %v4452 = vld [vmem:[#allocation3 + $0x2] sm:$0xff]
        %4453 = vset.pattern.permute.xlu0 109
        %4454 = vperm.xlu0 %4453, %v992
        %v4455 = vpop.permute.xlu0 %4454
        %4458 = vst [vmem:[#allocation1] ss:$4 sm:$0xff] %v4452
        %v4459 = vld.sshfl [vmem:[#allocation1] sm:$0xff pattern:$0x73625140]
        %v4460 = vld.sshfl [vmem:[#allocation1 + $0x8] sm:$0xff pattern:$0x73625140]
        %v4461 = vld.sshfl [vmem:[#allocation1 + $0x10] sm:$0xff pattern:$0x73625140]
        %v4462 = vld.sshfl [vmem:[#allocation1 + $0x18] sm:$0xff pattern:$0x73625140]
        %4463 = vrot.lane.b32.xlu0 %v4459, 27
        %v4464 = vpop.permute.xlu0 %4463
        %4465 = vrot.lane.b32.xlu0 %v4460, 27
        %v4466 = vpop.permute.xlu0 %4465
        %4467 = vrot.lane.b32.xlu0 %v4461, 27
        %v4468 = vpop.permute.xlu0 %4467
        %4469 = vrot.lane.b32.xlu0 %v4462, 27
        %v4470 = vpop.permute.xlu0 %4469
        %v4471 = vsel %vm2485, %v4464, %v4466
        %v4472 = vsel %vm2485, %v4466, %v4468
        %v4473 = vsel %vm2485, %v4468, %v4470
        %v4477 = vmul.f32 %v4455, %v4471
        %v4478 = vmul.f32 %v4455, %v4472
        %v4479 = vmul.f32 %v4455, %v4473
        %v4480 = vadd.f32 %v4449, %v4477
        %v4481 = vadd.f32 %v4450, %v4478
        %v4482 = vadd.f32 %v4451, %v4479
        %v4483 = vld [vmem:[#allocation3 + $0x2] sm:$0xff]
        %4484 = vset.pattern.permute.xlu0 110
        %4485 = vperm.xlu0 %4484, %v992
        %v4486 = vpop.permute.xlu0 %4485
        %4489 = vst [vmem:[#allocation1] ss:$4 sm:$0xff] %v4483
        %v4490 = vld.sshfl [vmem:[#allocation1] sm:$0xff pattern:$0x73625140]
        %v4491 = vld.sshfl [vmem:[#allocation1 + $0x8] sm:$0xff pattern:$0x73625140]
        %v4492 = vld.sshfl [vmem:[#allocation1 + $0x10] sm:$0xff pattern:$0x73625140]
        %v4493 = vld.sshfl [vmem:[#allocation1 + $0x18] sm:$0xff pattern:$0x73625140]
        %4494 = vrot.lane.b32.xlu0 %v4490, 13
        %v4495 = vpop.permute.xlu0 %4494
        %4496 = vrot.lane.b32.xlu0 %v4491, 13
        %v4497 = vpop.permute.xlu0 %4496
        %4498 = vrot.lane.b32.xlu0 %v4492, 13
        %v4499 = vpop.permute.xlu0 %4498
        %4500 = vrot.lane.b32.xlu0 %v4493, 13
        %v4501 = vpop.permute.xlu0 %4500
        %vm4502 = vcmask 105472
        %v4503 = vsel %vm4502, %v4495, %v4497
        %v4504 = vsel %vm4502, %v4497, %v4499
        %v4505 = vsel %vm4502, %v4499, %v4501
        %v4509 = vmul.f32 %v4486, %v4503
        %v4510 = vmul.f32 %v4486, %v4504
        %v4511 = vmul.f32 %v4486, %v4505
        %v4512 = vadd.f32 %v4480, %v4509
        %v4513 = vadd.f32 %v4481, %v4510
        %v4514 = vadd.f32 %v4482, %v4511
        %v4515 = vld [vmem:[#allocation3 + $0x2] sm:$0xff]
        %4516 = vset.pattern.permute.xlu0 111
        %4517 = vperm.xlu0 %4516, %v992
        %v4518 = vpop.permute.xlu0 %4517
        %4521 = vst [vmem:[#allocation1] ss:$4 sm:$0xff] %v4515
        %v4522 = vld.sshfl [vmem:[#allocation1] sm:$0xff pattern:$0x73625140]
        %v4523 = vld.sshfl [vmem:[#allocation1 + $0x8] sm:$0xff pattern:$0x73625140]
        %v4524 = vld.sshfl [vmem:[#allocation1 + $0x10] sm:$0xff pattern:$0x73625140]
        %v4525 = vld.sshfl [vmem:[#allocation1 + $0x18] sm:$0xff pattern:$0x73625140]
        %4526 = vrot.lane.b32.xlu0 %v4522, 12
        %v4527 = vpop.permute.xlu0 %4526
        %4528 = vrot.lane.b32.xlu0 %v4523, 12
        %v4529 = vpop.permute.xlu0 %4528
        %4530 = vrot.lane.b32.xlu0 %v4524, 12
        %v4531 = vpop.permute.xlu0 %4530
        %4532 = vrot.lane.b32.xlu0 %v4525, 12
        %v4533 = vpop.permute.xlu0 %4532
        %vm4534 = vcmask 97280
        %v4535 = vsel %vm4534, %v4527, %v4529
        %v4536 = vsel %vm4534, %v4529, %v4531
        %v4537 = vsel %vm4534, %v4531, %v4533
        %v4541 = vmul.f32 %v4518, %v4535
        %v4542 = vmul.f32 %v4518, %v4536
        %v4543 = vmul.f32 %v4518, %v4537
        %v4544 = vadd.f32 %v4512, %v4541
        %v4545 = vadd.f32 %v4513, %v4542
        %v4546 = vadd.f32 %v4514, %v4543
        %v4547 = vld [vmem:[#allocation3 + $0x2] sm:$0xff]
        %4548 = vset.pattern.permute.xlu0 112
        %4549 = vperm.xlu0 %4548, %v992
        %v4550 = vpop.permute.xlu0 %4549
        %4553 = vst [vmem:[#allocation1] ss:$4 sm:$0xff] %v4547
        %v4554 = vld.sshfl [vmem:[#allocation1] sm:$0xff pattern:$0x73625140]
        %v4555 = vld.sshfl [vmem:[#allocation1 + $0x8] sm:$0xff pattern:$0x73625140]
        %v4556 = vld.sshfl [vmem:[#allocation1 + $0x10] sm:$0xff pattern:$0x73625140]
        %v4557 = vld.sshfl [vmem:[#allocation1 + $0x18] sm:$0xff pattern:$0x73625140]
        %4558 = vrot.lane.b32.xlu0 %v4554, 11
        %v4559 = vpop.permute.xlu0 %4558
        %4560 = vrot.lane.b32.xlu0 %v4555, 11
        %v4561 = vpop.permute.xlu0 %4560
        %4562 = vrot.lane.b32.xlu0 %v4556, 11
        %v4563 = vpop.permute.xlu0 %4562
        %4564 = vrot.lane.b32.xlu0 %v4557, 11
        %v4565 = vpop.permute.xlu0 %4564
        %vm4566 = vcmask 89088
        %v4567 = vsel %vm4566, %v4559, %v4561
        %v4568 = vsel %vm4566, %v4561, %v4563
        %v4569 = vsel %vm4566, %v4563, %v4565
        %v4573 = vmul.f32 %v4550, %v4567
        %v4574 = vmul.f32 %v4550, %v4568
        %v4575 = vmul.f32 %v4550, %v4569
        %v4576 = vadd.f32 %v4544, %v4573
        %v4577 = vadd.f32 %v4545, %v4574
        %v4578 = vadd.f32 %v4546, %v4575
        %v4579 = vld [vmem:[#allocation3 + $0x2] sm:$0xff]
        %4580 = vset.pattern.permute.xlu0 113
        %4581 = vperm.xlu0 %4580, %v992
        %v4582 = vpop.permute.xlu0 %4581
        %4585 = vst [vmem:[#allocation1] ss:$4 sm:$0xff] %v4579
        %v4586 = vld.sshfl [vmem:[#allocation1] sm:$0xff pattern:$0x73625140]
        %v4587 = vld.sshfl [vmem:[#allocation1 + $0x8] sm:$0xff pattern:$0x73625140]
        %v4588 = vld.sshfl [vmem:[#allocation1 + $0x10] sm:$0xff pattern:$0x73625140]
        %v4589 = vld.sshfl [vmem:[#allocation1 + $0x18] sm:$0xff pattern:$0x73625140]
        %4590 = vrot.lane.b32.xlu0 %v4586, 10
        %v4591 = vpop.permute.xlu0 %4590
        %4592 = vrot.lane.b32.xlu0 %v4587, 10
        %v4593 = vpop.permute.xlu0 %4592
        %4594 = vrot.lane.b32.xlu0 %v4588, 10
        %v4595 = vpop.permute.xlu0 %4594
        %4596 = vrot.lane.b32.xlu0 %v4589, 10
        %v4597 = vpop.permute.xlu0 %4596
        %vm4598 = vcmask 80896
        %v4599 = vsel %vm4598, %v4591, %v4593
        %v4600 = vsel %vm4598, %v4593, %v4595
        %v4601 = vsel %vm4598, %v4595, %v4597
        %v4605 = vmul.f32 %v4582, %v4599
        %v4606 = vmul.f32 %v4582, %v4600
        %v4607 = vmul.f32 %v4582, %v4601
        %v4608 = vadd.f32 %v4576, %v4605
        %v4609 = vadd.f32 %v4577, %v4606
        %v4610 = vadd.f32 %v4578, %v4607
        %v4611 = vld [vmem:[#allocation3 + $0x2] sm:$0xff]
        %4612 = vset.pattern.permute.xlu0 114
        %4613 = vperm.xlu0 %4612, %v992
        %v4614 = vpop.permute.xlu0 %4613
        %4617 = vst [vmem:[#allocation1] ss:$4 sm:$0xff] %v4611
        %v4618 = vld.sshfl [vmem:[#allocation1] sm:$0xff pattern:$0x73625140]
        %v4619 = vld.sshfl [vmem:[#allocation1 + $0x8] sm:$0xff pattern:$0x73625140]
        %v4620 = vld.sshfl [vmem:[#allocation1 + $0x10] sm:$0xff pattern:$0x73625140]
        %v4621 = vld.sshfl [vmem:[#allocation1 + $0x18] sm:$0xff pattern:$0x73625140]
        %4622 = vrot.lane.b32.xlu0 %v4618, 9
        %v4623 = vpop.permute.xlu0 %4622
        %4624 = vrot.lane.b32.xlu0 %v4619, 9
        %v4625 = vpop.permute.xlu0 %4624
        %4626 = vrot.lane.b32.xlu0 %v4620, 9
        %v4627 = vpop.permute.xlu0 %4626
        %4628 = vrot.lane.b32.xlu0 %v4621, 9
        %v4629 = vpop.permute.xlu0 %4628
        %vm4630 = vcmask 72704
        %v4631 = vsel %vm4630, %v4623, %v4625
        %v4632 = vsel %vm4630, %v4625, %v4627
        %v4633 = vsel %vm4630, %v4627, %v4629
        %v4637 = vmul.f32 %v4614, %v4631
        %v4638 = vmul.f32 %v4614, %v4632
        %v4639 = vmul.f32 %v4614, %v4633
        %v4640 = vadd.f32 %v4608, %v4637
        %v4641 = vadd.f32 %v4609, %v4638
        %v4642 = vadd.f32 %v4610, %v4639
        %v4643 = vld [vmem:[#allocation3 + $0x2] sm:$0xff]
        %4644 = vset.pattern.permute.xlu0 115
        %4645 = vperm.xlu0 %4644, %v992
        %v4646 = vpop.permute.xlu0 %4645
        %4649 = vst [vmem:[#allocation1] ss:$4 sm:$0xff] %v4643
        %v4650 = vld.sshfl [vmem:[#allocation1] sm:$0xff pattern:$0x73625140]
        %v4651 = vld.sshfl [vmem:[#allocation1 + $0x8] sm:$0xff pattern:$0x73625140]
        %v4652 = vld.sshfl [vmem:[#allocation1 + $0x10] sm:$0xff pattern:$0x73625140]
        %v4653 = vld.sshfl [vmem:[#allocation1 + $0x18] sm:$0xff pattern:$0x73625140]
        %4654 = vrot.lane.b32.xlu0 %v4650, 8
        %v4655 = vpop.permute.xlu0 %4654
        %4656 = vrot.lane.b32.xlu0 %v4651, 8
        %v4657 = vpop.permute.xlu0 %4656
        %4658 = vrot.lane.b32.xlu0 %v4652, 8
        %v4659 = vpop.permute.xlu0 %4658
        %4660 = vrot.lane.b32.xlu0 %v4653, 8
        %v4661 = vpop.permute.xlu0 %4660
        %vm4662 = vcmask 64512
        %v4663 = vsel %vm4662, %v4655, %v4657
        %v4664 = vsel %vm4662, %v4657, %v4659
        %v4665 = vsel %vm4662, %v4659, %v4661
        %v4669 = vmul.f32 %v4646, %v4663
        %v4670 = vmul.f32 %v4646, %v4664
        %v4671 = vmul.f32 %v4646, %v4665
        %v4672 = vadd.f32 %v4640, %v4669
        %v4673 = vadd.f32 %v4641, %v4670
        %v4674 = vadd.f32 %v4642, %v4671
        %v4675 = vld [vmem:[#allocation3 + $0x2] sm:$0xff]
        %4676 = vset.pattern.permute.xlu0 116
        %4677 = vperm.xlu0 %4676, %v992
        %v4678 = vpop.permute.xlu0 %4677
        %4681 = vst [vmem:[#allocation1] ss:$4 sm:$0xff] %v4675
        %v4682 = vld.sshfl [vmem:[#allocation1] sm:$0xff pattern:$0x73625140]
        %v4683 = vld.sshfl [vmem:[#allocation1 + $0x8] sm:$0xff pattern:$0x73625140]
        %v4684 = vld.sshfl [vmem:[#allocation1 + $0x10] sm:$0xff pattern:$0x73625140]
        %v4685 = vld.sshfl [vmem:[#allocation1 + $0x18] sm:$0xff pattern:$0x73625140]
        %4686 = vrot.lane.b32.xlu0 %v4682, 7
        %v4687 = vpop.permute.xlu0 %4686
        %4688 = vrot.lane.b32.xlu0 %v4683, 7
        %v4689 = vpop.permute.xlu0 %4688
        %4690 = vrot.lane.b32.xlu0 %v4684, 7
        %v4691 = vpop.permute.xlu0 %4690
        %4692 = vrot.lane.b32.xlu0 %v4685, 7
        %v4693 = vpop.permute.xlu0 %4692
        %vm4694 = vcmask 56320
        %v4695 = vsel %vm4694, %v4687, %v4689
        %v4696 = vsel %vm4694, %v4689, %v4691
        %v4697 = vsel %vm4694, %v4691, %v4693
        %v4701 = vmul.f32 %v4678, %v4695
        %v4702 = vmul.f32 %v4678, %v4696
        %v4703 = vmul.f32 %v4678, %v4697
        %v4704 = vadd.f32 %v4672, %v4701
        %v4705 = vadd.f32 %v4673, %v4702
        %v4706 = vadd.f32 %v4674, %v4703
        %v4707 = vld [vmem:[#allocation3 + $0x2] sm:$0xff]
        %4708 = vset.pattern.permute.xlu0 117
        %4709 = vperm.xlu0 %4708, %v992
        %v4710 = vpop.permute.xlu0 %4709
        %4713 = vst [vmem:[#allocation1] ss:$4 sm:$0xff] %v4707
        %v4714 = vld.sshfl [vmem:[#allocation1] sm:$0xff pattern:$0x73625140]
        %v4715 = vld.sshfl [vmem:[#allocation1 + $0x8] sm:$0xff pattern:$0x73625140]
        %v4716 = vld.sshfl [vmem:[#allocation1 + $0x10] sm:$0xff pattern:$0x73625140]
        %v4717 = vld.sshfl [vmem:[#allocation1 + $0x18] sm:$0xff pattern:$0x73625140]
        %4718 = vrot.lane.b32.xlu0 %v4714, 6
        %v4719 = vpop.permute.xlu0 %4718
        %4720 = vrot.lane.b32.xlu0 %v4715, 6
        %v4721 = vpop.permute.xlu0 %4720
        %4722 = vrot.lane.b32.xlu0 %v4716, 6
        %v4723 = vpop.permute.xlu0 %4722
        %4724 = vrot.lane.b32.xlu0 %v4717, 6
        %v4725 = vpop.permute.xlu0 %4724
        %vm4726 = vcmask 48128
        %v4727 = vsel %vm4726, %v4719, %v4721
        %v4728 = vsel %vm4726, %v4721, %v4723
        %v4729 = vsel %vm4726, %v4723, %v4725
        %v4733 = vmul.f32 %v4710, %v4727
        %v4734 = vmul.f32 %v4710, %v4728
        %v4735 = vmul.f32 %v4710, %v4729
        %v4736 = vadd.f32 %v4704, %v4733
        %v4737 = vadd.f32 %v4705, %v4734
        %v4738 = vadd.f32 %v4706, %v4735
        %v4739 = vld [vmem:[#allocation3 + $0x2] sm:$0xff]
        %4740 = vset.pattern.permute.xlu0 118
        %4741 = vperm.xlu0 %4740, %v992
        %v4742 = vpop.permute.xlu0 %4741
        %4745 = vst [vmem:[#allocation1] ss:$4 sm:$0xff] %v4739
        %v4746 = vld.sshfl [vmem:[#allocation1] sm:$0xff pattern:$0x73625140]
        %v4747 = vld.sshfl [vmem:[#allocation1 + $0x8] sm:$0xff pattern:$0x73625140]
        %v4748 = vld.sshfl [vmem:[#allocation1 + $0x10] sm:$0xff pattern:$0x73625140]
        %v4749 = vld.sshfl [vmem:[#allocation1 + $0x18] sm:$0xff pattern:$0x73625140]
        %4750 = vrot.lane.b32.xlu0 %v4746, 5
        %v4751 = vpop.permute.xlu0 %4750
        %4752 = vrot.lane.b32.xlu0 %v4747, 5
        %v4753 = vpop.permute.xlu0 %4752
        %4754 = vrot.lane.b32.xlu0 %v4748, 5
        %v4755 = vpop.permute.xlu0 %4754
        %4756 = vrot.lane.b32.xlu0 %v4749, 5
        %v4757 = vpop.permute.xlu0 %4756
        %v4758 = vsel %vm2773, %v4751, %v4753
        %v4759 = vsel %vm2773, %v4753, %v4755
        %v4760 = vsel %vm2773, %v4755, %v4757
        %v4764 = vmul.f32 %v4742, %v4758
        %v4765 = vmul.f32 %v4742, %v4759
        %v4766 = vmul.f32 %v4742, %v4760
        %v4767 = vadd.f32 %v4736, %v4764
        %v4768 = vadd.f32 %v4737, %v4765
        %v4769 = vadd.f32 %v4738, %v4766
        %v4770 = vld [vmem:[#allocation3 + $0x2] sm:$0xff]
        %4771 = vset.pattern.permute.xlu0 119
        %4772 = vperm.xlu0 %4771, %v992
        %v4773 = vpop.permute.xlu0 %4772
        %4776 = vst [vmem:[#allocation1] ss:$4 sm:$0xff] %v4770
        %v4777 = vld.sshfl [vmem:[#allocation1] sm:$0xff pattern:$0x73625140]
        %v4778 = vld.sshfl [vmem:[#allocation1 + $0x8] sm:$0xff pattern:$0x73625140]
        %v4779 = vld.sshfl [vmem:[#allocation1 + $0x10] sm:$0xff pattern:$0x73625140]
        %v4780 = vld.sshfl [vmem:[#allocation1 + $0x18] sm:$0xff pattern:$0x73625140]
        %4781 = vrot.lane.b32.xlu0 %v4777, 4
        %v4782 = vpop.permute.xlu0 %4781
        %4783 = vrot.lane.b32.xlu0 %v4778, 4
        %v4784 = vpop.permute.xlu0 %4783
        %4785 = vrot.lane.b32.xlu0 %v4779, 4
        %v4786 = vpop.permute.xlu0 %4785
        %4787 = vrot.lane.b32.xlu0 %v4780, 4
        %v4788 = vpop.permute.xlu0 %4787
        %v4789 = vsel %vm2805, %v4782, %v4784
        %v4790 = vsel %vm2805, %v4784, %v4786
        %v4791 = vsel %vm2805, %v4786, %v4788
        %v4795 = vmul.f32 %v4773, %v4789
        %v4796 = vmul.f32 %v4773, %v4790
        %v4797 = vmul.f32 %v4773, %v4791
        %v4798 = vadd.f32 %v4767, %v4795
        %v4799 = vadd.f32 %v4768, %v4796
        %v4800 = vadd.f32 %v4769, %v4797
        %v4801 = vld [vmem:[#allocation3 + $0x2] sm:$0xff]
        %4802 = vset.pattern.permute.xlu0 120
        %4803 = vperm.xlu0 %4802, %v992
        %v4804 = vpop.permute.xlu0 %4803
        %4807 = vst [vmem:[#allocation1] ss:$4 sm:$0xff] %v4801
        %v4808 = vld.sshfl [vmem:[#allocation1] sm:$0xff pattern:$0x73625140]
        %v4809 = vld.sshfl [vmem:[#allocation1 + $0x8] sm:$0xff pattern:$0x73625140]
        %v4810 = vld.sshfl [vmem:[#allocation1 + $0x10] sm:$0xff pattern:$0x73625140]
        %v4811 = vld.sshfl [vmem:[#allocation1 + $0x18] sm:$0xff pattern:$0x73625140]
        %4812 = vrot.lane.b32.xlu0 %v4808, 3
        %v4813 = vpop.permute.xlu0 %4812
        %4814 = vrot.lane.b32.xlu0 %v4809, 3
        %v4815 = vpop.permute.xlu0 %4814
        %4816 = vrot.lane.b32.xlu0 %v4810, 3
        %v4817 = vpop.permute.xlu0 %4816
        %4818 = vrot.lane.b32.xlu0 %v4811, 3
        %v4819 = vpop.permute.xlu0 %4818
        %v4820 = vsel %vm2837, %v4813, %v4815
        %v4821 = vsel %vm2837, %v4815, %v4817
        %v4822 = vsel %vm2837, %v4817, %v4819
        %v4826 = vmul.f32 %v4804, %v4820
        %v4827 = vmul.f32 %v4804, %v4821
        %v4828 = vmul.f32 %v4804, %v4822
        %v4829 = vadd.f32 %v4798, %v4826
        %v4830 = vadd.f32 %v4799, %v4827
        %v4831 = vadd.f32 %v4800, %v4828
        %v4835 = vrot.slane %v4829, 1
        %v4836 = vrot.slane %v4830, 1
        %v4837 = vrot.slane %v4831, 1
        %v4841 = vadd.f32 %v4829, %v4835
        %v4842 = vadd.f32 %v4830, %v4836
        %v4843 = vadd.f32 %v4831, %v4837
        %v4844 = vxor.u32 %v4841, 2147483648
        %v4845 = vxor.u32 %v4842, 2147483648
        %v4846 = vxor.u32 %v4843, 2147483648
        %v4847 = vmul.f32 %v4844, 1.442695
        %v4848 = vpow.pop %v4847
        %v4849 = vmul.f32 %v4845, 1.442695
        %v4850 = vpow.pop %v4849
        %v4851 = vmul.f32 %v4846, 1.442695
        %v4852 = vpow.pop %v4851
        %v4853 = vadd.f32 %v4848, 1.0
        %v4854 = vadd.f32 %v4850, 1.0
        %v4855 = vadd.f32 %v4852, 1.0
        %v4856 = vrcp.pop %v4853
        %v4857 = vmul.f32 %v4853, %v4856
        %v4858 = vsub.f32 1.0, %v4857
        %v4859 = vmul.f32 %v4856, %v4858
        %v4860 = vadd.f32 %v4856, %v4859
        %vm4861 = vweird.f32 %v4853
        %vm4862 = vweird.f32 %v4856
        %vm4863 = vmor %vm4861, %vm4862
        %v4864 = vsel %vm4863, %v4856, %v4860
        %v4865 = vand.u32 2147483647, %v4853
        %vm4866 = vcmp.eq.f32.partialorder %v4865, 8.507059e+37
        %v4867 = vand.u32 %v4853, 2147483648
        %v4868 = vor.u32 1.1754944e-38, %v4867
        %v4869 = vsel %vm4866, %v4868, %v4864
        %v4870 = vmul.f32 1.0, %v4869
        %v4871 = vrcp.pop %v4854
        %v4872 = vmul.f32 %v4854, %v4871
        %v4873 = vsub.f32 1.0, %v4872
        %v4874 = vmul.f32 %v4871, %v4873
        %v4875 = vadd.f32 %v4871, %v4874
        %vm4876 = vweird.f32 %v4854
        %vm4877 = vweird.f32 %v4871
        %vm4878 = vmor %vm4876, %vm4877
        %v4879 = vsel %vm4878, %v4871, %v4875
        %v4880 = vand.u32 2147483647, %v4854
        %vm4881 = vcmp.eq.f32.partialorder %v4880, 8.507059e+37
        %v4882 = vand.u32 %v4854, 2147483648
        %v4883 = vor.u32 1.1754944e-38, %v4882
        %v4884 = vsel %vm4881, %v4883, %v4879
        %v4885 = vmul.f32 1.0, %v4884
        %v4886 = vrcp.pop %v4855
        %v4887 = vmul.f32 %v4855, %v4886
        %v4888 = vsub.f32 1.0, %v4887
        %v4889 = vmul.f32 %v4886, %v4888
        %v4890 = vadd.f32 %v4886, %v4889
        %vm4891 = vweird.f32 %v4855
        %vm4892 = vweird.f32 %v4886
        %vm4893 = vmor %vm4891, %vm4892
        %v4894 = vsel %vm4893, %v4886, %v4890
        %v4895 = vand.u32 2147483647, %v4855
        %vm4896 = vcmp.eq.f32.partialorder %v4895, 8.507059e+37
        %v4897 = vand.u32 %v4855, 2147483648
        %v4898 = vor.u32 1.1754944e-38, %v4897
        %v4899 = vsel %vm4896, %v4898, %v4894
        %v4900 = vmul.f32 1.0, %v4899
        %v4901 = vperm.slane %v4870, 0
        %v4902 = vperm.slane %v4885, 0
        %v4903 = vperm.slane %v4900, 0
        %v4904 = vmul.f32 %v902, %v4901
        %v4905 = vmul.f32 %v903, %v4902
        %v4906 = vmul.f32 %v904, %v4903
        %v4907 = vmul.f32 %v905, %v4901
        %v4908 = vmul.f32 %v906, %v4902
        %v4909 = vmul.f32 %v907, %v4903
        %v4910 = vmul.f32 %v908, %v4901
        %v4911 = vmul.f32 %v909, %v4902
        %v4912 = vmul.f32 %v910, %v4903
        %v4913 = vmul.f32 %v911, %v4901
        %v4914 = vmul.f32 %v912, %v4902
        %v4915 = vmul.f32 %v913, %v4903
        %4916 = vst [vmem:[#allocation2 + $0x8] sm:$0xff] %v4904
        %4917 = vst [vmem:[#allocation2 + $0x10] sm:$0xff] %v4905
        %4918 = vst [vmem:[#allocation2 + $0x18] sm:$0xff] %v4906
        %4919 = vst [vmem:[#allocation2 + $0x30] sm:$0xff] %v4907
        %4920 = vst [vmem:[#allocation2 + $0x38] sm:$0xff] %v4908
        %4921 = vst [vmem:[#allocation2 + $0x40] sm:$0xff] %v4909
        %4922 = vst [vmem:[#allocation2 + $0x58] sm:$0xff] %v4910
        %4923 = vst [vmem:[#allocation2 + $0x60] sm:$0xff] %v4911
        %4924 = vst [vmem:[#allocation2 + $0x68] sm:$0xff] %v4912
        %4925 = vst [vmem:[#allocation2 + $0x80] sm:$0xff] %v4913
        %4926 = vst [vmem:[#allocation2 + $0x88] sm:$0xff] %v4914
        %4927 = vst [vmem:[#allocation2 + $0x90] sm:$0xff] %v4915
        %v4928 = vld [vmem:[%s7] sm:$0xff]
        %v4929 = vld [vmem:[%s7 + $0x8] sm:$0xff]
        %v4930 = vld [vmem:[%s7 + $0x10] sm:$0xff]
        %v4931 = vld [vmem:[%s7 + $0x18] sm:$0xff]
        %4933 = vset.pattern.permute.xlu0 0
        %4934 = vperm.xlu0 %4933, %v4928
        %v4935 = vpop.permute.xlu0 %4934
        %4938 = vset.pattern.permute.xlu0 0
        %4939 = vperm.xlu0 %4938, %v4929
        %v4940 = vpop.permute.xlu0 %4939
        %4943 = vset.pattern.permute.xlu0 0
        %4944 = vperm.xlu0 %4943, %v4930
        %v4945 = vpop.permute.xlu0 %4944
        %4948 = vset.pattern.permute.xlu0 0
        %4949 = vperm.xlu0 %4948, %v4931
        %v4950 = vpop.permute.xlu0 %4949
        %v4952 = vmul.f32 %v4904, %v4935
        %v4953 = vmul.f32 %v4905, %v4935
        %v4954 = vmul.f32 %v4906, %v4935
        %v4955 = vmul.f32 %v4907, %v4940
        %v4956 = vmul.f32 %v4908, %v4940
        %v4957 = vmul.f32 %v4909, %v4940
        %v4958 = vmul.f32 %v4910, %v4945
        %v4959 = vmul.f32 %v4911, %v4945
        %v4960 = vmul.f32 %v4912, %v4945
        %v4961 = vmul.f32 %v4913, %v4950
        %v4962 = vmul.f32 %v4914, %v4950
        %v4963 = vmul.f32 %v4915, %v4950
        %v4964 = vld [vmem:[%s8] sm:$0xff]
        %v4965 = vld [vmem:[%s8 + $0x8] sm:$0xff]
        %v4966 = vld [vmem:[%s8 + $0x10] sm:$0xff]
        %v4967 = vld [vmem:[%s8 + $0x18] sm:$0xff]
        %4969 = vset.pattern.permute.xlu0 0
        %4970 = vperm.xlu0 %4969, %v4964
        %v4971 = vpop.permute.xlu0 %4970
        %4974 = vset.pattern.permute.xlu0 0
        %4975 = vperm.xlu0 %4974, %v4965
        %v4976 = vpop.permute.xlu0 %4975
        %4979 = vset.pattern.permute.xlu0 0
        %4980 = vperm.xlu0 %4979, %v4966
        %v4981 = vpop.permute.xlu0 %4980
        %4984 = vset.pattern.permute.xlu0 0
        %4985 = vperm.xlu0 %4984, %v4967
        %v4986 = vpop.permute.xlu0 %4985
        %v4988 = vadd.f32 %v4952, %v4971
        %v4989 = vadd.f32 %v4953, %v4971
        %v4990 = vadd.f32 %v4954, %v4971
        %v4991 = vadd.f32 %v4955, %v4976
        %v4992 = vadd.f32 %v4956, %v4976
        %v4993 = vadd.f32 %v4957, %v4976
        %v4994 = vadd.f32 %v4958, %v4981
        %v4995 = vadd.f32 %v4959, %v4981
        %v4996 = vadd.f32 %v4960, %v4981
        %v4997 = vadd.f32 %v4961, %v4986
        %v4998 = vadd.f32 %v4962, %v4986
        %v4999 = vadd.f32 %v4963, %v4986
        %v5000 = vmax.f32 %v4988, 0.0
        %v5001 = vmax.f32 %v4989, 0.0
        %v5002 = vmax.f32 %v4990, 0.0
        %v5003 = vmax.f32 %v4991, 0.0
        %v5004 = vmax.f32 %v4992, 0.0
        %v5005 = vmax.f32 %v4993, 0.0
        %v5006 = vmax.f32 %v4994, 0.0
        %v5007 = vmax.f32 %v4995, 0.0
        %v5008 = vmax.f32 %v4996, 0.0
        %v5009 = vmax.f32 %v4997, 0.0
        %v5010 = vmax.f32 %v4998, 0.0
        %v5011 = vmax.f32 %v4999, 0.0
        %v5012 = vld [vmem:[%s13] sm:$0xf]
        %v5013 = vld [vmem:[%s13 + $0x4] sm:$0xf]
        %v5014 = vld [vmem:[%s13 + $0x8] sm:$0xf]
        %v5015 = vld [vmem:[%s13 + $0xc] sm:$0xf]
        %v5016 = vpack.c.bf16 %v5003, %v5000
        %v5017 = vpack.c.bf16 %v5004, %v5001
        %v5018 = vpack.c.bf16 %v5005, %v5002
        %v5019 = vpack.c.bf16 %v5009, %v5006
        %v5020 = vpack.c.bf16 %v5010, %v5007
        %v5021 = vpack.c.bf16 %v5011, %v5008
        %v5026 = vunpack.c.l.b16 %v5012
        %v5027 = vunpack.c.l.b16 %v5013
        %v5028 = vunpack.c.l.b16 %v5014
        %v5029 = vunpack.c.l.b16 %v5015
        %v5030 = vpack.c.b16 %v5027, %v5026
        %v5031 = vpack.c.b16 %v5029, %v5028
        %v5033 = vsel %vm687, %v5030, 0
        %v5036 = vsel %vm687, %v5031, 0
        %5038 = vmatpush.bf16.msra.mxu0 0
        %5039 = vmatpush.bf16.msra.mxu0 0
        %5040 = vmatpush.bf16.msra.mxu0 0
        %5041 = vmatpush.bf16.msra.mxu0 0
        %5042 = vmatpush.bf16.msra.mxu0 0
        %5043 = vmatpush.bf16.msra.mxu0 0
        %5044 = vmatpush.bf16.msra.mxu0 %v5019
        %5045 = vmatpush.bf16.msra.mxu0 %v5016
        %5046 = vmatmul.bf16.gmra.mxu0 %v5033
        %v5047 = vpop.f32.mrf.mxu0
        %v5048 = vadd.f32 0.0, %v5047
        %v5049 = vpop.f32.mrf.mxu0
        %v5050 = vadd.f32 0.0, %v5049
        %5051 = vmatmul.bf16.gmra.mxu0 %v5036
        %v5052 = vpop.f32.mrf.mxu0
        %v5053 = vadd.f32 0.0, %v5052
        %v5054 = vpop.f32.mrf.mxu0
        %v5055 = vadd.f32 0.0, %v5054
        %5056 = vdwg.mxu0
        %5057 = vmatpush.bf16.msra.mxu0 0
        %5058 = vmatpush.bf16.msra.mxu0 0
        %5059 = vmatpush.bf16.msra.mxu0 0
        %5060 = vmatpush.bf16.msra.mxu0 0
        %5061 = vmatpush.bf16.msra.mxu0 0
        %5062 = vmatpush.bf16.msra.mxu0 0
        %5063 = vmatpush.bf16.msra.mxu0 %v5020
        %5064 = vmatpush.bf16.msra.mxu0 %v5017
        %5065 = vmatmul.bf16.gmra.mxu0 %v5033
        %v5066 = vpop.f32.mrf.mxu0
        %v5067 = vadd.f32 0.0, %v5066
        %v5068 = vpop.f32.mrf.mxu0
        %v5069 = vadd.f32 0.0, %v5068
        %5070 = vmatmul.bf16.gmra.mxu0 %v5036
        %v5071 = vpop.f32.mrf.mxu0
        %v5072 = vadd.f32 0.0, %v5071
        %v5073 = vpop.f32.mrf.mxu0
        %v5074 = vadd.f32 0.0, %v5073
        %5075 = vdwg.mxu0
        %5076 = vmatpush.bf16.msra.mxu0 0
        %5077 = vmatpush.bf16.msra.mxu0 0
        %5078 = vmatpush.bf16.msra.mxu0 0
        %5079 = vmatpush.bf16.msra.mxu0 0
        %5080 = vmatpush.bf16.msra.mxu0 0
        %5081 = vmatpush.bf16.msra.mxu0 0
        %5082 = vmatpush.bf16.msra.mxu0 %v5021
        %5083 = vmatpush.bf16.msra.mxu0 %v5018
        %5084 = vmatmul.bf16.gmra.mxu0 %v5033
        %v5085 = vpop.f32.mrf.mxu0
        %v5086 = vadd.f32 0.0, %v5085
        %v5087 = vpop.f32.mrf.mxu0
        %v5088 = vadd.f32 0.0, %v5087
        %5089 = vmatmul.bf16.gmra.mxu0 %v5036
        %v5090 = vpop.f32.mrf.mxu0
        %v5091 = vadd.f32 0.0, %v5090
        %v5092 = vpop.f32.mrf.mxu0
        %v5093 = vadd.f32 0.0, %v5092
        %5094 = vdwg.mxu0
        %5095 = vst [vmem:[%s595] sm:$0xff] %v5048
        %5096 = vst [vmem:[%s595 + $0x8] sm:$0xff] %v5067
        %5097 = vst [vmem:[%s595 + $0x10] sm:$0xff] %v5086
        %5098 = vst [vmem:[%s595 + $0x18] sm:$0xff] %v5050
        %5099 = vst [vmem:[%s595 + $0x20] sm:$0xff] %v5069
        %5100 = vst [vmem:[%s595 + $0x28] sm:$0xff] %v5088
        %5101 = vst [vmem:[%s595 + $0x30] sm:$0xff] %v5053
        %5102 = vst [vmem:[%s595 + $0x38] sm:$0xff] %v5072
        %5103 = vst [vmem:[%s595 + $0x40] sm:$0xff] %v5091
        %5104 = vst [vmem:[%s595 + $0x48] sm:$0xff] %v5055
        %5105 = vst [vmem:[%s595 + $0x50] sm:$0xff] %v5074
        %5106 = vst [vmem:[%s595 + $0x58] sm:$0xff] %v5093
        %v5107 = vld [vmem:[%s9] sm:$0xff]
        %v5108 = vld [vmem:[%s9 + $0x8] sm:$0xff]
        %v5109 = vld [vmem:[%s9 + $0x10] sm:$0xff]
        %v5110 = vld [vmem:[%s9 + $0x18] sm:$0xff]
        %v5111 = vld [vmem:[%s11] sm:$0xff]
        %v5112 = vld [vmem:[%s11 + $0x8] sm:$0xff]
        %v5113 = vld [vmem:[%s11 + $0x10] sm:$0xff]
        %v5114 = vld [vmem:[%s11 + $0x18] sm:$0xff]
        %v5115 = vld [vmem:[#allocation2] sm:$0xff]
        %v5116 = vld [vmem:[#allocation2 + $0x8] sm:$0xff]
        %v5117 = vld [vmem:[#allocation2 + $0x10] sm:$0xff]
        %v5118 = vld [vmem:[#allocation2 + $0x18] sm:$0xff]
        %v5119 = vld [vmem:[#allocation2 + $0x28] sm:$0xff]
        %v5120 = vld [vmem:[#allocation2 + $0x30] sm:$0xff]
        %v5121 = vld [vmem:[#allocation2 + $0x38] sm:$0xff]
        %v5122 = vld [vmem:[#allocation2 + $0x40] sm:$0xff]
        %v5123 = vld [vmem:[#allocation2 + $0x50] sm:$0xff]
        %v5124 = vld [vmem:[#allocation2 + $0x58] sm:$0xff]
        %v5125 = vld [vmem:[#allocation2 + $0x60] sm:$0xff]
        %v5126 = vld [vmem:[#allocation2 + $0x68] sm:$0xff]
        %v5127 = vld [vmem:[#allocation2 + $0x78] sm:$0xff]
        %v5128 = vld [vmem:[#allocation2 + $0x80] sm:$0xff]
        %v5129 = vld [vmem:[#allocation2 + $0x88] sm:$0xff]
        %v5130 = vld [vmem:[#allocation2 + $0x90] sm:$0xff]
        %5132 = vset.pattern.permute.xlu0 0
        %5133 = vperm.xlu0 %5132, %v5111
        %v5134 = vpop.permute.xlu0 %5133
        %5137 = vset.pattern.permute.xlu0 0
        %5138 = vperm.xlu0 %5137, %v5112
        %v5139 = vpop.permute.xlu0 %5138
        %5142 = vset.pattern.permute.xlu0 0
        %5143 = vperm.xlu0 %5142, %v5113
        %v5144 = vpop.permute.xlu0 %5143
        %5147 = vset.pattern.permute.xlu0 0
        %5148 = vperm.xlu0 %5147, %v5114
        %v5149 = vpop.permute.xlu0 %5148
        %v5151 = vmul.f32 %v5134, %v5115
        %v5152 = vmul.f32 %v5134, %v5116
        %v5153 = vmul.f32 %v5134, %v5117
        %v5154 = vmul.f32 %v5134, %v5118
        %v5155 = vmul.f32 %v5139, %v5119
        %v5156 = vmul.f32 %v5139, %v5120
        %v5157 = vmul.f32 %v5139, %v5121
        %v5158 = vmul.f32 %v5139, %v5122
        %v5159 = vmul.f32 %v5144, %v5123
        %v5160 = vmul.f32 %v5144, %v5124
        %v5161 = vmul.f32 %v5144, %v5125
        %v5162 = vmul.f32 %v5144, %v5126
        %v5163 = vmul.f32 %v5149, %v5127
        %v5164 = vmul.f32 %v5149, %v5128
        %v5165 = vmul.f32 %v5149, %v5129
        %v5166 = vmul.f32 %v5149, %v5130
        %v5167 = vadd.f32 %v5151, 0.0
        %v5168 = vadd.f32 %v5152, 0.0
        %v5169 = vadd.f32 %v5153, 0.0
        %v5170 = vadd.f32 %v5154, 0.0
        %v5171 = vadd.f32 %v5155, 0.0
        %v5172 = vadd.f32 %v5156, 0.0
        %v5173 = vadd.f32 %v5157, 0.0
        %v5174 = vadd.f32 %v5158, 0.0
        %v5175 = vadd.f32 %v5159, 0.0
        %v5176 = vadd.f32 %v5160, 0.0
        %v5177 = vadd.f32 %v5161, 0.0
        %v5178 = vadd.f32 %v5162, 0.0
        %v5179 = vadd.f32 %v5163, 0.0
        %v5180 = vadd.f32 %v5164, 0.0
        %v5181 = vadd.f32 %v5165, 0.0
        %v5182 = vadd.f32 %v5166, 0.0
        %5183 = vset.pattern.permute.xlu0 1
        %5184 = vperm.xlu0 %5183, %v5111
        %v5185 = vpop.permute.xlu0 %5184
        %5187 = vset.pattern.permute.xlu0 1
        %5188 = vperm.xlu0 %5187, %v5112
        %v5189 = vpop.permute.xlu0 %5188
        %5191 = vset.pattern.permute.xlu0 1
        %5192 = vperm.xlu0 %5191, %v5113
        %v5193 = vpop.permute.xlu0 %5192
        %5195 = vset.pattern.permute.xlu0 1
        %5196 = vperm.xlu0 %5195, %v5114
        %v5197 = vpop.permute.xlu0 %5196
        %v5199 = vmul.f32 %v5185, %v5115
        %v5200 = vmul.f32 %v5185, %v5116
        %v5201 = vmul.f32 %v5185, %v5117
        %v5202 = vmul.f32 %v5185, %v5118
        %v5203 = vmul.f32 %v5189, %v5119
        %v5204 = vmul.f32 %v5189, %v5120
        %v5205 = vmul.f32 %v5189, %v5121
        %v5206 = vmul.f32 %v5189, %v5122
        %v5207 = vmul.f32 %v5193, %v5123
        %v5208 = vmul.f32 %v5193, %v5124
        %v5209 = vmul.f32 %v5193, %v5125
        %v5210 = vmul.f32 %v5193, %v5126
        %v5211 = vmul.f32 %v5197, %v5127
        %v5212 = vmul.f32 %v5197, %v5128
        %v5213 = vmul.f32 %v5197, %v5129
        %v5214 = vmul.f32 %v5197, %v5130
        %5231 = vrot.lane.b32.xlu0 %v5199, 127
        %v5232 = vpop.permute.xlu0 %5231
        %5233 = vrot.lane.b32.xlu0 %v5200, 127
        %v5234 = vpop.permute.xlu0 %5233
        %5235 = vrot.lane.b32.xlu0 %v5201, 127
        %v5236 = vpop.permute.xlu0 %5235
        %5237 = vrot.lane.b32.xlu0 %v5202, 127
        %v5238 = vpop.permute.xlu0 %5237
        %5239 = vrot.lane.b32.xlu0 %v5203, 127
        %v5240 = vpop.permute.xlu0 %5239
        %5241 = vrot.lane.b32.xlu0 %v5204, 127
        %v5242 = vpop.permute.xlu0 %5241
        %5243 = vrot.lane.b32.xlu0 %v5205, 127
        %v5244 = vpop.permute.xlu0 %5243
        %5245 = vrot.lane.b32.xlu0 %v5206, 127
        %v5246 = vpop.permute.xlu0 %5245
        %5247 = vrot.lane.b32.xlu0 %v5207, 127
        %v5248 = vpop.permute.xlu0 %5247
        %5249 = vrot.lane.b32.xlu0 %v5208, 127
        %v5250 = vpop.permute.xlu0 %5249
        %5251 = vrot.lane.b32.xlu0 %v5209, 127
        %v5252 = vpop.permute.xlu0 %5251
        %5253 = vrot.lane.b32.xlu0 %v5210, 127
        %v5254 = vpop.permute.xlu0 %5253
        %5255 = vrot.lane.b32.xlu0 %v5211, 127
        %v5256 = vpop.permute.xlu0 %5255
        %5257 = vrot.lane.b32.xlu0 %v5212, 127
        %v5258 = vpop.permute.xlu0 %5257
        %5259 = vrot.lane.b32.xlu0 %v5213, 127
        %v5260 = vpop.permute.xlu0 %5259
        %5261 = vrot.lane.b32.xlu0 %v5214, 127
        %v5262 = vpop.permute.xlu0 %5261
        %v5263 = vsel %vm2950, %v5232, %v5234
        %v5264 = vsel %vm2950, %v5234, %v5236
        %v5265 = vsel %vm2950, %v5236, %v5238
        %v5266 = vsel %vm2950, %v5240, %v5242
        %v5267 = vsel %vm2950, %v5242, %v5244
        %v5268 = vsel %vm2950, %v5244, %v5246
        %v5269 = vsel %vm2950, %v5248, %v5250
        %v5270 = vsel %vm2950, %v5250, %v5252
        %v5271 = vsel %vm2950, %v5252, %v5254
        %v5272 = vsel %vm2950, %v5256, %v5258
        %v5273 = vsel %vm2950, %v5258, %v5260
        %v5274 = vsel %vm2950, %v5260, %v5262
        %v5291 = vadd.f32 %v5167, %v5263
        %v5292 = vadd.f32 %v5168, %v5264
        %v5293 = vadd.f32 %v5169, %v5265
        %v5294 = vadd.f32 %v5170, %v5238
        %v5295 = vadd.f32 %v5171, %v5266
        %v5296 = vadd.f32 %v5172, %v5267
        %v5297 = vadd.f32 %v5173, %v5268
        %v5298 = vadd.f32 %v5174, %v5246
        %v5299 = vadd.f32 %v5175, %v5269
        %v5300 = vadd.f32 %v5176, %v5270
        %v5301 = vadd.f32 %v5177, %v5271
        %v5302 = vadd.f32 %v5178, %v5254
        %v5303 = vadd.f32 %v5179, %v5272
        %v5304 = vadd.f32 %v5180, %v5273
        %v5305 = vadd.f32 %v5181, %v5274
        %v5306 = vadd.f32 %v5182, %v5262
        %5307 = vset.pattern.permute.xlu0 2
        %5308 = vperm.xlu0 %5307, %v5111
        %v5309 = vpop.permute.xlu0 %5308
        %5311 = vset.pattern.permute.xlu0 2
        %5312 = vperm.xlu0 %5311, %v5112
        %v5313 = vpop.permute.xlu0 %5312
        %5315 = vset.pattern.permute.xlu0 2
        %5316 = vperm.xlu0 %5315, %v5113
        %v5317 = vpop.permute.xlu0 %5316
        %5319 = vset.pattern.permute.xlu0 2
        %5320 = vperm.xlu0 %5319, %v5114
        %v5321 = vpop.permute.xlu0 %5320
        %v5323 = vmul.f32 %v5309, %v5115
        %v5324 = vmul.f32 %v5309, %v5116
        %v5325 = vmul.f32 %v5309, %v5117
        %v5326 = vmul.f32 %v5309, %v5118
        %v5327 = vmul.f32 %v5313, %v5119
        %v5328 = vmul.f32 %v5313, %v5120
        %v5329 = vmul.f32 %v5313, %v5121
        %v5330 = vmul.f32 %v5313, %v5122
        %v5331 = vmul.f32 %v5317, %v5123
        %v5332 = vmul.f32 %v5317, %v5124
        %v5333 = vmul.f32 %v5317, %v5125
        %v5334 = vmul.f32 %v5317, %v5126
        %v5335 = vmul.f32 %v5321, %v5127
        %v5336 = vmul.f32 %v5321, %v5128
        %v5337 = vmul.f32 %v5321, %v5129
        %v5338 = vmul.f32 %v5321, %v5130
        %5355 = vrot.lane.b32.xlu0 %v5323, 126
        %v5356 = vpop.permute.xlu0 %5355
        %5357 = vrot.lane.b32.xlu0 %v5324, 126
        %v5358 = vpop.permute.xlu0 %5357
        %5359 = vrot.lane.b32.xlu0 %v5325, 126
        %v5360 = vpop.permute.xlu0 %5359
        %5361 = vrot.lane.b32.xlu0 %v5326, 126
        %v5362 = vpop.permute.xlu0 %5361
        %5363 = vrot.lane.b32.xlu0 %v5327, 126
        %v5364 = vpop.permute.xlu0 %5363
        %5365 = vrot.lane.b32.xlu0 %v5328, 126
        %v5366 = vpop.permute.xlu0 %5365
        %5367 = vrot.lane.b32.xlu0 %v5329, 126
        %v5368 = vpop.permute.xlu0 %5367
        %5369 = vrot.lane.b32.xlu0 %v5330, 126
        %v5370 = vpop.permute.xlu0 %5369
        %5371 = vrot.lane.b32.xlu0 %v5331, 126
        %v5372 = vpop.permute.xlu0 %5371
        %5373 = vrot.lane.b32.xlu0 %v5332, 126
        %v5374 = vpop.permute.xlu0 %5373
        %5375 = vrot.lane.b32.xlu0 %v5333, 126
        %v5376 = vpop.permute.xlu0 %5375
        %5377 = vrot.lane.b32.xlu0 %v5334, 126
        %v5378 = vpop.permute.xlu0 %5377
        %5379 = vrot.lane.b32.xlu0 %v5335, 126
        %v5380 = vpop.permute.xlu0 %5379
        %5381 = vrot.lane.b32.xlu0 %v5336, 126
        %v5382 = vpop.permute.xlu0 %5381
        %5383 = vrot.lane.b32.xlu0 %v5337, 126
        %v5384 = vpop.permute.xlu0 %5383
        %5385 = vrot.lane.b32.xlu0 %v5338, 126
        %v5386 = vpop.permute.xlu0 %5385
        %v5387 = vsel %vm2982, %v5356, %v5358
        %v5388 = vsel %vm2982, %v5358, %v5360
        %v5389 = vsel %vm2982, %v5360, %v5362
        %v5390 = vsel %vm2982, %v5364, %v5366
        %v5391 = vsel %vm2982, %v5366, %v5368
        %v5392 = vsel %vm2982, %v5368, %v5370
        %v5393 = vsel %vm2982, %v5372, %v5374
        %v5394 = vsel %vm2982, %v5374, %v5376
        %v5395 = vsel %vm2982, %v5376, %v5378
        %v5396 = vsel %vm2982, %v5380, %v5382
        %v5397 = vsel %vm2982, %v5382, %v5384
        %v5398 = vsel %vm2982, %v5384, %v5386
        %v5415 = vadd.f32 %v5291, %v5387
        %v5416 = vadd.f32 %v5292, %v5388
        %v5417 = vadd.f32 %v5293, %v5389
        %v5418 = vadd.f32 %v5294, %v5362
        %v5419 = vadd.f32 %v5295, %v5390
        %v5420 = vadd.f32 %v5296, %v5391
        %v5421 = vadd.f32 %v5297, %v5392
        %v5422 = vadd.f32 %v5298, %v5370
        %v5423 = vadd.f32 %v5299, %v5393
        %v5424 = vadd.f32 %v5300, %v5394
        %v5425 = vadd.f32 %v5301, %v5395
        %v5426 = vadd.f32 %v5302, %v5378
        %v5427 = vadd.f32 %v5303, %v5396
        %v5428 = vadd.f32 %v5304, %v5397
        %v5429 = vadd.f32 %v5305, %v5398
        %v5430 = vadd.f32 %v5306, %v5386
        %5431 = vset.pattern.permute.xlu0 3
        %5432 = vperm.xlu0 %5431, %v5111
        %v5433 = vpop.permute.xlu0 %5432
        %5435 = vset.pattern.permute.xlu0 3
        %5436 = vperm.xlu0 %5435, %v5112
        %v5437 = vpop.permute.xlu0 %5436
        %5439 = vset.pattern.permute.xlu0 3
        %5440 = vperm.xlu0 %5439, %v5113
        %v5441 = vpop.permute.xlu0 %5440
        %5443 = vset.pattern.permute.xlu0 3
        %5444 = vperm.xlu0 %5443, %v5114
        %v5445 = vpop.permute.xlu0 %5444
        %v5447 = vmul.f32 %v5433, %v5115
        %v5448 = vmul.f32 %v5433, %v5116
        %v5449 = vmul.f32 %v5433, %v5117
        %v5450 = vmul.f32 %v5433, %v5118
        %v5451 = vmul.f32 %v5437, %v5119
        %v5452 = vmul.f32 %v5437, %v5120
        %v5453 = vmul.f32 %v5437, %v5121
        %v5454 = vmul.f32 %v5437, %v5122
        %v5455 = vmul.f32 %v5441, %v5123
        %v5456 = vmul.f32 %v5441, %v5124
        %v5457 = vmul.f32 %v5441, %v5125
        %v5458 = vmul.f32 %v5441, %v5126
        %v5459 = vmul.f32 %v5445, %v5127
        %v5460 = vmul.f32 %v5445, %v5128
        %v5461 = vmul.f32 %v5445, %v5129
        %v5462 = vmul.f32 %v5445, %v5130
        %5479 = vrot.lane.b32.xlu0 %v5447, 125
        %v5480 = vpop.permute.xlu0 %5479
        %5481 = vrot.lane.b32.xlu0 %v5448, 125
        %v5482 = vpop.permute.xlu0 %5481
        %5483 = vrot.lane.b32.xlu0 %v5449, 125
        %v5484 = vpop.permute.xlu0 %5483
        %5485 = vrot.lane.b32.xlu0 %v5450, 125
        %v5486 = vpop.permute.xlu0 %5485
        %5487 = vrot.lane.b32.xlu0 %v5451, 125
        %v5488 = vpop.permute.xlu0 %5487
        %5489 = vrot.lane.b32.xlu0 %v5452, 125
        %v5490 = vpop.permute.xlu0 %5489
        %5491 = vrot.lane.b32.xlu0 %v5453, 125
        %v5492 = vpop.permute.xlu0 %5491
        %5493 = vrot.lane.b32.xlu0 %v5454, 125
        %v5494 = vpop.permute.xlu0 %5493
        %5495 = vrot.lane.b32.xlu0 %v5455, 125
        %v5496 = vpop.permute.xlu0 %5495
        %5497 = vrot.lane.b32.xlu0 %v5456, 125
        %v5498 = vpop.permute.xlu0 %5497
        %5499 = vrot.lane.b32.xlu0 %v5457, 125
        %v5500 = vpop.permute.xlu0 %5499
        %5501 = vrot.lane.b32.xlu0 %v5458, 125
        %v5502 = vpop.permute.xlu0 %5501
        %5503 = vrot.lane.b32.xlu0 %v5459, 125
        %v5504 = vpop.permute.xlu0 %5503
        %5505 = vrot.lane.b32.xlu0 %v5460, 125
        %v5506 = vpop.permute.xlu0 %5505
        %5507 = vrot.lane.b32.xlu0 %v5461, 125
        %v5508 = vpop.permute.xlu0 %5507
        %5509 = vrot.lane.b32.xlu0 %v5462, 125
        %v5510 = vpop.permute.xlu0 %5509
        %v5511 = vsel %vm1013, %v5480, %v5482
        %v5512 = vsel %vm1013, %v5482, %v5484
        %v5513 = vsel %vm1013, %v5484, %v5486
        %v5514 = vsel %vm1013, %v5488, %v5490
        %v5515 = vsel %vm1013, %v5490, %v5492
        %v5516 = vsel %vm1013, %v5492, %v5494
        %v5517 = vsel %vm1013, %v5496, %v5498
        %v5518 = vsel %vm1013, %v5498, %v5500
        %v5519 = vsel %vm1013, %v5500, %v5502
        %v5520 = vsel %vm1013, %v5504, %v5506
        %v5521 = vsel %vm1013, %v5506, %v5508
        %v5522 = vsel %vm1013, %v5508, %v5510
        %v5539 = vadd.f32 %v5415, %v5511
        %v5540 = vadd.f32 %v5416, %v5512
        %v5541 = vadd.f32 %v5417, %v5513
        %v5542 = vadd.f32 %v5418, %v5486
        %v5543 = vadd.f32 %v5419, %v5514
        %v5544 = vadd.f32 %v5420, %v5515
        %v5545 = vadd.f32 %v5421, %v5516
        %v5546 = vadd.f32 %v5422, %v5494
        %v5547 = vadd.f32 %v5423, %v5517
        %v5548 = vadd.f32 %v5424, %v5518
        %v5549 = vadd.f32 %v5425, %v5519
        %v5550 = vadd.f32 %v5426, %v5502
        %v5551 = vadd.f32 %v5427, %v5520
        %v5552 = vadd.f32 %v5428, %v5521
        %v5553 = vadd.f32 %v5429, %v5522
        %v5554 = vadd.f32 %v5430, %v5510
        %5555 = vset.pattern.permute.xlu0 4
        %5556 = vperm.xlu0 %5555, %v5111
        %v5557 = vpop.permute.xlu0 %5556
        %5559 = vset.pattern.permute.xlu0 4
        %5560 = vperm.xlu0 %5559, %v5112
        %v5561 = vpop.permute.xlu0 %5560
        %5563 = vset.pattern.permute.xlu0 4
        %5564 = vperm.xlu0 %5563, %v5113
        %v5565 = vpop.permute.xlu0 %5564
        %5567 = vset.pattern.permute.xlu0 4
        %5568 = vperm.xlu0 %5567, %v5114
        %v5569 = vpop.permute.xlu0 %5568
        %v5571 = vmul.f32 %v5557, %v5115
        %v5572 = vmul.f32 %v5557, %v5116
        %v5573 = vmul.f32 %v5557, %v5117
        %v5574 = vmul.f32 %v5557, %v5118
        %v5575 = vmul.f32 %v5561, %v5119
        %v5576 = vmul.f32 %v5561, %v5120
        %v5577 = vmul.f32 %v5561, %v5121
        %v5578 = vmul.f32 %v5561, %v5122
        %v5579 = vmul.f32 %v5565, %v5123
        %v5580 = vmul.f32 %v5565, %v5124
        %v5581 = vmul.f32 %v5565, %v5125
        %v5582 = vmul.f32 %v5565, %v5126
        %v5583 = vmul.f32 %v5569, %v5127
        %v5584 = vmul.f32 %v5569, %v5128
        %v5585 = vmul.f32 %v5569, %v5129
        %v5586 = vmul.f32 %v5569, %v5130
        %5603 = vrot.lane.b32.xlu0 %v5571, 124
        %v5604 = vpop.permute.xlu0 %5603
        %5605 = vrot.lane.b32.xlu0 %v5572, 124
        %v5606 = vpop.permute.xlu0 %5605
        %5607 = vrot.lane.b32.xlu0 %v5573, 124
        %v5608 = vpop.permute.xlu0 %5607
        %5609 = vrot.lane.b32.xlu0 %v5574, 124
        %v5610 = vpop.permute.xlu0 %5609
        %5611 = vrot.lane.b32.xlu0 %v5575, 124
        %v5612 = vpop.permute.xlu0 %5611
        %5613 = vrot.lane.b32.xlu0 %v5576, 124
        %v5614 = vpop.permute.xlu0 %5613
        %5615 = vrot.lane.b32.xlu0 %v5577, 124
        %v5616 = vpop.permute.xlu0 %5615
        %5617 = vrot.lane.b32.xlu0 %v5578, 124
        %v5618 = vpop.permute.xlu0 %5617
        %5619 = vrot.lane.b32.xlu0 %v5579, 124
        %v5620 = vpop.permute.xlu0 %5619
        %5621 = vrot.lane.b32.xlu0 %v5580, 124
        %v5622 = vpop.permute.xlu0 %5621
        %5623 = vrot.lane.b32.xlu0 %v5581, 124
        %v5624 = vpop.permute.xlu0 %5623
        %5625 = vrot.lane.b32.xlu0 %v5582, 124
        %v5626 = vpop.permute.xlu0 %5625
        %5627 = vrot.lane.b32.xlu0 %v5583, 124
        %v5628 = vpop.permute.xlu0 %5627
        %5629 = vrot.lane.b32.xlu0 %v5584, 124
        %v5630 = vpop.permute.xlu0 %5629
        %5631 = vrot.lane.b32.xlu0 %v5585, 124
        %v5632 = vpop.permute.xlu0 %5631
        %5633 = vrot.lane.b32.xlu0 %v5586, 124
        %v5634 = vpop.permute.xlu0 %5633
        %v5635 = vsel %vm1045, %v5604, %v5606
        %v5636 = vsel %vm1045, %v5606, %v5608
        %v5637 = vsel %vm1045, %v5608, %v5610
        %v5638 = vsel %vm1045, %v5612, %v5614
        %v5639 = vsel %vm1045, %v5614, %v5616
        %v5640 = vsel %vm1045, %v5616, %v5618
        %v5641 = vsel %vm1045, %v5620, %v5622
        %v5642 = vsel %vm1045, %v5622, %v5624
        %v5643 = vsel %vm1045, %v5624, %v5626
        %v5644 = vsel %vm1045, %v5628, %v5630
        %v5645 = vsel %vm1045, %v5630, %v5632
        %v5646 = vsel %vm1045, %v5632, %v5634
        %v5663 = vadd.f32 %v5539, %v5635
        %v5664 = vadd.f32 %v5540, %v5636
        %v5665 = vadd.f32 %v5541, %v5637
        %v5666 = vadd.f32 %v5542, %v5610
        %v5667 = vadd.f32 %v5543, %v5638
        %v5668 = vadd.f32 %v5544, %v5639
        %v5669 = vadd.f32 %v5545, %v5640
        %v5670 = vadd.f32 %v5546, %v5618
        %v5671 = vadd.f32 %v5547, %v5641
        %v5672 = vadd.f32 %v5548, %v5642
        %v5673 = vadd.f32 %v5549, %v5643
        %v5674 = vadd.f32 %v5550, %v5626
        %v5675 = vadd.f32 %v5551, %v5644
        %v5676 = vadd.f32 %v5552, %v5645
        %v5677 = vadd.f32 %v5553, %v5646
        %v5678 = vadd.f32 %v5554, %v5634
        %5679 = vset.pattern.permute.xlu0 5
        %5680 = vperm.xlu0 %5679, %v5111
        %v5681 = vpop.permute.xlu0 %5680
        %5683 = vset.pattern.permute.xlu0 5
        %5684 = vperm.xlu0 %5683, %v5112
        %v5685 = vpop.permute.xlu0 %5684
        %5687 = vset.pattern.permute.xlu0 5
        %5688 = vperm.xlu0 %5687, %v5113
        %v5689 = vpop.permute.xlu0 %5688
        %5691 = vset.pattern.permute.xlu0 5
        %5692 = vperm.xlu0 %5691, %v5114
        %v5693 = vpop.permute.xlu0 %5692
        %v5695 = vmul.f32 %v5681, %v5115
        %v5696 = vmul.f32 %v5681, %v5116
        %v5697 = vmul.f32 %v5681, %v5117
        %v5698 = vmul.f32 %v5681, %v5118
        %v5699 = vmul.f32 %v5685, %v5119
        %v5700 = vmul.f32 %v5685, %v5120
        %v5701 = vmul.f32 %v5685, %v5121
        %v5702 = vmul.f32 %v5685, %v5122
        %v5703 = vmul.f32 %v5689, %v5123
        %v5704 = vmul.f32 %v5689, %v5124
        %v5705 = vmul.f32 %v5689, %v5125
        %v5706 = vmul.f32 %v5689, %v5126
        %v5707 = vmul.f32 %v5693, %v5127
        %v5708 = vmul.f32 %v5693, %v5128
        %v5709 = vmul.f32 %v5693, %v5129
        %v5710 = vmul.f32 %v5693, %v5130
        %5727 = vrot.lane.b32.xlu0 %v5695, 104
        %v5728 = vpop.permute.xlu0 %5727
        %5729 = vrot.lane.b32.xlu0 %v5696, 104
        %v5730 = vpop.permute.xlu0 %5729
        %5731 = vrot.lane.b32.xlu0 %v5697, 104
        %v5732 = vpop.permute.xlu0 %5731
        %5733 = vrot.lane.b32.xlu0 %v5698, 104
        %v5734 = vpop.permute.xlu0 %5733
        %5735 = vrot.lane.b32.xlu0 %v5699, 104
        %v5736 = vpop.permute.xlu0 %5735
        %5737 = vrot.lane.b32.xlu0 %v5700, 104
        %v5738 = vpop.permute.xlu0 %5737
        %5739 = vrot.lane.b32.xlu0 %v5701, 104
        %v5740 = vpop.permute.xlu0 %5739
        %5741 = vrot.lane.b32.xlu0 %v5702, 104
        %v5742 = vpop.permute.xlu0 %5741
        %5743 = vrot.lane.b32.xlu0 %v5703, 104
        %v5744 = vpop.permute.xlu0 %5743
        %5745 = vrot.lane.b32.xlu0 %v5704, 104
        %v5746 = vpop.permute.xlu0 %5745
        %5747 = vrot.lane.b32.xlu0 %v5705, 104
        %v5748 = vpop.permute.xlu0 %5747
        %5749 = vrot.lane.b32.xlu0 %v5706, 104
        %v5750 = vpop.permute.xlu0 %5749
        %5751 = vrot.lane.b32.xlu0 %v5707, 104
        %v5752 = vpop.permute.xlu0 %5751
        %5753 = vrot.lane.b32.xlu0 %v5708, 104
        %v5754 = vpop.permute.xlu0 %5753
        %5755 = vrot.lane.b32.xlu0 %v5709, 104
        %v5756 = vpop.permute.xlu0 %5755
        %5757 = vrot.lane.b32.xlu0 %v5710, 104
        %v5758 = vpop.permute.xlu0 %5757
        %v5759 = vsel %vm3267, %v5728, %v5730
        %v5760 = vsel %vm3267, %v5730, %v5732
        %v5761 = vsel %vm3267, %v5732, %v5734
        %v5762 = vsel %vm3267, %v5736, %v5738
        %v5763 = vsel %vm3267, %v5738, %v5740
        %v5764 = vsel %vm3267, %v5740, %v5742
        %v5765 = vsel %vm3267, %v5744, %v5746
        %v5766 = vsel %vm3267, %v5746, %v5748
        %v5767 = vsel %vm3267, %v5748, %v5750
        %v5768 = vsel %vm3267, %v5752, %v5754
        %v5769 = vsel %vm3267, %v5754, %v5756
        %v5770 = vsel %vm3267, %v5756, %v5758
        %v5787 = vadd.f32 %v5663, %v5759
        %v5788 = vadd.f32 %v5664, %v5760
        %v5789 = vadd.f32 %v5665, %v5761
        %v5790 = vadd.f32 %v5666, %v5734
        %v5791 = vadd.f32 %v5667, %v5762
        %v5792 = vadd.f32 %v5668, %v5763
        %v5793 = vadd.f32 %v5669, %v5764
        %v5794 = vadd.f32 %v5670, %v5742
        %v5795 = vadd.f32 %v5671, %v5765
        %v5796 = vadd.f32 %v5672, %v5766
        %v5797 = vadd.f32 %v5673, %v5767
        %v5798 = vadd.f32 %v5674, %v5750
        %v5799 = vadd.f32 %v5675, %v5768
        %v5800 = vadd.f32 %v5676, %v5769
        %v5801 = vadd.f32 %v5677, %v5770
        %v5802 = vadd.f32 %v5678, %v5758
        %5803 = vset.pattern.permute.xlu0 6
        %5804 = vperm.xlu0 %5803, %v5111
        %v5805 = vpop.permute.xlu0 %5804
        %5807 = vset.pattern.permute.xlu0 6
        %5808 = vperm.xlu0 %5807, %v5112
        %v5809 = vpop.permute.xlu0 %5808
        %5811 = vset.pattern.permute.xlu0 6
        %5812 = vperm.xlu0 %5811, %v5113
        %v5813 = vpop.permute.xlu0 %5812
        %5815 = vset.pattern.permute.xlu0 6
        %5816 = vperm.xlu0 %5815, %v5114
        %v5817 = vpop.permute.xlu0 %5816
        %v5819 = vmul.f32 %v5805, %v5115
        %v5820 = vmul.f32 %v5805, %v5116
        %v5821 = vmul.f32 %v5805, %v5117
        %v5822 = vmul.f32 %v5805, %v5118
        %v5823 = vmul.f32 %v5809, %v5119
        %v5824 = vmul.f32 %v5809, %v5120
        %v5825 = vmul.f32 %v5809, %v5121
        %v5826 = vmul.f32 %v5809, %v5122
        %v5827 = vmul.f32 %v5813, %v5123
        %v5828 = vmul.f32 %v5813, %v5124
        %v5829 = vmul.f32 %v5813, %v5125
        %v5830 = vmul.f32 %v5813, %v5126
        %v5831 = vmul.f32 %v5817, %v5127
        %v5832 = vmul.f32 %v5817, %v5128
        %v5833 = vmul.f32 %v5817, %v5129
        %v5834 = vmul.f32 %v5817, %v5130
        %5851 = vrot.lane.b32.xlu0 %v5819, 103
        %v5852 = vpop.permute.xlu0 %5851
        %5853 = vrot.lane.b32.xlu0 %v5820, 103
        %v5854 = vpop.permute.xlu0 %5853
        %5855 = vrot.lane.b32.xlu0 %v5821, 103
        %v5856 = vpop.permute.xlu0 %5855
        %5857 = vrot.lane.b32.xlu0 %v5822, 103
        %v5858 = vpop.permute.xlu0 %5857
        %5859 = vrot.lane.b32.xlu0 %v5823, 103
        %v5860 = vpop.permute.xlu0 %5859
        %5861 = vrot.lane.b32.xlu0 %v5824, 103
        %v5862 = vpop.permute.xlu0 %5861
        %5863 = vrot.lane.b32.xlu0 %v5825, 103
        %v5864 = vpop.permute.xlu0 %5863
        %5865 = vrot.lane.b32.xlu0 %v5826, 103
        %v5866 = vpop.permute.xlu0 %5865
        %5867 = vrot.lane.b32.xlu0 %v5827, 103
        %v5868 = vpop.permute.xlu0 %5867
        %5869 = vrot.lane.b32.xlu0 %v5828, 103
        %v5870 = vpop.permute.xlu0 %5869
        %5871 = vrot.lane.b32.xlu0 %v5829, 103
        %v5872 = vpop.permute.xlu0 %5871
        %5873 = vrot.lane.b32.xlu0 %v5830, 103
        %v5874 = vpop.permute.xlu0 %5873
        %5875 = vrot.lane.b32.xlu0 %v5831, 103
        %v5876 = vpop.permute.xlu0 %5875
        %5877 = vrot.lane.b32.xlu0 %v5832, 103
        %v5878 = vpop.permute.xlu0 %5877
        %5879 = vrot.lane.b32.xlu0 %v5833, 103
        %v5880 = vpop.permute.xlu0 %5879
        %5881 = vrot.lane.b32.xlu0 %v5834, 103
        %v5882 = vpop.permute.xlu0 %5881
        %v5883 = vsel %vm3299, %v5852, %v5854
        %v5884 = vsel %vm3299, %v5854, %v5856
        %v5885 = vsel %vm3299, %v5856, %v5858
        %v5886 = vsel %vm3299, %v5860, %v5862
        %v5887 = vsel %vm3299, %v5862, %v5864
        %v5888 = vsel %vm3299, %v5864, %v5866
        %v5889 = vsel %vm3299, %v5868, %v5870
        %v5890 = vsel %vm3299, %v5870, %v5872
        %v5891 = vsel %vm3299, %v5872, %v5874
        %v5892 = vsel %vm3299, %v5876, %v5878
        %v5893 = vsel %vm3299, %v5878, %v5880
        %v5894 = vsel %vm3299, %v5880, %v5882
        %v5911 = vadd.f32 %v5787, %v5883
        %v5912 = vadd.f32 %v5788, %v5884
        %v5913 = vadd.f32 %v5789, %v5885
        %v5914 = vadd.f32 %v5790, %v5858
        %v5915 = vadd.f32 %v5791, %v5886
        %v5916 = vadd.f32 %v5792, %v5887
        %v5917 = vadd.f32 %v5793, %v5888
        %v5918 = vadd.f32 %v5794, %v5866
        %v5919 = vadd.f32 %v5795, %v5889
        %v5920 = vadd.f32 %v5796, %v5890
        %v5921 = vadd.f32 %v5797, %v5891
        %v5922 = vadd.f32 %v5798, %v5874
        %v5923 = vadd.f32 %v5799, %v5892
        %v5924 = vadd.f32 %v5800, %v5893
        %v5925 = vadd.f32 %v5801, %v5894
        %v5926 = vadd.f32 %v5802, %v5882
        %5928 = vset.pattern.permute.xlu0 0
        %5929 = vperm.xlu0 %5928, %v5107
        %v5930 = vpop.permute.xlu0 %5929
        %5933 = vset.pattern.permute.xlu0 0
        %5934 = vperm.xlu0 %5933, %v5108
        %v5935 = vpop.permute.xlu0 %5934
        %5938 = vset.pattern.permute.xlu0 0
        %5939 = vperm.xlu0 %5938, %v5109
        %v5940 = vpop.permute.xlu0 %5939
        %5943 = vset.pattern.permute.xlu0 0
        %5944 = vperm.xlu0 %5943, %v5110
        %v5945 = vpop.permute.xlu0 %5944
        %v5947 = vmul.f32 %v5930, %v5115
        %v5948 = vmul.f32 %v5930, %v5116
        %v5949 = vmul.f32 %v5930, %v5117
        %v5950 = vmul.f32 %v5930, %v5118
        %v5951 = vmul.f32 %v5935, %v5119
        %v5952 = vmul.f32 %v5935, %v5120
        %v5953 = vmul.f32 %v5935, %v5121
        %v5954 = vmul.f32 %v5935, %v5122
        %v5955 = vmul.f32 %v5940, %v5123
        %v5956 = vmul.f32 %v5940, %v5124
        %v5957 = vmul.f32 %v5940, %v5125
        %v5958 = vmul.f32 %v5940, %v5126
        %v5959 = vmul.f32 %v5945, %v5127
        %v5960 = vmul.f32 %v5945, %v5128
        %v5961 = vmul.f32 %v5945, %v5129
        %v5962 = vmul.f32 %v5945, %v5130
        %v5963 = vadd.f32 %v5947, 0.0
        %v5964 = vadd.f32 %v5948, 0.0
        %v5965 = vadd.f32 %v5949, 0.0
        %v5966 = vadd.f32 %v5950, 0.0
        %v5967 = vadd.f32 %v5951, 0.0
        %v5968 = vadd.f32 %v5952, 0.0
        %v5969 = vadd.f32 %v5953, 0.0
        %v5970 = vadd.f32 %v5954, 0.0
        %v5971 = vadd.f32 %v5955, 0.0
        %v5972 = vadd.f32 %v5956, 0.0
        %v5973 = vadd.f32 %v5957, 0.0
        %v5974 = vadd.f32 %v5958, 0.0
        %v5975 = vadd.f32 %v5959, 0.0
        %v5976 = vadd.f32 %v5960, 0.0
        %v5977 = vadd.f32 %v5961, 0.0
        %v5978 = vadd.f32 %v5962, 0.0
        %5979 = vset.pattern.permute.xlu0 7
        %5980 = vperm.xlu0 %5979, %v5111
        %v5981 = vpop.permute.xlu0 %5980
        %5983 = vset.pattern.permute.xlu0 7
        %5984 = vperm.xlu0 %5983, %v5112
        %v5985 = vpop.permute.xlu0 %5984
        %5987 = vset.pattern.permute.xlu0 7
        %5988 = vperm.xlu0 %5987, %v5113
        %v5989 = vpop.permute.xlu0 %5988
        %5991 = vset.pattern.permute.xlu0 7
        %5992 = vperm.xlu0 %5991, %v5114
        %v5993 = vpop.permute.xlu0 %5992
        %v5995 = vmul.f32 %v5981, %v5115
        %v5996 = vmul.f32 %v5981, %v5116
        %v5997 = vmul.f32 %v5981, %v5117
        %v5998 = vmul.f32 %v5981, %v5118
        %v5999 = vmul.f32 %v5985, %v5119
        %v6000 = vmul.f32 %v5985, %v5120
        %v6001 = vmul.f32 %v5985, %v5121
        %v6002 = vmul.f32 %v5985, %v5122
        %v6003 = vmul.f32 %v5989, %v5123
        %v6004 = vmul.f32 %v5989, %v5124
        %v6005 = vmul.f32 %v5989, %v5125
        %v6006 = vmul.f32 %v5989, %v5126
        %v6007 = vmul.f32 %v5993, %v5127
        %v6008 = vmul.f32 %v5993, %v5128
        %v6009 = vmul.f32 %v5993, %v5129
        %v6010 = vmul.f32 %v5993, %v5130
        %6027 = vrot.lane.b32.xlu0 %v5995, 102
        %v6028 = vpop.permute.xlu0 %6027
        %6029 = vrot.lane.b32.xlu0 %v5996, 102
        %v6030 = vpop.permute.xlu0 %6029
        %6031 = vrot.lane.b32.xlu0 %v5997, 102
        %v6032 = vpop.permute.xlu0 %6031
        %6033 = vrot.lane.b32.xlu0 %v5998, 102
        %v6034 = vpop.permute.xlu0 %6033
        %6035 = vrot.lane.b32.xlu0 %v5999, 102
        %v6036 = vpop.permute.xlu0 %6035
        %6037 = vrot.lane.b32.xlu0 %v6000, 102
        %v6038 = vpop.permute.xlu0 %6037
        %6039 = vrot.lane.b32.xlu0 %v6001, 102
        %v6040 = vpop.permute.xlu0 %6039
        %6041 = vrot.lane.b32.xlu0 %v6002, 102
        %v6042 = vpop.permute.xlu0 %6041
        %6043 = vrot.lane.b32.xlu0 %v6003, 102
        %v6044 = vpop.permute.xlu0 %6043
        %6045 = vrot.lane.b32.xlu0 %v6004, 102
        %v6046 = vpop.permute.xlu0 %6045
        %6047 = vrot.lane.b32.xlu0 %v6005, 102
        %v6048 = vpop.permute.xlu0 %6047
        %6049 = vrot.lane.b32.xlu0 %v6006, 102
        %v6050 = vpop.permute.xlu0 %6049
        %6051 = vrot.lane.b32.xlu0 %v6007, 102
        %v6052 = vpop.permute.xlu0 %6051
        %6053 = vrot.lane.b32.xlu0 %v6008, 102
        %v6054 = vpop.permute.xlu0 %6053
        %6055 = vrot.lane.b32.xlu0 %v6009, 102
        %v6056 = vpop.permute.xlu0 %6055
        %6057 = vrot.lane.b32.xlu0 %v6010, 102
        %v6058 = vpop.permute.xlu0 %6057
        %v6059 = vsel %vm3331, %v6028, %v6030
        %v6060 = vsel %vm3331, %v6030, %v6032
        %v6061 = vsel %vm3331, %v6032, %v6034
        %v6062 = vsel %vm3331, %v6036, %v6038
        %v6063 = vsel %vm3331, %v6038, %v6040
        %v6064 = vsel %vm3331, %v6040, %v6042
        %v6065 = vsel %vm3331, %v6044, %v6046
        %v6066 = vsel %vm3331, %v6046, %v6048
        %v6067 = vsel %vm3331, %v6048, %v6050
        %v6068 = vsel %vm3331, %v6052, %v6054
        %v6069 = vsel %vm3331, %v6054, %v6056
        %v6070 = vsel %vm3331, %v6056, %v6058
        %v6087 = vadd.f32 %v5911, %v6059
        %v6088 = vadd.f32 %v5912, %v6060
        %v6089 = vadd.f32 %v5913, %v6061
        %v6090 = vadd.f32 %v5914, %v6034
        %v6091 = vadd.f32 %v5915, %v6062
        %v6092 = vadd.f32 %v5916, %v6063
        %v6093 = vadd.f32 %v5917, %v6064
        %v6094 = vadd.f32 %v5918, %v6042
        %v6095 = vadd.f32 %v5919, %v6065
        %v6096 = vadd.f32 %v5920, %v6066
        %v6097 = vadd.f32 %v5921, %v6067
        %v6098 = vadd.f32 %v5922, %v6050
        %v6099 = vadd.f32 %v5923, %v6068
        %v6100 = vadd.f32 %v5924, %v6069
        %v6101 = vadd.f32 %v5925, %v6070
        %v6102 = vadd.f32 %v5926, %v6058
        %6103 = vset.pattern.permute.xlu0 1
        %6104 = vperm.xlu0 %6103, %v5107
        %v6105 = vpop.permute.xlu0 %6104
        %6107 = vset.pattern.permute.xlu0 1
        %6108 = vperm.xlu0 %6107, %v5108
        %v6109 = vpop.permute.xlu0 %6108
        %6111 = vset.pattern.permute.xlu0 1
        %6112 = vperm.xlu0 %6111, %v5109
        %v6113 = vpop.permute.xlu0 %6112
        %6115 = vset.pattern.permute.xlu0 1
        %6116 = vperm.xlu0 %6115, %v5110
        %v6117 = vpop.permute.xlu0 %6116
        %v6119 = vmul.f32 %v6105, %v5115
        %v6120 = vmul.f32 %v6105, %v5116
        %v6121 = vmul.f32 %v6105, %v5117
        %v6122 = vmul.f32 %v6105, %v5118
        %v6123 = vmul.f32 %v6109, %v5119
        %v6124 = vmul.f32 %v6109, %v5120
        %v6125 = vmul.f32 %v6109, %v5121
        %v6126 = vmul.f32 %v6109, %v5122
        %v6127 = vmul.f32 %v6113, %v5123
        %v6128 = vmul.f32 %v6113, %v5124
        %v6129 = vmul.f32 %v6113, %v5125
        %v6130 = vmul.f32 %v6113, %v5126
        %v6131 = vmul.f32 %v6117, %v5127
        %v6132 = vmul.f32 %v6117, %v5128
        %v6133 = vmul.f32 %v6117, %v5129
        %v6134 = vmul.f32 %v6117, %v5130
        %6151 = vrot.lane.b32.xlu0 %v6119, 127
        %v6152 = vpop.permute.xlu0 %6151
        %6153 = vrot.lane.b32.xlu0 %v6120, 127
        %v6154 = vpop.permute.xlu0 %6153
        %6155 = vrot.lane.b32.xlu0 %v6121, 127
        %v6156 = vpop.permute.xlu0 %6155
        %6157 = vrot.lane.b32.xlu0 %v6122, 127
        %v6158 = vpop.permute.xlu0 %6157
        %6159 = vrot.lane.b32.xlu0 %v6123, 127
        %v6160 = vpop.permute.xlu0 %6159
        %6161 = vrot.lane.b32.xlu0 %v6124, 127
        %v6162 = vpop.permute.xlu0 %6161
        %6163 = vrot.lane.b32.xlu0 %v6125, 127
        %v6164 = vpop.permute.xlu0 %6163
        %6165 = vrot.lane.b32.xlu0 %v6126, 127
        %v6166 = vpop.permute.xlu0 %6165
        %6167 = vrot.lane.b32.xlu0 %v6127, 127
        %v6168 = vpop.permute.xlu0 %6167
        %6169 = vrot.lane.b32.xlu0 %v6128, 127
        %v6170 = vpop.permute.xlu0 %6169
        %6171 = vrot.lane.b32.xlu0 %v6129, 127
        %v6172 = vpop.permute.xlu0 %6171
        %6173 = vrot.lane.b32.xlu0 %v6130, 127
        %v6174 = vpop.permute.xlu0 %6173
        %6175 = vrot.lane.b32.xlu0 %v6131, 127
        %v6176 = vpop.permute.xlu0 %6175
        %6177 = vrot.lane.b32.xlu0 %v6132, 127
        %v6178 = vpop.permute.xlu0 %6177
        %6179 = vrot.lane.b32.xlu0 %v6133, 127
        %v6180 = vpop.permute.xlu0 %6179
        %6181 = vrot.lane.b32.xlu0 %v6134, 127
        %v6182 = vpop.permute.xlu0 %6181
        %v6183 = vsel %vm2950, %v6152, %v6154
        %v6184 = vsel %vm2950, %v6154, %v6156
        %v6185 = vsel %vm2950, %v6156, %v6158
        %v6186 = vsel %vm2950, %v6160, %v6162
        %v6187 = vsel %vm2950, %v6162, %v6164
        %v6188 = vsel %vm2950, %v6164, %v6166
        %v6189 = vsel %vm2950, %v6168, %v6170
        %v6190 = vsel %vm2950, %v6170, %v6172
        %v6191 = vsel %vm2950, %v6172, %v6174
        %v6192 = vsel %vm2950, %v6176, %v6178
        %v6193 = vsel %vm2950, %v6178, %v6180
        %v6194 = vsel %vm2950, %v6180, %v6182
        %v6211 = vadd.f32 %v5963, %v6183
        %v6212 = vadd.f32 %v5964, %v6184
        %v6213 = vadd.f32 %v5965, %v6185
        %v6214 = vadd.f32 %v5966, %v6158
        %v6215 = vadd.f32 %v5967, %v6186
        %v6216 = vadd.f32 %v5968, %v6187
        %v6217 = vadd.f32 %v5969, %v6188
        %v6218 = vadd.f32 %v5970, %v6166
        %v6219 = vadd.f32 %v5971, %v6189
        %v6220 = vadd.f32 %v5972, %v6190
        %v6221 = vadd.f32 %v5973, %v6191
        %v6222 = vadd.f32 %v5974, %v6174
        %v6223 = vadd.f32 %v5975, %v6192
        %v6224 = vadd.f32 %v5976, %v6193
        %v6225 = vadd.f32 %v5977, %v6194
        %v6226 = vadd.f32 %v5978, %v6182
        %6227 = vset.pattern.permute.xlu0 8
        %6228 = vperm.xlu0 %6227, %v5111
        %v6229 = vpop.permute.xlu0 %6228
        %6231 = vset.pattern.permute.xlu0 8
        %6232 = vperm.xlu0 %6231, %v5112
        %v6233 = vpop.permute.xlu0 %6232
        %6235 = vset.pattern.permute.xlu0 8
        %6236 = vperm.xlu0 %6235, %v5113
        %v6237 = vpop.permute.xlu0 %6236
        %6239 = vset.pattern.permute.xlu0 8
        %6240 = vperm.xlu0 %6239, %v5114
        %v6241 = vpop.permute.xlu0 %6240
        %v6243 = vmul.f32 %v6229, %v5115
        %v6244 = vmul.f32 %v6229, %v5116
        %v6245 = vmul.f32 %v6229, %v5117
        %v6246 = vmul.f32 %v6229, %v5118
        %v6247 = vmul.f32 %v6233, %v5119
        %v6248 = vmul.f32 %v6233, %v5120
        %v6249 = vmul.f32 %v6233, %v5121
        %v6250 = vmul.f32 %v6233, %v5122
        %v6251 = vmul.f32 %v6237, %v5123
        %v6252 = vmul.f32 %v6237, %v5124
        %v6253 = vmul.f32 %v6237, %v5125
        %v6254 = vmul.f32 %v6237, %v5126
        %v6255 = vmul.f32 %v6241, %v5127
        %v6256 = vmul.f32 %v6241, %v5128
        %v6257 = vmul.f32 %v6241, %v5129
        %v6258 = vmul.f32 %v6241, %v5130
        %6275 = vrot.lane.b32.xlu0 %v6243, 101
        %v6276 = vpop.permute.xlu0 %6275
        %6277 = vrot.lane.b32.xlu0 %v6244, 101
        %v6278 = vpop.permute.xlu0 %6277
        %6279 = vrot.lane.b32.xlu0 %v6245, 101
        %v6280 = vpop.permute.xlu0 %6279
        %6281 = vrot.lane.b32.xlu0 %v6246, 101
        %v6282 = vpop.permute.xlu0 %6281
        %6283 = vrot.lane.b32.xlu0 %v6247, 101
        %v6284 = vpop.permute.xlu0 %6283
        %6285 = vrot.lane.b32.xlu0 %v6248, 101
        %v6286 = vpop.permute.xlu0 %6285
        %6287 = vrot.lane.b32.xlu0 %v6249, 101
        %v6288 = vpop.permute.xlu0 %6287
        %6289 = vrot.lane.b32.xlu0 %v6250, 101
        %v6290 = vpop.permute.xlu0 %6289
        %6291 = vrot.lane.b32.xlu0 %v6251, 101
        %v6292 = vpop.permute.xlu0 %6291
        %6293 = vrot.lane.b32.xlu0 %v6252, 101
        %v6294 = vpop.permute.xlu0 %6293
        %6295 = vrot.lane.b32.xlu0 %v6253, 101
        %v6296 = vpop.permute.xlu0 %6295
        %6297 = vrot.lane.b32.xlu0 %v6254, 101
        %v6298 = vpop.permute.xlu0 %6297
        %6299 = vrot.lane.b32.xlu0 %v6255, 101
        %v6300 = vpop.permute.xlu0 %6299
        %6301 = vrot.lane.b32.xlu0 %v6256, 101
        %v6302 = vpop.permute.xlu0 %6301
        %6303 = vrot.lane.b32.xlu0 %v6257, 101
        %v6304 = vpop.permute.xlu0 %6303
        %6305 = vrot.lane.b32.xlu0 %v6258, 101
        %v6306 = vpop.permute.xlu0 %6305
        %v6307 = vsel %vm1365, %v6276, %v6278
        %v6308 = vsel %vm1365, %v6278, %v6280
        %v6309 = vsel %vm1365, %v6280, %v6282
        %v6310 = vsel %vm1365, %v6284, %v6286
        %v6311 = vsel %vm1365, %v6286, %v6288
        %v6312 = vsel %vm1365, %v6288, %v6290
        %v6313 = vsel %vm1365, %v6292, %v6294
        %v6314 = vsel %vm1365, %v6294, %v6296
        %v6315 = vsel %vm1365, %v6296, %v6298
        %v6316 = vsel %vm1365, %v6300, %v6302
        %v6317 = vsel %vm1365, %v6302, %v6304
        %v6318 = vsel %vm1365, %v6304, %v6306
        %v6335 = vadd.f32 %v6087, %v6307
        %v6336 = vadd.f32 %v6088, %v6308
        %v6337 = vadd.f32 %v6089, %v6309
        %v6338 = vadd.f32 %v6090, %v6282
        %v6339 = vadd.f32 %v6091, %v6310
        %v6340 = vadd.f32 %v6092, %v6311
        %v6341 = vadd.f32 %v6093, %v6312
        %v6342 = vadd.f32 %v6094, %v6290
        %v6343 = vadd.f32 %v6095, %v6313
        %v6344 = vadd.f32 %v6096, %v6314
        %v6345 = vadd.f32 %v6097, %v6315
        %v6346 = vadd.f32 %v6098, %v6298
        %v6347 = vadd.f32 %v6099, %v6316
        %v6348 = vadd.f32 %v6100, %v6317
        %v6349 = vadd.f32 %v6101, %v6318
        %v6350 = vadd.f32 %v6102, %v6306
        %6351 = vset.pattern.permute.xlu0 2
        %6352 = vperm.xlu0 %6351, %v5107
        %v6353 = vpop.permute.xlu0 %6352
        %6355 = vset.pattern.permute.xlu0 2
        %6356 = vperm.xlu0 %6355, %v5108
        %v6357 = vpop.permute.xlu0 %6356
        %6359 = vset.pattern.permute.xlu0 2
        %6360 = vperm.xlu0 %6359, %v5109
        %v6361 = vpop.permute.xlu0 %6360
        %6363 = vset.pattern.permute.xlu0 2
        %6364 = vperm.xlu0 %6363, %v5110
        %v6365 = vpop.permute.xlu0 %6364
        %v6367 = vmul.f32 %v6353, %v5115
        %v6368 = vmul.f32 %v6353, %v5116
        %v6369 = vmul.f32 %v6353, %v5117
        %v6370 = vmul.f32 %v6353, %v5118
        %v6371 = vmul.f32 %v6357, %v5119
        %v6372 = vmul.f32 %v6357, %v5120
        %v6373 = vmul.f32 %v6357, %v5121
        %v6374 = vmul.f32 %v6357, %v5122
        %v6375 = vmul.f32 %v6361, %v5123
        %v6376 = vmul.f32 %v6361, %v5124
        %v6377 = vmul.f32 %v6361, %v5125
        %v6378 = vmul.f32 %v6361, %v5126
        %v6379 = vmul.f32 %v6365, %v5127
        %v6380 = vmul.f32 %v6365, %v5128
        %v6381 = vmul.f32 %v6365, %v5129
        %v6382 = vmul.f32 %v6365, %v5130
        %6399 = vrot.lane.b32.xlu0 %v6367, 126
        %v6400 = vpop.permute.xlu0 %6399
        %6401 = vrot.lane.b32.xlu0 %v6368, 126
        %v6402 = vpop.permute.xlu0 %6401
        %6403 = vrot.lane.b32.xlu0 %v6369, 126
        %v6404 = vpop.permute.xlu0 %6403
        %6405 = vrot.lane.b32.xlu0 %v6370, 126
        %v6406 = vpop.permute.xlu0 %6405
        %6407 = vrot.lane.b32.xlu0 %v6371, 126
        %v6408 = vpop.permute.xlu0 %6407
        %6409 = vrot.lane.b32.xlu0 %v6372, 126
        %v6410 = vpop.permute.xlu0 %6409
        %6411 = vrot.lane.b32.xlu0 %v6373, 126
        %v6412 = vpop.permute.xlu0 %6411
        %6413 = vrot.lane.b32.xlu0 %v6374, 126
        %v6414 = vpop.permute.xlu0 %6413
        %6415 = vrot.lane.b32.xlu0 %v6375, 126
        %v6416 = vpop.permute.xlu0 %6415
        %6417 = vrot.lane.b32.xlu0 %v6376, 126
        %v6418 = vpop.permute.xlu0 %6417
        %6419 = vrot.lane.b32.xlu0 %v6377, 126
        %v6420 = vpop.permute.xlu0 %6419
        %6421 = vrot.lane.b32.xlu0 %v6378, 126
        %v6422 = vpop.permute.xlu0 %6421
        %6423 = vrot.lane.b32.xlu0 %v6379, 126
        %v6424 = vpop.permute.xlu0 %6423
        %6425 = vrot.lane.b32.xlu0 %v6380, 126
        %v6426 = vpop.permute.xlu0 %6425
        %6427 = vrot.lane.b32.xlu0 %v6381, 126
        %v6428 = vpop.permute.xlu0 %6427
        %6429 = vrot.lane.b32.xlu0 %v6382, 126
        %v6430 = vpop.permute.xlu0 %6429
        %v6431 = vsel %vm2982, %v6400, %v6402
        %v6432 = vsel %vm2982, %v6402, %v6404
        %v6433 = vsel %vm2982, %v6404, %v6406
        %v6434 = vsel %vm2982, %v6408, %v6410
        %v6435 = vsel %vm2982, %v6410, %v6412
        %v6436 = vsel %vm2982, %v6412, %v6414
        %v6437 = vsel %vm2982, %v6416, %v6418
        %v6438 = vsel %vm2982, %v6418, %v6420
        %v6439 = vsel %vm2982, %v6420, %v6422
        %v6440 = vsel %vm2982, %v6424, %v6426
        %v6441 = vsel %vm2982, %v6426, %v6428
        %v6442 = vsel %vm2982, %v6428, %v6430
        %v6459 = vadd.f32 %v6211, %v6431
        %v6460 = vadd.f32 %v6212, %v6432
        %v6461 = vadd.f32 %v6213, %v6433
        %v6462 = vadd.f32 %v6214, %v6406
        %v6463 = vadd.f32 %v6215, %v6434
        %v6464 = vadd.f32 %v6216, %v6435
        %v6465 = vadd.f32 %v6217, %v6436
        %v6466 = vadd.f32 %v6218, %v6414
        %v6467 = vadd.f32 %v6219, %v6437
        %v6468 = vadd.f32 %v6220, %v6438
        %v6469 = vadd.f32 %v6221, %v6439
        %v6470 = vadd.f32 %v6222, %v6422
        %v6471 = vadd.f32 %v6223, %v6440
        %v6472 = vadd.f32 %v6224, %v6441
        %v6473 = vadd.f32 %v6225, %v6442
        %v6474 = vadd.f32 %v6226, %v6430
        %6475 = vset.pattern.permute.xlu0 9
        %6476 = vperm.xlu0 %6475, %v5111
        %v6477 = vpop.permute.xlu0 %6476
        %6479 = vset.pattern.permute.xlu0 9
        %6480 = vperm.xlu0 %6479, %v5112
        %v6481 = vpop.permute.xlu0 %6480
        %6483 = vset.pattern.permute.xlu0 9
        %6484 = vperm.xlu0 %6483, %v5113
        %v6485 = vpop.permute.xlu0 %6484
        %6487 = vset.pattern.permute.xlu0 9
        %6488 = vperm.xlu0 %6487, %v5114
        %v6489 = vpop.permute.xlu0 %6488
        %v6491 = vmul.f32 %v6477, %v5115
        %v6492 = vmul.f32 %v6477, %v5116
        %v6493 = vmul.f32 %v6477, %v5117
        %v6494 = vmul.f32 %v6477, %v5118
        %v6495 = vmul.f32 %v6481, %v5119
        %v6496 = vmul.f32 %v6481, %v5120
        %v6497 = vmul.f32 %v6481, %v5121
        %v6498 = vmul.f32 %v6481, %v5122
        %v6499 = vmul.f32 %v6485, %v5123
        %v6500 = vmul.f32 %v6485, %v5124
        %v6501 = vmul.f32 %v6485, %v5125
        %v6502 = vmul.f32 %v6485, %v5126
        %v6503 = vmul.f32 %v6489, %v5127
        %v6504 = vmul.f32 %v6489, %v5128
        %v6505 = vmul.f32 %v6489, %v5129
        %v6506 = vmul.f32 %v6489, %v5130
        %6523 = vrot.lane.b32.xlu0 %v6491, 100
        %v6524 = vpop.permute.xlu0 %6523
        %6525 = vrot.lane.b32.xlu0 %v6492, 100
        %v6526 = vpop.permute.xlu0 %6525
        %6527 = vrot.lane.b32.xlu0 %v6493, 100
        %v6528 = vpop.permute.xlu0 %6527
        %6529 = vrot.lane.b32.xlu0 %v6494, 100
        %v6530 = vpop.permute.xlu0 %6529
        %6531 = vrot.lane.b32.xlu0 %v6495, 100
        %v6532 = vpop.permute.xlu0 %6531
        %6533 = vrot.lane.b32.xlu0 %v6496, 100
        %v6534 = vpop.permute.xlu0 %6533
        %6535 = vrot.lane.b32.xlu0 %v6497, 100
        %v6536 = vpop.permute.xlu0 %6535
        %6537 = vrot.lane.b32.xlu0 %v6498, 100
        %v6538 = vpop.permute.xlu0 %6537
        %6539 = vrot.lane.b32.xlu0 %v6499, 100
        %v6540 = vpop.permute.xlu0 %6539
        %6541 = vrot.lane.b32.xlu0 %v6500, 100
        %v6542 = vpop.permute.xlu0 %6541
        %6543 = vrot.lane.b32.xlu0 %v6501, 100
        %v6544 = vpop.permute.xlu0 %6543
        %6545 = vrot.lane.b32.xlu0 %v6502, 100
        %v6546 = vpop.permute.xlu0 %6545
        %6547 = vrot.lane.b32.xlu0 %v6503, 100
        %v6548 = vpop.permute.xlu0 %6547
        %6549 = vrot.lane.b32.xlu0 %v6504, 100
        %v6550 = vpop.permute.xlu0 %6549
        %6551 = vrot.lane.b32.xlu0 %v6505, 100
        %v6552 = vpop.permute.xlu0 %6551
        %6553 = vrot.lane.b32.xlu0 %v6506, 100
        %v6554 = vpop.permute.xlu0 %6553
        %v6555 = vsel %vm1397, %v6524, %v6526
        %v6556 = vsel %vm1397, %v6526, %v6528
        %v6557 = vsel %vm1397, %v6528, %v6530
        %v6558 = vsel %vm1397, %v6532, %v6534
        %v6559 = vsel %vm1397, %v6534, %v6536
        %v6560 = vsel %vm1397, %v6536, %v6538
        %v6561 = vsel %vm1397, %v6540, %v6542
        %v6562 = vsel %vm1397, %v6542, %v6544
        %v6563 = vsel %vm1397, %v6544, %v6546
        %v6564 = vsel %vm1397, %v6548, %v6550
        %v6565 = vsel %vm1397, %v6550, %v6552
        %v6566 = vsel %vm1397, %v6552, %v6554
        %v6583 = vadd.f32 %v6335, %v6555
        %v6584 = vadd.f32 %v6336, %v6556
        %v6585 = vadd.f32 %v6337, %v6557
        %v6586 = vadd.f32 %v6338, %v6530
        %v6587 = vadd.f32 %v6339, %v6558
        %v6588 = vadd.f32 %v6340, %v6559
        %v6589 = vadd.f32 %v6341, %v6560
        %v6590 = vadd.f32 %v6342, %v6538
        %v6591 = vadd.f32 %v6343, %v6561
        %v6592 = vadd.f32 %v6344, %v6562
        %v6593 = vadd.f32 %v6345, %v6563
        %v6594 = vadd.f32 %v6346, %v6546
        %v6595 = vadd.f32 %v6347, %v6564
        %v6596 = vadd.f32 %v6348, %v6565
        %v6597 = vadd.f32 %v6349, %v6566
        %v6598 = vadd.f32 %v6350, %v6554
        %6599 = vset.pattern.permute.xlu0 10
        %6600 = vperm.xlu0 %6599, %v5111
        %v6601 = vpop.permute.xlu0 %6600
        %6603 = vset.pattern.permute.xlu0 10
        %6604 = vperm.xlu0 %6603, %v5112
        %v6605 = vpop.permute.xlu0 %6604
        %6607 = vset.pattern.permute.xlu0 10
        %6608 = vperm.xlu0 %6607, %v5113
        %v6609 = vpop.permute.xlu0 %6608
        %6611 = vset.pattern.permute.xlu0 10
        %6612 = vperm.xlu0 %6611, %v5114
        %v6613 = vpop.permute.xlu0 %6612
        %v6615 = vmul.f32 %v6601, %v5115
        %v6616 = vmul.f32 %v6601, %v5116
        %v6617 = vmul.f32 %v6601, %v5117
        %v6618 = vmul.f32 %v6601, %v5118
        %v6619 = vmul.f32 %v6605, %v5119
        %v6620 = vmul.f32 %v6605, %v5120
        %v6621 = vmul.f32 %v6605, %v5121
        %v6622 = vmul.f32 %v6605, %v5122
        %v6623 = vmul.f32 %v6609, %v5123
        %v6624 = vmul.f32 %v6609, %v5124
        %v6625 = vmul.f32 %v6609, %v5125
        %v6626 = vmul.f32 %v6609, %v5126
        %v6627 = vmul.f32 %v6613, %v5127
        %v6628 = vmul.f32 %v6613, %v5128
        %v6629 = vmul.f32 %v6613, %v5129
        %v6630 = vmul.f32 %v6613, %v5130
        %6647 = vrot.lane.b32.xlu0 %v6615, 80
        %v6648 = vpop.permute.xlu0 %6647
        %6649 = vrot.lane.b32.xlu0 %v6616, 80
        %v6650 = vpop.permute.xlu0 %6649
        %6651 = vrot.lane.b32.xlu0 %v6617, 80
        %v6652 = vpop.permute.xlu0 %6651
        %6653 = vrot.lane.b32.xlu0 %v6618, 80
        %v6654 = vpop.permute.xlu0 %6653
        %6655 = vrot.lane.b32.xlu0 %v6619, 80
        %v6656 = vpop.permute.xlu0 %6655
        %6657 = vrot.lane.b32.xlu0 %v6620, 80
        %v6658 = vpop.permute.xlu0 %6657
        %6659 = vrot.lane.b32.xlu0 %v6621, 80
        %v6660 = vpop.permute.xlu0 %6659
        %6661 = vrot.lane.b32.xlu0 %v6622, 80
        %v6662 = vpop.permute.xlu0 %6661
        %6663 = vrot.lane.b32.xlu0 %v6623, 80
        %v6664 = vpop.permute.xlu0 %6663
        %6665 = vrot.lane.b32.xlu0 %v6624, 80
        %v6666 = vpop.permute.xlu0 %6665
        %6667 = vrot.lane.b32.xlu0 %v6625, 80
        %v6668 = vpop.permute.xlu0 %6667
        %6669 = vrot.lane.b32.xlu0 %v6626, 80
        %v6670 = vpop.permute.xlu0 %6669
        %6671 = vrot.lane.b32.xlu0 %v6627, 80
        %v6672 = vpop.permute.xlu0 %6671
        %6673 = vrot.lane.b32.xlu0 %v6628, 80
        %v6674 = vpop.permute.xlu0 %6673
        %6675 = vrot.lane.b32.xlu0 %v6629, 80
        %v6676 = vpop.permute.xlu0 %6675
        %6677 = vrot.lane.b32.xlu0 %v6630, 80
        %v6678 = vpop.permute.xlu0 %6677
        %v6679 = vsel %vm3616, %v6648, %v6650
        %v6680 = vsel %vm3616, %v6650, %v6652
        %v6681 = vsel %vm3616, %v6652, %v6654
        %v6682 = vsel %vm3616, %v6656, %v6658
        %v6683 = vsel %vm3616, %v6658, %v6660
        %v6684 = vsel %vm3616, %v6660, %v6662
        %v6685 = vsel %vm3616, %v6664, %v6666
        %v6686 = vsel %vm3616, %v6666, %v6668
        %v6687 = vsel %vm3616, %v6668, %v6670
        %v6688 = vsel %vm3616, %v6672, %v6674
        %v6689 = vsel %vm3616, %v6674, %v6676
        %v6690 = vsel %vm3616, %v6676, %v6678
        %v6707 = vadd.f32 %v6583, %v6679
        %v6708 = vadd.f32 %v6584, %v6680
        %v6709 = vadd.f32 %v6585, %v6681
        %v6710 = vadd.f32 %v6586, %v6654
        %v6711 = vadd.f32 %v6587, %v6682
        %v6712 = vadd.f32 %v6588, %v6683
        %v6713 = vadd.f32 %v6589, %v6684
        %v6714 = vadd.f32 %v6590, %v6662
        %v6715 = vadd.f32 %v6591, %v6685
        %v6716 = vadd.f32 %v6592, %v6686
        %v6717 = vadd.f32 %v6593, %v6687
        %v6718 = vadd.f32 %v6594, %v6670
        %v6719 = vadd.f32 %v6595, %v6688
        %v6720 = vadd.f32 %v6596, %v6689
        %v6721 = vadd.f32 %v6597, %v6690
        %v6722 = vadd.f32 %v6598, %v6678
        %6723 = vset.pattern.permute.xlu0 11
        %6724 = vperm.xlu0 %6723, %v5111
        %v6725 = vpop.permute.xlu0 %6724
        %6727 = vset.pattern.permute.xlu0 11
        %6728 = vperm.xlu0 %6727, %v5112
        %v6729 = vpop.permute.xlu0 %6728
        %6731 = vset.pattern.permute.xlu0 11
        %6732 = vperm.xlu0 %6731, %v5113
        %v6733 = vpop.permute.xlu0 %6732
        %6735 = vset.pattern.permute.xlu0 11
        %6736 = vperm.xlu0 %6735, %v5114
        %v6737 = vpop.permute.xlu0 %6736
        %v6739 = vmul.f32 %v6725, %v5115
        %v6740 = vmul.f32 %v6725, %v5116
        %v6741 = vmul.f32 %v6725, %v5117
        %v6742 = vmul.f32 %v6725, %v5118
        %v6743 = vmul.f32 %v6729, %v5119
        %v6744 = vmul.f32 %v6729, %v5120
        %v6745 = vmul.f32 %v6729, %v5121
        %v6746 = vmul.f32 %v6729, %v5122
        %v6747 = vmul.f32 %v6733, %v5123
        %v6748 = vmul.f32 %v6733, %v5124
        %v6749 = vmul.f32 %v6733, %v5125
        %v6750 = vmul.f32 %v6733, %v5126
        %v6751 = vmul.f32 %v6737, %v5127
        %v6752 = vmul.f32 %v6737, %v5128
        %v6753 = vmul.f32 %v6737, %v5129
        %v6754 = vmul.f32 %v6737, %v5130
        %6771 = vrot.lane.b32.xlu0 %v6739, 79
        %v6772 = vpop.permute.xlu0 %6771
        %6773 = vrot.lane.b32.xlu0 %v6740, 79
        %v6774 = vpop.permute.xlu0 %6773
        %6775 = vrot.lane.b32.xlu0 %v6741, 79
        %v6776 = vpop.permute.xlu0 %6775
        %6777 = vrot.lane.b32.xlu0 %v6742, 79
        %v6778 = vpop.permute.xlu0 %6777
        %6779 = vrot.lane.b32.xlu0 %v6743, 79
        %v6780 = vpop.permute.xlu0 %6779
        %6781 = vrot.lane.b32.xlu0 %v6744, 79
        %v6782 = vpop.permute.xlu0 %6781
        %6783 = vrot.lane.b32.xlu0 %v6745, 79
        %v6784 = vpop.permute.xlu0 %6783
        %6785 = vrot.lane.b32.xlu0 %v6746, 79
        %v6786 = vpop.permute.xlu0 %6785
        %6787 = vrot.lane.b32.xlu0 %v6747, 79
        %v6788 = vpop.permute.xlu0 %6787
        %6789 = vrot.lane.b32.xlu0 %v6748, 79
        %v6790 = vpop.permute.xlu0 %6789
        %6791 = vrot.lane.b32.xlu0 %v6749, 79
        %v6792 = vpop.permute.xlu0 %6791
        %6793 = vrot.lane.b32.xlu0 %v6750, 79
        %v6794 = vpop.permute.xlu0 %6793
        %6795 = vrot.lane.b32.xlu0 %v6751, 79
        %v6796 = vpop.permute.xlu0 %6795
        %6797 = vrot.lane.b32.xlu0 %v6752, 79
        %v6798 = vpop.permute.xlu0 %6797
        %6799 = vrot.lane.b32.xlu0 %v6753, 79
        %v6800 = vpop.permute.xlu0 %6799
        %6801 = vrot.lane.b32.xlu0 %v6754, 79
        %v6802 = vpop.permute.xlu0 %6801
        %v6803 = vsel %vm3648, %v6772, %v6774
        %v6804 = vsel %vm3648, %v6774, %v6776
        %v6805 = vsel %vm3648, %v6776, %v6778
        %v6806 = vsel %vm3648, %v6780, %v6782
        %v6807 = vsel %vm3648, %v6782, %v6784
        %v6808 = vsel %vm3648, %v6784, %v6786
        %v6809 = vsel %vm3648, %v6788, %v6790
        %v6810 = vsel %vm3648, %v6790, %v6792
        %v6811 = vsel %vm3648, %v6792, %v6794
        %v6812 = vsel %vm3648, %v6796, %v6798
        %v6813 = vsel %vm3648, %v6798, %v6800
        %v6814 = vsel %vm3648, %v6800, %v6802
        %v6831 = vadd.f32 %v6707, %v6803
        %v6832 = vadd.f32 %v6708, %v6804
        %v6833 = vadd.f32 %v6709, %v6805
        %v6834 = vadd.f32 %v6710, %v6778
        %v6835 = vadd.f32 %v6711, %v6806
        %v6836 = vadd.f32 %v6712, %v6807
        %v6837 = vadd.f32 %v6713, %v6808
        %v6838 = vadd.f32 %v6714, %v6786
        %v6839 = vadd.f32 %v6715, %v6809
        %v6840 = vadd.f32 %v6716, %v6810
        %v6841 = vadd.f32 %v6717, %v6811
        %v6842 = vadd.f32 %v6718, %v6794
        %v6843 = vadd.f32 %v6719, %v6812
        %v6844 = vadd.f32 %v6720, %v6813
        %v6845 = vadd.f32 %v6721, %v6814
        %v6846 = vadd.f32 %v6722, %v6802
        %6847 = vset.pattern.permute.xlu0 3
        %6848 = vperm.xlu0 %6847, %v5107
        %v6849 = vpop.permute.xlu0 %6848
        %6851 = vset.pattern.permute.xlu0 3
        %6852 = vperm.xlu0 %6851, %v5108
        %v6853 = vpop.permute.xlu0 %6852
        %6855 = vset.pattern.permute.xlu0 3
        %6856 = vperm.xlu0 %6855, %v5109
        %v6857 = vpop.permute.xlu0 %6856
        %6859 = vset.pattern.permute.xlu0 3
        %6860 = vperm.xlu0 %6859, %v5110
        %v6861 = vpop.permute.xlu0 %6860
        %v6863 = vmul.f32 %v6849, %v5115
        %v6864 = vmul.f32 %v6849, %v5116
        %v6865 = vmul.f32 %v6849, %v5117
        %v6866 = vmul.f32 %v6849, %v5118
        %v6867 = vmul.f32 %v6853, %v5119
        %v6868 = vmul.f32 %v6853, %v5120
        %v6869 = vmul.f32 %v6853, %v5121
        %v6870 = vmul.f32 %v6853, %v5122
        %v6871 = vmul.f32 %v6857, %v5123
        %v6872 = vmul.f32 %v6857, %v5124
        %v6873 = vmul.f32 %v6857, %v5125
        %v6874 = vmul.f32 %v6857, %v5126
        %v6875 = vmul.f32 %v6861, %v5127
        %v6876 = vmul.f32 %v6861, %v5128
        %v6877 = vmul.f32 %v6861, %v5129
        %v6878 = vmul.f32 %v6861, %v5130
        %6895 = vrot.lane.b32.xlu0 %v6863, 104
        %v6896 = vpop.permute.xlu0 %6895
        %6897 = vrot.lane.b32.xlu0 %v6864, 104
        %v6898 = vpop.permute.xlu0 %6897
        %6899 = vrot.lane.b32.xlu0 %v6865, 104
        %v6900 = vpop.permute.xlu0 %6899
        %6901 = vrot.lane.b32.xlu0 %v6866, 104
        %v6902 = vpop.permute.xlu0 %6901
        %6903 = vrot.lane.b32.xlu0 %v6867, 104
        %v6904 = vpop.permute.xlu0 %6903
        %6905 = vrot.lane.b32.xlu0 %v6868, 104
        %v6906 = vpop.permute.xlu0 %6905
        %6907 = vrot.lane.b32.xlu0 %v6869, 104
        %v6908 = vpop.permute.xlu0 %6907
        %6909 = vrot.lane.b32.xlu0 %v6870, 104
        %v6910 = vpop.permute.xlu0 %6909
        %6911 = vrot.lane.b32.xlu0 %v6871, 104
        %v6912 = vpop.permute.xlu0 %6911
        %6913 = vrot.lane.b32.xlu0 %v6872, 104
        %v6914 = vpop.permute.xlu0 %6913
        %6915 = vrot.lane.b32.xlu0 %v6873, 104
        %v6916 = vpop.permute.xlu0 %6915
        %6917 = vrot.lane.b32.xlu0 %v6874, 104
        %v6918 = vpop.permute.xlu0 %6917
        %6919 = vrot.lane.b32.xlu0 %v6875, 104
        %v6920 = vpop.permute.xlu0 %6919
        %6921 = vrot.lane.b32.xlu0 %v6876, 104
        %v6922 = vpop.permute.xlu0 %6921
        %6923 = vrot.lane.b32.xlu0 %v6877, 104
        %v6924 = vpop.permute.xlu0 %6923
        %6925 = vrot.lane.b32.xlu0 %v6878, 104
        %v6926 = vpop.permute.xlu0 %6925
        %v6927 = vsel %vm3267, %v6896, %v6898
        %v6928 = vsel %vm3267, %v6898, %v6900
        %v6929 = vsel %vm3267, %v6900, %v6902
        %v6930 = vsel %vm3267, %v6904, %v6906
        %v6931 = vsel %vm3267, %v6906, %v6908
        %v6932 = vsel %vm3267, %v6908, %v6910
        %v6933 = vsel %vm3267, %v6912, %v6914
        %v6934 = vsel %vm3267, %v6914, %v6916
        %v6935 = vsel %vm3267, %v6916, %v6918
        %v6936 = vsel %vm3267, %v6920, %v6922
        %v6937 = vsel %vm3267, %v6922, %v6924
        %v6938 = vsel %vm3267, %v6924, %v6926
        %v6955 = vadd.f32 %v6459, %v6927
        %v6956 = vadd.f32 %v6460, %v6928
        %v6957 = vadd.f32 %v6461, %v6929
        %v6958 = vadd.f32 %v6462, %v6902
        %v6959 = vadd.f32 %v6463, %v6930
        %v6960 = vadd.f32 %v6464, %v6931
        %v6961 = vadd.f32 %v6465, %v6932
        %v6962 = vadd.f32 %v6466, %v6910
        %v6963 = vadd.f32 %v6467, %v6933
        %v6964 = vadd.f32 %v6468, %v6934
        %v6965 = vadd.f32 %v6469, %v6935
        %v6966 = vadd.f32 %v6470, %v6918
        %v6967 = vadd.f32 %v6471, %v6936
        %v6968 = vadd.f32 %v6472, %v6937
        %v6969 = vadd.f32 %v6473, %v6938
        %v6970 = vadd.f32 %v6474, %v6926
        %6971 = vset.pattern.permute.xlu0 12
        %6972 = vperm.xlu0 %6971, %v5111
        %v6973 = vpop.permute.xlu0 %6972
        %6975 = vset.pattern.permute.xlu0 12
        %6976 = vperm.xlu0 %6975, %v5112
        %v6977 = vpop.permute.xlu0 %6976
        %6979 = vset.pattern.permute.xlu0 12
        %6980 = vperm.xlu0 %6979, %v5113
        %v6981 = vpop.permute.xlu0 %6980
        %6983 = vset.pattern.permute.xlu0 12
        %6984 = vperm.xlu0 %6983, %v5114
        %v6985 = vpop.permute.xlu0 %6984
        %v6987 = vmul.f32 %v6973, %v5116
        %v6988 = vmul.f32 %v6973, %v5117
        %v6989 = vmul.f32 %v6973, %v5118
        %v6990 = vmul.f32 %v6977, %v5120
        %v6991 = vmul.f32 %v6977, %v5121
        %v6992 = vmul.f32 %v6977, %v5122
        %v6993 = vmul.f32 %v6981, %v5124
        %v6994 = vmul.f32 %v6981, %v5125
        %v6995 = vmul.f32 %v6981, %v5126
        %v6996 = vmul.f32 %v6985, %v5128
        %v6997 = vmul.f32 %v6985, %v5129
        %v6998 = vmul.f32 %v6985, %v5130
        %7011 = vrot.lane.b32.xlu0 %v6987, 78
        %v7012 = vpop.permute.xlu0 %7011
        %7013 = vrot.lane.b32.xlu0 %v6988, 78
        %v7014 = vpop.permute.xlu0 %7013
        %7015 = vrot.lane.b32.xlu0 %v6989, 78
        %v7016 = vpop.permute.xlu0 %7015
        %7017 = vrot.lane.b32.xlu0 %v6990, 78
        %v7018 = vpop.permute.xlu0 %7017
        %7019 = vrot.lane.b32.xlu0 %v6991, 78
        %v7020 = vpop.permute.xlu0 %7019
        %7021 = vrot.lane.b32.xlu0 %v6992, 78
        %v7022 = vpop.permute.xlu0 %7021
        %7023 = vrot.lane.b32.xlu0 %v6993, 78
        %v7024 = vpop.permute.xlu0 %7023
        %7025 = vrot.lane.b32.xlu0 %v6994, 78
        %v7026 = vpop.permute.xlu0 %7025
        %7027 = vrot.lane.b32.xlu0 %v6995, 78
        %v7028 = vpop.permute.xlu0 %7027
        %7029 = vrot.lane.b32.xlu0 %v6996, 78
        %v7030 = vpop.permute.xlu0 %7029
        %7031 = vrot.lane.b32.xlu0 %v6997, 78
        %v7032 = vpop.permute.xlu0 %7031
        %7033 = vrot.lane.b32.xlu0 %v6998, 78
        %v7034 = vpop.permute.xlu0 %7033
        %v7035 = vsel %vm3680, %v7012, %v7014
        %v7036 = vsel %vm3680, %v7014, %v7016
        %v7037 = vsel %vm3680, %v7018, %v7020
        %v7038 = vsel %vm3680, %v7020, %v7022
        %v7039 = vsel %vm3680, %v7024, %v7026
        %v7040 = vsel %vm3680, %v7026, %v7028
        %v7041 = vsel %vm3680, %v7030, %v7032
        %v7042 = vsel %vm3680, %v7032, %v7034
        %v7059 = vadd.f32 %v6831, %v7012
        %v7060 = vadd.f32 %v6832, %v7035
        %v7061 = vadd.f32 %v6833, %v7036
        %v7062 = vadd.f32 %v6834, %v7016
        %v7063 = vadd.f32 %v6835, %v7018
        %v7064 = vadd.f32 %v6836, %v7037
        %v7065 = vadd.f32 %v6837, %v7038
        %v7066 = vadd.f32 %v6838, %v7022
        %v7067 = vadd.f32 %v6839, %v7024
        %v7068 = vadd.f32 %v6840, %v7039
        %v7069 = vadd.f32 %v6841, %v7040
        %v7070 = vadd.f32 %v6842, %v7028
        %v7071 = vadd.f32 %v6843, %v7030
        %v7072 = vadd.f32 %v6844, %v7041
        %v7073 = vadd.f32 %v6845, %v7042
        %v7074 = vadd.f32 %v6846, %v7034
        %7075 = vset.pattern.permute.xlu0 4
        %7076 = vperm.xlu0 %7075, %v5107
        %v7077 = vpop.permute.xlu0 %7076
        %7079 = vset.pattern.permute.xlu0 4
        %7080 = vperm.xlu0 %7079, %v5108
        %v7081 = vpop.permute.xlu0 %7080
        %7083 = vset.pattern.permute.xlu0 4
        %7084 = vperm.xlu0 %7083, %v5109
        %v7085 = vpop.permute.xlu0 %7084
        %7087 = vset.pattern.permute.xlu0 4
        %7088 = vperm.xlu0 %7087, %v5110
        %v7089 = vpop.permute.xlu0 %7088
        %v7091 = vmul.f32 %v7077, %v5116
        %v7092 = vmul.f32 %v7077, %v5117
        %v7093 = vmul.f32 %v7077, %v5118
        %v7094 = vmul.f32 %v7081, %v5120
        %v7095 = vmul.f32 %v7081, %v5121
        %v7096 = vmul.f32 %v7081, %v5122
        %v7097 = vmul.f32 %v7085, %v5124
        %v7098 = vmul.f32 %v7085, %v5125
        %v7099 = vmul.f32 %v7085, %v5126
        %v7100 = vmul.f32 %v7089, %v5128
        %v7101 = vmul.f32 %v7089, %v5129
        %v7102 = vmul.f32 %v7089, %v5130
        %7115 = vrot.lane.b32.xlu0 %v7091, 103
        %v7116 = vpop.permute.xlu0 %7115
        %7117 = vrot.lane.b32.xlu0 %v7092, 103
        %v7118 = vpop.permute.xlu0 %7117
        %7119 = vrot.lane.b32.xlu0 %v7093, 103
        %v7120 = vpop.permute.xlu0 %7119
        %7121 = vrot.lane.b32.xlu0 %v7094, 103
        %v7122 = vpop.permute.xlu0 %7121
        %7123 = vrot.lane.b32.xlu0 %v7095, 103
        %v7124 = vpop.permute.xlu0 %7123
        %7125 = vrot.lane.b32.xlu0 %v7096, 103
        %v7126 = vpop.permute.xlu0 %7125
        %7127 = vrot.lane.b32.xlu0 %v7097, 103
        %v7128 = vpop.permute.xlu0 %7127
        %7129 = vrot.lane.b32.xlu0 %v7098, 103
        %v7130 = vpop.permute.xlu0 %7129
        %7131 = vrot.lane.b32.xlu0 %v7099, 103
        %v7132 = vpop.permute.xlu0 %7131
        %7133 = vrot.lane.b32.xlu0 %v7100, 103
        %v7134 = vpop.permute.xlu0 %7133
        %7135 = vrot.lane.b32.xlu0 %v7101, 103
        %v7136 = vpop.permute.xlu0 %7135
        %7137 = vrot.lane.b32.xlu0 %v7102, 103
        %v7138 = vpop.permute.xlu0 %7137
        %v7139 = vsel %vm3299, %v7116, %v7118
        %v7140 = vsel %vm3299, %v7118, %v7120
        %v7141 = vsel %vm3299, %v7122, %v7124
        %v7142 = vsel %vm3299, %v7124, %v7126
        %v7143 = vsel %vm3299, %v7128, %v7130
        %v7144 = vsel %vm3299, %v7130, %v7132
        %v7145 = vsel %vm3299, %v7134, %v7136
        %v7146 = vsel %vm3299, %v7136, %v7138
        %v7163 = vadd.f32 %v6955, %v7116
        %v7164 = vadd.f32 %v6956, %v7139
        %v7165 = vadd.f32 %v6957, %v7140
        %v7166 = vadd.f32 %v6958, %v7120
        %v7167 = vadd.f32 %v6959, %v7122
        %v7168 = vadd.f32 %v6960, %v7141
        %v7169 = vadd.f32 %v6961, %v7142
        %v7170 = vadd.f32 %v6962, %v7126
        %v7171 = vadd.f32 %v6963, %v7128
        %v7172 = vadd.f32 %v6964, %v7143
        %v7173 = vadd.f32 %v6965, %v7144
        %v7174 = vadd.f32 %v6966, %v7132
        %v7175 = vadd.f32 %v6967, %v7134
        %v7176 = vadd.f32 %v6968, %v7145
        %v7177 = vadd.f32 %v6969, %v7146
        %v7178 = vadd.f32 %v6970, %v7138
        %v7179 = vld [vmem:[#allocation2 + $0x8] sm:$0xff]
        %v7180 = vld [vmem:[#allocation2 + $0x10] sm:$0xff]
        %v7181 = vld [vmem:[#allocation2 + $0x18] sm:$0xff]
        %v7182 = vld [vmem:[#allocation2 + $0x20] sm:$0xff]
        %v7183 = vld [vmem:[#allocation2 + $0x30] sm:$0xff]
        %v7184 = vld [vmem:[#allocation2 + $0x38] sm:$0xff]
        %v7185 = vld [vmem:[#allocation2 + $0x40] sm:$0xff]
        %v7186 = vld [vmem:[#allocation2 + $0x48] sm:$0xff]
        %v7187 = vld [vmem:[#allocation2 + $0x58] sm:$0xff]
        %v7188 = vld [vmem:[#allocation2 + $0x60] sm:$0xff]
        %v7189 = vld [vmem:[#allocation2 + $0x68] sm:$0xff]
        %v7190 = vld [vmem:[#allocation2 + $0x70] sm:$0xff]
        %v7191 = vld [vmem:[#allocation2 + $0x80] sm:$0xff]
        %v7192 = vld [vmem:[#allocation2 + $0x88] sm:$0xff]
        %v7193 = vld [vmem:[#allocation2 + $0x90] sm:$0xff]
        %v7194 = vld [vmem:[#allocation2 + $0x98] sm:$0xff]
        %7195 = vset.pattern.permute.xlu0 13
        %7196 = vperm.xlu0 %7195, %v5111
        %v7197 = vpop.permute.xlu0 %7196
        %7199 = vset.pattern.permute.xlu0 13
        %7200 = vperm.xlu0 %7199, %v5112
        %v7201 = vpop.permute.xlu0 %7200
        %7203 = vset.pattern.permute.xlu0 13
        %7204 = vperm.xlu0 %7203, %v5113
        %v7205 = vpop.permute.xlu0 %7204
        %7207 = vset.pattern.permute.xlu0 13
        %7208 = vperm.xlu0 %7207, %v5114
        %v7209 = vpop.permute.xlu0 %7208
        %v7211 = vmul.f32 %v7197, %v7179
        %v7212 = vmul.f32 %v7197, %v7180
        %v7213 = vmul.f32 %v7197, %v7181
        %v7214 = vmul.f32 %v7197, %v7182
        %v7215 = vmul.f32 %v7201, %v7183
        %v7216 = vmul.f32 %v7201, %v7184
        %v7217 = vmul.f32 %v7201, %v7185
        %v7218 = vmul.f32 %v7201, %v7186
        %v7219 = vmul.f32 %v7205, %v7187
        %v7220 = vmul.f32 %v7205, %v7188
        %v7221 = vmul.f32 %v7205, %v7189
        %v7222 = vmul.f32 %v7205, %v7190
        %v7223 = vmul.f32 %v7209, %v7191
        %v7224 = vmul.f32 %v7209, %v7192
        %v7225 = vmul.f32 %v7209, %v7193
        %v7226 = vmul.f32 %v7209, %v7194
        %7243 = vrot.lane.b32.xlu0 %v7211, 77
        %v7244 = vpop.permute.xlu0 %7243
        %7245 = vrot.lane.b32.xlu0 %v7212, 77
        %v7246 = vpop.permute.xlu0 %7245
        %7247 = vrot.lane.b32.xlu0 %v7213, 77
        %v7248 = vpop.permute.xlu0 %7247
        %7249 = vrot.lane.b32.xlu0 %v7214, 77
        %v7250 = vpop.permute.xlu0 %7249
        %7251 = vrot.lane.b32.xlu0 %v7215, 77
        %v7252 = vpop.permute.xlu0 %7251
        %7253 = vrot.lane.b32.xlu0 %v7216, 77
        %v7254 = vpop.permute.xlu0 %7253
        %7255 = vrot.lane.b32.xlu0 %v7217, 77
        %v7256 = vpop.permute.xlu0 %7255
        %7257 = vrot.lane.b32.xlu0 %v7218, 77
        %v7258 = vpop.permute.xlu0 %7257
        %7259 = vrot.lane.b32.xlu0 %v7219, 77
        %v7260 = vpop.permute.xlu0 %7259
        %7261 = vrot.lane.b32.xlu0 %v7220, 77
        %v7262 = vpop.permute.xlu0 %7261
        %7263 = vrot.lane.b32.xlu0 %v7221, 77
        %v7264 = vpop.permute.xlu0 %7263
        %7265 = vrot.lane.b32.xlu0 %v7222, 77
        %v7266 = vpop.permute.xlu0 %7265
        %7267 = vrot.lane.b32.xlu0 %v7223, 77
        %v7268 = vpop.permute.xlu0 %7267
        %7269 = vrot.lane.b32.xlu0 %v7224, 77
        %v7270 = vpop.permute.xlu0 %7269
        %7271 = vrot.lane.b32.xlu0 %v7225, 77
        %v7272 = vpop.permute.xlu0 %7271
        %7273 = vrot.lane.b32.xlu0 %v7226, 77
        %v7274 = vpop.permute.xlu0 %7273
        %v7275 = vsel %vm1717, %v7244, %v7246
        %v7276 = vsel %vm1717, %v7246, %v7248
        %v7277 = vsel %vm1717, %v7248, %v7250
        %v7278 = vsel %vm1717, %v7252, %v7254
        %v7279 = vsel %vm1717, %v7254, %v7256
        %v7280 = vsel %vm1717, %v7256, %v7258
        %v7281 = vsel %vm1717, %v7260, %v7262
        %v7282 = vsel %vm1717, %v7262, %v7264
        %v7283 = vsel %vm1717, %v7264, %v7266
        %v7284 = vsel %vm1717, %v7268, %v7270
        %v7285 = vsel %vm1717, %v7270, %v7272
        %v7286 = vsel %vm1717, %v7272, %v7274
        %v7303 = vadd.f32 %v7059, %v7244
        %v7304 = vadd.f32 %v7060, %v7275
        %v7305 = vadd.f32 %v7061, %v7276
        %v7306 = vadd.f32 %v7062, %v7277
        %v7307 = vadd.f32 %v7063, %v7252
        %v7308 = vadd.f32 %v7064, %v7278
        %v7309 = vadd.f32 %v7065, %v7279
        %v7310 = vadd.f32 %v7066, %v7280
        %v7311 = vadd.f32 %v7067, %v7260
        %v7312 = vadd.f32 %v7068, %v7281
        %v7313 = vadd.f32 %v7069, %v7282
        %v7314 = vadd.f32 %v7070, %v7283
        %v7315 = vadd.f32 %v7071, %v7268
        %v7316 = vadd.f32 %v7072, %v7284
        %v7317 = vadd.f32 %v7073, %v7285
        %v7318 = vadd.f32 %v7074, %v7286
        %7319 = vset.pattern.permute.xlu0 5
        %7320 = vperm.xlu0 %7319, %v5107
        %v7321 = vpop.permute.xlu0 %7320
        %7323 = vset.pattern.permute.xlu0 5
        %7324 = vperm.xlu0 %7323, %v5108
        %v7325 = vpop.permute.xlu0 %7324
        %7327 = vset.pattern.permute.xlu0 5
        %7328 = vperm.xlu0 %7327, %v5109
        %v7329 = vpop.permute.xlu0 %7328
        %7331 = vset.pattern.permute.xlu0 5
        %7332 = vperm.xlu0 %7331, %v5110
        %v7333 = vpop.permute.xlu0 %7332
        %v7335 = vmul.f32 %v7321, %v7179
        %v7336 = vmul.f32 %v7321, %v7180
        %v7337 = vmul.f32 %v7321, %v7181
        %v7338 = vmul.f32 %v7321, %v7182
        %v7339 = vmul.f32 %v7325, %v7183
        %v7340 = vmul.f32 %v7325, %v7184
        %v7341 = vmul.f32 %v7325, %v7185
        %v7342 = vmul.f32 %v7325, %v7186
        %v7343 = vmul.f32 %v7329, %v7187
        %v7344 = vmul.f32 %v7329, %v7188
        %v7345 = vmul.f32 %v7329, %v7189
        %v7346 = vmul.f32 %v7329, %v7190
        %v7347 = vmul.f32 %v7333, %v7191
        %v7348 = vmul.f32 %v7333, %v7192
        %v7349 = vmul.f32 %v7333, %v7193
        %v7350 = vmul.f32 %v7333, %v7194
        %7367 = vrot.lane.b32.xlu0 %v7335, 102
        %v7368 = vpop.permute.xlu0 %7367
        %7369 = vrot.lane.b32.xlu0 %v7336, 102
        %v7370 = vpop.permute.xlu0 %7369
        %7371 = vrot.lane.b32.xlu0 %v7337, 102
        %v7372 = vpop.permute.xlu0 %7371
        %7373 = vrot.lane.b32.xlu0 %v7338, 102
        %v7374 = vpop.permute.xlu0 %7373
        %7375 = vrot.lane.b32.xlu0 %v7339, 102
        %v7376 = vpop.permute.xlu0 %7375
        %7377 = vrot.lane.b32.xlu0 %v7340, 102
        %v7378 = vpop.permute.xlu0 %7377
        %7379 = vrot.lane.b32.xlu0 %v7341, 102
        %v7380 = vpop.permute.xlu0 %7379
        %7381 = vrot.lane.b32.xlu0 %v7342, 102
        %v7382 = vpop.permute.xlu0 %7381
        %7383 = vrot.lane.b32.xlu0 %v7343, 102
        %v7384 = vpop.permute.xlu0 %7383
        %7385 = vrot.lane.b32.xlu0 %v7344, 102
        %v7386 = vpop.permute.xlu0 %7385
        %7387 = vrot.lane.b32.xlu0 %v7345, 102
        %v7388 = vpop.permute.xlu0 %7387
        %7389 = vrot.lane.b32.xlu0 %v7346, 102
        %v7390 = vpop.permute.xlu0 %7389
        %7391 = vrot.lane.b32.xlu0 %v7347, 102
        %v7392 = vpop.permute.xlu0 %7391
        %7393 = vrot.lane.b32.xlu0 %v7348, 102
        %v7394 = vpop.permute.xlu0 %7393
        %7395 = vrot.lane.b32.xlu0 %v7349, 102
        %v7396 = vpop.permute.xlu0 %7395
        %7397 = vrot.lane.b32.xlu0 %v7350, 102
        %v7398 = vpop.permute.xlu0 %7397
        %v7399 = vsel %vm3331, %v7368, %v7370
        %v7400 = vsel %vm3331, %v7370, %v7372
        %v7401 = vsel %vm3331, %v7372, %v7374
        %v7402 = vsel %vm3331, %v7376, %v7378
        %v7403 = vsel %vm3331, %v7378, %v7380
        %v7404 = vsel %vm3331, %v7380, %v7382
        %v7405 = vsel %vm3331, %v7384, %v7386
        %v7406 = vsel %vm3331, %v7386, %v7388
        %v7407 = vsel %vm3331, %v7388, %v7390
        %v7408 = vsel %vm3331, %v7392, %v7394
        %v7409 = vsel %vm3331, %v7394, %v7396
        %v7410 = vsel %vm3331, %v7396, %v7398
        %v7427 = vadd.f32 %v7163, %v7368
        %v7428 = vadd.f32 %v7164, %v7399
        %v7429 = vadd.f32 %v7165, %v7400
        %v7430 = vadd.f32 %v7166, %v7401
        %v7431 = vadd.f32 %v7167, %v7376
        %v7432 = vadd.f32 %v7168, %v7402
        %v7433 = vadd.f32 %v7169, %v7403
        %v7434 = vadd.f32 %v7170, %v7404
        %v7435 = vadd.f32 %v7171, %v7384
        %v7436 = vadd.f32 %v7172, %v7405
        %v7437 = vadd.f32 %v7173, %v7406
        %v7438 = vadd.f32 %v7174, %v7407
        %v7439 = vadd.f32 %v7175, %v7392
        %v7440 = vadd.f32 %v7176, %v7408
        %v7441 = vadd.f32 %v7177, %v7409
        %v7442 = vadd.f32 %v7178, %v7410
        %7443 = vset.pattern.permute.xlu0 14
        %7444 = vperm.xlu0 %7443, %v5111
        %v7445 = vpop.permute.xlu0 %7444
        %7447 = vset.pattern.permute.xlu0 14
        %7448 = vperm.xlu0 %7447, %v5112
        %v7449 = vpop.permute.xlu0 %7448
        %7451 = vset.pattern.permute.xlu0 14
        %7452 = vperm.xlu0 %7451, %v5113
        %v7453 = vpop.permute.xlu0 %7452
        %7455 = vset.pattern.permute.xlu0 14
        %7456 = vperm.xlu0 %7455, %v5114
        %v7457 = vpop.permute.xlu0 %7456
        %v7459 = vmul.f32 %v7445, %v7179
        %v7460 = vmul.f32 %v7445, %v7180
        %v7461 = vmul.f32 %v7445, %v7181
        %v7462 = vmul.f32 %v7445, %v7182
        %v7463 = vmul.f32 %v7449, %v7183
        %v7464 = vmul.f32 %v7449, %v7184
        %v7465 = vmul.f32 %v7449, %v7185
        %v7466 = vmul.f32 %v7449, %v7186
        %v7467 = vmul.f32 %v7453, %v7187
        %v7468 = vmul.f32 %v7453, %v7188
        %v7469 = vmul.f32 %v7453, %v7189
        %v7470 = vmul.f32 %v7453, %v7190
        %v7471 = vmul.f32 %v7457, %v7191
        %v7472 = vmul.f32 %v7457, %v7192
        %v7473 = vmul.f32 %v7457, %v7193
        %v7474 = vmul.f32 %v7457, %v7194
        %7491 = vrot.lane.b32.xlu0 %v7459, 76
        %v7492 = vpop.permute.xlu0 %7491
        %7493 = vrot.lane.b32.xlu0 %v7460, 76
        %v7494 = vpop.permute.xlu0 %7493
        %7495 = vrot.lane.b32.xlu0 %v7461, 76
        %v7496 = vpop.permute.xlu0 %7495
        %7497 = vrot.lane.b32.xlu0 %v7462, 76
        %v7498 = vpop.permute.xlu0 %7497
        %7499 = vrot.lane.b32.xlu0 %v7463, 76
        %v7500 = vpop.permute.xlu0 %7499
        %7501 = vrot.lane.b32.xlu0 %v7464, 76
        %v7502 = vpop.permute.xlu0 %7501
        %7503 = vrot.lane.b32.xlu0 %v7465, 76
        %v7504 = vpop.permute.xlu0 %7503
        %7505 = vrot.lane.b32.xlu0 %v7466, 76
        %v7506 = vpop.permute.xlu0 %7505
        %7507 = vrot.lane.b32.xlu0 %v7467, 76
        %v7508 = vpop.permute.xlu0 %7507
        %7509 = vrot.lane.b32.xlu0 %v7468, 76
        %v7510 = vpop.permute.xlu0 %7509
        %7511 = vrot.lane.b32.xlu0 %v7469, 76
        %v7512 = vpop.permute.xlu0 %7511
        %7513 = vrot.lane.b32.xlu0 %v7470, 76
        %v7514 = vpop.permute.xlu0 %7513
        %7515 = vrot.lane.b32.xlu0 %v7471, 76
        %v7516 = vpop.permute.xlu0 %7515
        %7517 = vrot.lane.b32.xlu0 %v7472, 76
        %v7518 = vpop.permute.xlu0 %7517
        %7519 = vrot.lane.b32.xlu0 %v7473, 76
        %v7520 = vpop.permute.xlu0 %7519
        %7521 = vrot.lane.b32.xlu0 %v7474, 76
        %v7522 = vpop.permute.xlu0 %7521
        %v7523 = vsel %vm1749, %v7492, %v7494
        %v7524 = vsel %vm1749, %v7494, %v7496
        %v7525 = vsel %vm1749, %v7496, %v7498
        %v7526 = vsel %vm1749, %v7500, %v7502
        %v7527 = vsel %vm1749, %v7502, %v7504
        %v7528 = vsel %vm1749, %v7504, %v7506
        %v7529 = vsel %vm1749, %v7508, %v7510
        %v7530 = vsel %vm1749, %v7510, %v7512
        %v7531 = vsel %vm1749, %v7512, %v7514
        %v7532 = vsel %vm1749, %v7516, %v7518
        %v7533 = vsel %vm1749, %v7518, %v7520
        %v7534 = vsel %vm1749, %v7520, %v7522
        %v7551 = vadd.f32 %v7303, %v7492
        %v7552 = vadd.f32 %v7304, %v7523
        %v7553 = vadd.f32 %v7305, %v7524
        %v7554 = vadd.f32 %v7306, %v7525
        %v7555 = vadd.f32 %v7307, %v7500
        %v7556 = vadd.f32 %v7308, %v7526
        %v7557 = vadd.f32 %v7309, %v7527
        %v7558 = vadd.f32 %v7310, %v7528
        %v7559 = vadd.f32 %v7311, %v7508
        %v7560 = vadd.f32 %v7312, %v7529
        %v7561 = vadd.f32 %v7313, %v7530
        %v7562 = vadd.f32 %v7314, %v7531
        %v7563 = vadd.f32 %v7315, %v7516
        %v7564 = vadd.f32 %v7316, %v7532
        %v7565 = vadd.f32 %v7317, %v7533
        %v7566 = vadd.f32 %v7318, %v7534
        %7567 = vset.pattern.permute.xlu0 15
        %7568 = vperm.xlu0 %7567, %v5111
        %v7569 = vpop.permute.xlu0 %7568
        %7571 = vset.pattern.permute.xlu0 15
        %7572 = vperm.xlu0 %7571, %v5112
        %v7573 = vpop.permute.xlu0 %7572
        %7575 = vset.pattern.permute.xlu0 15
        %7576 = vperm.xlu0 %7575, %v5113
        %v7577 = vpop.permute.xlu0 %7576
        %7579 = vset.pattern.permute.xlu0 15
        %7580 = vperm.xlu0 %7579, %v5114
        %v7581 = vpop.permute.xlu0 %7580
        %v7583 = vmul.f32 %v7569, %v7179
        %v7584 = vmul.f32 %v7569, %v7180
        %v7585 = vmul.f32 %v7569, %v7181
        %v7586 = vmul.f32 %v7569, %v7182
        %v7587 = vmul.f32 %v7573, %v7183
        %v7588 = vmul.f32 %v7573, %v7184
        %v7589 = vmul.f32 %v7573, %v7185
        %v7590 = vmul.f32 %v7573, %v7186
        %v7591 = vmul.f32 %v7577, %v7187
        %v7592 = vmul.f32 %v7577, %v7188
        %v7593 = vmul.f32 %v7577, %v7189
        %v7594 = vmul.f32 %v7577, %v7190
        %v7595 = vmul.f32 %v7581, %v7191
        %v7596 = vmul.f32 %v7581, %v7192
        %v7597 = vmul.f32 %v7581, %v7193
        %v7598 = vmul.f32 %v7581, %v7194
        %7615 = vrot.lane.b32.xlu0 %v7583, 56
        %v7616 = vpop.permute.xlu0 %7615
        %7617 = vrot.lane.b32.xlu0 %v7584, 56
        %v7618 = vpop.permute.xlu0 %7617
        %7619 = vrot.lane.b32.xlu0 %v7585, 56
        %v7620 = vpop.permute.xlu0 %7619
        %7621 = vrot.lane.b32.xlu0 %v7586, 56
        %v7622 = vpop.permute.xlu0 %7621
        %7623 = vrot.lane.b32.xlu0 %v7587, 56
        %v7624 = vpop.permute.xlu0 %7623
        %7625 = vrot.lane.b32.xlu0 %v7588, 56
        %v7626 = vpop.permute.xlu0 %7625
        %7627 = vrot.lane.b32.xlu0 %v7589, 56
        %v7628 = vpop.permute.xlu0 %7627
        %7629 = vrot.lane.b32.xlu0 %v7590, 56
        %v7630 = vpop.permute.xlu0 %7629
        %7631 = vrot.lane.b32.xlu0 %v7591, 56
        %v7632 = vpop.permute.xlu0 %7631
        %7633 = vrot.lane.b32.xlu0 %v7592, 56
        %v7634 = vpop.permute.xlu0 %7633
        %7635 = vrot.lane.b32.xlu0 %v7593, 56
        %v7636 = vpop.permute.xlu0 %7635
        %7637 = vrot.lane.b32.xlu0 %v7594, 56
        %v7638 = vpop.permute.xlu0 %7637
        %7639 = vrot.lane.b32.xlu0 %v7595, 56
        %v7640 = vpop.permute.xlu0 %7639
        %7641 = vrot.lane.b32.xlu0 %v7596, 56
        %v7642 = vpop.permute.xlu0 %7641
        %7643 = vrot.lane.b32.xlu0 %v7597, 56
        %v7644 = vpop.permute.xlu0 %7643
        %7645 = vrot.lane.b32.xlu0 %v7598, 56
        %v7646 = vpop.permute.xlu0 %7645
        %v7647 = vsel %vm3965, %v7616, %v7618
        %v7648 = vsel %vm3965, %v7618, %v7620
        %v7649 = vsel %vm3965, %v7620, %v7622
        %v7650 = vsel %vm3965, %v7624, %v7626
        %v7651 = vsel %vm3965, %v7626, %v7628
        %v7652 = vsel %vm3965, %v7628, %v7630
        %v7653 = vsel %vm3965, %v7632, %v7634
        %v7654 = vsel %vm3965, %v7634, %v7636
        %v7655 = vsel %vm3965, %v7636, %v7638
        %v7656 = vsel %vm3965, %v7640, %v7642
        %v7657 = vsel %vm3965, %v7642, %v7644
        %v7658 = vsel %vm3965, %v7644, %v7646
        %v7675 = vadd.f32 %v7551, %v7616
        %v7676 = vadd.f32 %v7552, %v7647
        %v7677 = vadd.f32 %v7553, %v7648
        %v7678 = vadd.f32 %v7554, %v7649
        %v7679 = vadd.f32 %v7555, %v7624
        %v7680 = vadd.f32 %v7556, %v7650
        %v7681 = vadd.f32 %v7557, %v7651
        %v7682 = vadd.f32 %v7558, %v7652
        %v7683 = vadd.f32 %v7559, %v7632
        %v7684 = vadd.f32 %v7560, %v7653
        %v7685 = vadd.f32 %v7561, %v7654
        %v7686 = vadd.f32 %v7562, %v7655
        %v7687 = vadd.f32 %v7563, %v7640
        %v7688 = vadd.f32 %v7564, %v7656
        %v7689 = vadd.f32 %v7565, %v7657
        %v7690 = vadd.f32 %v7566, %v7658
        %7691 = vset.pattern.permute.xlu0 16
        %7692 = vperm.xlu0 %7691, %v5111
        %v7693 = vpop.permute.xlu0 %7692
        %7695 = vset.pattern.permute.xlu0 16
        %7696 = vperm.xlu0 %7695, %v5112
        %v7697 = vpop.permute.xlu0 %7696
        %7699 = vset.pattern.permute.xlu0 16
        %7700 = vperm.xlu0 %7699, %v5113
        %v7701 = vpop.permute.xlu0 %7700
        %7703 = vset.pattern.permute.xlu0 16
        %7704 = vperm.xlu0 %7703, %v5114
        %v7705 = vpop.permute.xlu0 %7704
        %v7707 = vmul.f32 %v7693, %v7179
        %v7708 = vmul.f32 %v7693, %v7180
        %v7709 = vmul.f32 %v7693, %v7181
        %v7710 = vmul.f32 %v7693, %v7182
        %v7711 = vmul.f32 %v7697, %v7183
        %v7712 = vmul.f32 %v7697, %v7184
        %v7713 = vmul.f32 %v7697, %v7185
        %v7714 = vmul.f32 %v7697, %v7186
        %v7715 = vmul.f32 %v7701, %v7187
        %v7716 = vmul.f32 %v7701, %v7188
        %v7717 = vmul.f32 %v7701, %v7189
        %v7718 = vmul.f32 %v7701, %v7190
        %v7719 = vmul.f32 %v7705, %v7191
        %v7720 = vmul.f32 %v7705, %v7192
        %v7721 = vmul.f32 %v7705, %v7193
        %v7722 = vmul.f32 %v7705, %v7194
        %7739 = vrot.lane.b32.xlu0 %v7707, 55
        %v7740 = vpop.permute.xlu0 %7739
        %7741 = vrot.lane.b32.xlu0 %v7708, 55
        %v7742 = vpop.permute.xlu0 %7741
        %7743 = vrot.lane.b32.xlu0 %v7709, 55
        %v7744 = vpop.permute.xlu0 %7743
        %7745 = vrot.lane.b32.xlu0 %v7710, 55
        %v7746 = vpop.permute.xlu0 %7745
        %7747 = vrot.lane.b32.xlu0 %v7711, 55
        %v7748 = vpop.permute.xlu0 %7747
        %7749 = vrot.lane.b32.xlu0 %v7712, 55
        %v7750 = vpop.permute.xlu0 %7749
        %7751 = vrot.lane.b32.xlu0 %v7713, 55
        %v7752 = vpop.permute.xlu0 %7751
        %7753 = vrot.lane.b32.xlu0 %v7714, 55
        %v7754 = vpop.permute.xlu0 %7753
        %7755 = vrot.lane.b32.xlu0 %v7715, 55
        %v7756 = vpop.permute.xlu0 %7755
        %7757 = vrot.lane.b32.xlu0 %v7716, 55
        %v7758 = vpop.permute.xlu0 %7757
        %7759 = vrot.lane.b32.xlu0 %v7717, 55
        %v7760 = vpop.permute.xlu0 %7759
        %7761 = vrot.lane.b32.xlu0 %v7718, 55
        %v7762 = vpop.permute.xlu0 %7761
        %7763 = vrot.lane.b32.xlu0 %v7719, 55
        %v7764 = vpop.permute.xlu0 %7763
        %7765 = vrot.lane.b32.xlu0 %v7720, 55
        %v7766 = vpop.permute.xlu0 %7765
        %7767 = vrot.lane.b32.xlu0 %v7721, 55
        %v7768 = vpop.permute.xlu0 %7767
        %7769 = vrot.lane.b32.xlu0 %v7722, 55
        %v7770 = vpop.permute.xlu0 %7769
        %v7771 = vsel %vm3997, %v7740, %v7742
        %v7772 = vsel %vm3997, %v7742, %v7744
        %v7773 = vsel %vm3997, %v7744, %v7746
        %v7774 = vsel %vm3997, %v7748, %v7750
        %v7775 = vsel %vm3997, %v7750, %v7752
        %v7776 = vsel %vm3997, %v7752, %v7754
        %v7777 = vsel %vm3997, %v7756, %v7758
        %v7778 = vsel %vm3997, %v7758, %v7760
        %v7779 = vsel %vm3997, %v7760, %v7762
        %v7780 = vsel %vm3997, %v7764, %v7766
        %v7781 = vsel %vm3997, %v7766, %v7768
        %v7782 = vsel %vm3997, %v7768, %v7770
        %v7799 = vadd.f32 %v7675, %v7740
        %v7800 = vadd.f32 %v7676, %v7771
        %v7801 = vadd.f32 %v7677, %v7772
        %v7802 = vadd.f32 %v7678, %v7773
        %v7803 = vadd.f32 %v7679, %v7748
        %v7804 = vadd.f32 %v7680, %v7774
        %v7805 = vadd.f32 %v7681, %v7775
        %v7806 = vadd.f32 %v7682, %v7776
        %v7807 = vadd.f32 %v7683, %v7756
        %v7808 = vadd.f32 %v7684, %v7777
        %v7809 = vadd.f32 %v7685, %v7778
        %v7810 = vadd.f32 %v7686, %v7779
        %v7811 = vadd.f32 %v7687, %v7764
        %v7812 = vadd.f32 %v7688, %v7780
        %v7813 = vadd.f32 %v7689, %v7781
        %v7814 = vadd.f32 %v7690, %v7782
        %7815 = vset.pattern.permute.xlu0 6
        %7816 = vperm.xlu0 %7815, %v5107
        %v7817 = vpop.permute.xlu0 %7816
        %7819 = vset.pattern.permute.xlu0 6
        %7820 = vperm.xlu0 %7819, %v5108
        %v7821 = vpop.permute.xlu0 %7820
        %7823 = vset.pattern.permute.xlu0 6
        %7824 = vperm.xlu0 %7823, %v5109
        %v7825 = vpop.permute.xlu0 %7824
        %7827 = vset.pattern.permute.xlu0 6
        %7828 = vperm.xlu0 %7827, %v5110
        %v7829 = vpop.permute.xlu0 %7828
        %v7831 = vmul.f32 %v7817, %v7179
        %v7832 = vmul.f32 %v7817, %v7180
        %v7833 = vmul.f32 %v7817, %v7181
        %v7834 = vmul.f32 %v7817, %v7182
        %v7835 = vmul.f32 %v7821, %v7183
        %v7836 = vmul.f32 %v7821, %v7184
        %v7837 = vmul.f32 %v7821, %v7185
        %v7838 = vmul.f32 %v7821, %v7186
        %v7839 = vmul.f32 %v7825, %v7187
        %v7840 = vmul.f32 %v7825, %v7188
        %v7841 = vmul.f32 %v7825, %v7189
        %v7842 = vmul.f32 %v7825, %v7190
        %v7843 = vmul.f32 %v7829, %v7191
        %v7844 = vmul.f32 %v7829, %v7192
        %v7845 = vmul.f32 %v7829, %v7193
        %v7846 = vmul.f32 %v7829, %v7194
        %7863 = vrot.lane.b32.xlu0 %v7831, 80
        %v7864 = vpop.permute.xlu0 %7863
        %7865 = vrot.lane.b32.xlu0 %v7832, 80
        %v7866 = vpop.permute.xlu0 %7865
        %7867 = vrot.lane.b32.xlu0 %v7833, 80
        %v7868 = vpop.permute.xlu0 %7867
        %7869 = vrot.lane.b32.xlu0 %v7834, 80
        %v7870 = vpop.permute.xlu0 %7869
        %7871 = vrot.lane.b32.xlu0 %v7835, 80
        %v7872 = vpop.permute.xlu0 %7871
        %7873 = vrot.lane.b32.xlu0 %v7836, 80
        %v7874 = vpop.permute.xlu0 %7873
        %7875 = vrot.lane.b32.xlu0 %v7837, 80
        %v7876 = vpop.permute.xlu0 %7875
        %7877 = vrot.lane.b32.xlu0 %v7838, 80
        %v7878 = vpop.permute.xlu0 %7877
        %7879 = vrot.lane.b32.xlu0 %v7839, 80
        %v7880 = vpop.permute.xlu0 %7879
        %7881 = vrot.lane.b32.xlu0 %v7840, 80
        %v7882 = vpop.permute.xlu0 %7881
        %7883 = vrot.lane.b32.xlu0 %v7841, 80
        %v7884 = vpop.permute.xlu0 %7883
        %7885 = vrot.lane.b32.xlu0 %v7842, 80
        %v7886 = vpop.permute.xlu0 %7885
        %7887 = vrot.lane.b32.xlu0 %v7843, 80
        %v7888 = vpop.permute.xlu0 %7887
        %7889 = vrot.lane.b32.xlu0 %v7844, 80
        %v7890 = vpop.permute.xlu0 %7889
        %7891 = vrot.lane.b32.xlu0 %v7845, 80
        %v7892 = vpop.permute.xlu0 %7891
        %7893 = vrot.lane.b32.xlu0 %v7846, 80
        %v7894 = vpop.permute.xlu0 %7893
        %v7895 = vsel %vm3616, %v7864, %v7866
        %v7896 = vsel %vm3616, %v7866, %v7868
        %v7897 = vsel %vm3616, %v7868, %v7870
        %v7898 = vsel %vm3616, %v7872, %v7874
        %v7899 = vsel %vm3616, %v7874, %v7876
        %v7900 = vsel %vm3616, %v7876, %v7878
        %v7901 = vsel %vm3616, %v7880, %v7882
        %v7902 = vsel %vm3616, %v7882, %v7884
        %v7903 = vsel %vm3616, %v7884, %v7886
        %v7904 = vsel %vm3616, %v7888, %v7890
        %v7905 = vsel %vm3616, %v7890, %v7892
        %v7906 = vsel %vm3616, %v7892, %v7894
        %v7923 = vadd.f32 %v7427, %v7864
        %v7924 = vadd.f32 %v7428, %v7895
        %v7925 = vadd.f32 %v7429, %v7896
        %v7926 = vadd.f32 %v7430, %v7897
        %v7927 = vadd.f32 %v7431, %v7872
        %v7928 = vadd.f32 %v7432, %v7898
        %v7929 = vadd.f32 %v7433, %v7899
        %v7930 = vadd.f32 %v7434, %v7900
        %v7931 = vadd.f32 %v7435, %v7880
        %v7932 = vadd.f32 %v7436, %v7901
        %v7933 = vadd.f32 %v7437, %v7902
        %v7934 = vadd.f32 %v7438, %v7903
        %v7935 = vadd.f32 %v7439, %v7888
        %v7936 = vadd.f32 %v7440, %v7904
        %v7937 = vadd.f32 %v7441, %v7905
        %v7938 = vadd.f32 %v7442, %v7906
        %7939 = vset.pattern.permute.xlu0 17
        %7940 = vperm.xlu0 %7939, %v5111
        %v7941 = vpop.permute.xlu0 %7940
        %7943 = vset.pattern.permute.xlu0 17
        %7944 = vperm.xlu0 %7943, %v5112
        %v7945 = vpop.permute.xlu0 %7944
        %7947 = vset.pattern.permute.xlu0 17
        %7948 = vperm.xlu0 %7947, %v5113
        %v7949 = vpop.permute.xlu0 %7948
        %7951 = vset.pattern.permute.xlu0 17
        %7952 = vperm.xlu0 %7951, %v5114
        %v7953 = vpop.permute.xlu0 %7952
        %v7955 = vmul.f32 %v7941, %v7179
        %v7956 = vmul.f32 %v7941, %v7180
        %v7957 = vmul.f32 %v7941, %v7181
        %v7958 = vmul.f32 %v7941, %v7182
        %v7959 = vmul.f32 %v7945, %v7183
        %v7960 = vmul.f32 %v7945, %v7184
        %v7961 = vmul.f32 %v7945, %v7185
        %v7962 = vmul.f32 %v7945, %v7186
        %v7963 = vmul.f32 %v7949, %v7187
        %v7964 = vmul.f32 %v7949, %v7188
        %v7965 = vmul.f32 %v7949, %v7189
        %v7966 = vmul.f32 %v7949, %v7190
        %v7967 = vmul.f32 %v7953, %v7191
        %v7968 = vmul.f32 %v7953, %v7192
        %v7969 = vmul.f32 %v7953, %v7193
        %v7970 = vmul.f32 %v7953, %v7194
        %7987 = vrot.lane.b32.xlu0 %v7955, 54
        %v7988 = vpop.permute.xlu0 %7987
        %7989 = vrot.lane.b32.xlu0 %v7956, 54
        %v7990 = vpop.permute.xlu0 %7989
        %7991 = vrot.lane.b32.xlu0 %v7957, 54
        %v7992 = vpop.permute.xlu0 %7991
        %7993 = vrot.lane.b32.xlu0 %v7958, 54
        %v7994 = vpop.permute.xlu0 %7993
        %7995 = vrot.lane.b32.xlu0 %v7959, 54
        %v7996 = vpop.permute.xlu0 %7995
        %7997 = vrot.lane.b32.xlu0 %v7960, 54
        %v7998 = vpop.permute.xlu0 %7997
        %7999 = vrot.lane.b32.xlu0 %v7961, 54
        %v8000 = vpop.permute.xlu0 %7999
        %8001 = vrot.lane.b32.xlu0 %v7962, 54
        %v8002 = vpop.permute.xlu0 %8001
        %8003 = vrot.lane.b32.xlu0 %v7963, 54
        %v8004 = vpop.permute.xlu0 %8003
        %8005 = vrot.lane.b32.xlu0 %v7964, 54
        %v8006 = vpop.permute.xlu0 %8005
        %8007 = vrot.lane.b32.xlu0 %v7965, 54
        %v8008 = vpop.permute.xlu0 %8007
        %8009 = vrot.lane.b32.xlu0 %v7966, 54
        %v8010 = vpop.permute.xlu0 %8009
        %8011 = vrot.lane.b32.xlu0 %v7967, 54
        %v8012 = vpop.permute.xlu0 %8011
        %8013 = vrot.lane.b32.xlu0 %v7968, 54
        %v8014 = vpop.permute.xlu0 %8013
        %8015 = vrot.lane.b32.xlu0 %v7969, 54
        %v8016 = vpop.permute.xlu0 %8015
        %8017 = vrot.lane.b32.xlu0 %v7970, 54
        %v8018 = vpop.permute.xlu0 %8017
        %v8019 = vsel %vm4029, %v7988, %v7990
        %v8020 = vsel %vm4029, %v7990, %v7992
        %v8021 = vsel %vm4029, %v7992, %v7994
        %v8022 = vsel %vm4029, %v7996, %v7998
        %v8023 = vsel %vm4029, %v7998, %v8000
        %v8024 = vsel %vm4029, %v8000, %v8002
        %v8025 = vsel %vm4029, %v8004, %v8006
        %v8026 = vsel %vm4029, %v8006, %v8008
        %v8027 = vsel %vm4029, %v8008, %v8010
        %v8028 = vsel %vm4029, %v8012, %v8014
        %v8029 = vsel %vm4029, %v8014, %v8016
        %v8030 = vsel %vm4029, %v8016, %v8018
        %v8047 = vadd.f32 %v7799, %v7988
        %v8048 = vadd.f32 %v7800, %v8019
        %v8049 = vadd.f32 %v7801, %v8020
        %v8050 = vadd.f32 %v7802, %v8021
        %v8051 = vadd.f32 %v7803, %v7996
        %v8052 = vadd.f32 %v7804, %v8022
        %v8053 = vadd.f32 %v7805, %v8023
        %v8054 = vadd.f32 %v7806, %v8024
        %v8055 = vadd.f32 %v7807, %v8004
        %v8056 = vadd.f32 %v7808, %v8025
        %v8057 = vadd.f32 %v7809, %v8026
        %v8058 = vadd.f32 %v7810, %v8027
        %v8059 = vadd.f32 %v7811, %v8012
        %v8060 = vadd.f32 %v7812, %v8028
        %v8061 = vadd.f32 %v7813, %v8029
        %v8062 = vadd.f32 %v7814, %v8030
        %8063 = vset.pattern.permute.xlu0 7
        %8064 = vperm.xlu0 %8063, %v5107
        %v8065 = vpop.permute.xlu0 %8064
        %8067 = vset.pattern.permute.xlu0 7
        %8068 = vperm.xlu0 %8067, %v5108
        %v8069 = vpop.permute.xlu0 %8068
        %8071 = vset.pattern.permute.xlu0 7
        %8072 = vperm.xlu0 %8071, %v5109
        %v8073 = vpop.permute.xlu0 %8072
        %8075 = vset.pattern.permute.xlu0 7
        %8076 = vperm.xlu0 %8075, %v5110
        %v8077 = vpop.permute.xlu0 %8076
        %v8079 = vmul.f32 %v8065, %v7179
        %v8080 = vmul.f32 %v8065, %v7180
        %v8081 = vmul.f32 %v8065, %v7181
        %v8082 = vmul.f32 %v8065, %v7182
        %v8083 = vmul.f32 %v8069, %v7183
        %v8084 = vmul.f32 %v8069, %v7184
        %v8085 = vmul.f32 %v8069, %v7185
        %v8086 = vmul.f32 %v8069, %v7186
        %v8087 = vmul.f32 %v8073, %v7187
        %v8088 = vmul.f32 %v8073, %v7188
        %v8089 = vmul.f32 %v8073, %v7189
        %v8090 = vmul.f32 %v8073, %v7190
        %v8091 = vmul.f32 %v8077, %v7191
        %v8092 = vmul.f32 %v8077, %v7192
        %v8093 = vmul.f32 %v8077, %v7193
        %v8094 = vmul.f32 %v8077, %v7194
        %8111 = vrot.lane.b32.xlu0 %v8079, 79
        %v8112 = vpop.permute.xlu0 %8111
        %8113 = vrot.lane.b32.xlu0 %v8080, 79
        %v8114 = vpop.permute.xlu0 %8113
        %8115 = vrot.lane.b32.xlu0 %v8081, 79
        %v8116 = vpop.permute.xlu0 %8115
        %8117 = vrot.lane.b32.xlu0 %v8082, 79
        %v8118 = vpop.permute.xlu0 %8117
        %8119 = vrot.lane.b32.xlu0 %v8083, 79
        %v8120 = vpop.permute.xlu0 %8119
        %8121 = vrot.lane.b32.xlu0 %v8084, 79
        %v8122 = vpop.permute.xlu0 %8121
        %8123 = vrot.lane.b32.xlu0 %v8085, 79
        %v8124 = vpop.permute.xlu0 %8123
        %8125 = vrot.lane.b32.xlu0 %v8086, 79
        %v8126 = vpop.permute.xlu0 %8125
        %8127 = vrot.lane.b32.xlu0 %v8087, 79
        %v8128 = vpop.permute.xlu0 %8127
        %8129 = vrot.lane.b32.xlu0 %v8088, 79
        %v8130 = vpop.permute.xlu0 %8129
        %8131 = vrot.lane.b32.xlu0 %v8089, 79
        %v8132 = vpop.permute.xlu0 %8131
        %8133 = vrot.lane.b32.xlu0 %v8090, 79
        %v8134 = vpop.permute.xlu0 %8133
        %8135 = vrot.lane.b32.xlu0 %v8091, 79
        %v8136 = vpop.permute.xlu0 %8135
        %8137 = vrot.lane.b32.xlu0 %v8092, 79
        %v8138 = vpop.permute.xlu0 %8137
        %8139 = vrot.lane.b32.xlu0 %v8093, 79
        %v8140 = vpop.permute.xlu0 %8139
        %8141 = vrot.lane.b32.xlu0 %v8094, 79
        %v8142 = vpop.permute.xlu0 %8141
        %v8143 = vsel %vm3648, %v8112, %v8114
        %v8144 = vsel %vm3648, %v8114, %v8116
        %v8145 = vsel %vm3648, %v8116, %v8118
        %v8146 = vsel %vm3648, %v8120, %v8122
        %v8147 = vsel %vm3648, %v8122, %v8124
        %v8148 = vsel %vm3648, %v8124, %v8126
        %v8149 = vsel %vm3648, %v8128, %v8130
        %v8150 = vsel %vm3648, %v8130, %v8132
        %v8151 = vsel %vm3648, %v8132, %v8134
        %v8152 = vsel %vm3648, %v8136, %v8138
        %v8153 = vsel %vm3648, %v8138, %v8140
        %v8154 = vsel %vm3648, %v8140, %v8142
        %v8171 = vadd.f32 %v7923, %v8112
        %v8172 = vadd.f32 %v7924, %v8143
        %v8173 = vadd.f32 %v7925, %v8144
        %v8174 = vadd.f32 %v7926, %v8145
        %v8175 = vadd.f32 %v7927, %v8120
        %v8176 = vadd.f32 %v7928, %v8146
        %v8177 = vadd.f32 %v7929, %v8147
        %v8178 = vadd.f32 %v7930, %v8148
        %v8179 = vadd.f32 %v7931, %v8128
        %v8180 = vadd.f32 %v7932, %v8149
        %v8181 = vadd.f32 %v7933, %v8150
        %v8182 = vadd.f32 %v7934, %v8151
        %v8183 = vadd.f32 %v7935, %v8136
        %v8184 = vadd.f32 %v7936, %v8152
        %v8185 = vadd.f32 %v7937, %v8153
        %v8186 = vadd.f32 %v7938, %v8154
        %8187 = vset.pattern.permute.xlu0 18
        %8188 = vperm.xlu0 %8187, %v5111
        %v8189 = vpop.permute.xlu0 %8188
        %8191 = vset.pattern.permute.xlu0 18
        %8192 = vperm.xlu0 %8191, %v5112
        %v8193 = vpop.permute.xlu0 %8192
        %8195 = vset.pattern.permute.xlu0 18
        %8196 = vperm.xlu0 %8195, %v5113
        %v8197 = vpop.permute.xlu0 %8196
        %8199 = vset.pattern.permute.xlu0 18
        %8200 = vperm.xlu0 %8199, %v5114
        %v8201 = vpop.permute.xlu0 %8200
        %v8203 = vmul.f32 %v8189, %v7179
        %v8204 = vmul.f32 %v8189, %v7180
        %v8205 = vmul.f32 %v8189, %v7181
        %v8206 = vmul.f32 %v8189, %v7182
        %v8207 = vmul.f32 %v8193, %v7183
        %v8208 = vmul.f32 %v8193, %v7184
        %v8209 = vmul.f32 %v8193, %v7185
        %v8210 = vmul.f32 %v8193, %v7186
        %v8211 = vmul.f32 %v8197, %v7187
        %v8212 = vmul.f32 %v8197, %v7188
        %v8213 = vmul.f32 %v8197, %v7189
        %v8214 = vmul.f32 %v8197, %v7190
        %v8215 = vmul.f32 %v8201, %v7191
        %v8216 = vmul.f32 %v8201, %v7192
        %v8217 = vmul.f32 %v8201, %v7193
        %v8218 = vmul.f32 %v8201, %v7194
        %8235 = vrot.lane.b32.xlu0 %v8203, 53
        %v8236 = vpop.permute.xlu0 %8235
        %8237 = vrot.lane.b32.xlu0 %v8204, 53
        %v8238 = vpop.permute.xlu0 %8237
        %8239 = vrot.lane.b32.xlu0 %v8205, 53
        %v8240 = vpop.permute.xlu0 %8239
        %8241 = vrot.lane.b32.xlu0 %v8206, 53
        %v8242 = vpop.permute.xlu0 %8241
        %8243 = vrot.lane.b32.xlu0 %v8207, 53
        %v8244 = vpop.permute.xlu0 %8243
        %8245 = vrot.lane.b32.xlu0 %v8208, 53
        %v8246 = vpop.permute.xlu0 %8245
        %8247 = vrot.lane.b32.xlu0 %v8209, 53
        %v8248 = vpop.permute.xlu0 %8247
        %8249 = vrot.lane.b32.xlu0 %v8210, 53
        %v8250 = vpop.permute.xlu0 %8249
        %8251 = vrot.lane.b32.xlu0 %v8211, 53
        %v8252 = vpop.permute.xlu0 %8251
        %8253 = vrot.lane.b32.xlu0 %v8212, 53
        %v8254 = vpop.permute.xlu0 %8253
        %8255 = vrot.lane.b32.xlu0 %v8213, 53
        %v8256 = vpop.permute.xlu0 %8255
        %8257 = vrot.lane.b32.xlu0 %v8214, 53
        %v8258 = vpop.permute.xlu0 %8257
        %8259 = vrot.lane.b32.xlu0 %v8215, 53
        %v8260 = vpop.permute.xlu0 %8259
        %8261 = vrot.lane.b32.xlu0 %v8216, 53
        %v8262 = vpop.permute.xlu0 %8261
        %8263 = vrot.lane.b32.xlu0 %v8217, 53
        %v8264 = vpop.permute.xlu0 %8263
        %8265 = vrot.lane.b32.xlu0 %v8218, 53
        %v8266 = vpop.permute.xlu0 %8265
        %v8267 = vsel %vm2069, %v8236, %v8238
        %v8268 = vsel %vm2069, %v8238, %v8240
        %v8269 = vsel %vm2069, %v8240, %v8242
        %v8270 = vsel %vm2069, %v8244, %v8246
        %v8271 = vsel %vm2069, %v8246, %v8248
        %v8272 = vsel %vm2069, %v8248, %v8250
        %v8273 = vsel %vm2069, %v8252, %v8254
        %v8274 = vsel %vm2069, %v8254, %v8256
        %v8275 = vsel %vm2069, %v8256, %v8258
        %v8276 = vsel %vm2069, %v8260, %v8262
        %v8277 = vsel %vm2069, %v8262, %v8264
        %v8278 = vsel %vm2069, %v8264, %v8266
        %v8295 = vadd.f32 %v8047, %v8236
        %v8296 = vadd.f32 %v8048, %v8267
        %v8297 = vadd.f32 %v8049, %v8268
        %v8298 = vadd.f32 %v8050, %v8269
        %v8299 = vadd.f32 %v8051, %v8244
        %v8300 = vadd.f32 %v8052, %v8270
        %v8301 = vadd.f32 %v8053, %v8271
        %v8302 = vadd.f32 %v8054, %v8272
        %v8303 = vadd.f32 %v8055, %v8252
        %v8304 = vadd.f32 %v8056, %v8273
        %v8305 = vadd.f32 %v8057, %v8274
        %v8306 = vadd.f32 %v8058, %v8275
        %v8307 = vadd.f32 %v8059, %v8260
        %v8308 = vadd.f32 %v8060, %v8276
        %v8309 = vadd.f32 %v8061, %v8277
        %v8310 = vadd.f32 %v8062, %v8278
        %8311 = vset.pattern.permute.xlu0 8
        %8312 = vperm.xlu0 %8311, %v5107
        %v8313 = vpop.permute.xlu0 %8312
        %8315 = vset.pattern.permute.xlu0 8
        %8316 = vperm.xlu0 %8315, %v5108
        %v8317 = vpop.permute.xlu0 %8316
        %8319 = vset.pattern.permute.xlu0 8
        %8320 = vperm.xlu0 %8319, %v5109
        %v8321 = vpop.permute.xlu0 %8320
        %8323 = vset.pattern.permute.xlu0 8
        %8324 = vperm.xlu0 %8323, %v5110
        %v8325 = vpop.permute.xlu0 %8324
        %v8327 = vmul.f32 %v8313, %v7179
        %v8328 = vmul.f32 %v8313, %v7180
        %v8329 = vmul.f32 %v8313, %v7181
        %v8330 = vmul.f32 %v8313, %v7182
        %v8331 = vmul.f32 %v8317, %v7183
        %v8332 = vmul.f32 %v8317, %v7184
        %v8333 = vmul.f32 %v8317, %v7185
        %v8334 = vmul.f32 %v8317, %v7186
        %v8335 = vmul.f32 %v8321, %v7187
        %v8336 = vmul.f32 %v8321, %v7188
        %v8337 = vmul.f32 %v8321, %v7189
        %v8338 = vmul.f32 %v8321, %v7190
        %v8339 = vmul.f32 %v8325, %v7191
        %v8340 = vmul.f32 %v8325, %v7192
        %v8341 = vmul.f32 %v8325, %v7193
        %v8342 = vmul.f32 %v8325, %v7194
        %8359 = vrot.lane.b32.xlu0 %v8327, 78
        %v8360 = vpop.permute.xlu0 %8359
        %8361 = vrot.lane.b32.xlu0 %v8328, 78
        %v8362 = vpop.permute.xlu0 %8361
        %8363 = vrot.lane.b32.xlu0 %v8329, 78
        %v8364 = vpop.permute.xlu0 %8363
        %8365 = vrot.lane.b32.xlu0 %v8330, 78
        %v8366 = vpop.permute.xlu0 %8365
        %8367 = vrot.lane.b32.xlu0 %v8331, 78
        %v8368 = vpop.permute.xlu0 %8367
        %8369 = vrot.lane.b32.xlu0 %v8332, 78
        %v8370 = vpop.permute.xlu0 %8369
        %8371 = vrot.lane.b32.xlu0 %v8333, 78
        %v8372 = vpop.permute.xlu0 %8371
        %8373 = vrot.lane.b32.xlu0 %v8334, 78
        %v8374 = vpop.permute.xlu0 %8373
        %8375 = vrot.lane.b32.xlu0 %v8335, 78
        %v8376 = vpop.permute.xlu0 %8375
        %8377 = vrot.lane.b32.xlu0 %v8336, 78
        %v8378 = vpop.permute.xlu0 %8377
        %8379 = vrot.lane.b32.xlu0 %v8337, 78
        %v8380 = vpop.permute.xlu0 %8379
        %8381 = vrot.lane.b32.xlu0 %v8338, 78
        %v8382 = vpop.permute.xlu0 %8381
        %8383 = vrot.lane.b32.xlu0 %v8339, 78
        %v8384 = vpop.permute.xlu0 %8383
        %8385 = vrot.lane.b32.xlu0 %v8340, 78
        %v8386 = vpop.permute.xlu0 %8385
        %8387 = vrot.lane.b32.xlu0 %v8341, 78
        %v8388 = vpop.permute.xlu0 %8387
        %8389 = vrot.lane.b32.xlu0 %v8342, 78
        %v8390 = vpop.permute.xlu0 %8389
        %v8391 = vsel %vm3680, %v8360, %v8362
        %v8392 = vsel %vm3680, %v8362, %v8364
        %v8393 = vsel %vm3680, %v8364, %v8366
        %v8394 = vsel %vm3680, %v8368, %v8370
        %v8395 = vsel %vm3680, %v8370, %v8372
        %v8396 = vsel %vm3680, %v8372, %v8374
        %v8397 = vsel %vm3680, %v8376, %v8378
        %v8398 = vsel %vm3680, %v8378, %v8380
        %v8399 = vsel %vm3680, %v8380, %v8382
        %v8400 = vsel %vm3680, %v8384, %v8386
        %v8401 = vsel %vm3680, %v8386, %v8388
        %v8402 = vsel %vm3680, %v8388, %v8390
        %v8419 = vadd.f32 %v8171, %v8360
        %v8420 = vadd.f32 %v8172, %v8391
        %v8421 = vadd.f32 %v8173, %v8392
        %v8422 = vadd.f32 %v8174, %v8393
        %v8423 = vadd.f32 %v8175, %v8368
        %v8424 = vadd.f32 %v8176, %v8394
        %v8425 = vadd.f32 %v8177, %v8395
        %v8426 = vadd.f32 %v8178, %v8396
        %v8427 = vadd.f32 %v8179, %v8376
        %v8428 = vadd.f32 %v8180, %v8397
        %v8429 = vadd.f32 %v8181, %v8398
        %v8430 = vadd.f32 %v8182, %v8399
        %v8431 = vadd.f32 %v8183, %v8384
        %v8432 = vadd.f32 %v8184, %v8400
        %v8433 = vadd.f32 %v8185, %v8401
        %v8434 = vadd.f32 %v8186, %v8402
        %8435 = vset.pattern.permute.xlu0 19
        %8436 = vperm.xlu0 %8435, %v5111
        %v8437 = vpop.permute.xlu0 %8436
        %8439 = vset.pattern.permute.xlu0 19
        %8440 = vperm.xlu0 %8439, %v5112
        %v8441 = vpop.permute.xlu0 %8440
        %8443 = vset.pattern.permute.xlu0 19
        %8444 = vperm.xlu0 %8443, %v5113
        %v8445 = vpop.permute.xlu0 %8444
        %8447 = vset.pattern.permute.xlu0 19
        %8448 = vperm.xlu0 %8447, %v5114
        %v8449 = vpop.permute.xlu0 %8448
        %v8451 = vmul.f32 %v8437, %v7179
        %v8452 = vmul.f32 %v8437, %v7180
        %v8453 = vmul.f32 %v8437, %v7181
        %v8454 = vmul.f32 %v8437, %v7182
        %v8455 = vmul.f32 %v8441, %v7183
        %v8456 = vmul.f32 %v8441, %v7184
        %v8457 = vmul.f32 %v8441, %v7185
        %v8458 = vmul.f32 %v8441, %v7186
        %v8459 = vmul.f32 %v8445, %v7187
        %v8460 = vmul.f32 %v8445, %v7188
        %v8461 = vmul.f32 %v8445, %v7189
        %v8462 = vmul.f32 %v8445, %v7190
        %v8463 = vmul.f32 %v8449, %v7191
        %v8464 = vmul.f32 %v8449, %v7192
        %v8465 = vmul.f32 %v8449, %v7193
        %v8466 = vmul.f32 %v8449, %v7194
        %8483 = vrot.lane.b32.xlu0 %v8451, 52
        %v8484 = vpop.permute.xlu0 %8483
        %8485 = vrot.lane.b32.xlu0 %v8452, 52
        %v8486 = vpop.permute.xlu0 %8485
        %8487 = vrot.lane.b32.xlu0 %v8453, 52
        %v8488 = vpop.permute.xlu0 %8487
        %8489 = vrot.lane.b32.xlu0 %v8454, 52
        %v8490 = vpop.permute.xlu0 %8489
        %8491 = vrot.lane.b32.xlu0 %v8455, 52
        %v8492 = vpop.permute.xlu0 %8491
        %8493 = vrot.lane.b32.xlu0 %v8456, 52
        %v8494 = vpop.permute.xlu0 %8493
        %8495 = vrot.lane.b32.xlu0 %v8457, 52
        %v8496 = vpop.permute.xlu0 %8495
        %8497 = vrot.lane.b32.xlu0 %v8458, 52
        %v8498 = vpop.permute.xlu0 %8497
        %8499 = vrot.lane.b32.xlu0 %v8459, 52
        %v8500 = vpop.permute.xlu0 %8499
        %8501 = vrot.lane.b32.xlu0 %v8460, 52
        %v8502 = vpop.permute.xlu0 %8501
        %8503 = vrot.lane.b32.xlu0 %v8461, 52
        %v8504 = vpop.permute.xlu0 %8503
        %8505 = vrot.lane.b32.xlu0 %v8462, 52
        %v8506 = vpop.permute.xlu0 %8505
        %8507 = vrot.lane.b32.xlu0 %v8463, 52
        %v8508 = vpop.permute.xlu0 %8507
        %8509 = vrot.lane.b32.xlu0 %v8464, 52
        %v8510 = vpop.permute.xlu0 %8509
        %8511 = vrot.lane.b32.xlu0 %v8465, 52
        %v8512 = vpop.permute.xlu0 %8511
        %8513 = vrot.lane.b32.xlu0 %v8466, 52
        %v8514 = vpop.permute.xlu0 %8513
        %v8515 = vsel %vm2101, %v8484, %v8486
        %v8516 = vsel %vm2101, %v8486, %v8488
        %v8517 = vsel %vm2101, %v8488, %v8490
        %v8518 = vsel %vm2101, %v8492, %v8494
        %v8519 = vsel %vm2101, %v8494, %v8496
        %v8520 = vsel %vm2101, %v8496, %v8498
        %v8521 = vsel %vm2101, %v8500, %v8502
        %v8522 = vsel %vm2101, %v8502, %v8504
        %v8523 = vsel %vm2101, %v8504, %v8506
        %v8524 = vsel %vm2101, %v8508, %v8510
        %v8525 = vsel %vm2101, %v8510, %v8512
        %v8526 = vsel %vm2101, %v8512, %v8514
        %v8543 = vadd.f32 %v8295, %v8484
        %v8544 = vadd.f32 %v8296, %v8515
        %v8545 = vadd.f32 %v8297, %v8516
        %v8546 = vadd.f32 %v8298, %v8517
        %v8547 = vadd.f32 %v8299, %v8492
        %v8548 = vadd.f32 %v8300, %v8518
        %v8549 = vadd.f32 %v8301, %v8519
        %v8550 = vadd.f32 %v8302, %v8520
        %v8551 = vadd.f32 %v8303, %v8500
        %v8552 = vadd.f32 %v8304, %v8521
        %v8553 = vadd.f32 %v8305, %v8522
        %v8554 = vadd.f32 %v8306, %v8523
        %v8555 = vadd.f32 %v8307, %v8508
        %v8556 = vadd.f32 %v8308, %v8524
        %v8557 = vadd.f32 %v8309, %v8525
        %v8558 = vadd.f32 %v8310, %v8526
        %8559 = vset.pattern.permute.xlu0 20
        %8560 = vperm.xlu0 %8559, %v5111
        %v8561 = vpop.permute.xlu0 %8560
        %8563 = vset.pattern.permute.xlu0 20
        %8564 = vperm.xlu0 %8563, %v5112
        %v8565 = vpop.permute.xlu0 %8564
        %8567 = vset.pattern.permute.xlu0 20
        %8568 = vperm.xlu0 %8567, %v5113
        %v8569 = vpop.permute.xlu0 %8568
        %8571 = vset.pattern.permute.xlu0 20
        %8572 = vperm.xlu0 %8571, %v5114
        %v8573 = vpop.permute.xlu0 %8572
        %v8575 = vmul.f32 %v8561, %v7179
        %v8576 = vmul.f32 %v8561, %v7180
        %v8577 = vmul.f32 %v8561, %v7181
        %v8578 = vmul.f32 %v8561, %v7182
        %v8579 = vmul.f32 %v8565, %v7183
        %v8580 = vmul.f32 %v8565, %v7184
        %v8581 = vmul.f32 %v8565, %v7185
        %v8582 = vmul.f32 %v8565, %v7186
        %v8583 = vmul.f32 %v8569, %v7187
        %v8584 = vmul.f32 %v8569, %v7188
        %v8585 = vmul.f32 %v8569, %v7189
        %v8586 = vmul.f32 %v8569, %v7190
        %v8587 = vmul.f32 %v8573, %v7191
        %v8588 = vmul.f32 %v8573, %v7192
        %v8589 = vmul.f32 %v8573, %v7193
        %v8590 = vmul.f32 %v8573, %v7194
        %8607 = vrot.lane.b32.xlu0 %v8575, 32
        %v8608 = vpop.permute.xlu0 %8607
        %8609 = vrot.lane.b32.xlu0 %v8576, 32
        %v8610 = vpop.permute.xlu0 %8609
        %8611 = vrot.lane.b32.xlu0 %v8577, 32
        %v8612 = vpop.permute.xlu0 %8611
        %8613 = vrot.lane.b32.xlu0 %v8578, 32
        %v8614 = vpop.permute.xlu0 %8613
        %8615 = vrot.lane.b32.xlu0 %v8579, 32
        %v8616 = vpop.permute.xlu0 %8615
        %8617 = vrot.lane.b32.xlu0 %v8580, 32
        %v8618 = vpop.permute.xlu0 %8617
        %8619 = vrot.lane.b32.xlu0 %v8581, 32
        %v8620 = vpop.permute.xlu0 %8619
        %8621 = vrot.lane.b32.xlu0 %v8582, 32
        %v8622 = vpop.permute.xlu0 %8621
        %8623 = vrot.lane.b32.xlu0 %v8583, 32
        %v8624 = vpop.permute.xlu0 %8623
        %8625 = vrot.lane.b32.xlu0 %v8584, 32
        %v8626 = vpop.permute.xlu0 %8625
        %8627 = vrot.lane.b32.xlu0 %v8585, 32
        %v8628 = vpop.permute.xlu0 %8627
        %8629 = vrot.lane.b32.xlu0 %v8586, 32
        %v8630 = vpop.permute.xlu0 %8629
        %8631 = vrot.lane.b32.xlu0 %v8587, 32
        %v8632 = vpop.permute.xlu0 %8631
        %8633 = vrot.lane.b32.xlu0 %v8588, 32
        %v8634 = vpop.permute.xlu0 %8633
        %8635 = vrot.lane.b32.xlu0 %v8589, 32
        %v8636 = vpop.permute.xlu0 %8635
        %8637 = vrot.lane.b32.xlu0 %v8590, 32
        %v8638 = vpop.permute.xlu0 %8637
        %v8639 = vsel %vm687, %v8608, %v8610
        %v8640 = vsel %vm687, %v8610, %v8612
        %v8641 = vsel %vm687, %v8612, %v8614
        %v8642 = vsel %vm687, %v8616, %v8618
        %v8643 = vsel %vm687, %v8618, %v8620
        %v8644 = vsel %vm687, %v8620, %v8622
        %v8645 = vsel %vm687, %v8624, %v8626
        %v8646 = vsel %vm687, %v8626, %v8628
        %v8647 = vsel %vm687, %v8628, %v8630
        %v8648 = vsel %vm687, %v8632, %v8634
        %v8649 = vsel %vm687, %v8634, %v8636
        %v8650 = vsel %vm687, %v8636, %v8638
        %v8667 = vadd.f32 %v8543, %v8608
        %v8668 = vadd.f32 %v8544, %v8639
        %v8669 = vadd.f32 %v8545, %v8640
        %v8670 = vadd.f32 %v8546, %v8641
        %v8671 = vadd.f32 %v8547, %v8616
        %v8672 = vadd.f32 %v8548, %v8642
        %v8673 = vadd.f32 %v8549, %v8643
        %v8674 = vadd.f32 %v8550, %v8644
        %v8675 = vadd.f32 %v8551, %v8624
        %v8676 = vadd.f32 %v8552, %v8645
        %v8677 = vadd.f32 %v8553, %v8646
        %v8678 = vadd.f32 %v8554, %v8647
        %v8679 = vadd.f32 %v8555, %v8632
        %v8680 = vadd.f32 %v8556, %v8648
        %v8681 = vadd.f32 %v8557, %v8649
        %v8682 = vadd.f32 %v8558, %v8650
        %8683 = vset.pattern.permute.xlu0 21
        %8684 = vperm.xlu0 %8683, %v5111
        %v8685 = vpop.permute.xlu0 %8684
        %8687 = vset.pattern.permute.xlu0 21
        %8688 = vperm.xlu0 %8687, %v5112
        %v8689 = vpop.permute.xlu0 %8688
        %8691 = vset.pattern.permute.xlu0 21
        %8692 = vperm.xlu0 %8691, %v5113
        %v8693 = vpop.permute.xlu0 %8692
        %8695 = vset.pattern.permute.xlu0 21
        %8696 = vperm.xlu0 %8695, %v5114
        %v8697 = vpop.permute.xlu0 %8696
        %v8699 = vmul.f32 %v8685, %v7179
        %v8700 = vmul.f32 %v8685, %v7180
        %v8701 = vmul.f32 %v8685, %v7181
        %v8702 = vmul.f32 %v8685, %v7182
        %v8703 = vmul.f32 %v8689, %v7183
        %v8704 = vmul.f32 %v8689, %v7184
        %v8705 = vmul.f32 %v8689, %v7185
        %v8706 = vmul.f32 %v8689, %v7186
        %v8707 = vmul.f32 %v8693, %v7187
        %v8708 = vmul.f32 %v8693, %v7188
        %v8709 = vmul.f32 %v8693, %v7189
        %v8710 = vmul.f32 %v8693, %v7190
        %v8711 = vmul.f32 %v8697, %v7191
        %v8712 = vmul.f32 %v8697, %v7192
        %v8713 = vmul.f32 %v8697, %v7193
        %v8714 = vmul.f32 %v8697, %v7194
        %8731 = vrot.lane.b32.xlu0 %v8699, 31
        %v8732 = vpop.permute.xlu0 %8731
        %8733 = vrot.lane.b32.xlu0 %v8700, 31
        %v8734 = vpop.permute.xlu0 %8733
        %8735 = vrot.lane.b32.xlu0 %v8701, 31
        %v8736 = vpop.permute.xlu0 %8735
        %8737 = vrot.lane.b32.xlu0 %v8702, 31
        %v8738 = vpop.permute.xlu0 %8737
        %8739 = vrot.lane.b32.xlu0 %v8703, 31
        %v8740 = vpop.permute.xlu0 %8739
        %8741 = vrot.lane.b32.xlu0 %v8704, 31
        %v8742 = vpop.permute.xlu0 %8741
        %8743 = vrot.lane.b32.xlu0 %v8705, 31
        %v8744 = vpop.permute.xlu0 %8743
        %8745 = vrot.lane.b32.xlu0 %v8706, 31
        %v8746 = vpop.permute.xlu0 %8745
        %8747 = vrot.lane.b32.xlu0 %v8707, 31
        %v8748 = vpop.permute.xlu0 %8747
        %8749 = vrot.lane.b32.xlu0 %v8708, 31
        %v8750 = vpop.permute.xlu0 %8749
        %8751 = vrot.lane.b32.xlu0 %v8709, 31
        %v8752 = vpop.permute.xlu0 %8751
        %8753 = vrot.lane.b32.xlu0 %v8710, 31
        %v8754 = vpop.permute.xlu0 %8753
        %8755 = vrot.lane.b32.xlu0 %v8711, 31
        %v8756 = vpop.permute.xlu0 %8755
        %8757 = vrot.lane.b32.xlu0 %v8712, 31
        %v8758 = vpop.permute.xlu0 %8757
        %8759 = vrot.lane.b32.xlu0 %v8713, 31
        %v8760 = vpop.permute.xlu0 %8759
        %8761 = vrot.lane.b32.xlu0 %v8714, 31
        %v8762 = vpop.permute.xlu0 %8761
        %v8763 = vsel %vm4345, %v8732, %v8734
        %v8764 = vsel %vm4345, %v8734, %v8736
        %v8765 = vsel %vm4345, %v8736, %v8738
        %v8766 = vsel %vm4345, %v8740, %v8742
        %v8767 = vsel %vm4345, %v8742, %v8744
        %v8768 = vsel %vm4345, %v8744, %v8746
        %v8769 = vsel %vm4345, %v8748, %v8750
        %v8770 = vsel %vm4345, %v8750, %v8752
        %v8771 = vsel %vm4345, %v8752, %v8754
        %v8772 = vsel %vm4345, %v8756, %v8758
        %v8773 = vsel %vm4345, %v8758, %v8760
        %v8774 = vsel %vm4345, %v8760, %v8762
        %v8791 = vadd.f32 %v8667, %v8732
        %v8792 = vadd.f32 %v8668, %v8763
        %v8793 = vadd.f32 %v8669, %v8764
        %v8794 = vadd.f32 %v8670, %v8765
        %v8795 = vadd.f32 %v8671, %v8740
        %v8796 = vadd.f32 %v8672, %v8766
        %v8797 = vadd.f32 %v8673, %v8767
        %v8798 = vadd.f32 %v8674, %v8768
        %v8799 = vadd.f32 %v8675, %v8748
        %v8800 = vadd.f32 %v8676, %v8769
        %v8801 = vadd.f32 %v8677, %v8770
        %v8802 = vadd.f32 %v8678, %v8771
        %v8803 = vadd.f32 %v8679, %v8756
        %v8804 = vadd.f32 %v8680, %v8772
        %v8805 = vadd.f32 %v8681, %v8773
        %v8806 = vadd.f32 %v8682, %v8774
        %8807 = vset.pattern.permute.xlu0 22
        %8808 = vperm.xlu0 %8807, %v5111
        %v8809 = vpop.permute.xlu0 %8808
        %8811 = vset.pattern.permute.xlu0 22
        %8812 = vperm.xlu0 %8811, %v5112
        %v8813 = vpop.permute.xlu0 %8812
        %8815 = vset.pattern.permute.xlu0 22
        %8816 = vperm.xlu0 %8815, %v5113
        %v8817 = vpop.permute.xlu0 %8816
        %8819 = vset.pattern.permute.xlu0 22
        %8820 = vperm.xlu0 %8819, %v5114
        %v8821 = vpop.permute.xlu0 %8820
        %v8823 = vmul.f32 %v8809, %v7179
        %v8824 = vmul.f32 %v8809, %v7180
        %v8825 = vmul.f32 %v8809, %v7181
        %v8826 = vmul.f32 %v8809, %v7182
        %v8827 = vmul.f32 %v8813, %v7183
        %v8828 = vmul.f32 %v8813, %v7184
        %v8829 = vmul.f32 %v8813, %v7185
        %v8830 = vmul.f32 %v8813, %v7186
        %v8831 = vmul.f32 %v8817, %v7187
        %v8832 = vmul.f32 %v8817, %v7188
        %v8833 = vmul.f32 %v8817, %v7189
        %v8834 = vmul.f32 %v8817, %v7190
        %v8835 = vmul.f32 %v8821, %v7191
        %v8836 = vmul.f32 %v8821, %v7192
        %v8837 = vmul.f32 %v8821, %v7193
        %v8838 = vmul.f32 %v8821, %v7194
        %8855 = vrot.lane.b32.xlu0 %v8823, 30
        %v8856 = vpop.permute.xlu0 %8855
        %8857 = vrot.lane.b32.xlu0 %v8824, 30
        %v8858 = vpop.permute.xlu0 %8857
        %8859 = vrot.lane.b32.xlu0 %v8825, 30
        %v8860 = vpop.permute.xlu0 %8859
        %8861 = vrot.lane.b32.xlu0 %v8826, 30
        %v8862 = vpop.permute.xlu0 %8861
        %8863 = vrot.lane.b32.xlu0 %v8827, 30
        %v8864 = vpop.permute.xlu0 %8863
        %8865 = vrot.lane.b32.xlu0 %v8828, 30
        %v8866 = vpop.permute.xlu0 %8865
        %8867 = vrot.lane.b32.xlu0 %v8829, 30
        %v8868 = vpop.permute.xlu0 %8867
        %8869 = vrot.lane.b32.xlu0 %v8830, 30
        %v8870 = vpop.permute.xlu0 %8869
        %8871 = vrot.lane.b32.xlu0 %v8831, 30
        %v8872 = vpop.permute.xlu0 %8871
        %8873 = vrot.lane.b32.xlu0 %v8832, 30
        %v8874 = vpop.permute.xlu0 %8873
        %8875 = vrot.lane.b32.xlu0 %v8833, 30
        %v8876 = vpop.permute.xlu0 %8875
        %8877 = vrot.lane.b32.xlu0 %v8834, 30
        %v8878 = vpop.permute.xlu0 %8877
        %8879 = vrot.lane.b32.xlu0 %v8835, 30
        %v8880 = vpop.permute.xlu0 %8879
        %8881 = vrot.lane.b32.xlu0 %v8836, 30
        %v8882 = vpop.permute.xlu0 %8881
        %8883 = vrot.lane.b32.xlu0 %v8837, 30
        %v8884 = vpop.permute.xlu0 %8883
        %8885 = vrot.lane.b32.xlu0 %v8838, 30
        %v8886 = vpop.permute.xlu0 %8885
        %v8887 = vsel %vm4377, %v8856, %v8858
        %v8888 = vsel %vm4377, %v8858, %v8860
        %v8889 = vsel %vm4377, %v8860, %v8862
        %v8890 = vsel %vm4377, %v8864, %v8866
        %v8891 = vsel %vm4377, %v8866, %v8868
        %v8892 = vsel %vm4377, %v8868, %v8870
        %v8893 = vsel %vm4377, %v8872, %v8874
        %v8894 = vsel %vm4377, %v8874, %v8876
        %v8895 = vsel %vm4377, %v8876, %v8878
        %v8896 = vsel %vm4377, %v8880, %v8882
        %v8897 = vsel %vm4377, %v8882, %v8884
        %v8898 = vsel %vm4377, %v8884, %v8886
        %v8915 = vadd.f32 %v8791, %v8856
        %v8916 = vadd.f32 %v8792, %v8887
        %v8917 = vadd.f32 %v8793, %v8888
        %v8918 = vadd.f32 %v8794, %v8889
        %v8919 = vadd.f32 %v8795, %v8864
        %v8920 = vadd.f32 %v8796, %v8890
        %v8921 = vadd.f32 %v8797, %v8891
        %v8922 = vadd.f32 %v8798, %v8892
        %v8923 = vadd.f32 %v8799, %v8872
        %v8924 = vadd.f32 %v8800, %v8893
        %v8925 = vadd.f32 %v8801, %v8894
        %v8926 = vadd.f32 %v8802, %v8895
        %v8927 = vadd.f32 %v8803, %v8880
        %v8928 = vadd.f32 %v8804, %v8896
        %v8929 = vadd.f32 %v8805, %v8897
        %v8930 = vadd.f32 %v8806, %v8898
        %8931 = vset.pattern.permute.xlu0 23
        %8932 = vperm.xlu0 %8931, %v5111
        %v8933 = vpop.permute.xlu0 %8932
        %8935 = vset.pattern.permute.xlu0 23
        %8936 = vperm.xlu0 %8935, %v5112
        %v8937 = vpop.permute.xlu0 %8936
        %8939 = vset.pattern.permute.xlu0 23
        %8940 = vperm.xlu0 %8939, %v5113
        %v8941 = vpop.permute.xlu0 %8940
        %8943 = vset.pattern.permute.xlu0 23
        %8944 = vperm.xlu0 %8943, %v5114
        %v8945 = vpop.permute.xlu0 %8944
        %v8947 = vmul.f32 %v8933, %v7179
        %v8948 = vmul.f32 %v8933, %v7180
        %v8949 = vmul.f32 %v8933, %v7181
        %v8950 = vmul.f32 %v8933, %v7182
        %v8951 = vmul.f32 %v8937, %v7183
        %v8952 = vmul.f32 %v8937, %v7184
        %v8953 = vmul.f32 %v8937, %v7185
        %v8954 = vmul.f32 %v8937, %v7186
        %v8955 = vmul.f32 %v8941, %v7187
        %v8956 = vmul.f32 %v8941, %v7188
        %v8957 = vmul.f32 %v8941, %v7189
        %v8958 = vmul.f32 %v8941, %v7190
        %v8959 = vmul.f32 %v8945, %v7191
        %v8960 = vmul.f32 %v8945, %v7192
        %v8961 = vmul.f32 %v8945, %v7193
        %v8962 = vmul.f32 %v8945, %v7194
        %8979 = vrot.lane.b32.xlu0 %v8947, 29
        %v8980 = vpop.permute.xlu0 %8979
        %8981 = vrot.lane.b32.xlu0 %v8948, 29
        %v8982 = vpop.permute.xlu0 %8981
        %8983 = vrot.lane.b32.xlu0 %v8949, 29
        %v8984 = vpop.permute.xlu0 %8983
        %8985 = vrot.lane.b32.xlu0 %v8950, 29
        %v8986 = vpop.permute.xlu0 %8985
        %8987 = vrot.lane.b32.xlu0 %v8951, 29
        %v8988 = vpop.permute.xlu0 %8987
        %8989 = vrot.lane.b32.xlu0 %v8952, 29
        %v8990 = vpop.permute.xlu0 %8989
        %8991 = vrot.lane.b32.xlu0 %v8953, 29
        %v8992 = vpop.permute.xlu0 %8991
        %8993 = vrot.lane.b32.xlu0 %v8954, 29
        %v8994 = vpop.permute.xlu0 %8993
        %8995 = vrot.lane.b32.xlu0 %v8955, 29
        %v8996 = vpop.permute.xlu0 %8995
        %8997 = vrot.lane.b32.xlu0 %v8956, 29
        %v8998 = vpop.permute.xlu0 %8997
        %8999 = vrot.lane.b32.xlu0 %v8957, 29
        %v9000 = vpop.permute.xlu0 %8999
        %9001 = vrot.lane.b32.xlu0 %v8958, 29
        %v9002 = vpop.permute.xlu0 %9001
        %9003 = vrot.lane.b32.xlu0 %v8959, 29
        %v9004 = vpop.permute.xlu0 %9003
        %9005 = vrot.lane.b32.xlu0 %v8960, 29
        %v9006 = vpop.permute.xlu0 %9005
        %9007 = vrot.lane.b32.xlu0 %v8961, 29
        %v9008 = vpop.permute.xlu0 %9007
        %9009 = vrot.lane.b32.xlu0 %v8962, 29
        %v9010 = vpop.permute.xlu0 %9009
        %v9011 = vsel %vm2421, %v8980, %v8982
        %v9012 = vsel %vm2421, %v8982, %v8984
        %v9013 = vsel %vm2421, %v8984, %v8986
        %v9014 = vsel %vm2421, %v8988, %v8990
        %v9015 = vsel %vm2421, %v8990, %v8992
        %v9016 = vsel %vm2421, %v8992, %v8994
        %v9017 = vsel %vm2421, %v8996, %v8998
        %v9018 = vsel %vm2421, %v8998, %v9000
        %v9019 = vsel %vm2421, %v9000, %v9002
        %v9020 = vsel %vm2421, %v9004, %v9006
        %v9021 = vsel %vm2421, %v9006, %v9008
        %v9022 = vsel %vm2421, %v9008, %v9010
        %v9039 = vadd.f32 %v8915, %v8980
        %v9040 = vadd.f32 %v8916, %v9011
        %v9041 = vadd.f32 %v8917, %v9012
        %v9042 = vadd.f32 %v8918, %v9013
        %v9043 = vadd.f32 %v8919, %v8988
        %v9044 = vadd.f32 %v8920, %v9014
        %v9045 = vadd.f32 %v8921, %v9015
        %v9046 = vadd.f32 %v8922, %v9016
        %v9047 = vadd.f32 %v8923, %v8996
        %v9048 = vadd.f32 %v8924, %v9017
        %v9049 = vadd.f32 %v8925, %v9018
        %v9050 = vadd.f32 %v8926, %v9019
        %v9051 = vadd.f32 %v8927, %v9004
        %v9052 = vadd.f32 %v8928, %v9020
        %v9053 = vadd.f32 %v8929, %v9021
        %v9054 = vadd.f32 %v8930, %v9022
        %9055 = vset.pattern.permute.xlu0 24
        %9056 = vperm.xlu0 %9055, %v5111
        %v9057 = vpop.permute.xlu0 %9056
        %9059 = vset.pattern.permute.xlu0 24
        %9060 = vperm.xlu0 %9059, %v5112
        %v9061 = vpop.permute.xlu0 %9060
        %9063 = vset.pattern.permute.xlu0 24
        %9064 = vperm.xlu0 %9063, %v5113
        %v9065 = vpop.permute.xlu0 %9064
        %9067 = vset.pattern.permute.xlu0 24
        %9068 = vperm.xlu0 %9067, %v5114
        %v9069 = vpop.permute.xlu0 %9068
        %v9071 = vmul.f32 %v9057, %v7179
        %v9072 = vmul.f32 %v9057, %v7180
        %v9073 = vmul.f32 %v9057, %v7181
        %v9074 = vmul.f32 %v9057, %v7182
        %v9075 = vmul.f32 %v9061, %v7183
        %v9076 = vmul.f32 %v9061, %v7184
        %v9077 = vmul.f32 %v9061, %v7185
        %v9078 = vmul.f32 %v9061, %v7186
        %v9079 = vmul.f32 %v9065, %v7187
        %v9080 = vmul.f32 %v9065, %v7188
        %v9081 = vmul.f32 %v9065, %v7189
        %v9082 = vmul.f32 %v9065, %v7190
        %v9083 = vmul.f32 %v9069, %v7191
        %v9084 = vmul.f32 %v9069, %v7192
        %v9085 = vmul.f32 %v9069, %v7193
        %v9086 = vmul.f32 %v9069, %v7194
        %9103 = vrot.lane.b32.xlu0 %v9071, 28
        %v9104 = vpop.permute.xlu0 %9103
        %9105 = vrot.lane.b32.xlu0 %v9072, 28
        %v9106 = vpop.permute.xlu0 %9105
        %9107 = vrot.lane.b32.xlu0 %v9073, 28
        %v9108 = vpop.permute.xlu0 %9107
        %9109 = vrot.lane.b32.xlu0 %v9074, 28
        %v9110 = vpop.permute.xlu0 %9109
        %9111 = vrot.lane.b32.xlu0 %v9075, 28
        %v9112 = vpop.permute.xlu0 %9111
        %9113 = vrot.lane.b32.xlu0 %v9076, 28
        %v9114 = vpop.permute.xlu0 %9113
        %9115 = vrot.lane.b32.xlu0 %v9077, 28
        %v9116 = vpop.permute.xlu0 %9115
        %9117 = vrot.lane.b32.xlu0 %v9078, 28
        %v9118 = vpop.permute.xlu0 %9117
        %9119 = vrot.lane.b32.xlu0 %v9079, 28
        %v9120 = vpop.permute.xlu0 %9119
        %9121 = vrot.lane.b32.xlu0 %v9080, 28
        %v9122 = vpop.permute.xlu0 %9121
        %9123 = vrot.lane.b32.xlu0 %v9081, 28
        %v9124 = vpop.permute.xlu0 %9123
        %9125 = vrot.lane.b32.xlu0 %v9082, 28
        %v9126 = vpop.permute.xlu0 %9125
        %9127 = vrot.lane.b32.xlu0 %v9083, 28
        %v9128 = vpop.permute.xlu0 %9127
        %9129 = vrot.lane.b32.xlu0 %v9084, 28
        %v9130 = vpop.permute.xlu0 %9129
        %9131 = vrot.lane.b32.xlu0 %v9085, 28
        %v9132 = vpop.permute.xlu0 %9131
        %9133 = vrot.lane.b32.xlu0 %v9086, 28
        %v9134 = vpop.permute.xlu0 %9133
        %v9135 = vsel %vm2453, %v9104, %v9106
        %v9136 = vsel %vm2453, %v9106, %v9108
        %v9137 = vsel %vm2453, %v9108, %v9110
        %v9138 = vsel %vm2453, %v9112, %v9114
        %v9139 = vsel %vm2453, %v9114, %v9116
        %v9140 = vsel %vm2453, %v9116, %v9118
        %v9141 = vsel %vm2453, %v9120, %v9122
        %v9142 = vsel %vm2453, %v9122, %v9124
        %v9143 = vsel %vm2453, %v9124, %v9126
        %v9144 = vsel %vm2453, %v9128, %v9130
        %v9145 = vsel %vm2453, %v9130, %v9132
        %v9146 = vsel %vm2453, %v9132, %v9134
        %v9163 = vadd.f32 %v9039, %v9104
        %v9164 = vadd.f32 %v9040, %v9135
        %v9165 = vadd.f32 %v9041, %v9136
        %v9166 = vadd.f32 %v9042, %v9137
        %v9167 = vadd.f32 %v9043, %v9112
        %v9168 = vadd.f32 %v9044, %v9138
        %v9169 = vadd.f32 %v9045, %v9139
        %v9170 = vadd.f32 %v9046, %v9140
        %v9171 = vadd.f32 %v9047, %v9120
        %v9172 = vadd.f32 %v9048, %v9141
        %v9173 = vadd.f32 %v9049, %v9142
        %v9174 = vadd.f32 %v9050, %v9143
        %v9175 = vadd.f32 %v9051, %v9128
        %v9176 = vadd.f32 %v9052, %v9144
        %v9177 = vadd.f32 %v9053, %v9145
        %v9178 = vadd.f32 %v9054, %v9146
        %v9179 = vld [vmem:[%s10] sm:$0xff]
        %v9180 = vld [vmem:[%s10 + $0x8] sm:$0xff]
        %v9181 = vld [vmem:[%s10 + $0x10] sm:$0xff]
        %v9182 = vld [vmem:[%s10 + $0x18] sm:$0xff]
        %9184 = vset.pattern.permute.xlu0 0
        %9185 = vperm.xlu0 %9184, %v9179
        %v9186 = vpop.permute.xlu0 %9185
        %9189 = vset.pattern.permute.xlu0 0
        %9190 = vperm.xlu0 %9189, %v9180
        %v9191 = vpop.permute.xlu0 %9190
        %9194 = vset.pattern.permute.xlu0 0
        %9195 = vperm.xlu0 %9194, %v9181
        %v9196 = vpop.permute.xlu0 %9195
        %9199 = vset.pattern.permute.xlu0 0
        %9200 = vperm.xlu0 %9199, %v9182
        %v9201 = vpop.permute.xlu0 %9200
        %v9203 = vadd.f32 %v8419, %v9186
        %v9204 = vadd.f32 %v8420, %v9186
        %v9205 = vadd.f32 %v8421, %v9186
        %v9206 = vadd.f32 %v8422, %v9186
        %v9207 = vadd.f32 %v8423, %v9191
        %v9208 = vadd.f32 %v8424, %v9191
        %v9209 = vadd.f32 %v8425, %v9191
        %v9210 = vadd.f32 %v8426, %v9191
        %v9211 = vadd.f32 %v8427, %v9196
        %v9212 = vadd.f32 %v8428, %v9196
        %v9213 = vadd.f32 %v8429, %v9196
        %v9214 = vadd.f32 %v8430, %v9196
        %v9215 = vadd.f32 %v8431, %v9201
        %v9216 = vadd.f32 %v8432, %v9201
        %v9217 = vadd.f32 %v8433, %v9201
        %v9218 = vadd.f32 %v8434, %v9201
        %v9219 = vmax.f32 %v9203, 0.0
        %v9220 = vmax.f32 %v9204, 0.0
        %v9221 = vmax.f32 %v9205, 0.0
        %v9222 = vmax.f32 %v9206, 0.0
        %v9223 = vmax.f32 %v9207, 0.0
        %v9224 = vmax.f32 %v9208, 0.0
        %v9225 = vmax.f32 %v9209, 0.0
        %v9226 = vmax.f32 %v9210, 0.0
        %v9227 = vmax.f32 %v9211, 0.0
        %v9228 = vmax.f32 %v9212, 0.0
        %v9229 = vmax.f32 %v9213, 0.0
        %v9230 = vmax.f32 %v9214, 0.0
        %v9231 = vmax.f32 %v9215, 0.0
        %v9232 = vmax.f32 %v9216, 0.0
        %v9233 = vmax.f32 %v9217, 0.0
        %v9234 = vmax.f32 %v9218, 0.0
        %v9235 = vld [vmem:[%s12] sm:$0xff]
        %v9236 = vld [vmem:[%s12 + $0x8] sm:$0xff]
        %v9237 = vld [vmem:[%s12 + $0x10] sm:$0xff]
        %v9238 = vld [vmem:[%s12 + $0x18] sm:$0xff]
        %9240 = vset.pattern.permute.xlu0 0
        %9241 = vperm.xlu0 %9240, %v9235
        %v9242 = vpop.permute.xlu0 %9241
        %9245 = vset.pattern.permute.xlu0 0
        %9246 = vperm.xlu0 %9245, %v9236
        %v9247 = vpop.permute.xlu0 %9246
        %9250 = vset.pattern.permute.xlu0 0
        %9251 = vperm.xlu0 %9250, %v9237
        %v9252 = vpop.permute.xlu0 %9251
        %9255 = vset.pattern.permute.xlu0 0
        %9256 = vperm.xlu0 %9255, %v9238
        %v9257 = vpop.permute.xlu0 %9256
        %v9259 = vadd.f32 %v9163, %v9242
        %v9260 = vadd.f32 %v9164, %v9242
        %v9261 = vadd.f32 %v9165, %v9242
        %v9262 = vadd.f32 %v9166, %v9242
        %v9263 = vadd.f32 %v9167, %v9247
        %v9264 = vadd.f32 %v9168, %v9247
        %v9265 = vadd.f32 %v9169, %v9247
        %v9266 = vadd.f32 %v9170, %v9247
        %v9267 = vadd.f32 %v9171, %v9252
        %v9268 = vadd.f32 %v9172, %v9252
        %v9269 = vadd.f32 %v9173, %v9252
        %v9270 = vadd.f32 %v9174, %v9252
        %v9271 = vadd.f32 %v9175, %v9257
        %v9272 = vadd.f32 %v9176, %v9257
        %v9273 = vadd.f32 %v9177, %v9257
        %v9274 = vadd.f32 %v9178, %v9257
        %v9275 = vmax.f32 %v9259, 0.0
        %v9276 = vmax.f32 %v9260, 0.0
        %v9277 = vmax.f32 %v9261, 0.0
        %v9278 = vmax.f32 %v9262, 0.0
        %v9279 = vmax.f32 %v9263, 0.0
        %v9280 = vmax.f32 %v9264, 0.0
        %v9281 = vmax.f32 %v9265, 0.0
        %v9282 = vmax.f32 %v9266, 0.0
        %v9283 = vmax.f32 %v9267, 0.0
        %v9284 = vmax.f32 %v9268, 0.0
        %v9285 = vmax.f32 %v9269, 0.0
        %v9286 = vmax.f32 %v9270, 0.0
        %v9287 = vmax.f32 %v9271, 0.0
        %v9288 = vmax.f32 %v9272, 0.0
        %v9289 = vmax.f32 %v9273, 0.0
        %v9290 = vmax.f32 %v9274, 0.0
        %v9291 = vld [vmem:[%s595] sm:$0xff]
        %v9292 = vld [vmem:[%s595 + $0x8] sm:$0xff]
        %v9293 = vld [vmem:[%s595 + $0x10] sm:$0xff]
        %v9294 = vld [vmem:[%s595 + $0x18] sm:$0xff]
        %v9295 = vld [vmem:[%s595 + $0x20] sm:$0xff]
        %v9296 = vld [vmem:[%s595 + $0x28] sm:$0xff]
        %v9297 = vld [vmem:[%s595 + $0x30] sm:$0xff]
        %v9298 = vld [vmem:[%s595 + $0x38] sm:$0xff]
        %v9299 = vld [vmem:[%s595 + $0x40] sm:$0xff]
        %v9300 = vld [vmem:[%s595 + $0x48] sm:$0xff]
        %v9301 = vld [vmem:[%s595 + $0x50] sm:$0xff]
        %v9302 = vld [vmem:[%s595 + $0x58] sm:$0xff]
        %v9303 = vld [vmem:[%s14] sm:$0xf]
        %v9304 = vld [vmem:[%s14 + $0x4] sm:$0xf]
        %v9305 = vld [vmem:[%s14 + $0x8] sm:$0xf]
        %v9306 = vld [vmem:[%s14 + $0xc] sm:$0xf]
        %v9307 = vpack.c.bf16 %v9223, %v9219
        %v9308 = vpack.c.bf16 %v9224, %v9220
        %v9309 = vpack.c.bf16 %v9225, %v9221
        %v9310 = vpack.c.bf16 %v9226, %v9222
        %v9311 = vpack.c.bf16 %v9231, %v9227
        %v9312 = vpack.c.bf16 %v9232, %v9228
        %v9313 = vpack.c.bf16 %v9233, %v9229
        %v9314 = vpack.c.bf16 %v9234, %v9230
        %v9319 = vunpack.c.l.b16 %v9303
        %v9320 = vunpack.c.l.b16 %v9304
        %v9321 = vunpack.c.l.b16 %v9305
        %v9322 = vunpack.c.l.b16 %v9306
        %v9323 = vpack.c.b16 %v9320, %v9319
        %v9324 = vpack.c.b16 %v9322, %v9321
        %9333 = vrot.lane.b32.xlu0 %v9307, 25
        %v9334 = vpop.permute.xlu0 %9333
        %9335 = vrot.lane.b32.xlu0 %v9308, 25
        %v9336 = vpop.permute.xlu0 %9335
        %9337 = vrot.lane.b32.xlu0 %v9309, 25
        %v9338 = vpop.permute.xlu0 %9337
        %9339 = vrot.lane.b32.xlu0 %v9310, 25
        %v9340 = vpop.permute.xlu0 %9339
        %9341 = vrot.lane.b32.xlu0 %v9311, 25
        %v9342 = vpop.permute.xlu0 %9341
        %9343 = vrot.lane.b32.xlu0 %v9312, 25
        %v9344 = vpop.permute.xlu0 %9343
        %9345 = vrot.lane.b32.xlu0 %v9313, 25
        %v9346 = vpop.permute.xlu0 %9345
        %9347 = vrot.lane.b32.xlu0 %v9314, 25
        %v9348 = vpop.permute.xlu0 %9347
        %vm9349 = vcmask 203776
        %v9350 = vsel %vm9349, %v9334, %v9336
        %v9351 = vsel %vm9349, %v9336, %v9338
        %v9352 = vsel %vm9349, %v9338, %v9340
        %v9353 = vsel %vm9349, %v9342, %v9344
        %v9354 = vsel %vm9349, %v9344, %v9346
        %v9355 = vsel %vm9349, %v9346, %v9348
        %v9363 = vsel %vm687, %v9323, 0
        %v9366 = vsel %vm687, %v9324, 0
        %9368 = vmatpush.bf16.msra.mxu0 0
        %9369 = vmatpush.bf16.msra.mxu0 0
        %9370 = vmatpush.bf16.msra.mxu0 0
        %9371 = vmatpush.bf16.msra.mxu0 0
        %9372 = vmatpush.bf16.msra.mxu0 0
        %9373 = vmatpush.bf16.msra.mxu0 0
        %9374 = vmatpush.bf16.msra.mxu0 %v9353
        %9375 = vmatpush.bf16.msra.mxu0 %v9350
        %9376 = vmatmul.bf16.gmra.mxu0 %v9363
        %v9377 = vpop.f32.mrf.mxu0
        %v9378 = vadd.f32 0.0, %v9377
        %v9379 = vpop.f32.mrf.mxu0
        %v9380 = vadd.f32 0.0, %v9379
        %9381 = vmatmul.bf16.gmra.mxu0 %v9366
        %v9382 = vpop.f32.mrf.mxu0
        %v9383 = vadd.f32 0.0, %v9382
        %v9384 = vpop.f32.mrf.mxu0
        %v9385 = vadd.f32 0.0, %v9384
        %9386 = vdwg.mxu0
        %9387 = vmatpush.bf16.msra.mxu0 0
        %9388 = vmatpush.bf16.msra.mxu0 0
        %9389 = vmatpush.bf16.msra.mxu0 0
        %9390 = vmatpush.bf16.msra.mxu0 0
        %9391 = vmatpush.bf16.msra.mxu0 0
        %9392 = vmatpush.bf16.msra.mxu0 0
        %9393 = vmatpush.bf16.msra.mxu0 %v9354
        %9394 = vmatpush.bf16.msra.mxu0 %v9351
        %9395 = vmatmul.bf16.gmra.mxu0 %v9363
        %v9396 = vpop.f32.mrf.mxu0
        %v9397 = vadd.f32 0.0, %v9396
        %v9398 = vpop.f32.mrf.mxu0
        %v9399 = vadd.f32 0.0, %v9398
        %9400 = vmatmul.bf16.gmra.mxu0 %v9366
        %v9401 = vpop.f32.mrf.mxu0
        %v9402 = vadd.f32 0.0, %v9401
        %v9403 = vpop.f32.mrf.mxu0
        %v9404 = vadd.f32 0.0, %v9403
        %9405 = vdwg.mxu0
        %9406 = vmatpush.bf16.msra.mxu0 0
        %9407 = vmatpush.bf16.msra.mxu0 0
        %9408 = vmatpush.bf16.msra.mxu0 0
        %9409 = vmatpush.bf16.msra.mxu0 0
        %9410 = vmatpush.bf16.msra.mxu0 0
        %9411 = vmatpush.bf16.msra.mxu0 0
        %9412 = vmatpush.bf16.msra.mxu0 %v9355
        %9413 = vmatpush.bf16.msra.mxu0 %v9352
        %9414 = vmatmul.bf16.gmra.mxu0 %v9363
        %v9415 = vpop.f32.mrf.mxu0
        %v9416 = vadd.f32 0.0, %v9415
        %v9417 = vpop.f32.mrf.mxu0
        %v9418 = vadd.f32 0.0, %v9417
        %9419 = vmatmul.bf16.gmra.mxu0 %v9366
        %v9420 = vpop.f32.mrf.mxu0
        %v9421 = vadd.f32 0.0, %v9420
        %v9422 = vpop.f32.mrf.mxu0
        %v9423 = vadd.f32 0.0, %v9422
        %9424 = vdwg.mxu0
        %v9425 = vadd.f32 %v9291, %v9378
        %v9426 = vadd.f32 %v9292, %v9397
        %v9427 = vadd.f32 %v9293, %v9416
        %v9428 = vadd.f32 %v9294, %v9380
        %v9429 = vadd.f32 %v9295, %v9399
        %v9430 = vadd.f32 %v9296, %v9418
        %v9431 = vadd.f32 %v9297, %v9383
        %v9432 = vadd.f32 %v9298, %v9402
        %v9433 = vadd.f32 %v9299, %v9421
        %v9434 = vadd.f32 %v9300, %v9385
        %v9435 = vadd.f32 %v9301, %v9404
        %v9436 = vadd.f32 %v9302, %v9423
        %v9437 = vld [vmem:[%s15] sm:$0xf]
        %v9438 = vld [vmem:[%s15 + $0x4] sm:$0xf]
        %v9439 = vld [vmem:[%s15 + $0x8] sm:$0xf]
        %v9440 = vld [vmem:[%s15 + $0xc] sm:$0xf]
        %v9441 = vpack.c.bf16 %v9279, %v9275
        %v9442 = vpack.c.bf16 %v9280, %v9276
        %v9443 = vpack.c.bf16 %v9281, %v9277
        %v9444 = vpack.c.bf16 %v9282, %v9278
        %v9445 = vpack.c.bf16 %v9287, %v9283
        %v9446 = vpack.c.bf16 %v9288, %v9284
        %v9447 = vpack.c.bf16 %v9289, %v9285
        %v9448 = vpack.c.bf16 %v9290, %v9286
        %v9453 = vunpack.c.l.b16 %v9437
        %v9454 = vunpack.c.l.b16 %v9438
        %v9455 = vunpack.c.l.b16 %v9439
        %v9456 = vunpack.c.l.b16 %v9440
        %v9457 = vpack.c.b16 %v9454, %v9453
        %v9458 = vpack.c.b16 %v9456, %v9455
        %9467 = vrot.lane.b32.xlu0 %v9441, 50
        %v9468 = vpop.permute.xlu0 %9467
        %9469 = vrot.lane.b32.xlu0 %v9442, 50
        %v9470 = vpop.permute.xlu0 %9469
        %9471 = vrot.lane.b32.xlu0 %v9443, 50
        %v9472 = vpop.permute.xlu0 %9471
        %9473 = vrot.lane.b32.xlu0 %v9444, 50
        %v9474 = vpop.permute.xlu0 %9473
        %9475 = vrot.lane.b32.xlu0 %v9445, 50
        %v9476 = vpop.permute.xlu0 %9475
        %9477 = vrot.lane.b32.xlu0 %v9446, 50
        %v9478 = vpop.permute.xlu0 %9477
        %9479 = vrot.lane.b32.xlu0 %v9447, 50
        %v9480 = vpop.permute.xlu0 %9479
        %9481 = vrot.lane.b32.xlu0 %v9448, 50
        %v9482 = vpop.permute.xlu0 %9481
        %vm9483 = vcmask 408576
        %v9484 = vsel %vm9483, %v9468, %v9470
        %v9485 = vsel %vm9483, %v9470, %v9472
        %v9486 = vsel %vm9483, %v9472, %v9474
        %v9487 = vsel %vm9483, %v9476, %v9478
        %v9488 = vsel %vm9483, %v9478, %v9480
        %v9489 = vsel %vm9483, %v9480, %v9482
        %v9497 = vsel %vm687, %v9457, 0
        %v9500 = vsel %vm687, %v9458, 0
        %9502 = vmatpush.bf16.msra.mxu0 0
        %9503 = vmatpush.bf16.msra.mxu0 0
        %9504 = vmatpush.bf16.msra.mxu0 0
        %9505 = vmatpush.bf16.msra.mxu0 0
        %9506 = vmatpush.bf16.msra.mxu0 0
        %9507 = vmatpush.bf16.msra.mxu0 0
        %9508 = vmatpush.bf16.msra.mxu0 %v9487
        %9509 = vmatpush.bf16.msra.mxu0 %v9484
        %9510 = vmatmul.bf16.gmra.mxu0 %v9497
        %v9511 = vpop.f32.mrf.mxu0
        %v9512 = vadd.f32 0.0, %v9511
        %v9513 = vpop.f32.mrf.mxu0
        %v9514 = vadd.f32 0.0, %v9513
        %9515 = vmatmul.bf16.gmra.mxu0 %v9500
        %v9516 = vpop.f32.mrf.mxu0
        %v9517 = vadd.f32 0.0, %v9516
        %v9518 = vpop.f32.mrf.mxu0
        %v9519 = vadd.f32 0.0, %v9518
        %9520 = vdwg.mxu0
        %9521 = vmatpush.bf16.msra.mxu0 0
        %9522 = vmatpush.bf16.msra.mxu0 0
        %9523 = vmatpush.bf16.msra.mxu0 0
        %9524 = vmatpush.bf16.msra.mxu0 0
        %9525 = vmatpush.bf16.msra.mxu0 0
        %9526 = vmatpush.bf16.msra.mxu0 0
        %9527 = vmatpush.bf16.msra.mxu0 %v9488
        %9528 = vmatpush.bf16.msra.mxu0 %v9485
        %9529 = vmatmul.bf16.gmra.mxu0 %v9497
        %v9530 = vpop.f32.mrf.mxu0
        %v9531 = vadd.f32 0.0, %v9530
        %v9532 = vpop.f32.mrf.mxu0
        %v9533 = vadd.f32 0.0, %v9532
        %9534 = vmatmul.bf16.gmra.mxu0 %v9500
        %v9535 = vpop.f32.mrf.mxu0
        %v9536 = vadd.f32 0.0, %v9535
        %v9537 = vpop.f32.mrf.mxu0
        %v9538 = vadd.f32 0.0, %v9537
        %9539 = vdwg.mxu0
        %9540 = vmatpush.bf16.msra.mxu0 0
        %9541 = vmatpush.bf16.msra.mxu0 0
        %9542 = vmatpush.bf16.msra.mxu0 0
        %9543 = vmatpush.bf16.msra.mxu0 0
        %9544 = vmatpush.bf16.msra.mxu0 0
        %9545 = vmatpush.bf16.msra.mxu0 0
        %9546 = vmatpush.bf16.msra.mxu0 %v9489
        %9547 = vmatpush.bf16.msra.mxu0 %v9486
        %9548 = vmatmul.bf16.gmra.mxu0 %v9497
        %v9549 = vpop.f32.mrf.mxu0
        %v9550 = vadd.f32 0.0, %v9549
        %v9551 = vpop.f32.mrf.mxu0
        %v9552 = vadd.f32 0.0, %v9551
        %9553 = vmatmul.bf16.gmra.mxu0 %v9500
        %v9554 = vpop.f32.mrf.mxu0
        %v9555 = vadd.f32 0.0, %v9554
        %v9556 = vpop.f32.mrf.mxu0
        %v9557 = vadd.f32 0.0, %v9556
        %9558 = vdwg.mxu0
        %v9559 = vadd.f32 %v9425, %v9512
        %v9560 = vadd.f32 %v9426, %v9531
        %v9561 = vadd.f32 %v9427, %v9550
        %v9562 = vadd.f32 %v9428, %v9514
        %v9563 = vadd.f32 %v9429, %v9533
        %v9564 = vadd.f32 %v9430, %v9552
        %v9565 = vadd.f32 %v9431, %v9517
        %v9566 = vadd.f32 %v9432, %v9536
        %v9567 = vadd.f32 %v9433, %v9555
        %v9568 = vadd.f32 %v9434, %v9519
        %v9569 = vadd.f32 %v9435, %v9538
        %v9570 = vadd.f32 %v9436, %v9557
        %v9571 = vld [vmem:[%s16] sm:$0xff]
        %v9572 = vld [vmem:[%s16 + $0x8] sm:$0xff]
        %v9573 = vld [vmem:[%s16 + $0x10] sm:$0xff]
        %v9574 = vld [vmem:[%s16 + $0x18] sm:$0xff]
        %9576 = vset.pattern.permute.xlu0 0
        %9577 = vperm.xlu0 %9576, %v9571
        %v9578 = vpop.permute.xlu0 %9577
        %9581 = vset.pattern.permute.xlu0 0
        %9582 = vperm.xlu0 %9581, %v9572
        %v9583 = vpop.permute.xlu0 %9582
        %9586 = vset.pattern.permute.xlu0 0
        %9587 = vperm.xlu0 %9586, %v9573
        %v9588 = vpop.permute.xlu0 %9587
        %9591 = vset.pattern.permute.xlu0 0
        %9592 = vperm.xlu0 %9591, %v9574
        %v9593 = vpop.permute.xlu0 %9592
        %v9595 = vmul.f32 %v9559, %v9578
        %v9596 = vmul.f32 %v9560, %v9578
        %v9597 = vmul.f32 %v9561, %v9578
        %v9598 = vmul.f32 %v9562, %v9583
        %v9599 = vmul.f32 %v9563, %v9583
        %v9600 = vmul.f32 %v9564, %v9583
        %v9601 = vmul.f32 %v9565, %v9588
        %v9602 = vmul.f32 %v9566, %v9588
        %v9603 = vmul.f32 %v9567, %v9588
        %v9604 = vmul.f32 %v9568, %v9593
        %v9605 = vmul.f32 %v9569, %v9593
        %v9606 = vmul.f32 %v9570, %v9593
        %v9607 = vld [vmem:[%s17] sm:$0xff]
        %v9608 = vld [vmem:[%s17 + $0x8] sm:$0xff]
        %v9609 = vld [vmem:[%s17 + $0x10] sm:$0xff]
        %v9610 = vld [vmem:[%s17 + $0x18] sm:$0xff]
        %9612 = vset.pattern.permute.xlu0 0
        %9613 = vperm.xlu0 %9612, %v9607
        %v9614 = vpop.permute.xlu0 %9613
        %9617 = vset.pattern.permute.xlu0 0
        %9618 = vperm.xlu0 %9617, %v9608
        %v9619 = vpop.permute.xlu0 %9618
        %9622 = vset.pattern.permute.xlu0 0
        %9623 = vperm.xlu0 %9622, %v9609
        %v9624 = vpop.permute.xlu0 %9623
        %9627 = vset.pattern.permute.xlu0 0
        %9628 = vperm.xlu0 %9627, %v9610
        %v9629 = vpop.permute.xlu0 %9628
        %v9631 = vadd.f32 %v9595, %v9614
        %v9632 = vadd.f32 %v9596, %v9614
        %v9633 = vadd.f32 %v9597, %v9614
        %v9634 = vadd.f32 %v9598, %v9619
        %v9635 = vadd.f32 %v9599, %v9619
        %v9636 = vadd.f32 %v9600, %v9619
        %v9637 = vadd.f32 %v9601, %v9624
        %v9638 = vadd.f32 %v9602, %v9624
        %v9639 = vadd.f32 %v9603, %v9624
        %v9640 = vadd.f32 %v9604, %v9629
        %v9641 = vadd.f32 %v9605, %v9629
        %v9642 = vadd.f32 %v9606, %v9629
        %9643 = vst [vmem:[%s595] sm:$0xff] %v9631
        %9644 = vst [vmem:[%s595 + $0x8] sm:$0xff] %v9632
        %9645 = vst [vmem:[%s595 + $0x10] sm:$0xff] %v9633
        %9646 = vst [vmem:[%s595 + $0x18] sm:$0xff] %v9634
        %9647 = vst [vmem:[%s595 + $0x20] sm:$0xff] %v9635
        %9648 = vst [vmem:[%s595 + $0x28] sm:$0xff] %v9636
        %9649 = vst [vmem:[%s595 + $0x30] sm:$0xff] %v9637
        %9650 = vst [vmem:[%s595 + $0x38] sm:$0xff] %v9638
        %9651 = vst [vmem:[%s595 + $0x40] sm:$0xff] %v9639
        %9652 = vst [vmem:[%s595 + $0x48] sm:$0xff] %v9640
        %9653 = vst [vmem:[%s595 + $0x50] sm:$0xff] %v9641
        %9654 = vst [vmem:[%s595 + $0x58] sm:$0xff] %v9642
        %s9655 = sand.u32 %s426, 1
        %s9656 = scalar_lea.sflag [#allocation6], %s9655
        %s9657 = sand.u32 %s426, 1
        %s9658 = smul.addr %s9657, 96
        %s9659 = scalar_lea.vmem [#allocation7], %s9658
        // Predicated region
        $region97: #{tpu_custom_call.1} parent=91 // pred_check
          %p9660 = pneg %p436
        $region98: #{tpu_custom_call.1} parent=91 // pred_check_branch
          %9662 = sbr.rel (%p9660) target = $region100
        $region99: #{tpu_custom_call.1} parent=91 // pred_region
          %9664 = vsyncadd %s9656, 0
          %s9665 = smul.addr %s35, 12
          %s9666 = smul.addr %s9665, 8
          %s9667 = scalar_lea.hbm %s18, %s9666
          %s9668 = sshll.u32 %s9659, 4
          %s9669 = int_to_ptr.vmem [resolvable:$true] %s9668
          %s9670 = sshll.u32 %s9667, 4
          %s9671 = int_to_ptr.hbm [resolvable:$true] %s9670
          %9676 = dma.vmem_to_hbm [thread:$0]  %s9669, 1536, %s9671, %s9656, 384, 384, 24
        $region100: #{tpu_custom_call.1} parent=91 // pred_fallthru
          _
      $region92: #{tpu_custom_call.1} parent=5 // pred_fallthru
        _
      %p9677 = scmp.le.s32.totalorder 2, %s30
      // Predicated region
      $region101: #{tpu_custom_call.1} parent=5 // pred_check
        %p9678 = pneg %p9677
      $region102: #{tpu_custom_call.1} parent=5 // pred_check_branch
        %9680 = sbr.rel (%p9678) target = $region104
      $region103: #{tpu_custom_call.1} parent=5 // pred_region
        %s9681 = ssub.s32 %s30, 2
        // Predicated region
        $region105: #{tpu_custom_call.1} parent=103 // pred_check
          %p9682 = pneg %p442
        $region106: #{tpu_custom_call.1} parent=103 // pred_check_branch
          %9684 = sbr.rel (%p9682) target = $region108
        $region107: #{tpu_custom_call.1} parent=103 // pred_region
          %s9685 = sand.u32 %s427, 1
          %s9686 = scalar_lea.sflag [#allocation6], %s9685
          %s9687 = sand.u32 %s427, 1
          %s9688 = smul.addr %s9687, 96
          %s9689 = scalar_lea.vmem [#allocation7], %s9688
          %9691 = dma.done %s9686, 1536
        $region108: #{tpu_custom_call.1} parent=103 // pred_fallthru
          _
      $region104: #{tpu_custom_call.1} parent=5 // pred_fallthru
        _
    $region6: #{tpu_custom_call.1} parent=1 // loop_footer
      %s34 = sadd.s32 1, %s30
    $region7: #{tpu_custom_call.1} parent=1 // loop_footer_branch
      %29 = sbr.rel target = $region3
    $region8: #{tpu_custom_call.1} parent=1 // loop_exit
      _
    %9692 = vsyncpa [#allocation5], 1
    %s9693 = scalar_lea.sflag [#allocation5], 1
    %9694 = vsyncpa %s9693, 1
    %9695 = vsyncpa [#allocation6], 1
    %s9696 = scalar_lea.sflag [#allocation6], 1
    %9697 = vsyncpa %s9696, 1

</llo_original>
